<compile_context>
chip_gen: v7x
topology: tpu7x:2x2x1
jax: 0.10.0
libtpu: 0.0.40
codegen_flags: <defaults>
</compile_context>

<pallas_src>
import jax
import jax.numpy as jnp
from jax.experimental import pallas as pl
from jax.experimental.pallas import tpu as pltpu

HP = 128   # padded hidden / input-feature width (one vreg lane span)
OP = 128   # padded output width (lane-dense final store)


def _sigmoid(a):
    # Plain exp-based sigmoid: guaranteed Mosaic lowering (EUP exp + divide),
    # and used identically in the pure-JAX reference.
    return 1.0 / (1.0 + jnp.exp(-a))


def gru_kernel(x_ref, wih_ref, whh_ref, bih_ref, bhh_ref, wout_ref, bout_ref,
               o_ref):
    T, B, H = x_ref.shape          # (seq, batch, padded hidden) — H == HP
    L = wih_ref.shape[0]

    # Current layer's input sequence kept as values (T tiles of (B, H)).
    seq = [x_ref[t] for t in range(T)]

    h = jnp.zeros((B, H), jnp.float32)
    for l in range(L):                         # static -> fully unrolled
        wih = wih_ref[l]                       # (H, 3H), gate order [r | z | n]
        whh = whh_ref[l]                       # (H, 3H)
        bih = bih_ref[l]                       # (1, 3H)
        bhh = bhh_ref[l]                       # (1, 3H)
        h = jnp.zeros((B, H), jnp.float32)     # h0 = 0 for every layer
        for t in range(T):                     # static -> fully unrolled
            gi = jnp.dot(seq[t], wih, preferred_element_type=jnp.float32) + bih
            gh = jnp.dot(h,      whh, preferred_element_type=jnp.float32) + bhh
            r = _sigmoid(gi[:, 0:H]         + gh[:, 0:H])
            z = _sigmoid(gi[:, H:2 * H]     + gh[:, H:2 * H])
            n = jnp.tanh(gi[:, 2 * H:3 * H] + r * gh[:, 2 * H:3 * H])
            h = (1.0 - z) * n + z * h
            seq[t] = h                         # becomes next layer's input
    # h is r_out[:, -1, :] of the last layer -> output Linear (with bias).
    o_ref[...] = (jnp.dot(h, wout_ref[...], preferred_element_type=jnp.float32)
                  + bout_ref[...])


def gru_forward(x_pad, wih, whh, bih, bhh, wout, bout):
    """x_pad: (T, B, HP); weights pre-packed to padded (in, out) layout."""
    B = x_pad.shape[1]
    vmem = pl.BlockSpec(memory_space=pltpu.MemorySpace.VMEM)
    return pl.pallas_call(
        gru_kernel,
        out_shape=jax.ShapeDtypeStruct((B, OP), jnp.float32),
        in_specs=[vmem] * 7,
        out_specs=vmem,
    )(x_pad, wih, whh, bih, bhh, wout, bout)


def init_params(key, input_size, hidden_size, output_size, num_layers):
    """Deterministic PyTorch-style init: all GRU params U(-1/sqrt(H), 1/sqrt(H)),
    Linear params U(-1/sqrt(fan_in), 1/sqrt(fan_in))."""
    ks = jax.random.split(key, 4 * num_layers + 2)

    def uni(k, shape, fan):
        b = 1.0 / jnp.sqrt(jnp.float32(fan))
        return jax.random.uniform(k, shape, jnp.float32, -b, b)

    gru, ki = [], 0
    for l in range(num_layers):
        in_dim = input_size if l == 0 else hidden_size
        w_ih = uni(ks[ki], (3 * hidden_size, in_dim), hidden_size); ki += 1
        w_hh = uni(ks[ki], (3 * hidden_size, hidden_size), hidden_size); ki += 1
        b_ih = uni(ks[ki], (3 * hidden_size,), hidden_size); ki += 1
        b_hh = uni(ks[ki], (3 * hidden_size,), hidden_size); ki += 1
        gru.append((w_ih, w_hh, b_ih, b_hh))
    w_out = uni(ks[ki], (output_size, hidden_size), hidden_size); ki += 1
    b_out = uni(ks[ki], (output_size,), hidden_size)
    return {"gru": gru, "w_out": w_out, "b_out": b_out}


def pack_params(p, input_size, hidden_size, output_size, num_layers):
    """PyTorch (out,in) gate-stacked weights -> padded (in, 3*HP) kernel layout.
    Padded rows/cols/biases are zero, which keeps padded lanes exactly 0."""
    H, L = hidden_size, num_layers
    wih = jnp.zeros((L, HP, 3 * HP), jnp.float32)
    whh = jnp.zeros((L, HP, 3 * HP), jnp.float32)
    bih = jnp.zeros((L, 1, 3 * HP), jnp.float32)
    bhh = jnp.zeros((L, 1, 3 * HP), jnp.float32)
    for l in range(L):
        w_ih_l, w_hh_l, b_ih_l, b_hh_l = p["gru"][l]
        in_dim = input_size if l == 0 else hidden_size
        for g in range(3):                      # gate order: r, z, n
            wih = wih.at[l, :in_dim, g * HP:g * HP + H].set(
                w_ih_l[g * H:(g + 1) * H, :].T)
            whh = whh.at[l, :H, g * HP:g * HP + H].set(
                w_hh_l[g * H:(g + 1) * H, :].T)
            bih = bih.at[l, 0, g * HP:g * HP + H].set(b_ih_l[g * H:(g + 1) * H])
            bhh = bhh.at[l, 0, g * HP:g * HP + H].set(b_hh_l[g * H:(g + 1) * H])
    wout = jnp.zeros((HP, OP), jnp.float32).at[:H, :output_size].set(p["w_out"].T)
    bout = jnp.zeros((1, OP), jnp.float32).at[0, :output_size].set(p["b_out"])
    return wih, whh, bih, bhh, wout, bout


def reference_forward(x, p, hidden_size, num_layers):
    """Pure-JAX reference matching torch.nn.GRU + Linear (exact f32 matmuls)."""
    hi = jax.lax.Precision.HIGHEST
    B, T, _ = x.shape
    seq = x
    for l in range(num_layers):
        w_ih, w_hh, b_ih, b_hh = p["gru"][l]
        h = jnp.zeros((B, hidden_size), jnp.float32)
        outs = []
        for t in range(T):
            gi = jnp.dot(seq[:, t, :], w_ih.T, precision=hi) + b_ih
            gh = jnp.dot(h, w_hh.T, precision=hi) + b_hh
            i_r, i_z, i_n = jnp.split(gi, 3, axis=1)
            h_r, h_z, h_n = jnp.split(gh, 3, axis=1)
            r = _sigmoid(i_r + h_r)
            z = _sigmoid(i_z + h_z)
            n = jnp.tanh(i_n + r * h_n)
            h = (1.0 - z) * n + z * h
            outs.append(h)
        seq = jnp.stack(outs, axis=1)
    return jnp.dot(seq[:, -1, :], p["w_out"].T, precision=hi) + p["b_out"]


if __name__ == "__main__":
    # Module defaults: input=3, output=1, layers=3, hidden=10; small batch/seq.
    input_size, hidden_size, output_size, num_layers = 3, 10, 1, 3
    batch, seq_len = 8, 6

    key = jax.random.PRNGKey(0)
    kx, kp = jax.random.split(key)
    x = jax.random.normal(kx, (batch, seq_len, input_size), jnp.float32)

    p = init_params(kp, input_size, hidden_size, output_size, num_layers)
    wih, whh, bih, bhh, wout, bout = pack_params(
        p, input_size, hidden_size, output_size, num_layers)

    # (B, T, in) -> time-major (T, B, HP), feature lanes zero-padded.
    x_pad = jnp.zeros((seq_len, batch, HP), jnp.float32)
    x_pad = x_pad.at[:, :, :input_size].set(jnp.transpose(x, (1, 0, 2)))

    y_pad = gru_forward(x_pad, wih, whh, bih, bhh, wout, bout)
    y_pad = jax.block_until_ready(y_pad)
    y = y_pad[:, :output_size]          # drop lane padding of the output

    y_ref = reference_forward(x, p, hidden_size, num_layers)
    assert y.shape == (batch, output_size)
    # Tolerance covers MXU f32 matmul pass-precision differences vs the
    # HIGHEST-precision XLA reference; structural errors would be >> this.
    err = float(jnp.max(jnp.abs(y - y_ref)))
    assert jnp.allclose(y, y_ref, atol=5e-3, rtol=5e-3), err

    print("KERNEL_OK")
</pallas_src>

<mosaic_0001>
module attributes {stable_mosaic.version = 11 : i64} {
  func.func @gru_kernel(%arg0: memref<6x8x128xf32, #tpu.memory_space<vmem>>, %arg1: memref<3x128x384xf32, #tpu.memory_space<vmem>>, %arg2: memref<3x128x384xf32, #tpu.memory_space<vmem>>, %arg3: memref<3x1x384xf32, #tpu.memory_space<vmem>>, %arg4: memref<3x1x384xf32, #tpu.memory_space<vmem>>, %arg5: memref<128x128xf32, #tpu.memory_space<vmem>>, %arg6: memref<1x128xf32, #tpu.memory_space<vmem>>, %arg7: memref<8x128xf32, #tpu.memory_space<vmem>>) attributes {dimension_semantics = [], scalar_prefetch = 0 : i64, scratch_operands = 0 : i64, tpu.core_type = #tpu.core_type<tc>} {
    %c0 = arith.constant 0 : index
    %c0_0 = arith.constant 0 : index
    %c0_1 = arith.constant 0 : index
    %0 = vector.load %arg0[%c0, %c0_0, %c0_1] : memref<6x8x128xf32, #tpu.memory_space<vmem>>, vector<1x8x128xf32>
    %1 = vector.shape_cast %0 : vector<1x8x128xf32> to vector<8x128xf32>
    %c1 = arith.constant 1 : index
    %c0_2 = arith.constant 0 : index
    %c0_3 = arith.constant 0 : index
    %2 = vector.load %arg0[%c1, %c0_2, %c0_3] : memref<6x8x128xf32, #tpu.memory_space<vmem>>, vector<1x8x128xf32>
    %3 = vector.shape_cast %2 : vector<1x8x128xf32> to vector<8x128xf32>
    %c2 = arith.constant 2 : index
    %c0_4 = arith.constant 0 : index
    %c0_5 = arith.constant 0 : index
    %4 = vector.load %arg0[%c2, %c0_4, %c0_5] : memref<6x8x128xf32, #tpu.memory_space<vmem>>, vector<1x8x128xf32>
    %5 = vector.shape_cast %4 : vector<1x8x128xf32> to vector<8x128xf32>
    %c3 = arith.constant 3 : index
    %c0_6 = arith.constant 0 : index
    %c0_7 = arith.constant 0 : index
    %6 = vector.load %arg0[%c3, %c0_6, %c0_7] : memref<6x8x128xf32, #tpu.memory_space<vmem>>, vector<1x8x128xf32>
    %7 = vector.shape_cast %6 : vector<1x8x128xf32> to vector<8x128xf32>
    %c4 = arith.constant 4 : index
    %c0_8 = arith.constant 0 : index
    %c0_9 = arith.constant 0 : index
    %8 = vector.load %arg0[%c4, %c0_8, %c0_9] : memref<6x8x128xf32, #tpu.memory_space<vmem>>, vector<1x8x128xf32>
    %9 = vector.shape_cast %8 : vector<1x8x128xf32> to vector<8x128xf32>
    %c5 = arith.constant 5 : index
    %c0_10 = arith.constant 0 : index
    %c0_11 = arith.constant 0 : index
    %10 = vector.load %arg0[%c5, %c0_10, %c0_11] : memref<6x8x128xf32, #tpu.memory_space<vmem>>, vector<1x8x128xf32>
    %11 = vector.shape_cast %10 : vector<1x8x128xf32> to vector<8x128xf32>
    %c0_12 = arith.constant 0 : index
    %c0_13 = arith.constant 0 : index
    %c0_14 = arith.constant 0 : index
    %12 = vector.load %arg1[%c0_12, %c0_13, %c0_14] : memref<3x128x384xf32, #tpu.memory_space<vmem>>, vector<1x128x384xf32>
    %13 = vector.shape_cast %12 : vector<1x128x384xf32> to vector<128x384xf32>
    %c0_15 = arith.constant 0 : index
    %c0_16 = arith.constant 0 : index
    %c0_17 = arith.constant 0 : index
    %14 = vector.load %arg2[%c0_15, %c0_16, %c0_17] : memref<3x128x384xf32, #tpu.memory_space<vmem>>, vector<1x128x384xf32>
    %15 = vector.shape_cast %14 : vector<1x128x384xf32> to vector<128x384xf32>
    %c0_18 = arith.constant 0 : index
    %c0_19 = arith.constant 0 : index
    %c0_20 = arith.constant 0 : index
    %16 = vector.load %arg3[%c0_18, %c0_19, %c0_20] : memref<3x1x384xf32, #tpu.memory_space<vmem>>, vector<1x1x384xf32>
    %17 = vector.shape_cast %16 : vector<1x1x384xf32> to vector<1x384xf32>
    %c0_21 = arith.constant 0 : index
    %c0_22 = arith.constant 0 : index
    %c0_23 = arith.constant 0 : index
    %18 = vector.load %arg4[%c0_21, %c0_22, %c0_23] : memref<3x1x384xf32, #tpu.memory_space<vmem>>, vector<1x1x384xf32>
    %19 = vector.shape_cast %18 : vector<1x1x384xf32> to vector<1x384xf32>
    %cst = arith.constant 0.000000e+00 : f32
    %20 = vector.broadcast %cst : f32 to vector<8x128xf32>
    %cst_24 = arith.constant dense<0.000000e+00> : vector<8x384xf32>
    %21 = tpu.matmul %1, %13, %cst_24 {dimension_numbers = #tpu.dot_dimension_numbers<[1], [0], [0], [1], [0, 0, 1, 1], [], []>} : vector<8x128xf32>, vector<128x384xf32>, vector<8x384xf32> -> vector<8x384xf32>
    %22 = vector.broadcast %17 : vector<1x384xf32> to vector<8x384xf32>
    %23 = arith.addf %21, %22 : vector<8x384xf32>
    %cst_25 = arith.constant dense<0.000000e+00> : vector<8x384xf32>
    %24 = tpu.matmul %20, %15, %cst_25 {dimension_numbers = #tpu.dot_dimension_numbers<[1], [0], [0], [1], [0, 0, 1, 1], [], []>} : vector<8x128xf32>, vector<128x384xf32>, vector<8x384xf32> -> vector<8x384xf32>
    %25 = vector.broadcast %19 : vector<1x384xf32> to vector<8x384xf32>
    %26 = arith.addf %24, %25 : vector<8x384xf32>
    %27 = vector.extract_strided_slice %23 {offsets = [0, 0], sizes = [8, 128], strides = [1, 1]} : vector<8x384xf32> to vector<8x128xf32>
    %28 = vector.extract_strided_slice %26 {offsets = [0, 0], sizes = [8, 128], strides = [1, 1]} : vector<8x384xf32> to vector<8x128xf32>
    %29 = arith.addf %27, %28 : vector<8x128xf32>
    %cst_26 = arith.constant 0.000000e+00 : f32
    %30 = vector.broadcast %cst_26 : f32 to vector<8x128xf32>
    %31 = arith.subf %30, %29 : vector<8x128xf32>
    %32 = math.exp %31 : vector<8x128xf32>
    %cst_27 = arith.constant 1.000000e+00 : f32
    %33 = vector.broadcast %cst_27 : f32 to vector<8x128xf32>
    %34 = arith.addf %33, %32 : vector<8x128xf32>
    %cst_28 = arith.constant 1.000000e+00 : f32
    %35 = vector.broadcast %cst_28 : f32 to vector<8x128xf32>
    %36 = arith.divf %35, %34 : vector<8x128xf32>
    %37 = vector.extract_strided_slice %23 {offsets = [0, 128], sizes = [8, 128], strides = [1, 1]} : vector<8x384xf32> to vector<8x128xf32>
    %38 = vector.extract_strided_slice %26 {offsets = [0, 128], sizes = [8, 128], strides = [1, 1]} : vector<8x384xf32> to vector<8x128xf32>
    %39 = arith.addf %37, %38 : vector<8x128xf32>
    %cst_29 = arith.constant 0.000000e+00 : f32
    %40 = vector.broadcast %cst_29 : f32 to vector<8x128xf32>
    %41 = arith.subf %40, %39 : vector<8x128xf32>
    %42 = math.exp %41 : vector<8x128xf32>
    %cst_30 = arith.constant 1.000000e+00 : f32
    %43 = vector.broadcast %cst_30 : f32 to vector<8x128xf32>
    %44 = arith.addf %43, %42 : vector<8x128xf32>
    %cst_31 = arith.constant 1.000000e+00 : f32
    %45 = vector.broadcast %cst_31 : f32 to vector<8x128xf32>
    %46 = arith.divf %45, %44 : vector<8x128xf32>
    %47 = vector.extract_strided_slice %23 {offsets = [0, 256], sizes = [8, 128], strides = [1, 1]} : vector<8x384xf32> to vector<8x128xf32>
    %48 = vector.extract_strided_slice %26 {offsets = [0, 256], sizes = [8, 128], strides = [1, 1]} : vector<8x384xf32> to vector<8x128xf32>
    %49 = arith.mulf %36, %48 : vector<8x128xf32>
    %50 = arith.addf %47, %49 : vector<8x128xf32>
    %51 = math.tanh %50 : vector<8x128xf32>
    %cst_32 = arith.constant 1.000000e+00 : f32
    %52 = vector.broadcast %cst_32 : f32 to vector<8x128xf32>
    %53 = arith.subf %52, %46 : vector<8x128xf32>
    %54 = arith.mulf %53, %51 : vector<8x128xf32>
    %55 = arith.mulf %46, %20 : vector<8x128xf32>
    %56 = arith.addf %54, %55 : vector<8x128xf32>
    %cst_33 = arith.constant dense<0.000000e+00> : vector<8x384xf32>
    %57 = tpu.matmul %3, %13, %cst_33 {dimension_numbers = #tpu.dot_dimension_numbers<[1], [0], [0], [1], [0, 0, 1, 1], [], []>} : vector<8x128xf32>, vector<128x384xf32>, vector<8x384xf32> -> vector<8x384xf32>
    %58 = vector.broadcast %17 : vector<1x384xf32> to vector<8x384xf32>
    %59 = arith.addf %57, %58 : vector<8x384xf32>
    %cst_34 = arith.constant dense<0.000000e+00> : vector<8x384xf32>
    %60 = tpu.matmul %56, %15, %cst_34 {dimension_numbers = #tpu.dot_dimension_numbers<[1], [0], [0], [1], [0, 0, 1, 1], [], []>} : vector<8x128xf32>, vector<128x384xf32>, vector<8x384xf32> -> vector<8x384xf32>
    %61 = vector.broadcast %19 : vector<1x384xf32> to vector<8x384xf32>
    %62 = arith.addf %60, %61 : vector<8x384xf32>
    %63 = vector.extract_strided_slice %59 {offsets = [0, 0], sizes = [8, 128], strides = [1, 1]} : vector<8x384xf32> to vector<8x128xf32>
    %64 = vector.extract_strided_slice %62 {offsets = [0, 0], sizes = [8, 128], strides = [1, 1]} : vector<8x384xf32> to vector<8x128xf32>
    %65 = arith.addf %63, %64 : vector<8x128xf32>
    %cst_35 = arith.constant 0.000000e+00 : f32
    %66 = vector.broadcast %cst_35 : f32 to vector<8x128xf32>
    %67 = arith.subf %66, %65 : vector<8x128xf32>
    %68 = math.exp %67 : vector<8x128xf32>
    %cst_36 = arith.constant 1.000000e+00 : f32
    %69 = vector.broadcast %cst_36 : f32 to vector<8x128xf32>
    %70 = arith.addf %69, %68 : vector<8x128xf32>
    %cst_37 = arith.constant 1.000000e+00 : f32
    %71 = vector.broadcast %cst_37 : f32 to vector<8x128xf32>
    %72 = arith.divf %71, %70 : vector<8x128xf32>
    %73 = vector.extract_strided_slice %59 {offsets = [0, 128], sizes = [8, 128], strides = [1, 1]} : vector<8x384xf32> to vector<8x128xf32>
    %74 = vector.extract_strided_slice %62 {offsets = [0, 128], sizes = [8, 128], strides = [1, 1]} : vector<8x384xf32> to vector<8x128xf32>
    %75 = arith.addf %73, %74 : vector<8x128xf32>
    %cst_38 = arith.constant 0.000000e+00 : f32
    %76 = vector.broadcast %cst_38 : f32 to vector<8x128xf32>
    %77 = arith.subf %76, %75 : vector<8x128xf32>
    %78 = math.exp %77 : vector<8x128xf32>
    %cst_39 = arith.constant 1.000000e+00 : f32
    %79 = vector.broadcast %cst_39 : f32 to vector<8x128xf32>
    %80 = arith.addf %79, %78 : vector<8x128xf32>
    %cst_40 = arith.constant 1.000000e+00 : f32
    %81 = vector.broadcast %cst_40 : f32 to vector<8x128xf32>
    %82 = arith.divf %81, %80 : vector<8x128xf32>
    %83 = vector.extract_strided_slice %59 {offsets = [0, 256], sizes = [8, 128], strides = [1, 1]} : vector<8x384xf32> to vector<8x128xf32>
    %84 = vector.extract_strided_slice %62 {offsets = [0, 256], sizes = [8, 128], strides = [1, 1]} : vector<8x384xf32> to vector<8x128xf32>
    %85 = arith.mulf %72, %84 : vector<8x128xf32>
    %86 = arith.addf %83, %85 : vector<8x128xf32>
    %87 = math.tanh %86 : vector<8x128xf32>
    %cst_41 = arith.constant 1.000000e+00 : f32
    %88 = vector.broadcast %cst_41 : f32 to vector<8x128xf32>
    %89 = arith.subf %88, %82 : vector<8x128xf32>
    %90 = arith.mulf %89, %87 : vector<8x128xf32>
    %91 = arith.mulf %82, %56 : vector<8x128xf32>
    %92 = arith.addf %90, %91 : vector<8x128xf32>
    %cst_42 = arith.constant dense<0.000000e+00> : vector<8x384xf32>
    %93 = tpu.matmul %5, %13, %cst_42 {dimension_numbers = #tpu.dot_dimension_numbers<[1], [0], [0], [1], [0, 0, 1, 1], [], []>} : vector<8x128xf32>, vector<128x384xf32>, vector<8x384xf32> -> vector<8x384xf32>
    %94 = vector.broadcast %17 : vector<1x384xf32> to vector<8x384xf32>
    %95 = arith.addf %93, %94 : vector<8x384xf32>
    %cst_43 = arith.constant dense<0.000000e+00> : vector<8x384xf32>
    %96 = tpu.matmul %92, %15, %cst_43 {dimension_numbers = #tpu.dot_dimension_numbers<[1], [0], [0], [1], [0, 0, 1, 1], [], []>} : vector<8x128xf32>, vector<128x384xf32>, vector<8x384xf32> -> vector<8x384xf32>
    %97 = vector.broadcast %19 : vector<1x384xf32> to vector<8x384xf32>
    %98 = arith.addf %96, %97 : vector<8x384xf32>
    %99 = vector.extract_strided_slice %95 {offsets = [0, 0], sizes = [8, 128], strides = [1, 1]} : vector<8x384xf32> to vector<8x128xf32>
    %100 = vector.extract_strided_slice %98 {offsets = [0, 0], sizes = [8, 128], strides = [1, 1]} : vector<8x384xf32> to vector<8x128xf32>
    %101 = arith.addf %99, %100 : vector<8x128xf32>
    %cst_44 = arith.constant 0.000000e+00 : f32
    %102 = vector.broadcast %cst_44 : f32 to vector<8x128xf32>
    %103 = arith.subf %102, %101 : vector<8x128xf32>
    %104 = math.exp %103 : vector<8x128xf32>
    %cst_45 = arith.constant 1.000000e+00 : f32
    %105 = vector.broadcast %cst_45 : f32 to vector<8x128xf32>
    %106 = arith.addf %105, %104 : vector<8x128xf32>
    %cst_46 = arith.constant 1.000000e+00 : f32
    %107 = vector.broadcast %cst_46 : f32 to vector<8x128xf32>
    %108 = arith.divf %107, %106 : vector<8x128xf32>
    %109 = vector.extract_strided_slice %95 {offsets = [0, 128], sizes = [8, 128], strides = [1, 1]} : vector<8x384xf32> to vector<8x128xf32>
    %110 = vector.extract_strided_slice %98 {offsets = [0, 128], sizes = [8, 128], strides = [1, 1]} : vector<8x384xf32> to vector<8x128xf32>
    %111 = arith.addf %109, %110 : vector<8x128xf32>
    %cst_47 = arith.constant 0.000000e+00 : f32
    %112 = vector.broadcast %cst_47 : f32 to vector<8x128xf32>
    %113 = arith.subf %112, %111 : vector<8x128xf32>
    %114 = math.exp %113 : vector<8x128xf32>
    %cst_48 = arith.constant 1.000000e+00 : f32
    %115 = vector.broadcast %cst_48 : f32 to vector<8x128xf32>
    %116 = arith.addf %115, %114 : vector<8x128xf32>
    %cst_49 = arith.constant 1.000000e+00 : f32
    %117 = vector.broadcast %cst_49 : f32 to vector<8x128xf32>
    %118 = arith.divf %117, %116 : vector<8x128xf32>
    %119 = vector.extract_strided_slice %95 {offsets = [0, 256], sizes = [8, 128], strides = [1, 1]} : vector<8x384xf32> to vector<8x128xf32>
    %120 = vector.extract_strided_slice %98 {offsets = [0, 256], sizes = [8, 128], strides = [1, 1]} : vector<8x384xf32> to vector<8x128xf32>
    %121 = arith.mulf %108, %120 : vector<8x128xf32>
    %122 = arith.addf %119, %121 : vector<8x128xf32>
    %123 = math.tanh %122 : vector<8x128xf32>
    %cst_50 = arith.constant 1.000000e+00 : f32
    %124 = vector.broadcast %cst_50 : f32 to vector<8x128xf32>
    %125 = arith.subf %124, %118 : vector<8x128xf32>
    %126 = arith.mulf %125, %123 : vector<8x128xf32>
    %127 = arith.mulf %118, %92 : vector<8x128xf32>
    %128 = arith.addf %126, %127 : vector<8x128xf32>
    %cst_51 = arith.constant dense<0.000000e+00> : vector<8x384xf32>
    %129 = tpu.matmul %7, %13, %cst_51 {dimension_numbers = #tpu.dot_dimension_numbers<[1], [0], [0], [1], [0, 0, 1, 1], [], []>} : vector<8x128xf32>, vector<128x384xf32>, vector<8x384xf32> -> vector<8x384xf32>
    %130 = vector.broadcast %17 : vector<1x384xf32> to vector<8x384xf32>
    %131 = arith.addf %129, %130 : vector<8x384xf32>
    %cst_52 = arith.constant dense<0.000000e+00> : vector<8x384xf32>
    %132 = tpu.matmul %128, %15, %cst_52 {dimension_numbers = #tpu.dot_dimension_numbers<[1], [0], [0], [1], [0, 0, 1, 1], [], []>} : vector<8x128xf32>, vector<128x384xf32>, vector<8x384xf32> -> vector<8x384xf32>
    %133 = vector.broadcast %19 : vector<1x384xf32> to vector<8x384xf32>
    %134 = arith.addf %132, %133 : vector<8x384xf32>
    %135 = vector.extract_strided_slice %131 {offsets = [0, 0], sizes = [8, 128], strides = [1, 1]} : vector<8x384xf32> to vector<8x128xf32>
    %136 = vector.extract_strided_slice %134 {offsets = [0, 0], sizes = [8, 128], strides = [1, 1]} : vector<8x384xf32> to vector<8x128xf32>
    %137 = arith.addf %135, %136 : vector<8x128xf32>
    %cst_53 = arith.constant 0.000000e+00 : f32
    %138 = vector.broadcast %cst_53 : f32 to vector<8x128xf32>
    %139 = arith.subf %138, %137 : vector<8x128xf32>
    %140 = math.exp %139 : vector<8x128xf32>
    %cst_54 = arith.constant 1.000000e+00 : f32
    %141 = vector.broadcast %cst_54 : f32 to vector<8x128xf32>
    %142 = arith.addf %141, %140 : vector<8x128xf32>
    %cst_55 = arith.constant 1.000000e+00 : f32
    %143 = vector.broadcast %cst_55 : f32 to vector<8x128xf32>
    %144 = arith.divf %143, %142 : vector<8x128xf32>
    %145 = vector.extract_strided_slice %131 {offsets = [0, 128], sizes = [8, 128], strides = [1, 1]} : vector<8x384xf32> to vector<8x128xf32>
    %146 = vector.extract_strided_slice %134 {offsets = [0, 128], sizes = [8, 128], strides = [1, 1]} : vector<8x384xf32> to vector<8x128xf32>
    %147 = arith.addf %145, %146 : vector<8x128xf32>
    %cst_56 = arith.constant 0.000000e+00 : f32
    %148 = vector.broadcast %cst_56 : f32 to vector<8x128xf32>
    %149 = arith.subf %148, %147 : vector<8x128xf32>
    %150 = math.exp %149 : vector<8x128xf32>
    %cst_57 = arith.constant 1.000000e+00 : f32
    %151 = vector.broadcast %cst_57 : f32 to vector<8x128xf32>
    %152 = arith.addf %151, %150 : vector<8x128xf32>
    %cst_58 = arith.constant 1.000000e+00 : f32
    %153 = vector.broadcast %cst_58 : f32 to vector<8x128xf32>
    %154 = arith.divf %153, %152 : vector<8x128xf32>
    %155 = vector.extract_strided_slice %131 {offsets = [0, 256], sizes = [8, 128], strides = [1, 1]} : vector<8x384xf32> to vector<8x128xf32>
    %156 = vector.extract_strided_slice %134 {offsets = [0, 256], sizes = [8, 128], strides = [1, 1]} : vector<8x384xf32> to vector<8x128xf32>
    %157 = arith.mulf %144, %156 : vector<8x128xf32>
    %158 = arith.addf %155, %157 : vector<8x128xf32>
    %159 = math.tanh %158 : vector<8x128xf32>
    %cst_59 = arith.constant 1.000000e+00 : f32
    %160 = vector.broadcast %cst_59 : f32 to vector<8x128xf32>
    %161 = arith.subf %160, %154 : vector<8x128xf32>
    %162 = arith.mulf %161, %159 : vector<8x128xf32>
    %163 = arith.mulf %154, %128 : vector<8x128xf32>
    %164 = arith.addf %162, %163 : vector<8x128xf32>
    %cst_60 = arith.constant dense<0.000000e+00> : vector<8x384xf32>
    %165 = tpu.matmul %9, %13, %cst_60 {dimension_numbers = #tpu.dot_dimension_numbers<[1], [0], [0], [1], [0, 0, 1, 1], [], []>} : vector<8x128xf32>, vector<128x384xf32>, vector<8x384xf32> -> vector<8x384xf32>
    %166 = vector.broadcast %17 : vector<1x384xf32> to vector<8x384xf32>
    %167 = arith.addf %165, %166 : vector<8x384xf32>
    %cst_61 = arith.constant dense<0.000000e+00> : vector<8x384xf32>
    %168 = tpu.matmul %164, %15, %cst_61 {dimension_numbers = #tpu.dot_dimension_numbers<[1], [0], [0], [1], [0, 0, 1, 1], [], []>} : vector<8x128xf32>, vector<128x384xf32>, vector<8x384xf32> -> vector<8x384xf32>
    %169 = vector.broadcast %19 : vector<1x384xf32> to vector<8x384xf32>
    %170 = arith.addf %168, %169 : vector<8x384xf32>
    %171 = vector.extract_strided_slice %167 {offsets = [0, 0], sizes = [8, 128], strides = [1, 1]} : vector<8x384xf32> to vector<8x128xf32>
    %172 = vector.extract_strided_slice %170 {offsets = [0, 0], sizes = [8, 128], strides = [1, 1]} : vector<8x384xf32> to vector<8x128xf32>
    %173 = arith.addf %171, %172 : vector<8x128xf32>
    %cst_62 = arith.constant 0.000000e+00 : f32
    %174 = vector.broadcast %cst_62 : f32 to vector<8x128xf32>
    %175 = arith.subf %174, %173 : vector<8x128xf32>
    %176 = math.exp %175 : vector<8x128xf32>
    %cst_63 = arith.constant 1.000000e+00 : f32
    %177 = vector.broadcast %cst_63 : f32 to vector<8x128xf32>
    %178 = arith.addf %177, %176 : vector<8x128xf32>
    %cst_64 = arith.constant 1.000000e+00 : f32
    %179 = vector.broadcast %cst_64 : f32 to vector<8x128xf32>
    %180 = arith.divf %179, %178 : vector<8x128xf32>
    %181 = vector.extract_strided_slice %167 {offsets = [0, 128], sizes = [8, 128], strides = [1, 1]} : vector<8x384xf32> to vector<8x128xf32>
    %182 = vector.extract_strided_slice %170 {offsets = [0, 128], sizes = [8, 128], strides = [1, 1]} : vector<8x384xf32> to vector<8x128xf32>
    %183 = arith.addf %181, %182 : vector<8x128xf32>
    %cst_65 = arith.constant 0.000000e+00 : f32
    %184 = vector.broadcast %cst_65 : f32 to vector<8x128xf32>
    %185 = arith.subf %184, %183 : vector<8x128xf32>
    %186 = math.exp %185 : vector<8x128xf32>
    %cst_66 = arith.constant 1.000000e+00 : f32
    %187 = vector.broadcast %cst_66 : f32 to vector<8x128xf32>
    %188 = arith.addf %187, %186 : vector<8x128xf32>
    %cst_67 = arith.constant 1.000000e+00 : f32
    %189 = vector.broadcast %cst_67 : f32 to vector<8x128xf32>
    %190 = arith.divf %189, %188 : vector<8x128xf32>
    %191 = vector.extract_strided_slice %167 {offsets = [0, 256], sizes = [8, 128], strides = [1, 1]} : vector<8x384xf32> to vector<8x128xf32>
    %192 = vector.extract_strided_slice %170 {offsets = [0, 256], sizes = [8, 128], strides = [1, 1]} : vector<8x384xf32> to vector<8x128xf32>
    %193 = arith.mulf %180, %192 : vector<8x128xf32>
    %194 = arith.addf %191, %193 : vector<8x128xf32>
    %195 = math.tanh %194 : vector<8x128xf32>
    %cst_68 = arith.constant 1.000000e+00 : f32
    %196 = vector.broadcast %cst_68 : f32 to vector<8x128xf32>
    %197 = arith.subf %196, %190 : vector<8x128xf32>
    %198 = arith.mulf %197, %195 : vector<8x128xf32>
    %199 = arith.mulf %190, %164 : vector<8x128xf32>
    %200 = arith.addf %198, %199 : vector<8x128xf32>
    %cst_69 = arith.constant dense<0.000000e+00> : vector<8x384xf32>
    %201 = tpu.matmul %11, %13, %cst_69 {dimension_numbers = #tpu.dot_dimension_numbers<[1], [0], [0], [1], [0, 0, 1, 1], [], []>} : vector<8x128xf32>, vector<128x384xf32>, vector<8x384xf32> -> vector<8x384xf32>
    %202 = vector.broadcast %17 : vector<1x384xf32> to vector<8x384xf32>
    %203 = arith.addf %201, %202 : vector<8x384xf32>
    %cst_70 = arith.constant dense<0.000000e+00> : vector<8x384xf32>
    %204 = tpu.matmul %200, %15, %cst_70 {dimension_numbers = #tpu.dot_dimension_numbers<[1], [0], [0], [1], [0, 0, 1, 1], [], []>} : vector<8x128xf32>, vector<128x384xf32>, vector<8x384xf32> -> vector<8x384xf32>
    %205 = vector.broadcast %19 : vector<1x384xf32> to vector<8x384xf32>
    %206 = arith.addf %204, %205 : vector<8x384xf32>
    %207 = vector.extract_strided_slice %203 {offsets = [0, 0], sizes = [8, 128], strides = [1, 1]} : vector<8x384xf32> to vector<8x128xf32>
    %208 = vector.extract_strided_slice %206 {offsets = [0, 0], sizes = [8, 128], strides = [1, 1]} : vector<8x384xf32> to vector<8x128xf32>
    %209 = arith.addf %207, %208 : vector<8x128xf32>
    %cst_71 = arith.constant 0.000000e+00 : f32
    %210 = vector.broadcast %cst_71 : f32 to vector<8x128xf32>
    %211 = arith.subf %210, %209 : vector<8x128xf32>
    %212 = math.exp %211 : vector<8x128xf32>
    %cst_72 = arith.constant 1.000000e+00 : f32
    %213 = vector.broadcast %cst_72 : f32 to vector<8x128xf32>
    %214 = arith.addf %213, %212 : vector<8x128xf32>
    %cst_73 = arith.constant 1.000000e+00 : f32
    %215 = vector.broadcast %cst_73 : f32 to vector<8x128xf32>
    %216 = arith.divf %215, %214 : vector<8x128xf32>
    %217 = vector.extract_strided_slice %203 {offsets = [0, 128], sizes = [8, 128], strides = [1, 1]} : vector<8x384xf32> to vector<8x128xf32>
    %218 = vector.extract_strided_slice %206 {offsets = [0, 128], sizes = [8, 128], strides = [1, 1]} : vector<8x384xf32> to vector<8x128xf32>
    %219 = arith.addf %217, %218 : vector<8x128xf32>
    %cst_74 = arith.constant 0.000000e+00 : f32
    %220 = vector.broadcast %cst_74 : f32 to vector<8x128xf32>
    %221 = arith.subf %220, %219 : vector<8x128xf32>
    %222 = math.exp %221 : vector<8x128xf32>
    %cst_75 = arith.constant 1.000000e+00 : f32
    %223 = vector.broadcast %cst_75 : f32 to vector<8x128xf32>
    %224 = arith.addf %223, %222 : vector<8x128xf32>
    %cst_76 = arith.constant 1.000000e+00 : f32
    %225 = vector.broadcast %cst_76 : f32 to vector<8x128xf32>
    %226 = arith.divf %225, %224 : vector<8x128xf32>
    %227 = vector.extract_strided_slice %203 {offsets = [0, 256], sizes = [8, 128], strides = [1, 1]} : vector<8x384xf32> to vector<8x128xf32>
    %228 = vector.extract_strided_slice %206 {offsets = [0, 256], sizes = [8, 128], strides = [1, 1]} : vector<8x384xf32> to vector<8x128xf32>
    %229 = arith.mulf %216, %228 : vector<8x128xf32>
    %230 = arith.addf %227, %229 : vector<8x128xf32>
    %231 = math.tanh %230 : vector<8x128xf32>
    %cst_77 = arith.constant 1.000000e+00 : f32
    %232 = vector.broadcast %cst_77 : f32 to vector<8x128xf32>
    %233 = arith.subf %232, %226 : vector<8x128xf32>
    %234 = arith.mulf %233, %231 : vector<8x128xf32>
    %235 = arith.mulf %226, %200 : vector<8x128xf32>
    %236 = arith.addf %234, %235 : vector<8x128xf32>
    %c1_78 = arith.constant 1 : index
    %c0_79 = arith.constant 0 : index
    %c0_80 = arith.constant 0 : index
    %237 = vector.load %arg1[%c1_78, %c0_79, %c0_80] : memref<3x128x384xf32, #tpu.memory_space<vmem>>, vector<1x128x384xf32>
    %238 = vector.shape_cast %237 : vector<1x128x384xf32> to vector<128x384xf32>
    %c1_81 = arith.constant 1 : index
    %c0_82 = arith.constant 0 : index
    %c0_83 = arith.constant 0 : index
    %239 = vector.load %arg2[%c1_81, %c0_82, %c0_83] : memref<3x128x384xf32, #tpu.memory_space<vmem>>, vector<1x128x384xf32>
    %240 = vector.shape_cast %239 : vector<1x128x384xf32> to vector<128x384xf32>
    %c1_84 = arith.constant 1 : index
    %c0_85 = arith.constant 0 : index
    %c0_86 = arith.constant 0 : index
    %241 = vector.load %arg3[%c1_84, %c0_85, %c0_86] : memref<3x1x384xf32, #tpu.memory_space<vmem>>, vector<1x1x384xf32>
    %242 = vector.shape_cast %241 : vector<1x1x384xf32> to vector<1x384xf32>
    %c1_87 = arith.constant 1 : index
    %c0_88 = arith.constant 0 : index
    %c0_89 = arith.constant 0 : index
    %243 = vector.load %arg4[%c1_87, %c0_88, %c0_89] : memref<3x1x384xf32, #tpu.memory_space<vmem>>, vector<1x1x384xf32>
    %244 = vector.shape_cast %243 : vector<1x1x384xf32> to vector<1x384xf32>
    %cst_90 = arith.constant 0.000000e+00 : f32
    %245 = vector.broadcast %cst_90 : f32 to vector<8x128xf32>
    %cst_91 = arith.constant dense<0.000000e+00> : vector<8x384xf32>
    %246 = tpu.matmul %56, %238, %cst_91 {dimension_numbers = #tpu.dot_dimension_numbers<[1], [0], [0], [1], [0, 0, 1, 1], [], []>} : vector<8x128xf32>, vector<128x384xf32>, vector<8x384xf32> -> vector<8x384xf32>
    %247 = vector.broadcast %242 : vector<1x384xf32> to vector<8x384xf32>
    %248 = arith.addf %246, %247 : vector<8x384xf32>
    %cst_92 = arith.constant dense<0.000000e+00> : vector<8x384xf32>
    %249 = tpu.matmul %245, %240, %cst_92 {dimension_numbers = #tpu.dot_dimension_numbers<[1], [0], [0], [1], [0, 0, 1, 1], [], []>} : vector<8x128xf32>, vector<128x384xf32>, vector<8x384xf32> -> vector<8x384xf32>
    %250 = vector.broadcast %244 : vector<1x384xf32> to vector<8x384xf32>
    %251 = arith.addf %249, %250 : vector<8x384xf32>
    %252 = vector.extract_strided_slice %248 {offsets = [0, 0], sizes = [8, 128], strides = [1, 1]} : vector<8x384xf32> to vector<8x128xf32>
    %253 = vector.extract_strided_slice %251 {offsets = [0, 0], sizes = [8, 128], strides = [1, 1]} : vector<8x384xf32> to vector<8x128xf32>
    %254 = arith.addf %252, %253 : vector<8x128xf32>
    %cst_93 = arith.constant 0.000000e+00 : f32
    %255 = vector.broadcast %cst_93 : f32 to vector<8x128xf32>
    %256 = arith.subf %255, %254 : vector<8x128xf32>
    %257 = math.exp %256 : vector<8x128xf32>
    %cst_94 = arith.constant 1.000000e+00 : f32
    %258 = vector.broadcast %cst_94 : f32 to vector<8x128xf32>
    %259 = arith.addf %258, %257 : vector<8x128xf32>
    %cst_95 = arith.constant 1.000000e+00 : f32
    %260 = vector.broadcast %cst_95 : f32 to vector<8x128xf32>
    %261 = arith.divf %260, %259 : vector<8x128xf32>
    %262 = vector.extract_strided_slice %248 {offsets = [0, 128], sizes = [8, 128], strides = [1, 1]} : vector<8x384xf32> to vector<8x128xf32>
    %263 = vector.extract_strided_slice %251 {offsets = [0, 128], sizes = [8, 128], strides = [1, 1]} : vector<8x384xf32> to vector<8x128xf32>
    %264 = arith.addf %262, %263 : vector<8x128xf32>
    %cst_96 = arith.constant 0.000000e+00 : f32
    %265 = vector.broadcast %cst_96 : f32 to vector<8x128xf32>
    %266 = arith.subf %265, %264 : vector<8x128xf32>
    %267 = math.exp %266 : vector<8x128xf32>
    %cst_97 = arith.constant 1.000000e+00 : f32
    %268 = vector.broadcast %cst_97 : f32 to vector<8x128xf32>
    %269 = arith.addf %268, %267 : vector<8x128xf32>
    %cst_98 = arith.constant 1.000000e+00 : f32
    %270 = vector.broadcast %cst_98 : f32 to vector<8x128xf32>
    %271 = arith.divf %270, %269 : vector<8x128xf32>
    %272 = vector.extract_strided_slice %248 {offsets = [0, 256], sizes = [8, 128], strides = [1, 1]} : vector<8x384xf32> to vector<8x128xf32>
    %273 = vector.extract_strided_slice %251 {offsets = [0, 256], sizes = [8, 128], strides = [1, 1]} : vector<8x384xf32> to vector<8x128xf32>
    %274 = arith.mulf %261, %273 : vector<8x128xf32>
    %275 = arith.addf %272, %274 : vector<8x128xf32>
    %276 = math.tanh %275 : vector<8x128xf32>
    %cst_99 = arith.constant 1.000000e+00 : f32
    %277 = vector.broadcast %cst_99 : f32 to vector<8x128xf32>
    %278 = arith.subf %277, %271 : vector<8x128xf32>
    %279 = arith.mulf %278, %276 : vector<8x128xf32>
    %280 = arith.mulf %271, %245 : vector<8x128xf32>
    %281 = arith.addf %279, %280 : vector<8x128xf32>
    %cst_100 = arith.constant dense<0.000000e+00> : vector<8x384xf32>
    %282 = tpu.matmul %92, %238, %cst_100 {dimension_numbers = #tpu.dot_dimension_numbers<[1], [0], [0], [1], [0, 0, 1, 1], [], []>} : vector<8x128xf32>, vector<128x384xf32>, vector<8x384xf32> -> vector<8x384xf32>
    %283 = vector.broadcast %242 : vector<1x384xf32> to vector<8x384xf32>
    %284 = arith.addf %282, %283 : vector<8x384xf32>
    %cst_101 = arith.constant dense<0.000000e+00> : vector<8x384xf32>
    %285 = tpu.matmul %281, %240, %cst_101 {dimension_numbers = #tpu.dot_dimension_numbers<[1], [0], [0], [1], [0, 0, 1, 1], [], []>} : vector<8x128xf32>, vector<128x384xf32>, vector<8x384xf32> -> vector<8x384xf32>
    %286 = vector.broadcast %244 : vector<1x384xf32> to vector<8x384xf32>
    %287 = arith.addf %285, %286 : vector<8x384xf32>
    %288 = vector.extract_strided_slice %284 {offsets = [0, 0], sizes = [8, 128], strides = [1, 1]} : vector<8x384xf32> to vector<8x128xf32>
    %289 = vector.extract_strided_slice %287 {offsets = [0, 0], sizes = [8, 128], strides = [1, 1]} : vector<8x384xf32> to vector<8x128xf32>
    %290 = arith.addf %288, %289 : vector<8x128xf32>
    %cst_102 = arith.constant 0.000000e+00 : f32
    %291 = vector.broadcast %cst_102 : f32 to vector<8x128xf32>
    %292 = arith.subf %291, %290 : vector<8x128xf32>
    %293 = math.exp %292 : vector<8x128xf32>
    %cst_103 = arith.constant 1.000000e+00 : f32
    %294 = vector.broadcast %cst_103 : f32 to vector<8x128xf32>
    %295 = arith.addf %294, %293 : vector<8x128xf32>
    %cst_104 = arith.constant 1.000000e+00 : f32
    %296 = vector.broadcast %cst_104 : f32 to vector<8x128xf32>
    %297 = arith.divf %296, %295 : vector<8x128xf32>
    %298 = vector.extract_strided_slice %284 {offsets = [0, 128], sizes = [8, 128], strides = [1, 1]} : vector<8x384xf32> to vector<8x128xf32>
    %299 = vector.extract_strided_slice %287 {offsets = [0, 128], sizes = [8, 128], strides = [1, 1]} : vector<8x384xf32> to vector<8x128xf32>
    %300 = arith.addf %298, %299 : vector<8x128xf32>
    %cst_105 = arith.constant 0.000000e+00 : f32
    %301 = vector.broadcast %cst_105 : f32 to vector<8x128xf32>
    %302 = arith.subf %301, %300 : vector<8x128xf32>
    %303 = math.exp %302 : vector<8x128xf32>
    %cst_106 = arith.constant 1.000000e+00 : f32
    %304 = vector.broadcast %cst_106 : f32 to vector<8x128xf32>
    %305 = arith.addf %304, %303 : vector<8x128xf32>
    %cst_107 = arith.constant 1.000000e+00 : f32
    %306 = vector.broadcast %cst_107 : f32 to vector<8x128xf32>
    %307 = arith.divf %306, %305 : vector<8x128xf32>
    %308 = vector.extract_strided_slice %284 {offsets = [0, 256], sizes = [8, 128], strides = [1, 1]} : vector<8x384xf32> to vector<8x128xf32>
    %309 = vector.extract_strided_slice %287 {offsets = [0, 256], sizes = [8, 128], strides = [1, 1]} : vector<8x384xf32> to vector<8x128xf32>
    %310 = arith.mulf %297, %309 : vector<8x128xf32>
    %311 = arith.addf %308, %310 : vector<8x128xf32>
    %312 = math.tanh %311 : vector<8x128xf32>
    %cst_108 = arith.constant 1.000000e+00 : f32
    %313 = vector.broadcast %cst_108 : f32 to vector<8x128xf32>
    %314 = arith.subf %313, %307 : vector<8x128xf32>
    %315 = arith.mulf %314, %312 : vector<8x128xf32>
    %316 = arith.mulf %307, %281 : vector<8x128xf32>
    %317 = arith.addf %315, %316 : vector<8x128xf32>
    %cst_109 = arith.constant dense<0.000000e+00> : vector<8x384xf32>
    %318 = tpu.matmul %128, %238, %cst_109 {dimension_numbers = #tpu.dot_dimension_numbers<[1], [0], [0], [1], [0, 0, 1, 1], [], []>} : vector<8x128xf32>, vector<128x384xf32>, vector<8x384xf32> -> vector<8x384xf32>
    %319 = vector.broadcast %242 : vector<1x384xf32> to vector<8x384xf32>
    %320 = arith.addf %318, %319 : vector<8x384xf32>
    %cst_110 = arith.constant dense<0.000000e+00> : vector<8x384xf32>
    %321 = tpu.matmul %317, %240, %cst_110 {dimension_numbers = #tpu.dot_dimension_numbers<[1], [0], [0], [1], [0, 0, 1, 1], [], []>} : vector<8x128xf32>, vector<128x384xf32>, vector<8x384xf32> -> vector<8x384xf32>
    %322 = vector.broadcast %244 : vector<1x384xf32> to vector<8x384xf32>
    %323 = arith.addf %321, %322 : vector<8x384xf32>
    %324 = vector.extract_strided_slice %320 {offsets = [0, 0], sizes = [8, 128], strides = [1, 1]} : vector<8x384xf32> to vector<8x128xf32>
    %325 = vector.extract_strided_slice %323 {offsets = [0, 0], sizes = [8, 128], strides = [1, 1]} : vector<8x384xf32> to vector<8x128xf32>
    %326 = arith.addf %324, %325 : vector<8x128xf32>
    %cst_111 = arith.constant 0.000000e+00 : f32
    %327 = vector.broadcast %cst_111 : f32 to vector<8x128xf32>
    %328 = arith.subf %327, %326 : vector<8x128xf32>
    %329 = math.exp %328 : vector<8x128xf32>
    %cst_112 = arith.constant 1.000000e+00 : f32
    %330 = vector.broadcast %cst_112 : f32 to vector<8x128xf32>
    %331 = arith.addf %330, %329 : vector<8x128xf32>
    %cst_113 = arith.constant 1.000000e+00 : f32
    %332 = vector.broadcast %cst_113 : f32 to vector<8x128xf32>
    %333 = arith.divf %332, %331 : vector<8x128xf32>
    %334 = vector.extract_strided_slice %320 {offsets = [0, 128], sizes = [8, 128], strides = [1, 1]} : vector<8x384xf32> to vector<8x128xf32>
    %335 = vector.extract_strided_slice %323 {offsets = [0, 128], sizes = [8, 128], strides = [1, 1]} : vector<8x384xf32> to vector<8x128xf32>
    %336 = arith.addf %334, %335 : vector<8x128xf32>
    %cst_114 = arith.constant 0.000000e+00 : f32
    %337 = vector.broadcast %cst_114 : f32 to vector<8x128xf32>
    %338 = arith.subf %337, %336 : vector<8x128xf32>
    %339 = math.exp %338 : vector<8x128xf32>
    %cst_115 = arith.constant 1.000000e+00 : f32
    %340 = vector.broadcast %cst_115 : f32 to vector<8x128xf32>
    %341 = arith.addf %340, %339 : vector<8x128xf32>
    %cst_116 = arith.constant 1.000000e+00 : f32
    %342 = vector.broadcast %cst_116 : f32 to vector<8x128xf32>
    %343 = arith.divf %342, %341 : vector<8x128xf32>
    %344 = vector.extract_strided_slice %320 {offsets = [0, 256], sizes = [8, 128], strides = [1, 1]} : vector<8x384xf32> to vector<8x128xf32>
    %345 = vector.extract_strided_slice %323 {offsets = [0, 256], sizes = [8, 128], strides = [1, 1]} : vector<8x384xf32> to vector<8x128xf32>
    %346 = arith.mulf %333, %345 : vector<8x128xf32>
    %347 = arith.addf %344, %346 : vector<8x128xf32>
    %348 = math.tanh %347 : vector<8x128xf32>
    %cst_117 = arith.constant 1.000000e+00 : f32
    %349 = vector.broadcast %cst_117 : f32 to vector<8x128xf32>
    %350 = arith.subf %349, %343 : vector<8x128xf32>
    %351 = arith.mulf %350, %348 : vector<8x128xf32>
    %352 = arith.mulf %343, %317 : vector<8x128xf32>
    %353 = arith.addf %351, %352 : vector<8x128xf32>
    %cst_118 = arith.constant dense<0.000000e+00> : vector<8x384xf32>
    %354 = tpu.matmul %164, %238, %cst_118 {dimension_numbers = #tpu.dot_dimension_numbers<[1], [0], [0], [1], [0, 0, 1, 1], [], []>} : vector<8x128xf32>, vector<128x384xf32>, vector<8x384xf32> -> vector<8x384xf32>
    %355 = vector.broadcast %242 : vector<1x384xf32> to vector<8x384xf32>
    %356 = arith.addf %354, %355 : vector<8x384xf32>
    %cst_119 = arith.constant dense<0.000000e+00> : vector<8x384xf32>
    %357 = tpu.matmul %353, %240, %cst_119 {dimension_numbers = #tpu.dot_dimension_numbers<[1], [0], [0], [1], [0, 0, 1, 1], [], []>} : vector<8x128xf32>, vector<128x384xf32>, vector<8x384xf32> -> vector<8x384xf32>
    %358 = vector.broadcast %244 : vector<1x384xf32> to vector<8x384xf32>
    %359 = arith.addf %357, %358 : vector<8x384xf32>
    %360 = vector.extract_strided_slice %356 {offsets = [0, 0], sizes = [8, 128], strides = [1, 1]} : vector<8x384xf32> to vector<8x128xf32>
    %361 = vector.extract_strided_slice %359 {offsets = [0, 0], sizes = [8, 128], strides = [1, 1]} : vector<8x384xf32> to vector<8x128xf32>
    %362 = arith.addf %360, %361 : vector<8x128xf32>
    %cst_120 = arith.constant 0.000000e+00 : f32
    %363 = vector.broadcast %cst_120 : f32 to vector<8x128xf32>
    %364 = arith.subf %363, %362 : vector<8x128xf32>
    %365 = math.exp %364 : vector<8x128xf32>
    %cst_121 = arith.constant 1.000000e+00 : f32
    %366 = vector.broadcast %cst_121 : f32 to vector<8x128xf32>
    %367 = arith.addf %366, %365 : vector<8x128xf32>
    %cst_122 = arith.constant 1.000000e+00 : f32
    %368 = vector.broadcast %cst_122 : f32 to vector<8x128xf32>
    %369 = arith.divf %368, %367 : vector<8x128xf32>
    %370 = vector.extract_strided_slice %356 {offsets = [0, 128], sizes = [8, 128], strides = [1, 1]} : vector<8x384xf32> to vector<8x128xf32>
    %371 = vector.extract_strided_slice %359 {offsets = [0, 128], sizes = [8, 128], strides = [1, 1]} : vector<8x384xf32> to vector<8x128xf32>
    %372 = arith.addf %370, %371 : vector<8x128xf32>
    %cst_123 = arith.constant 0.000000e+00 : f32
    %373 = vector.broadcast %cst_123 : f32 to vector<8x128xf32>
    %374 = arith.subf %373, %372 : vector<8x128xf32>
    %375 = math.exp %374 : vector<8x128xf32>
    %cst_124 = arith.constant 1.000000e+00 : f32
    %376 = vector.broadcast %cst_124 : f32 to vector<8x128xf32>
    %377 = arith.addf %376, %375 : vector<8x128xf32>
    %cst_125 = arith.constant 1.000000e+00 : f32
    %378 = vector.broadcast %cst_125 : f32 to vector<8x128xf32>
    %379 = arith.divf %378, %377 : vector<8x128xf32>
    %380 = vector.extract_strided_slice %356 {offsets = [0, 256], sizes = [8, 128], strides = [1, 1]} : vector<8x384xf32> to vector<8x128xf32>
    %381 = vector.extract_strided_slice %359 {offsets = [0, 256], sizes = [8, 128], strides = [1, 1]} : vector<8x384xf32> to vector<8x128xf32>
    %382 = arith.mulf %369, %381 : vector<8x128xf32>
    %383 = arith.addf %380, %382 : vector<8x128xf32>
    %384 = math.tanh %383 : vector<8x128xf32>
    %cst_126 = arith.constant 1.000000e+00 : f32
    %385 = vector.broadcast %cst_126 : f32 to vector<8x128xf32>
    %386 = arith.subf %385, %379 : vector<8x128xf32>
    %387 = arith.mulf %386, %384 : vector<8x128xf32>
    %388 = arith.mulf %379, %353 : vector<8x128xf32>
    %389 = arith.addf %387, %388 : vector<8x128xf32>
    %cst_127 = arith.constant dense<0.000000e+00> : vector<8x384xf32>
    %390 = tpu.matmul %200, %238, %cst_127 {dimension_numbers = #tpu.dot_dimension_numbers<[1], [0], [0], [1], [0, 0, 1, 1], [], []>} : vector<8x128xf32>, vector<128x384xf32>, vector<8x384xf32> -> vector<8x384xf32>
    %391 = vector.broadcast %242 : vector<1x384xf32> to vector<8x384xf32>
    %392 = arith.addf %390, %391 : vector<8x384xf32>
    %cst_128 = arith.constant dense<0.000000e+00> : vector<8x384xf32>
    %393 = tpu.matmul %389, %240, %cst_128 {dimension_numbers = #tpu.dot_dimension_numbers<[1], [0], [0], [1], [0, 0, 1, 1], [], []>} : vector<8x128xf32>, vector<128x384xf32>, vector<8x384xf32> -> vector<8x384xf32>
    %394 = vector.broadcast %244 : vector<1x384xf32> to vector<8x384xf32>
    %395 = arith.addf %393, %394 : vector<8x384xf32>
    %396 = vector.extract_strided_slice %392 {offsets = [0, 0], sizes = [8, 128], strides = [1, 1]} : vector<8x384xf32> to vector<8x128xf32>
    %397 = vector.extract_strided_slice %395 {offsets = [0, 0], sizes = [8, 128], strides = [1, 1]} : vector<8x384xf32> to vector<8x128xf32>
    %398 = arith.addf %396, %397 : vector<8x128xf32>
    %cst_129 = arith.constant 0.000000e+00 : f32
    %399 = vector.broadcast %cst_129 : f32 to vector<8x128xf32>
    %400 = arith.subf %399, %398 : vector<8x128xf32>
    %401 = math.exp %400 : vector<8x128xf32>
    %cst_130 = arith.constant 1.000000e+00 : f32
    %402 = vector.broadcast %cst_130 : f32 to vector<8x128xf32>
    %403 = arith.addf %402, %401 : vector<8x128xf32>
    %cst_131 = arith.constant 1.000000e+00 : f32
    %404 = vector.broadcast %cst_131 : f32 to vector<8x128xf32>
    %405 = arith.divf %404, %403 : vector<8x128xf32>
    %406 = vector.extract_strided_slice %392 {offsets = [0, 128], sizes = [8, 128], strides = [1, 1]} : vector<8x384xf32> to vector<8x128xf32>
    %407 = vector.extract_strided_slice %395 {offsets = [0, 128], sizes = [8, 128], strides = [1, 1]} : vector<8x384xf32> to vector<8x128xf32>
    %408 = arith.addf %406, %407 : vector<8x128xf32>
    %cst_132 = arith.constant 0.000000e+00 : f32
    %409 = vector.broadcast %cst_132 : f32 to vector<8x128xf32>
    %410 = arith.subf %409, %408 : vector<8x128xf32>
    %411 = math.exp %410 : vector<8x128xf32>
    %cst_133 = arith.constant 1.000000e+00 : f32
    %412 = vector.broadcast %cst_133 : f32 to vector<8x128xf32>
    %413 = arith.addf %412, %411 : vector<8x128xf32>
    %cst_134 = arith.constant 1.000000e+00 : f32
    %414 = vector.broadcast %cst_134 : f32 to vector<8x128xf32>
    %415 = arith.divf %414, %413 : vector<8x128xf32>
    %416 = vector.extract_strided_slice %392 {offsets = [0, 256], sizes = [8, 128], strides = [1, 1]} : vector<8x384xf32> to vector<8x128xf32>
    %417 = vector.extract_strided_slice %395 {offsets = [0, 256], sizes = [8, 128], strides = [1, 1]} : vector<8x384xf32> to vector<8x128xf32>
    %418 = arith.mulf %405, %417 : vector<8x128xf32>
    %419 = arith.addf %416, %418 : vector<8x128xf32>
    %420 = math.tanh %419 : vector<8x128xf32>
    %cst_135 = arith.constant 1.000000e+00 : f32
    %421 = vector.broadcast %cst_135 : f32 to vector<8x128xf32>
    %422 = arith.subf %421, %415 : vector<8x128xf32>
    %423 = arith.mulf %422, %420 : vector<8x128xf32>
    %424 = arith.mulf %415, %389 : vector<8x128xf32>
    %425 = arith.addf %423, %424 : vector<8x128xf32>
    %cst_136 = arith.constant dense<0.000000e+00> : vector<8x384xf32>
    %426 = tpu.matmul %236, %238, %cst_136 {dimension_numbers = #tpu.dot_dimension_numbers<[1], [0], [0], [1], [0, 0, 1, 1], [], []>} : vector<8x128xf32>, vector<128x384xf32>, vector<8x384xf32> -> vector<8x384xf32>
    %427 = vector.broadcast %242 : vector<1x384xf32> to vector<8x384xf32>
    %428 = arith.addf %426, %427 : vector<8x384xf32>
    %cst_137 = arith.constant dense<0.000000e+00> : vector<8x384xf32>
    %429 = tpu.matmul %425, %240, %cst_137 {dimension_numbers = #tpu.dot_dimension_numbers<[1], [0], [0], [1], [0, 0, 1, 1], [], []>} : vector<8x128xf32>, vector<128x384xf32>, vector<8x384xf32> -> vector<8x384xf32>
    %430 = vector.broadcast %244 : vector<1x384xf32> to vector<8x384xf32>
    %431 = arith.addf %429, %430 : vector<8x384xf32>
    %432 = vector.extract_strided_slice %428 {offsets = [0, 0], sizes = [8, 128], strides = [1, 1]} : vector<8x384xf32> to vector<8x128xf32>
    %433 = vector.extract_strided_slice %431 {offsets = [0, 0], sizes = [8, 128], strides = [1, 1]} : vector<8x384xf32> to vector<8x128xf32>
    %434 = arith.addf %432, %433 : vector<8x128xf32>
    %cst_138 = arith.constant 0.000000e+00 : f32
    %435 = vector.broadcast %cst_138 : f32 to vector<8x128xf32>
    %436 = arith.subf %435, %434 : vector<8x128xf32>
    %437 = math.exp %436 : vector<8x128xf32>
    %cst_139 = arith.constant 1.000000e+00 : f32
    %438 = vector.broadcast %cst_139 : f32 to vector<8x128xf32>
    %439 = arith.addf %438, %437 : vector<8x128xf32>
    %cst_140 = arith.constant 1.000000e+00 : f32
    %440 = vector.broadcast %cst_140 : f32 to vector<8x128xf32>
    %441 = arith.divf %440, %439 : vector<8x128xf32>
    %442 = vector.extract_strided_slice %428 {offsets = [0, 128], sizes = [8, 128], strides = [1, 1]} : vector<8x384xf32> to vector<8x128xf32>
    %443 = vector.extract_strided_slice %431 {offsets = [0, 128], sizes = [8, 128], strides = [1, 1]} : vector<8x384xf32> to vector<8x128xf32>
    %444 = arith.addf %442, %443 : vector<8x128xf32>
    %cst_141 = arith.constant 0.000000e+00 : f32
    %445 = vector.broadcast %cst_141 : f32 to vector<8x128xf32>
    %446 = arith.subf %445, %444 : vector<8x128xf32>
    %447 = math.exp %446 : vector<8x128xf32>
    %cst_142 = arith.constant 1.000000e+00 : f32
    %448 = vector.broadcast %cst_142 : f32 to vector<8x128xf32>
    %449 = arith.addf %448, %447 : vector<8x128xf32>
    %cst_143 = arith.constant 1.000000e+00 : f32
    %450 = vector.broadcast %cst_143 : f32 to vector<8x128xf32>
    %451 = arith.divf %450, %449 : vector<8x128xf32>
    %452 = vector.extract_strided_slice %428 {offsets = [0, 256], sizes = [8, 128], strides = [1, 1]} : vector<8x384xf32> to vector<8x128xf32>
    %453 = vector.extract_strided_slice %431 {offsets = [0, 256], sizes = [8, 128], strides = [1, 1]} : vector<8x384xf32> to vector<8x128xf32>
    %454 = arith.mulf %441, %453 : vector<8x128xf32>
    %455 = arith.addf %452, %454 : vector<8x128xf32>
    %456 = math.tanh %455 : vector<8x128xf32>
    %cst_144 = arith.constant 1.000000e+00 : f32
    %457 = vector.broadcast %cst_144 : f32 to vector<8x128xf32>
    %458 = arith.subf %457, %451 : vector<8x128xf32>
    %459 = arith.mulf %458, %456 : vector<8x128xf32>
    %460 = arith.mulf %451, %425 : vector<8x128xf32>
    %461 = arith.addf %459, %460 : vector<8x128xf32>
    %c2_145 = arith.constant 2 : index
    %c0_146 = arith.constant 0 : index
    %c0_147 = arith.constant 0 : index
    %462 = vector.load %arg1[%c2_145, %c0_146, %c0_147] : memref<3x128x384xf32, #tpu.memory_space<vmem>>, vector<1x128x384xf32>
    %463 = vector.shape_cast %462 : vector<1x128x384xf32> to vector<128x384xf32>
    %c2_148 = arith.constant 2 : index
    %c0_149 = arith.constant 0 : index
    %c0_150 = arith.constant 0 : index
    %464 = vector.load %arg2[%c2_148, %c0_149, %c0_150] : memref<3x128x384xf32, #tpu.memory_space<vmem>>, vector<1x128x384xf32>
    %465 = vector.shape_cast %464 : vector<1x128x384xf32> to vector<128x384xf32>
    %c2_151 = arith.constant 2 : index
    %c0_152 = arith.constant 0 : index
    %c0_153 = arith.constant 0 : index
    %466 = vector.load %arg3[%c2_151, %c0_152, %c0_153] : memref<3x1x384xf32, #tpu.memory_space<vmem>>, vector<1x1x384xf32>
    %467 = vector.shape_cast %466 : vector<1x1x384xf32> to vector<1x384xf32>
    %c2_154 = arith.constant 2 : index
    %c0_155 = arith.constant 0 : index
    %c0_156 = arith.constant 0 : index
    %468 = vector.load %arg4[%c2_154, %c0_155, %c0_156] : memref<3x1x384xf32, #tpu.memory_space<vmem>>, vector<1x1x384xf32>
    %469 = vector.shape_cast %468 : vector<1x1x384xf32> to vector<1x384xf32>
    %cst_157 = arith.constant 0.000000e+00 : f32
    %470 = vector.broadcast %cst_157 : f32 to vector<8x128xf32>
    %cst_158 = arith.constant dense<0.000000e+00> : vector<8x384xf32>
    %471 = tpu.matmul %281, %463, %cst_158 {dimension_numbers = #tpu.dot_dimension_numbers<[1], [0], [0], [1], [0, 0, 1, 1], [], []>} : vector<8x128xf32>, vector<128x384xf32>, vector<8x384xf32> -> vector<8x384xf32>
    %472 = vector.broadcast %467 : vector<1x384xf32> to vector<8x384xf32>
    %473 = arith.addf %471, %472 : vector<8x384xf32>
    %cst_159 = arith.constant dense<0.000000e+00> : vector<8x384xf32>
    %474 = tpu.matmul %470, %465, %cst_159 {dimension_numbers = #tpu.dot_dimension_numbers<[1], [0], [0], [1], [0, 0, 1, 1], [], []>} : vector<8x128xf32>, vector<128x384xf32>, vector<8x384xf32> -> vector<8x384xf32>
    %475 = vector.broadcast %469 : vector<1x384xf32> to vector<8x384xf32>
    %476 = arith.addf %474, %475 : vector<8x384xf32>
    %477 = vector.extract_strided_slice %473 {offsets = [0, 0], sizes = [8, 128], strides = [1, 1]} : vector<8x384xf32> to vector<8x128xf32>
    %478 = vector.extract_strided_slice %476 {offsets = [0, 0], sizes = [8, 128], strides = [1, 1]} : vector<8x384xf32> to vector<8x128xf32>
    %479 = arith.addf %477, %478 : vector<8x128xf32>
    %cst_160 = arith.constant 0.000000e+00 : f32
    %480 = vector.broadcast %cst_160 : f32 to vector<8x128xf32>
    %481 = arith.subf %480, %479 : vector<8x128xf32>
    %482 = math.exp %481 : vector<8x128xf32>
    %cst_161 = arith.constant 1.000000e+00 : f32
    %483 = vector.broadcast %cst_161 : f32 to vector<8x128xf32>
    %484 = arith.addf %483, %482 : vector<8x128xf32>
    %cst_162 = arith.constant 1.000000e+00 : f32
    %485 = vector.broadcast %cst_162 : f32 to vector<8x128xf32>
    %486 = arith.divf %485, %484 : vector<8x128xf32>
    %487 = vector.extract_strided_slice %473 {offsets = [0, 128], sizes = [8, 128], strides = [1, 1]} : vector<8x384xf32> to vector<8x128xf32>
    %488 = vector.extract_strided_slice %476 {offsets = [0, 128], sizes = [8, 128], strides = [1, 1]} : vector<8x384xf32> to vector<8x128xf32>
    %489 = arith.addf %487, %488 : vector<8x128xf32>
    %cst_163 = arith.constant 0.000000e+00 : f32
    %490 = vector.broadcast %cst_163 : f32 to vector<8x128xf32>
    %491 = arith.subf %490, %489 : vector<8x128xf32>
    %492 = math.exp %491 : vector<8x128xf32>
    %cst_164 = arith.constant 1.000000e+00 : f32
    %493 = vector.broadcast %cst_164 : f32 to vector<8x128xf32>
    %494 = arith.addf %493, %492 : vector<8x128xf32>
    %cst_165 = arith.constant 1.000000e+00 : f32
    %495 = vector.broadcast %cst_165 : f32 to vector<8x128xf32>
    %496 = arith.divf %495, %494 : vector<8x128xf32>
    %497 = vector.extract_strided_slice %473 {offsets = [0, 256], sizes = [8, 128], strides = [1, 1]} : vector<8x384xf32> to vector<8x128xf32>
    %498 = vector.extract_strided_slice %476 {offsets = [0, 256], sizes = [8, 128], strides = [1, 1]} : vector<8x384xf32> to vector<8x128xf32>
    %499 = arith.mulf %486, %498 : vector<8x128xf32>
    %500 = arith.addf %497, %499 : vector<8x128xf32>
    %501 = math.tanh %500 : vector<8x128xf32>
    %cst_166 = arith.constant 1.000000e+00 : f32
    %502 = vector.broadcast %cst_166 : f32 to vector<8x128xf32>
    %503 = arith.subf %502, %496 : vector<8x128xf32>
    %504 = arith.mulf %503, %501 : vector<8x128xf32>
    %505 = arith.mulf %496, %470 : vector<8x128xf32>
    %506 = arith.addf %504, %505 : vector<8x128xf32>
    %cst_167 = arith.constant dense<0.000000e+00> : vector<8x384xf32>
    %507 = tpu.matmul %317, %463, %cst_167 {dimension_numbers = #tpu.dot_dimension_numbers<[1], [0], [0], [1], [0, 0, 1, 1], [], []>} : vector<8x128xf32>, vector<128x384xf32>, vector<8x384xf32> -> vector<8x384xf32>
    %508 = vector.broadcast %467 : vector<1x384xf32> to vector<8x384xf32>
    %509 = arith.addf %507, %508 : vector<8x384xf32>
    %cst_168 = arith.constant dense<0.000000e+00> : vector<8x384xf32>
    %510 = tpu.matmul %506, %465, %cst_168 {dimension_numbers = #tpu.dot_dimension_numbers<[1], [0], [0], [1], [0, 0, 1, 1], [], []>} : vector<8x128xf32>, vector<128x384xf32>, vector<8x384xf32> -> vector<8x384xf32>
    %511 = vector.broadcast %469 : vector<1x384xf32> to vector<8x384xf32>
    %512 = arith.addf %510, %511 : vector<8x384xf32>
    %513 = vector.extract_strided_slice %509 {offsets = [0, 0], sizes = [8, 128], strides = [1, 1]} : vector<8x384xf32> to vector<8x128xf32>
    %514 = vector.extract_strided_slice %512 {offsets = [0, 0], sizes = [8, 128], strides = [1, 1]} : vector<8x384xf32> to vector<8x128xf32>
    %515 = arith.addf %513, %514 : vector<8x128xf32>
    %cst_169 = arith.constant 0.000000e+00 : f32
    %516 = vector.broadcast %cst_169 : f32 to vector<8x128xf32>
    %517 = arith.subf %516, %515 : vector<8x128xf32>
    %518 = math.exp %517 : vector<8x128xf32>
    %cst_170 = arith.constant 1.000000e+00 : f32
    %519 = vector.broadcast %cst_170 : f32 to vector<8x128xf32>
    %520 = arith.addf %519, %518 : vector<8x128xf32>
    %cst_171 = arith.constant 1.000000e+00 : f32
    %521 = vector.broadcast %cst_171 : f32 to vector<8x128xf32>
    %522 = arith.divf %521, %520 : vector<8x128xf32>
    %523 = vector.extract_strided_slice %509 {offsets = [0, 128], sizes = [8, 128], strides = [1, 1]} : vector<8x384xf32> to vector<8x128xf32>
    %524 = vector.extract_strided_slice %512 {offsets = [0, 128], sizes = [8, 128], strides = [1, 1]} : vector<8x384xf32> to vector<8x128xf32>
    %525 = arith.addf %523, %524 : vector<8x128xf32>
    %cst_172 = arith.constant 0.000000e+00 : f32
    %526 = vector.broadcast %cst_172 : f32 to vector<8x128xf32>
    %527 = arith.subf %526, %525 : vector<8x128xf32>
    %528 = math.exp %527 : vector<8x128xf32>
    %cst_173 = arith.constant 1.000000e+00 : f32
    %529 = vector.broadcast %cst_173 : f32 to vector<8x128xf32>
    %530 = arith.addf %529, %528 : vector<8x128xf32>
    %cst_174 = arith.constant 1.000000e+00 : f32
    %531 = vector.broadcast %cst_174 : f32 to vector<8x128xf32>
    %532 = arith.divf %531, %530 : vector<8x128xf32>
    %533 = vector.extract_strided_slice %509 {offsets = [0, 256], sizes = [8, 128], strides = [1, 1]} : vector<8x384xf32> to vector<8x128xf32>
    %534 = vector.extract_strided_slice %512 {offsets = [0, 256], sizes = [8, 128], strides = [1, 1]} : vector<8x384xf32> to vector<8x128xf32>
    %535 = arith.mulf %522, %534 : vector<8x128xf32>
    %536 = arith.addf %533, %535 : vector<8x128xf32>
    %537 = math.tanh %536 : vector<8x128xf32>
    %cst_175 = arith.constant 1.000000e+00 : f32
    %538 = vector.broadcast %cst_175 : f32 to vector<8x128xf32>
    %539 = arith.subf %538, %532 : vector<8x128xf32>
    %540 = arith.mulf %539, %537 : vector<8x128xf32>
    %541 = arith.mulf %532, %506 : vector<8x128xf32>
    %542 = arith.addf %540, %541 : vector<8x128xf32>
    %cst_176 = arith.constant dense<0.000000e+00> : vector<8x384xf32>
    %543 = tpu.matmul %353, %463, %cst_176 {dimension_numbers = #tpu.dot_dimension_numbers<[1], [0], [0], [1], [0, 0, 1, 1], [], []>} : vector<8x128xf32>, vector<128x384xf32>, vector<8x384xf32> -> vector<8x384xf32>
    %544 = vector.broadcast %467 : vector<1x384xf32> to vector<8x384xf32>
    %545 = arith.addf %543, %544 : vector<8x384xf32>
    %cst_177 = arith.constant dense<0.000000e+00> : vector<8x384xf32>
    %546 = tpu.matmul %542, %465, %cst_177 {dimension_numbers = #tpu.dot_dimension_numbers<[1], [0], [0], [1], [0, 0, 1, 1], [], []>} : vector<8x128xf32>, vector<128x384xf32>, vector<8x384xf32> -> vector<8x384xf32>
    %547 = vector.broadcast %469 : vector<1x384xf32> to vector<8x384xf32>
    %548 = arith.addf %546, %547 : vector<8x384xf32>
    %549 = vector.extract_strided_slice %545 {offsets = [0, 0], sizes = [8, 128], strides = [1, 1]} : vector<8x384xf32> to vector<8x128xf32>
    %550 = vector.extract_strided_slice %548 {offsets = [0, 0], sizes = [8, 128], strides = [1, 1]} : vector<8x384xf32> to vector<8x128xf32>
    %551 = arith.addf %549, %550 : vector<8x128xf32>
    %cst_178 = arith.constant 0.000000e+00 : f32
    %552 = vector.broadcast %cst_178 : f32 to vector<8x128xf32>
    %553 = arith.subf %552, %551 : vector<8x128xf32>
    %554 = math.exp %553 : vector<8x128xf32>
    %cst_179 = arith.constant 1.000000e+00 : f32
    %555 = vector.broadcast %cst_179 : f32 to vector<8x128xf32>
    %556 = arith.addf %555, %554 : vector<8x128xf32>
    %cst_180 = arith.constant 1.000000e+00 : f32
    %557 = vector.broadcast %cst_180 : f32 to vector<8x128xf32>
    %558 = arith.divf %557, %556 : vector<8x128xf32>
    %559 = vector.extract_strided_slice %545 {offsets = [0, 128], sizes = [8, 128], strides = [1, 1]} : vector<8x384xf32> to vector<8x128xf32>
    %560 = vector.extract_strided_slice %548 {offsets = [0, 128], sizes = [8, 128], strides = [1, 1]} : vector<8x384xf32> to vector<8x128xf32>
    %561 = arith.addf %559, %560 : vector<8x128xf32>
    %cst_181 = arith.constant 0.000000e+00 : f32
    %562 = vector.broadcast %cst_181 : f32 to vector<8x128xf32>
    %563 = arith.subf %562, %561 : vector<8x128xf32>
    %564 = math.exp %563 : vector<8x128xf32>
    %cst_182 = arith.constant 1.000000e+00 : f32
    %565 = vector.broadcast %cst_182 : f32 to vector<8x128xf32>
    %566 = arith.addf %565, %564 : vector<8x128xf32>
    %cst_183 = arith.constant 1.000000e+00 : f32
    %567 = vector.broadcast %cst_183 : f32 to vector<8x128xf32>
    %568 = arith.divf %567, %566 : vector<8x128xf32>
    %569 = vector.extract_strided_slice %545 {offsets = [0, 256], sizes = [8, 128], strides = [1, 1]} : vector<8x384xf32> to vector<8x128xf32>
    %570 = vector.extract_strided_slice %548 {offsets = [0, 256], sizes = [8, 128], strides = [1, 1]} : vector<8x384xf32> to vector<8x128xf32>
    %571 = arith.mulf %558, %570 : vector<8x128xf32>
    %572 = arith.addf %569, %571 : vector<8x128xf32>
    %573 = math.tanh %572 : vector<8x128xf32>
    %cst_184 = arith.constant 1.000000e+00 : f32
    %574 = vector.broadcast %cst_184 : f32 to vector<8x128xf32>
    %575 = arith.subf %574, %568 : vector<8x128xf32>
    %576 = arith.mulf %575, %573 : vector<8x128xf32>
    %577 = arith.mulf %568, %542 : vector<8x128xf32>
    %578 = arith.addf %576, %577 : vector<8x128xf32>
    %cst_185 = arith.constant dense<0.000000e+00> : vector<8x384xf32>
    %579 = tpu.matmul %389, %463, %cst_185 {dimension_numbers = #tpu.dot_dimension_numbers<[1], [0], [0], [1], [0, 0, 1, 1], [], []>} : vector<8x128xf32>, vector<128x384xf32>, vector<8x384xf32> -> vector<8x384xf32>
    %580 = vector.broadcast %467 : vector<1x384xf32> to vector<8x384xf32>
    %581 = arith.addf %579, %580 : vector<8x384xf32>
    %cst_186 = arith.constant dense<0.000000e+00> : vector<8x384xf32>
    %582 = tpu.matmul %578, %465, %cst_186 {dimension_numbers = #tpu.dot_dimension_numbers<[1], [0], [0], [1], [0, 0, 1, 1], [], []>} : vector<8x128xf32>, vector<128x384xf32>, vector<8x384xf32> -> vector<8x384xf32>
    %583 = vector.broadcast %469 : vector<1x384xf32> to vector<8x384xf32>
    %584 = arith.addf %582, %583 : vector<8x384xf32>
    %585 = vector.extract_strided_slice %581 {offsets = [0, 0], sizes = [8, 128], strides = [1, 1]} : vector<8x384xf32> to vector<8x128xf32>
    %586 = vector.extract_strided_slice %584 {offsets = [0, 0], sizes = [8, 128], strides = [1, 1]} : vector<8x384xf32> to vector<8x128xf32>
    %587 = arith.addf %585, %586 : vector<8x128xf32>
    %cst_187 = arith.constant 0.000000e+00 : f32
    %588 = vector.broadcast %cst_187 : f32 to vector<8x128xf32>
    %589 = arith.subf %588, %587 : vector<8x128xf32>
    %590 = math.exp %589 : vector<8x128xf32>
    %cst_188 = arith.constant 1.000000e+00 : f32
    %591 = vector.broadcast %cst_188 : f32 to vector<8x128xf32>
    %592 = arith.addf %591, %590 : vector<8x128xf32>
    %cst_189 = arith.constant 1.000000e+00 : f32
    %593 = vector.broadcast %cst_189 : f32 to vector<8x128xf32>
    %594 = arith.divf %593, %592 : vector<8x128xf32>
    %595 = vector.extract_strided_slice %581 {offsets = [0, 128], sizes = [8, 128], strides = [1, 1]} : vector<8x384xf32> to vector<8x128xf32>
    %596 = vector.extract_strided_slice %584 {offsets = [0, 128], sizes = [8, 128], strides = [1, 1]} : vector<8x384xf32> to vector<8x128xf32>
    %597 = arith.addf %595, %596 : vector<8x128xf32>
    %cst_190 = arith.constant 0.000000e+00 : f32
    %598 = vector.broadcast %cst_190 : f32 to vector<8x128xf32>
    %599 = arith.subf %598, %597 : vector<8x128xf32>
    %600 = math.exp %599 : vector<8x128xf32>
    %cst_191 = arith.constant 1.000000e+00 : f32
    %601 = vector.broadcast %cst_191 : f32 to vector<8x128xf32>
    %602 = arith.addf %601, %600 : vector<8x128xf32>
    %cst_192 = arith.constant 1.000000e+00 : f32
    %603 = vector.broadcast %cst_192 : f32 to vector<8x128xf32>
    %604 = arith.divf %603, %602 : vector<8x128xf32>
    %605 = vector.extract_strided_slice %581 {offsets = [0, 256], sizes = [8, 128], strides = [1, 1]} : vector<8x384xf32> to vector<8x128xf32>
    %606 = vector.extract_strided_slice %584 {offsets = [0, 256], sizes = [8, 128], strides = [1, 1]} : vector<8x384xf32> to vector<8x128xf32>
    %607 = arith.mulf %594, %606 : vector<8x128xf32>
    %608 = arith.addf %605, %607 : vector<8x128xf32>
    %609 = math.tanh %608 : vector<8x128xf32>
    %cst_193 = arith.constant 1.000000e+00 : f32
    %610 = vector.broadcast %cst_193 : f32 to vector<8x128xf32>
    %611 = arith.subf %610, %604 : vector<8x128xf32>
    %612 = arith.mulf %611, %609 : vector<8x128xf32>
    %613 = arith.mulf %604, %578 : vector<8x128xf32>
    %614 = arith.addf %612, %613 : vector<8x128xf32>
    %cst_194 = arith.constant dense<0.000000e+00> : vector<8x384xf32>
    %615 = tpu.matmul %425, %463, %cst_194 {dimension_numbers = #tpu.dot_dimension_numbers<[1], [0], [0], [1], [0, 0, 1, 1], [], []>} : vector<8x128xf32>, vector<128x384xf32>, vector<8x384xf32> -> vector<8x384xf32>
    %616 = vector.broadcast %467 : vector<1x384xf32> to vector<8x384xf32>
    %617 = arith.addf %615, %616 : vector<8x384xf32>
    %cst_195 = arith.constant dense<0.000000e+00> : vector<8x384xf32>
    %618 = tpu.matmul %614, %465, %cst_195 {dimension_numbers = #tpu.dot_dimension_numbers<[1], [0], [0], [1], [0, 0, 1, 1], [], []>} : vector<8x128xf32>, vector<128x384xf32>, vector<8x384xf32> -> vector<8x384xf32>
    %619 = vector.broadcast %469 : vector<1x384xf32> to vector<8x384xf32>
    %620 = arith.addf %618, %619 : vector<8x384xf32>
    %621 = vector.extract_strided_slice %617 {offsets = [0, 0], sizes = [8, 128], strides = [1, 1]} : vector<8x384xf32> to vector<8x128xf32>
    %622 = vector.extract_strided_slice %620 {offsets = [0, 0], sizes = [8, 128], strides = [1, 1]} : vector<8x384xf32> to vector<8x128xf32>
    %623 = arith.addf %621, %622 : vector<8x128xf32>
    %cst_196 = arith.constant 0.000000e+00 : f32
    %624 = vector.broadcast %cst_196 : f32 to vector<8x128xf32>
    %625 = arith.subf %624, %623 : vector<8x128xf32>
    %626 = math.exp %625 : vector<8x128xf32>
    %cst_197 = arith.constant 1.000000e+00 : f32
    %627 = vector.broadcast %cst_197 : f32 to vector<8x128xf32>
    %628 = arith.addf %627, %626 : vector<8x128xf32>
    %cst_198 = arith.constant 1.000000e+00 : f32
    %629 = vector.broadcast %cst_198 : f32 to vector<8x128xf32>
    %630 = arith.divf %629, %628 : vector<8x128xf32>
    %631 = vector.extract_strided_slice %617 {offsets = [0, 128], sizes = [8, 128], strides = [1, 1]} : vector<8x384xf32> to vector<8x128xf32>
    %632 = vector.extract_strided_slice %620 {offsets = [0, 128], sizes = [8, 128], strides = [1, 1]} : vector<8x384xf32> to vector<8x128xf32>
    %633 = arith.addf %631, %632 : vector<8x128xf32>
    %cst_199 = arith.constant 0.000000e+00 : f32
    %634 = vector.broadcast %cst_199 : f32 to vector<8x128xf32>
    %635 = arith.subf %634, %633 : vector<8x128xf32>
    %636 = math.exp %635 : vector<8x128xf32>
    %cst_200 = arith.constant 1.000000e+00 : f32
    %637 = vector.broadcast %cst_200 : f32 to vector<8x128xf32>
    %638 = arith.addf %637, %636 : vector<8x128xf32>
    %cst_201 = arith.constant 1.000000e+00 : f32
    %639 = vector.broadcast %cst_201 : f32 to vector<8x128xf32>
    %640 = arith.divf %639, %638 : vector<8x128xf32>
    %641 = vector.extract_strided_slice %617 {offsets = [0, 256], sizes = [8, 128], strides = [1, 1]} : vector<8x384xf32> to vector<8x128xf32>
    %642 = vector.extract_strided_slice %620 {offsets = [0, 256], sizes = [8, 128], strides = [1, 1]} : vector<8x384xf32> to vector<8x128xf32>
    %643 = arith.mulf %630, %642 : vector<8x128xf32>
    %644 = arith.addf %641, %643 : vector<8x128xf32>
    %645 = math.tanh %644 : vector<8x128xf32>
    %cst_202 = arith.constant 1.000000e+00 : f32
    %646 = vector.broadcast %cst_202 : f32 to vector<8x128xf32>
    %647 = arith.subf %646, %640 : vector<8x128xf32>
    %648 = arith.mulf %647, %645 : vector<8x128xf32>
    %649 = arith.mulf %640, %614 : vector<8x128xf32>
    %650 = arith.addf %648, %649 : vector<8x128xf32>
    %cst_203 = arith.constant dense<0.000000e+00> : vector<8x384xf32>
    %651 = tpu.matmul %461, %463, %cst_203 {dimension_numbers = #tpu.dot_dimension_numbers<[1], [0], [0], [1], [0, 0, 1, 1], [], []>} : vector<8x128xf32>, vector<128x384xf32>, vector<8x384xf32> -> vector<8x384xf32>
    %652 = vector.broadcast %467 : vector<1x384xf32> to vector<8x384xf32>
    %653 = arith.addf %651, %652 : vector<8x384xf32>
    %cst_204 = arith.constant dense<0.000000e+00> : vector<8x384xf32>
    %654 = tpu.matmul %650, %465, %cst_204 {dimension_numbers = #tpu.dot_dimension_numbers<[1], [0], [0], [1], [0, 0, 1, 1], [], []>} : vector<8x128xf32>, vector<128x384xf32>, vector<8x384xf32> -> vector<8x384xf32>
    %655 = vector.broadcast %469 : vector<1x384xf32> to vector<8x384xf32>
    %656 = arith.addf %654, %655 : vector<8x384xf32>
    %657 = vector.extract_strided_slice %653 {offsets = [0, 0], sizes = [8, 128], strides = [1, 1]} : vector<8x384xf32> to vector<8x128xf32>
    %658 = vector.extract_strided_slice %656 {offsets = [0, 0], sizes = [8, 128], strides = [1, 1]} : vector<8x384xf32> to vector<8x128xf32>
    %659 = arith.addf %657, %658 : vector<8x128xf32>
    %cst_205 = arith.constant 0.000000e+00 : f32
    %660 = vector.broadcast %cst_205 : f32 to vector<8x128xf32>
    %661 = arith.subf %660, %659 : vector<8x128xf32>
    %662 = math.exp %661 : vector<8x128xf32>
    %cst_206 = arith.constant 1.000000e+00 : f32
    %663 = vector.broadcast %cst_206 : f32 to vector<8x128xf32>
    %664 = arith.addf %663, %662 : vector<8x128xf32>
    %cst_207 = arith.constant 1.000000e+00 : f32
    %665 = vector.broadcast %cst_207 : f32 to vector<8x128xf32>
    %666 = arith.divf %665, %664 : vector<8x128xf32>
    %667 = vector.extract_strided_slice %653 {offsets = [0, 128], sizes = [8, 128], strides = [1, 1]} : vector<8x384xf32> to vector<8x128xf32>
    %668 = vector.extract_strided_slice %656 {offsets = [0, 128], sizes = [8, 128], strides = [1, 1]} : vector<8x384xf32> to vector<8x128xf32>
    %669 = arith.addf %667, %668 : vector<8x128xf32>
    %cst_208 = arith.constant 0.000000e+00 : f32
    %670 = vector.broadcast %cst_208 : f32 to vector<8x128xf32>
    %671 = arith.subf %670, %669 : vector<8x128xf32>
    %672 = math.exp %671 : vector<8x128xf32>
    %cst_209 = arith.constant 1.000000e+00 : f32
    %673 = vector.broadcast %cst_209 : f32 to vector<8x128xf32>
    %674 = arith.addf %673, %672 : vector<8x128xf32>
    %cst_210 = arith.constant 1.000000e+00 : f32
    %675 = vector.broadcast %cst_210 : f32 to vector<8x128xf32>
    %676 = arith.divf %675, %674 : vector<8x128xf32>
    %677 = vector.extract_strided_slice %653 {offsets = [0, 256], sizes = [8, 128], strides = [1, 1]} : vector<8x384xf32> to vector<8x128xf32>
    %678 = vector.extract_strided_slice %656 {offsets = [0, 256], sizes = [8, 128], strides = [1, 1]} : vector<8x384xf32> to vector<8x128xf32>
    %679 = arith.mulf %666, %678 : vector<8x128xf32>
    %680 = arith.addf %677, %679 : vector<8x128xf32>
    %681 = math.tanh %680 : vector<8x128xf32>
    %cst_211 = arith.constant 1.000000e+00 : f32
    %682 = vector.broadcast %cst_211 : f32 to vector<8x128xf32>
    %683 = arith.subf %682, %676 : vector<8x128xf32>
    %684 = arith.mulf %683, %681 : vector<8x128xf32>
    %685 = arith.mulf %676, %650 : vector<8x128xf32>
    %686 = arith.addf %684, %685 : vector<8x128xf32>
    %c0_212 = arith.constant 0 : index
    %c0_213 = arith.constant 0 : index
    %687 = vector.load %arg5[%c0_212, %c0_213] : memref<128x128xf32, #tpu.memory_space<vmem>>, vector<128x128xf32>
    %cst_214 = arith.constant dense<0.000000e+00> : vector<8x128xf32>
    %688 = tpu.matmul %686, %687, %cst_214 {dimension_numbers = #tpu.dot_dimension_numbers<[1], [0], [0], [1], [0, 0, 1, 1], [], []>} : vector<8x128xf32>, vector<128x128xf32>, vector<8x128xf32> -> vector<8x128xf32>
    %c0_215 = arith.constant 0 : index
    %c0_216 = arith.constant 0 : index
    %689 = vector.load %arg6[%c0_215, %c0_216] : memref<1x128xf32, #tpu.memory_space<vmem>>, vector<1x128xf32>
    %690 = vector.broadcast %689 : vector<1x128xf32> to vector<8x128xf32>
    %691 = arith.addf %688, %690 : vector<8x128xf32>
    %c0_217 = arith.constant 0 : index
    %c0_218 = arith.constant 0 : index
    %692 = vector.load %arg7[%c0_217, %c0_218] : memref<8x128xf32, #tpu.memory_space<vmem>>, vector<8x128xf32>
    tpu.vector_store %arg7[%c0_217, %c0_218], %691 {strides = array<i32>} : memref<8x128xf32, #tpu.memory_space<vmem>>, vector<8x128xf32>,
    return
  }
}

</mosaic_0001>

<llo_original>
// kernel: tpu_custom_call.1
$region0: #{tpu_custom_call.1}
  #allocation0 [shape = 'u32[]', space=smem, size = 0x4, offset = 0x4, fixed_abs, tag = 'smem constant byte address 0x4 - core index']
  #allocation1 [shape = 'u32[144,128]{1,0:T(1,128)}', space=vmem, size = 0x12000, scoped, tag = 'internal scratch']
  %s0 = inlined_call_operand.hbm [shape: f32[6,8,128], index: 0, kind: input, shape index: {}]
  %s1 = inlined_call_operand.hbm [shape: f32[3,128,384], index: 1, kind: input, shape index: {}]
  %s2 = inlined_call_operand.hbm [shape: f32[3,128,384], index: 2, kind: input, shape index: {}]
  %s3 = inlined_call_operand.vmem [shape: f32[3,1,384], index: 3, kind: input, shape index: {}]
  %s4 = inlined_call_operand.hbm [shape: f32[3,1,384], index: 4, kind: input, shape index: {}]
  %s5 = inlined_call_operand.hbm [shape: f32[128,128], index: 5, kind: input, shape index: {}]
  %s6 = inlined_call_operand.vmem [shape: f32[1,128], index: 6, kind: input, shape index: {}]
  %s7 = inlined_call_operand.hbm [shape: f32[8,128], index: 7, kind: output, shape index: {}]
  %s8 = sld [smem:[#allocation0]]
  $region58: #{tpu_custom_call.1} parent=0
    _
  %s10 = ssub.s32 1, %s8
  %s11 = scalar_select 0, %s10, %s8
  $region1: #{tpu_custom_call.1} parent=0
    #allocation2 [shape = 'u8[24576]{0}', space=vmem, size = 0x6000, scoped, tag = 'input window, operand 0, single buffered']
    #allocation3 [shape = 's32[1]{0}', space=sflag, size = 0x4, scoped, tag = 'scoped memory for tpu_custom_call.1']
    #allocation4 [shape = 's32[1]{0}', space=sflag, size = 0x4, scoped, tag = 'scoped memory for tpu_custom_call.1']
    #allocation5 [shape = 'u8[589824]{0}', space=vmem, size = 0x90000, scoped, tag = 'input window, operand 1, single buffered']
    #allocation6 [shape = 's32[1]{0}', space=sflag, size = 0x4, scoped, tag = 'scoped memory for tpu_custom_call.1']
    #allocation7 [shape = 'u8[589824]{0}', space=vmem, size = 0x90000, scoped, tag = 'input window, operand 2, single buffered']
    #allocation8 [shape = 'u8[4608]{0}', space=vmem, size = 0x1400, scoped, tag = 'input window, operand 4, single buffered']
    #allocation9 [shape = 's32[1]{0}', space=sflag, size = 0x4, scoped, tag = 'scoped memory for tpu_custom_call.1']
    #allocation10 [shape = 'u8[65536]{0}', space=vmem, size = 0x10000, scoped, tag = 'input window, operand 5, single buffered']
    #allocation11 [shape = 'u8[4096]{0}', space=vmem, size = 0x1000, scoped, tag = 'output window, operand 0, single buffered']
    %12 = vsyncpa [#allocation3], 0
    %13 = vsyncpa [#allocation6], 0
    %14 = vsyncpa [#allocation9], 0
    %15 = vsyncpa [#allocation4], 0
    // Predicated region
    $region2: #{tpu_custom_call.1} parent=1 // pred_check
      _
    $region3: #{tpu_custom_call.1} parent=1 // pred_check_branch
      %17 = sbr.rel (0) target = $region5
    $region4: #{tpu_custom_call.1} parent=1 // pred_region
      %s19 = ssub.s32 768, 768
      %20 = vsyncadd [#allocation3], %s19
      %s21 = sshll.u32 [#allocation2], 4
      %s22 = int_to_ptr.vmem [resolvable:$true] %s21
      %27 = dma.hbm_to_vmem [thread:$0]  %s0, 768, %s22, [#allocation3], 128, 128, 8
    $region5: #{tpu_custom_call.1} parent=1 // pred_fallthru
      _
    // Predicated region
    $region6: #{tpu_custom_call.1} parent=1 // pred_check
      _
    $region7: #{tpu_custom_call.1} parent=1 // pred_check_branch
      %29 = sbr.rel (0) target = $region9
    $region8: #{tpu_custom_call.1} parent=1 // pred_region
      %s31 = ssub.s32 18432, 18432
      %32 = vsyncadd [#allocation6], %s31
      %s33 = sshll.u32 [#allocation5], 4
      %s34 = int_to_ptr.vmem [resolvable:$true] %s33
      %39 = dma.hbm_to_vmem [thread:$0]  %s1, 18432, %s34, [#allocation6], 384, 384, 24
    $region9: #{tpu_custom_call.1} parent=1 // pred_fallthru
      _
    // Predicated region
    $region10: #{tpu_custom_call.1} parent=1 // pred_check
      _
    $region11: #{tpu_custom_call.1} parent=1 // pred_check_branch
      %41 = sbr.rel (0) target = $region13
    $region12: #{tpu_custom_call.1} parent=1 // pred_region
      %s43 = ssub.s32 18432, 18432
      %44 = vsyncadd [#allocation6], %s43
      %s45 = sshll.u32 [#allocation7], 4
      %s46 = int_to_ptr.vmem [resolvable:$true] %s45
      %51 = dma.hbm_to_vmem [thread:$0]  %s2, 18432, %s46, [#allocation6], 384, 384, 24
    $region13: #{tpu_custom_call.1} parent=1 // pred_fallthru
      _
    // Predicated region
    $region14: #{tpu_custom_call.1} parent=1 // pred_check
      _
    $region15: #{tpu_custom_call.1} parent=1 // pred_check_branch
      %53 = sbr.rel (0) target = $region17
    $region16: #{tpu_custom_call.1} parent=1 // pred_region
      _
    $region17: #{tpu_custom_call.1} parent=1 // pred_fallthru
      _
    // Predicated region
    $region18: #{tpu_custom_call.1} parent=1 // pred_check
      _
    $region19: #{tpu_custom_call.1} parent=1 // pred_check_branch
      %55 = sbr.rel (0) target = $region21
    $region20: #{tpu_custom_call.1} parent=1 // pred_region
      %s57 = ssub.s32 144, 144
      %58 = vsyncadd [#allocation9], %s57
      %s59 = sshll.u32 [#allocation8], 4
      %s60 = int_to_ptr.vmem [resolvable:$true] %s59
      %65 = dma.hbm_to_vmem [thread:$0]  %s4, 144, %s60, [#allocation9], 48, 48, 3
    $region21: #{tpu_custom_call.1} parent=1 // pred_fallthru
      _
    // Predicated region
    $region22: #{tpu_custom_call.1} parent=1 // pred_check
      _
    $region23: #{tpu_custom_call.1} parent=1 // pred_check_branch
      %67 = sbr.rel (0) target = $region25
    $region24: #{tpu_custom_call.1} parent=1 // pred_region
      %s69 = ssub.s32 2048, 2048
      %70 = vsyncadd [#allocation9], %s69
      %s71 = sshll.u32 [#allocation10], 4
      %s72 = int_to_ptr.vmem [resolvable:$true] %s71
      %77 = dma.hbm_to_vmem [thread:$0]  %s5, 2048, %s72, [#allocation9], 128, 128, 8
    $region25: #{tpu_custom_call.1} parent=1 // pred_fallthru
      _
    // Predicated region
    $region26: #{tpu_custom_call.1} parent=1 // pred_check
      _
    $region27: #{tpu_custom_call.1} parent=1 // pred_check_branch
      %79 = sbr.rel (0) target = $region29
    $region28: #{tpu_custom_call.1} parent=1 // pred_region
      _
    $region29: #{tpu_custom_call.1} parent=1 // pred_fallthru
      _
    // Predicated region
    $region30: #{tpu_custom_call.1} parent=1 // pred_check
      _
    $region31: #{tpu_custom_call.1} parent=1 // pred_check_branch
      %81 = sbr.rel (0) target = $region33
    $region32: #{tpu_custom_call.1} parent=1 // pred_region
      %82 = dma.done [#allocation3], 768
    $region33: #{tpu_custom_call.1} parent=1 // pred_fallthru
      _
    // Predicated region
    $region34: #{tpu_custom_call.1} parent=1 // pred_check
      _
    $region35: #{tpu_custom_call.1} parent=1 // pred_check_branch
      %84 = sbr.rel (0) target = $region37
    $region36: #{tpu_custom_call.1} parent=1 // pred_region
      %85 = dma.done [#allocation6], 18432
    $region37: #{tpu_custom_call.1} parent=1 // pred_fallthru
      _
    // Predicated region
    $region38: #{tpu_custom_call.1} parent=1 // pred_check
      _
    $region39: #{tpu_custom_call.1} parent=1 // pred_check_branch
      %87 = sbr.rel (0) target = $region41
    $region40: #{tpu_custom_call.1} parent=1 // pred_region
      %88 = dma.done [#allocation6], 18432
    $region41: #{tpu_custom_call.1} parent=1 // pred_fallthru
      _
    // Predicated region
    $region42: #{tpu_custom_call.1} parent=1 // pred_check
      _
    $region43: #{tpu_custom_call.1} parent=1 // pred_check_branch
      %90 = sbr.rel (0) target = $region45
    $region44: #{tpu_custom_call.1} parent=1 // pred_region
      %91 = dma.done [#allocation9], 144
    $region45: #{tpu_custom_call.1} parent=1 // pred_fallthru
      _
    // Predicated region
    $region46: #{tpu_custom_call.1} parent=1 // pred_check
      _
    $region47: #{tpu_custom_call.1} parent=1 // pred_check_branch
      %93 = sbr.rel (0) target = $region49
    $region48: #{tpu_custom_call.1} parent=1 // pred_region
      %94 = dma.done [#allocation9], 2048
    $region49: #{tpu_custom_call.1} parent=1 // pred_fallthru
      _
    %v95 = vld [vmem:[#allocation2] sm:$0xff]
    %s96 = scalar_lea.vmem [#allocation2], 8
    %v97 = vld [vmem:[%s96] sm:$0xff]
    %s98 = scalar_lea.vmem [#allocation2], 16
    %v99 = vld [vmem:[%s98] sm:$0xff]
    %s100 = scalar_lea.vmem [#allocation2], 24
    %v101 = vld [vmem:[%s100] sm:$0xff]
    %s102 = scalar_lea.vmem [#allocation2], 32
    %v103 = vld [vmem:[%s102] sm:$0xff]
    %s104 = scalar_lea.vmem [#allocation2], 40
    %v105 = vld [vmem:[%s104] sm:$0xff]
    %v106 = vld [vmem:[#allocation5] sm:$0xff]
    %v107 = vld [vmem:[#allocation5 + $0x8] sm:$0xff]
    %v108 = vld [vmem:[#allocation5 + $0x10] sm:$0xff]
    %v109 = vld [vmem:[#allocation5 + $0x18] sm:$0xff]
    %v110 = vld [vmem:[#allocation5 + $0x20] sm:$0xff]
    %v111 = vld [vmem:[#allocation5 + $0x28] sm:$0xff]
    %v112 = vld [vmem:[#allocation5 + $0x30] sm:$0xff]
    %v113 = vld [vmem:[#allocation5 + $0x38] sm:$0xff]
    %v114 = vld [vmem:[#allocation5 + $0x40] sm:$0xff]
    %v115 = vld [vmem:[#allocation5 + $0x48] sm:$0xff]
    %v116 = vld [vmem:[#allocation5 + $0x50] sm:$0xff]
    %v117 = vld [vmem:[#allocation5 + $0x58] sm:$0xff]
    %v118 = vld [vmem:[#allocation5 + $0x60] sm:$0xff]
    %v119 = vld [vmem:[#allocation5 + $0x68] sm:$0xff]
    %v120 = vld [vmem:[#allocation5 + $0x70] sm:$0xff]
    %v121 = vld [vmem:[#allocation5 + $0x78] sm:$0xff]
    %v122 = vld [vmem:[#allocation5 + $0x80] sm:$0xff]
    %v123 = vld [vmem:[#allocation5 + $0x88] sm:$0xff]
    %v124 = vld [vmem:[#allocation5 + $0x90] sm:$0xff]
    %v125 = vld [vmem:[#allocation5 + $0x98] sm:$0xff]
    %v126 = vld [vmem:[#allocation5 + $0xa0] sm:$0xff]
    %v127 = vld [vmem:[#allocation5 + $0xa8] sm:$0xff]
    %v128 = vld [vmem:[#allocation5 + $0xb0] sm:$0xff]
    %v129 = vld [vmem:[#allocation5 + $0xb8] sm:$0xff]
    %v130 = vld [vmem:[#allocation5 + $0xc0] sm:$0xff]
    %v131 = vld [vmem:[#allocation5 + $0xc8] sm:$0xff]
    %v132 = vld [vmem:[#allocation5 + $0xd0] sm:$0xff]
    %v133 = vld [vmem:[#allocation5 + $0xd8] sm:$0xff]
    %v134 = vld [vmem:[#allocation5 + $0xe0] sm:$0xff]
    %v135 = vld [vmem:[#allocation5 + $0xe8] sm:$0xff]
    %v136 = vld [vmem:[#allocation5 + $0xf0] sm:$0xff]
    %v137 = vld [vmem:[#allocation5 + $0xf8] sm:$0xff]
    %v138 = vld [vmem:[#allocation5 + $0x100] sm:$0xff]
    %v139 = vld [vmem:[#allocation5 + $0x108] sm:$0xff]
    %v140 = vld [vmem:[#allocation5 + $0x110] sm:$0xff]
    %v141 = vld [vmem:[#allocation5 + $0x118] sm:$0xff]
    %v142 = vld [vmem:[#allocation5 + $0x120] sm:$0xff]
    %v143 = vld [vmem:[#allocation5 + $0x128] sm:$0xff]
    %v144 = vld [vmem:[#allocation5 + $0x130] sm:$0xff]
    %v145 = vld [vmem:[#allocation5 + $0x138] sm:$0xff]
    %v146 = vld [vmem:[#allocation5 + $0x140] sm:$0xff]
    %v147 = vld [vmem:[#allocation5 + $0x148] sm:$0xff]
    %v148 = vld [vmem:[#allocation5 + $0x150] sm:$0xff]
    %v149 = vld [vmem:[#allocation5 + $0x158] sm:$0xff]
    %v150 = vld [vmem:[#allocation5 + $0x160] sm:$0xff]
    %v151 = vld [vmem:[#allocation5 + $0x168] sm:$0xff]
    %v152 = vld [vmem:[#allocation5 + $0x170] sm:$0xff]
    %v153 = vld [vmem:[#allocation5 + $0x178] sm:$0xff]
    %v154 = vld [vmem:[#allocation7] sm:$0xff]
    %v155 = vld [vmem:[#allocation7 + $0x8] sm:$0xff]
    %v156 = vld [vmem:[#allocation7 + $0x10] sm:$0xff]
    %v157 = vld [vmem:[#allocation7 + $0x18] sm:$0xff]
    %v158 = vld [vmem:[#allocation7 + $0x20] sm:$0xff]
    %v159 = vld [vmem:[#allocation7 + $0x28] sm:$0xff]
    %v160 = vld [vmem:[#allocation7 + $0x30] sm:$0xff]
    %v161 = vld [vmem:[#allocation7 + $0x38] sm:$0xff]
    %v162 = vld [vmem:[#allocation7 + $0x40] sm:$0xff]
    %v163 = vld [vmem:[#allocation7 + $0x48] sm:$0xff]
    %v164 = vld [vmem:[#allocation7 + $0x50] sm:$0xff]
    %v165 = vld [vmem:[#allocation7 + $0x58] sm:$0xff]
    %v166 = vld [vmem:[#allocation7 + $0x60] sm:$0xff]
    %v167 = vld [vmem:[#allocation7 + $0x68] sm:$0xff]
    %v168 = vld [vmem:[#allocation7 + $0x70] sm:$0xff]
    %v169 = vld [vmem:[#allocation7 + $0x78] sm:$0xff]
    %v170 = vld [vmem:[#allocation7 + $0x80] sm:$0xff]
    %v171 = vld [vmem:[#allocation7 + $0x88] sm:$0xff]
    %v172 = vld [vmem:[#allocation7 + $0x90] sm:$0xff]
    %v173 = vld [vmem:[#allocation7 + $0x98] sm:$0xff]
    %v174 = vld [vmem:[#allocation7 + $0xa0] sm:$0xff]
    %v175 = vld [vmem:[#allocation7 + $0xa8] sm:$0xff]
    %v176 = vld [vmem:[#allocation7 + $0xb0] sm:$0xff]
    %v177 = vld [vmem:[#allocation7 + $0xb8] sm:$0xff]
    %v178 = vld [vmem:[#allocation7 + $0xc0] sm:$0xff]
    %v179 = vld [vmem:[#allocation7 + $0xc8] sm:$0xff]
    %v180 = vld [vmem:[#allocation7 + $0xd0] sm:$0xff]
    %v181 = vld [vmem:[#allocation7 + $0xd8] sm:$0xff]
    %v182 = vld [vmem:[#allocation7 + $0xe0] sm:$0xff]
    %v183 = vld [vmem:[#allocation7 + $0xe8] sm:$0xff]
    %v184 = vld [vmem:[#allocation7 + $0xf0] sm:$0xff]
    %v185 = vld [vmem:[#allocation7 + $0xf8] sm:$0xff]
    %v186 = vld [vmem:[#allocation7 + $0x100] sm:$0xff]
    %v187 = vld [vmem:[#allocation7 + $0x108] sm:$0xff]
    %v188 = vld [vmem:[#allocation7 + $0x110] sm:$0xff]
    %v189 = vld [vmem:[#allocation7 + $0x118] sm:$0xff]
    %v190 = vld [vmem:[#allocation7 + $0x120] sm:$0xff]
    %v191 = vld [vmem:[#allocation7 + $0x128] sm:$0xff]
    %v192 = vld [vmem:[#allocation7 + $0x130] sm:$0xff]
    %v193 = vld [vmem:[#allocation7 + $0x138] sm:$0xff]
    %v194 = vld [vmem:[#allocation7 + $0x140] sm:$0xff]
    %v195 = vld [vmem:[#allocation7 + $0x148] sm:$0xff]
    %v196 = vld [vmem:[#allocation7 + $0x150] sm:$0xff]
    %v197 = vld [vmem:[#allocation7 + $0x158] sm:$0xff]
    %v198 = vld [vmem:[#allocation7 + $0x160] sm:$0xff]
    %v199 = vld [vmem:[#allocation7 + $0x168] sm:$0xff]
    %v200 = vld [vmem:[#allocation7 + $0x170] sm:$0xff]
    %v201 = vld [vmem:[#allocation7 + $0x178] sm:$0xff]
    %v202 = vld [vmem:[%s3] sm:$0x7]
    %v203 = vld [vmem:[#allocation8] sm:$0x7]
    %v205 = vlaneseq
    %v206 = vshrl.u32 %v205, 7
    %v207 = vsub.s32 0, %v206
    %v208 = vrot.slane %v202, %v207
    %v209 = vlaneseq
    %v210 = vshrl.u32 %v209, 7
    %v211 = vsub.s32 1, %v210
    %v212 = vrot.slane %v202, %v211
    %v213 = vlaneseq
    %v214 = vshrl.u32 %v213, 7
    %v215 = vsub.s32 2, %v214
    %v216 = vrot.slane %v202, %v215
    %220 = vmatprep.subr.mxu0 %v107
    %221 = vmatpush1.msra.mxu0 %v106
    %222 = vmatprep.subr.mxu0 %v110
    %223 = vmatpush1.msra.mxu0 %v109
    %224 = vmatprep.subr.mxu0 %v113
    %225 = vmatpush1.msra.mxu0 %v112
    %226 = vmatprep.subr.mxu0 %v116
    %227 = vmatpush1.msra.mxu0 %v115
    %228 = vmatprep.subr.mxu0 %v119
    %229 = vmatpush1.msra.mxu0 %v118
    %230 = vmatprep.subr.mxu0 %v122
    %231 = vmatpush1.msra.mxu0 %v121
    %232 = vmatprep.subr.mxu0 %v125
    %233 = vmatpush1.msra.mxu0 %v124
    %234 = vmatprep.subr.mxu0 %v128
    %235 = vmatpush1.msra.mxu0 %v127
    %236 = vmatprep.subr.mxu0 %v131
    %237 = vmatpush1.msra.mxu0 %v130
    %238 = vmatprep.subr.mxu0 %v134
    %239 = vmatpush1.msra.mxu0 %v133
    %240 = vmatprep.subr.mxu0 %v137
    %241 = vmatpush1.msra.mxu0 %v136
    %242 = vmatprep.subr.mxu0 %v140
    %243 = vmatpush1.msra.mxu0 %v139
    %244 = vmatprep.subr.mxu0 %v143
    %245 = vmatpush1.msra.mxu0 %v142
    %246 = vmatprep.subr.mxu0 %v146
    %247 = vmatpush1.msra.mxu0 %v145
    %248 = vmatprep.subr.mxu0 %v149
    %249 = vmatpush1.msra.mxu0 %v148
    %250 = vmatprep.subr.mxu0 %v152
    %251 = vmatpush1.msra.mxu0 %v151
    %252 = vmatprep.subr.mxu0 0.0
    %253 = vmatpush1.msra.mxu0 0.0
    %254 = vmatprep.subr.mxu0 0.0
    %255 = vmatpush1.msra.mxu0 0.0
    %256 = vmatprep.subr.mxu0 0.0
    %257 = vmatpush1.msra.mxu0 0.0
    %258 = vmatprep.subr.mxu0 0.0
    %259 = vmatpush1.msra.mxu0 0.0
    %260 = vmatprep.subr.mxu0 0.0
    %261 = vmatpush1.msra.mxu0 0.0
    %262 = vmatprep.subr.mxu0 0.0
    %263 = vmatpush1.msra.mxu0 0.0
    %264 = vmatprep.subr.mxu0 0.0
    %265 = vmatpush1.msra.mxu0 0.0
    %266 = vmatprep.subr.mxu0 0.0
    %267 = vmatpush1.msra.mxu0 0.0
    %268 = vmatprep.subr.mxu0 0.0
    %269 = vmatpush1.msra.mxu0 0.0
    %270 = vmatprep.subr.mxu0 0.0
    %271 = vmatpush1.msra.mxu0 0.0
    %272 = vmatprep.subr.mxu0 0.0
    %273 = vmatpush1.msra.mxu0 0.0
    %274 = vmatprep.subr.mxu0 0.0
    %275 = vmatpush1.msra.mxu0 0.0
    %276 = vmatprep.subr.mxu0 0.0
    %277 = vmatpush1.msra.mxu0 0.0
    %278 = vmatprep.subr.mxu0 0.0
    %279 = vmatpush1.msra.mxu0 0.0
    %280 = vmatprep.subr.mxu0 0.0
    %281 = vmatpush1.msra.mxu0 0.0
    %282 = vmatprep.subr.mxu0 0.0
    %283 = vmatpush1.msra.mxu0 0.0
    %284 = vmatprep.mubr.f32.mxu0 0.0
    %285 = vmatmul.mubr.f32.gmra.mrb[0].mxu0 %v95
    %v286 = vpop.f32.mrb[0].mxu0
    %v287 = vadd.f32 %v208, %v286
    %v288 = vpop.f32.mrb[0].mxu0
    %v289 = vadd.f32 %v212, %v288
    %290 = vdwg.mxu0
    %291 = vmatprep.subr.mxu0 0.0
    %292 = vmatpush1.msra.mxu0 %v108
    %293 = vmatprep.subr.mxu0 0.0
    %294 = vmatpush1.msra.mxu0 %v111
    %295 = vmatprep.subr.mxu0 0.0
    %296 = vmatpush1.msra.mxu0 %v114
    %297 = vmatprep.subr.mxu0 0.0
    %298 = vmatpush1.msra.mxu0 %v117
    %299 = vmatprep.subr.mxu0 0.0
    %300 = vmatpush1.msra.mxu0 %v120
    %301 = vmatprep.subr.mxu0 0.0
    %302 = vmatpush1.msra.mxu0 %v123
    %303 = vmatprep.subr.mxu0 0.0
    %304 = vmatpush1.msra.mxu0 %v126
    %305 = vmatprep.subr.mxu0 0.0
    %306 = vmatpush1.msra.mxu0 %v129
    %307 = vmatprep.subr.mxu0 0.0
    %308 = vmatpush1.msra.mxu0 %v132
    %309 = vmatprep.subr.mxu0 0.0
    %310 = vmatpush1.msra.mxu0 %v135
    %311 = vmatprep.subr.mxu0 0.0
    %312 = vmatpush1.msra.mxu0 %v138
    %313 = vmatprep.subr.mxu0 0.0
    %314 = vmatpush1.msra.mxu0 %v141
    %315 = vmatprep.subr.mxu0 0.0
    %316 = vmatpush1.msra.mxu0 %v144
    %317 = vmatprep.subr.mxu0 0.0
    %318 = vmatpush1.msra.mxu0 %v147
    %319 = vmatprep.subr.mxu0 0.0
    %320 = vmatpush1.msra.mxu0 %v150
    %321 = vmatprep.subr.mxu0 0.0
    %322 = vmatpush1.msra.mxu0 %v153
    %323 = vmatprep.subr.mxu0 0.0
    %324 = vmatpush1.msra.mxu0 0.0
    %325 = vmatprep.subr.mxu0 0.0
    %326 = vmatpush1.msra.mxu0 0.0
    %327 = vmatprep.subr.mxu0 0.0
    %328 = vmatpush1.msra.mxu0 0.0
    %329 = vmatprep.subr.mxu0 0.0
    %330 = vmatpush1.msra.mxu0 0.0
    %331 = vmatprep.subr.mxu0 0.0
    %332 = vmatpush1.msra.mxu0 0.0
    %333 = vmatprep.subr.mxu0 0.0
    %334 = vmatpush1.msra.mxu0 0.0
    %335 = vmatprep.subr.mxu0 0.0
    %336 = vmatpush1.msra.mxu0 0.0
    %337 = vmatprep.subr.mxu0 0.0
    %338 = vmatpush1.msra.mxu0 0.0
    %339 = vmatprep.subr.mxu0 0.0
    %340 = vmatpush1.msra.mxu0 0.0
    %341 = vmatprep.subr.mxu0 0.0
    %342 = vmatpush1.msra.mxu0 0.0
    %343 = vmatprep.subr.mxu0 0.0
    %344 = vmatpush1.msra.mxu0 0.0
    %345 = vmatprep.subr.mxu0 0.0
    %346 = vmatpush1.msra.mxu0 0.0
    %347 = vmatprep.subr.mxu0 0.0
    %348 = vmatpush1.msra.mxu0 0.0
    %349 = vmatprep.subr.mxu0 0.0
    %350 = vmatpush1.msra.mxu0 0.0
    %351 = vmatprep.subr.mxu0 0.0
    %352 = vmatpush1.msra.mxu0 0.0
    %353 = vmatprep.subr.mxu0 0.0
    %354 = vmatpush1.msra.mxu0 0.0
    %355 = vmatprep.mubr.f32.mxu0 0.0
    %356 = vmatmul.mubr.f32.gmra.mrb[0].mxu0 %v95
    %v357 = vpop.f32.mrb[0].mxu0
    %v358 = vadd.f32 %v216, %v357
    %v359 = vpop.f32.mrb[0].mxu0
    %360 = vdwg.mxu0
    %v362 = vlaneseq
    %v363 = vshrl.u32 %v362, 7
    %v364 = vsub.s32 0, %v363
    %v365 = vrot.slane %v203, %v364
    %v366 = vlaneseq
    %v367 = vshrl.u32 %v366, 7
    %v368 = vsub.s32 1, %v367
    %v369 = vrot.slane %v203, %v368
    %v370 = vlaneseq
    %v371 = vshrl.u32 %v370, 7
    %v372 = vsub.s32 2, %v371
    %v373 = vrot.slane %v203, %v372
    %377 = vmatprep.subr.mxu0 %v155
    %378 = vmatpush1.msra.mxu0 %v154
    %379 = vmatprep.subr.mxu0 %v158
    %380 = vmatpush1.msra.mxu0 %v157
    %381 = vmatprep.subr.mxu0 %v161
    %382 = vmatpush1.msra.mxu0 %v160
    %383 = vmatprep.subr.mxu0 %v164
    %384 = vmatpush1.msra.mxu0 %v163
    %385 = vmatprep.subr.mxu0 %v167
    %386 = vmatpush1.msra.mxu0 %v166
    %387 = vmatprep.subr.mxu0 %v170
    %388 = vmatpush1.msra.mxu0 %v169
    %389 = vmatprep.subr.mxu0 %v173
    %390 = vmatpush1.msra.mxu0 %v172
    %391 = vmatprep.subr.mxu0 %v176
    %392 = vmatpush1.msra.mxu0 %v175
    %393 = vmatprep.subr.mxu0 %v179
    %394 = vmatpush1.msra.mxu0 %v178
    %395 = vmatprep.subr.mxu0 %v182
    %396 = vmatpush1.msra.mxu0 %v181
    %397 = vmatprep.subr.mxu0 %v185
    %398 = vmatpush1.msra.mxu0 %v184
    %399 = vmatprep.subr.mxu0 %v188
    %400 = vmatpush1.msra.mxu0 %v187
    %401 = vmatprep.subr.mxu0 %v191
    %402 = vmatpush1.msra.mxu0 %v190
    %403 = vmatprep.subr.mxu0 %v194
    %404 = vmatpush1.msra.mxu0 %v193
    %405 = vmatprep.subr.mxu0 %v197
    %406 = vmatpush1.msra.mxu0 %v196
    %407 = vmatprep.subr.mxu0 %v200
    %408 = vmatpush1.msra.mxu0 %v199
    %409 = vmatprep.subr.mxu0 0.0
    %410 = vmatpush1.msra.mxu0 0.0
    %411 = vmatprep.subr.mxu0 0.0
    %412 = vmatpush1.msra.mxu0 0.0
    %413 = vmatprep.subr.mxu0 0.0
    %414 = vmatpush1.msra.mxu0 0.0
    %415 = vmatprep.subr.mxu0 0.0
    %416 = vmatpush1.msra.mxu0 0.0
    %417 = vmatprep.subr.mxu0 0.0
    %418 = vmatpush1.msra.mxu0 0.0
    %419 = vmatprep.subr.mxu0 0.0
    %420 = vmatpush1.msra.mxu0 0.0
    %421 = vmatprep.subr.mxu0 0.0
    %422 = vmatpush1.msra.mxu0 0.0
    %423 = vmatprep.subr.mxu0 0.0
    %424 = vmatpush1.msra.mxu0 0.0
    %425 = vmatprep.subr.mxu0 0.0
    %426 = vmatpush1.msra.mxu0 0.0
    %427 = vmatprep.subr.mxu0 0.0
    %428 = vmatpush1.msra.mxu0 0.0
    %429 = vmatprep.subr.mxu0 0.0
    %430 = vmatpush1.msra.mxu0 0.0
    %431 = vmatprep.subr.mxu0 0.0
    %432 = vmatpush1.msra.mxu0 0.0
    %433 = vmatprep.subr.mxu0 0.0
    %434 = vmatpush1.msra.mxu0 0.0
    %435 = vmatprep.subr.mxu0 0.0
    %436 = vmatpush1.msra.mxu0 0.0
    %437 = vmatprep.subr.mxu0 0.0
    %438 = vmatpush1.msra.mxu0 0.0
    %439 = vmatprep.subr.mxu0 0.0
    %440 = vmatpush1.msra.mxu0 0.0
    %441 = vmatprep.mubr.f32.mxu0 0.0
    %442 = vmatmul.mubr.f32.gmra.mrb[0].mxu0 0.0
    %v443 = vpop.f32.mrb[0].mxu0
    %v444 = vadd.f32 %v365, %v443
    %v445 = vpop.f32.mrb[0].mxu0
    %v446 = vadd.f32 %v369, %v445
    %447 = vdwg.mxu0
    %448 = vmatprep.subr.mxu0 0.0
    %449 = vmatpush1.msra.mxu0 %v156
    %450 = vmatprep.subr.mxu0 0.0
    %451 = vmatpush1.msra.mxu0 %v159
    %452 = vmatprep.subr.mxu0 0.0
    %453 = vmatpush1.msra.mxu0 %v162
    %454 = vmatprep.subr.mxu0 0.0
    %455 = vmatpush1.msra.mxu0 %v165
    %456 = vmatprep.subr.mxu0 0.0
    %457 = vmatpush1.msra.mxu0 %v168
    %458 = vmatprep.subr.mxu0 0.0
    %459 = vmatpush1.msra.mxu0 %v171
    %460 = vmatprep.subr.mxu0 0.0
    %461 = vmatpush1.msra.mxu0 %v174
    %462 = vmatprep.subr.mxu0 0.0
    %463 = vmatpush1.msra.mxu0 %v177
    %464 = vmatprep.subr.mxu0 0.0
    %465 = vmatpush1.msra.mxu0 %v180
    %466 = vmatprep.subr.mxu0 0.0
    %467 = vmatpush1.msra.mxu0 %v183
    %468 = vmatprep.subr.mxu0 0.0
    %469 = vmatpush1.msra.mxu0 %v186
    %470 = vmatprep.subr.mxu0 0.0
    %471 = vmatpush1.msra.mxu0 %v189
    %472 = vmatprep.subr.mxu0 0.0
    %473 = vmatpush1.msra.mxu0 %v192
    %474 = vmatprep.subr.mxu0 0.0
    %475 = vmatpush1.msra.mxu0 %v195
    %476 = vmatprep.subr.mxu0 0.0
    %477 = vmatpush1.msra.mxu0 %v198
    %478 = vmatprep.subr.mxu0 0.0
    %479 = vmatpush1.msra.mxu0 %v201
    %480 = vmatprep.subr.mxu0 0.0
    %481 = vmatpush1.msra.mxu0 0.0
    %482 = vmatprep.subr.mxu0 0.0
    %483 = vmatpush1.msra.mxu0 0.0
    %484 = vmatprep.subr.mxu0 0.0
    %485 = vmatpush1.msra.mxu0 0.0
    %486 = vmatprep.subr.mxu0 0.0
    %487 = vmatpush1.msra.mxu0 0.0
    %488 = vmatprep.subr.mxu0 0.0
    %489 = vmatpush1.msra.mxu0 0.0
    %490 = vmatprep.subr.mxu0 0.0
    %491 = vmatpush1.msra.mxu0 0.0
    %492 = vmatprep.subr.mxu0 0.0
    %493 = vmatpush1.msra.mxu0 0.0
    %494 = vmatprep.subr.mxu0 0.0
    %495 = vmatpush1.msra.mxu0 0.0
    %496 = vmatprep.subr.mxu0 0.0
    %497 = vmatpush1.msra.mxu0 0.0
    %498 = vmatprep.subr.mxu0 0.0
    %499 = vmatpush1.msra.mxu0 0.0
    %500 = vmatprep.subr.mxu0 0.0
    %501 = vmatpush1.msra.mxu0 0.0
    %502 = vmatprep.subr.mxu0 0.0
    %503 = vmatpush1.msra.mxu0 0.0
    %504 = vmatprep.subr.mxu0 0.0
    %505 = vmatpush1.msra.mxu0 0.0
    %506 = vmatprep.subr.mxu0 0.0
    %507 = vmatpush1.msra.mxu0 0.0
    %508 = vmatprep.subr.mxu0 0.0
    %509 = vmatpush1.msra.mxu0 0.0
    %510 = vmatprep.subr.mxu0 0.0
    %511 = vmatpush1.msra.mxu0 0.0
    %512 = vmatprep.mubr.f32.mxu0 0.0
    %513 = vmatmul.mubr.f32.gmra.mrb[0].mxu0 0.0
    %v514 = vpop.f32.mrb[0].mxu0
    %v515 = vadd.f32 %v373, %v514
    %v516 = vpop.f32.mrb[0].mxu0
    %517 = vdwg.mxu0
    %v518 = vadd.f32 %v287, %v444
    %v519 = vsub.f32 0.0, %v518
    %v520 = vmul.f32 %v519, 1.442695
    %v521 = vpow.pop %v520
    %v522 = vadd.f32 %v521, 1.0
    %v523 = vrcp.pop %v522
    %v524 = vmul.f32 1.0, %v523
    %v525 = vadd.f32 %v289, %v446
    %v526 = vsub.f32 0.0, %v525
    %v527 = vmul.f32 %v526, 1.442695
    %v528 = vpow.pop %v527
    %v529 = vadd.f32 %v528, 1.0
    %v530 = vrcp.pop %v529
    %v531 = vmul.f32 1.0, %v530
    %v532 = vmul.f32 %v524, %v515
    %v533 = vadd.f32 %v358, %v532
    %v534 = vtanh.pop %v533
    %v535 = vsub.f32 1.0, %v531
    %v536 = vmul.f32 %v535, %v534
    %v537 = vmul.f32 %v531, 0.0
    %v538 = vadd.f32 %v536, %v537
    %539 = vmatprep.subr.mxu0 %v107
    %540 = vmatpush1.msra.mxu0 %v106
    %541 = vmatprep.subr.mxu0 %v110
    %542 = vmatpush1.msra.mxu0 %v109
    %543 = vmatprep.subr.mxu0 %v113
    %544 = vmatpush1.msra.mxu0 %v112
    %545 = vmatprep.subr.mxu0 %v116
    %546 = vmatpush1.msra.mxu0 %v115
    %547 = vmatprep.subr.mxu0 %v119
    %548 = vmatpush1.msra.mxu0 %v118
    %549 = vmatprep.subr.mxu0 %v122
    %550 = vmatpush1.msra.mxu0 %v121
    %551 = vmatprep.subr.mxu0 %v125
    %552 = vmatpush1.msra.mxu0 %v124
    %553 = vmatprep.subr.mxu0 %v128
    %554 = vmatpush1.msra.mxu0 %v127
    %555 = vmatprep.subr.mxu0 %v131
    %556 = vmatpush1.msra.mxu0 %v130
    %557 = vmatprep.subr.mxu0 %v134
    %558 = vmatpush1.msra.mxu0 %v133
    %559 = vmatprep.subr.mxu0 %v137
    %560 = vmatpush1.msra.mxu0 %v136
    %561 = vmatprep.subr.mxu0 %v140
    %562 = vmatpush1.msra.mxu0 %v139
    %563 = vmatprep.subr.mxu0 %v143
    %564 = vmatpush1.msra.mxu0 %v142
    %565 = vmatprep.subr.mxu0 %v146
    %566 = vmatpush1.msra.mxu0 %v145
    %567 = vmatprep.subr.mxu0 %v149
    %568 = vmatpush1.msra.mxu0 %v148
    %569 = vmatprep.subr.mxu0 %v152
    %570 = vmatpush1.msra.mxu0 %v151
    %571 = vmatprep.subr.mxu0 0.0
    %572 = vmatpush1.msra.mxu0 0.0
    %573 = vmatprep.subr.mxu0 0.0
    %574 = vmatpush1.msra.mxu0 0.0
    %575 = vmatprep.subr.mxu0 0.0
    %576 = vmatpush1.msra.mxu0 0.0
    %577 = vmatprep.subr.mxu0 0.0
    %578 = vmatpush1.msra.mxu0 0.0
    %579 = vmatprep.subr.mxu0 0.0
    %580 = vmatpush1.msra.mxu0 0.0
    %581 = vmatprep.subr.mxu0 0.0
    %582 = vmatpush1.msra.mxu0 0.0
    %583 = vmatprep.subr.mxu0 0.0
    %584 = vmatpush1.msra.mxu0 0.0
    %585 = vmatprep.subr.mxu0 0.0
    %586 = vmatpush1.msra.mxu0 0.0
    %587 = vmatprep.subr.mxu0 0.0
    %588 = vmatpush1.msra.mxu0 0.0
    %589 = vmatprep.subr.mxu0 0.0
    %590 = vmatpush1.msra.mxu0 0.0
    %591 = vmatprep.subr.mxu0 0.0
    %592 = vmatpush1.msra.mxu0 0.0
    %593 = vmatprep.subr.mxu0 0.0
    %594 = vmatpush1.msra.mxu0 0.0
    %595 = vmatprep.subr.mxu0 0.0
    %596 = vmatpush1.msra.mxu0 0.0
    %597 = vmatprep.subr.mxu0 0.0
    %598 = vmatpush1.msra.mxu0 0.0
    %599 = vmatprep.subr.mxu0 0.0
    %600 = vmatpush1.msra.mxu0 0.0
    %601 = vmatprep.subr.mxu0 0.0
    %602 = vmatpush1.msra.mxu0 0.0
    %603 = vmatprep.mubr.f32.mxu0 0.0
    %604 = vmatmul.mubr.f32.gmra.mrb[0].mxu0 %v97
    %v605 = vpop.f32.mrb[0].mxu0
    %v606 = vadd.f32 %v208, %v605
    %v607 = vpop.f32.mrb[0].mxu0
    %v608 = vadd.f32 %v212, %v607
    %609 = vdwg.mxu0
    %610 = vmatprep.subr.mxu0 0.0
    %611 = vmatpush1.msra.mxu0 %v108
    %612 = vmatprep.subr.mxu0 0.0
    %613 = vmatpush1.msra.mxu0 %v111
    %614 = vmatprep.subr.mxu0 0.0
    %615 = vmatpush1.msra.mxu0 %v114
    %616 = vmatprep.subr.mxu0 0.0
    %617 = vmatpush1.msra.mxu0 %v117
    %618 = vmatprep.subr.mxu0 0.0
    %619 = vmatpush1.msra.mxu0 %v120
    %620 = vmatprep.subr.mxu0 0.0
    %621 = vmatpush1.msra.mxu0 %v123
    %622 = vmatprep.subr.mxu0 0.0
    %623 = vmatpush1.msra.mxu0 %v126
    %624 = vmatprep.subr.mxu0 0.0
    %625 = vmatpush1.msra.mxu0 %v129
    %626 = vmatprep.subr.mxu0 0.0
    %627 = vmatpush1.msra.mxu0 %v132
    %628 = vmatprep.subr.mxu0 0.0
    %629 = vmatpush1.msra.mxu0 %v135
    %630 = vmatprep.subr.mxu0 0.0
    %631 = vmatpush1.msra.mxu0 %v138
    %632 = vmatprep.subr.mxu0 0.0
    %633 = vmatpush1.msra.mxu0 %v141
    %634 = vmatprep.subr.mxu0 0.0
    %635 = vmatpush1.msra.mxu0 %v144
    %636 = vmatprep.subr.mxu0 0.0
    %637 = vmatpush1.msra.mxu0 %v147
    %638 = vmatprep.subr.mxu0 0.0
    %639 = vmatpush1.msra.mxu0 %v150
    %640 = vmatprep.subr.mxu0 0.0
    %641 = vmatpush1.msra.mxu0 %v153
    %642 = vmatprep.subr.mxu0 0.0
    %643 = vmatpush1.msra.mxu0 0.0
    %644 = vmatprep.subr.mxu0 0.0
    %645 = vmatpush1.msra.mxu0 0.0
    %646 = vmatprep.subr.mxu0 0.0
    %647 = vmatpush1.msra.mxu0 0.0
    %648 = vmatprep.subr.mxu0 0.0
    %649 = vmatpush1.msra.mxu0 0.0
    %650 = vmatprep.subr.mxu0 0.0
    %651 = vmatpush1.msra.mxu0 0.0
    %652 = vmatprep.subr.mxu0 0.0
    %653 = vmatpush1.msra.mxu0 0.0
    %654 = vmatprep.subr.mxu0 0.0
    %655 = vmatpush1.msra.mxu0 0.0
    %656 = vmatprep.subr.mxu0 0.0
    %657 = vmatpush1.msra.mxu0 0.0
    %658 = vmatprep.subr.mxu0 0.0
    %659 = vmatpush1.msra.mxu0 0.0
    %660 = vmatprep.subr.mxu0 0.0
    %661 = vmatpush1.msra.mxu0 0.0
    %662 = vmatprep.subr.mxu0 0.0
    %663 = vmatpush1.msra.mxu0 0.0
    %664 = vmatprep.subr.mxu0 0.0
    %665 = vmatpush1.msra.mxu0 0.0
    %666 = vmatprep.subr.mxu0 0.0
    %667 = vmatpush1.msra.mxu0 0.0
    %668 = vmatprep.subr.mxu0 0.0
    %669 = vmatpush1.msra.mxu0 0.0
    %670 = vmatprep.subr.mxu0 0.0
    %671 = vmatpush1.msra.mxu0 0.0
    %672 = vmatprep.subr.mxu0 0.0
    %673 = vmatpush1.msra.mxu0 0.0
    %674 = vmatprep.mubr.f32.mxu0 0.0
    %675 = vmatmul.mubr.f32.gmra.mrb[0].mxu0 %v97
    %v676 = vpop.f32.mrb[0].mxu0
    %v677 = vadd.f32 %v216, %v676
    %v678 = vpop.f32.mrb[0].mxu0
    %679 = vdwg.mxu0
    %680 = vmatprep.subr.mxu0 %v155
    %681 = vmatpush1.msra.mxu0 %v154
    %682 = vmatprep.subr.mxu0 %v158
    %683 = vmatpush1.msra.mxu0 %v157
    %684 = vmatprep.subr.mxu0 %v161
    %685 = vmatpush1.msra.mxu0 %v160
    %686 = vmatprep.subr.mxu0 %v164
    %687 = vmatpush1.msra.mxu0 %v163
    %688 = vmatprep.subr.mxu0 %v167
    %689 = vmatpush1.msra.mxu0 %v166
    %690 = vmatprep.subr.mxu0 %v170
    %691 = vmatpush1.msra.mxu0 %v169
    %692 = vmatprep.subr.mxu0 %v173
    %693 = vmatpush1.msra.mxu0 %v172
    %694 = vmatprep.subr.mxu0 %v176
    %695 = vmatpush1.msra.mxu0 %v175
    %696 = vmatprep.subr.mxu0 %v179
    %697 = vmatpush1.msra.mxu0 %v178
    %698 = vmatprep.subr.mxu0 %v182
    %699 = vmatpush1.msra.mxu0 %v181
    %700 = vmatprep.subr.mxu0 %v185
    %701 = vmatpush1.msra.mxu0 %v184
    %702 = vmatprep.subr.mxu0 %v188
    %703 = vmatpush1.msra.mxu0 %v187
    %704 = vmatprep.subr.mxu0 %v191
    %705 = vmatpush1.msra.mxu0 %v190
    %706 = vmatprep.subr.mxu0 %v194
    %707 = vmatpush1.msra.mxu0 %v193
    %708 = vmatprep.subr.mxu0 %v197
    %709 = vmatpush1.msra.mxu0 %v196
    %710 = vmatprep.subr.mxu0 %v200
    %711 = vmatpush1.msra.mxu0 %v199
    %712 = vmatprep.subr.mxu0 0.0
    %713 = vmatpush1.msra.mxu0 0.0
    %714 = vmatprep.subr.mxu0 0.0
    %715 = vmatpush1.msra.mxu0 0.0
    %716 = vmatprep.subr.mxu0 0.0
    %717 = vmatpush1.msra.mxu0 0.0
    %718 = vmatprep.subr.mxu0 0.0
    %719 = vmatpush1.msra.mxu0 0.0
    %720 = vmatprep.subr.mxu0 0.0
    %721 = vmatpush1.msra.mxu0 0.0
    %722 = vmatprep.subr.mxu0 0.0
    %723 = vmatpush1.msra.mxu0 0.0
    %724 = vmatprep.subr.mxu0 0.0
    %725 = vmatpush1.msra.mxu0 0.0
    %726 = vmatprep.subr.mxu0 0.0
    %727 = vmatpush1.msra.mxu0 0.0
    %728 = vmatprep.subr.mxu0 0.0
    %729 = vmatpush1.msra.mxu0 0.0
    %730 = vmatprep.subr.mxu0 0.0
    %731 = vmatpush1.msra.mxu0 0.0
    %732 = vmatprep.subr.mxu0 0.0
    %733 = vmatpush1.msra.mxu0 0.0
    %734 = vmatprep.subr.mxu0 0.0
    %735 = vmatpush1.msra.mxu0 0.0
    %736 = vmatprep.subr.mxu0 0.0
    %737 = vmatpush1.msra.mxu0 0.0
    %738 = vmatprep.subr.mxu0 0.0
    %739 = vmatpush1.msra.mxu0 0.0
    %740 = vmatprep.subr.mxu0 0.0
    %741 = vmatpush1.msra.mxu0 0.0
    %742 = vmatprep.subr.mxu0 0.0
    %743 = vmatpush1.msra.mxu0 0.0
    %744 = vmatprep.mubr.f32.mxu0 0.0
    %745 = vmatmul.mubr.f32.gmra.mrb[0].mxu0 %v538
    %v746 = vpop.f32.mrb[0].mxu0
    %v747 = vadd.f32 %v365, %v746
    %v748 = vpop.f32.mrb[0].mxu0
    %v749 = vadd.f32 %v369, %v748
    %750 = vdwg.mxu0
    %751 = vmatprep.subr.mxu0 0.0
    %752 = vmatpush1.msra.mxu0 %v156
    %753 = vmatprep.subr.mxu0 0.0
    %754 = vmatpush1.msra.mxu0 %v159
    %755 = vmatprep.subr.mxu0 0.0
    %756 = vmatpush1.msra.mxu0 %v162
    %757 = vmatprep.subr.mxu0 0.0
    %758 = vmatpush1.msra.mxu0 %v165
    %759 = vmatprep.subr.mxu0 0.0
    %760 = vmatpush1.msra.mxu0 %v168
    %761 = vmatprep.subr.mxu0 0.0
    %762 = vmatpush1.msra.mxu0 %v171
    %763 = vmatprep.subr.mxu0 0.0
    %764 = vmatpush1.msra.mxu0 %v174
    %765 = vmatprep.subr.mxu0 0.0
    %766 = vmatpush1.msra.mxu0 %v177
    %767 = vmatprep.subr.mxu0 0.0
    %768 = vmatpush1.msra.mxu0 %v180
    %769 = vmatprep.subr.mxu0 0.0
    %770 = vmatpush1.msra.mxu0 %v183
    %771 = vmatprep.subr.mxu0 0.0
    %772 = vmatpush1.msra.mxu0 %v186
    %773 = vmatprep.subr.mxu0 0.0
    %774 = vmatpush1.msra.mxu0 %v189
    %775 = vmatprep.subr.mxu0 0.0
    %776 = vmatpush1.msra.mxu0 %v192
    %777 = vmatprep.subr.mxu0 0.0
    %778 = vmatpush1.msra.mxu0 %v195
    %779 = vmatprep.subr.mxu0 0.0
    %780 = vmatpush1.msra.mxu0 %v198
    %781 = vmatprep.subr.mxu0 0.0
    %782 = vmatpush1.msra.mxu0 %v201
    %783 = vmatprep.subr.mxu0 0.0
    %784 = vmatpush1.msra.mxu0 0.0
    %785 = vmatprep.subr.mxu0 0.0
    %786 = vmatpush1.msra.mxu0 0.0
    %787 = vmatprep.subr.mxu0 0.0
    %788 = vmatpush1.msra.mxu0 0.0
    %789 = vmatprep.subr.mxu0 0.0
    %790 = vmatpush1.msra.mxu0 0.0
    %791 = vmatprep.subr.mxu0 0.0
    %792 = vmatpush1.msra.mxu0 0.0
    %793 = vmatprep.subr.mxu0 0.0
    %794 = vmatpush1.msra.mxu0 0.0
    %795 = vmatprep.subr.mxu0 0.0
    %796 = vmatpush1.msra.mxu0 0.0
    %797 = vmatprep.subr.mxu0 0.0
    %798 = vmatpush1.msra.mxu0 0.0
    %799 = vmatprep.subr.mxu0 0.0
    %800 = vmatpush1.msra.mxu0 0.0
    %801 = vmatprep.subr.mxu0 0.0
    %802 = vmatpush1.msra.mxu0 0.0
    %803 = vmatprep.subr.mxu0 0.0
    %804 = vmatpush1.msra.mxu0 0.0
    %805 = vmatprep.subr.mxu0 0.0
    %806 = vmatpush1.msra.mxu0 0.0
    %807 = vmatprep.subr.mxu0 0.0
    %808 = vmatpush1.msra.mxu0 0.0
    %809 = vmatprep.subr.mxu0 0.0
    %810 = vmatpush1.msra.mxu0 0.0
    %811 = vmatprep.subr.mxu0 0.0
    %812 = vmatpush1.msra.mxu0 0.0
    %813 = vmatprep.subr.mxu0 0.0
    %814 = vmatpush1.msra.mxu0 0.0
    %815 = vmatprep.mubr.f32.mxu0 0.0
    %816 = vmatmul.mubr.f32.gmra.mrb[0].mxu0 %v538
    %v817 = vpop.f32.mrb[0].mxu0
    %v818 = vadd.f32 %v373, %v817
    %v819 = vpop.f32.mrb[0].mxu0
    %820 = vdwg.mxu0
    %v821 = vadd.f32 %v606, %v747
    %v822 = vsub.f32 0.0, %v821
    %v823 = vmul.f32 %v822, 1.442695
    %v824 = vpow.pop %v823
    %v825 = vadd.f32 %v824, 1.0
    %v826 = vrcp.pop %v825
    %v827 = vmul.f32 1.0, %v826
    %v828 = vadd.f32 %v608, %v749
    %v829 = vsub.f32 0.0, %v828
    %v830 = vmul.f32 %v829, 1.442695
    %v831 = vpow.pop %v830
    %v832 = vadd.f32 %v831, 1.0
    %v833 = vrcp.pop %v832
    %v834 = vmul.f32 1.0, %v833
    %v835 = vmul.f32 %v827, %v818
    %v836 = vadd.f32 %v677, %v835
    %v837 = vtanh.pop %v836
    %v838 = vsub.f32 1.0, %v834
    %v839 = vmul.f32 %v838, %v837
    %v840 = vmul.f32 %v834, %v538
    %v841 = vadd.f32 %v839, %v840
    %842 = vmatprep.subr.mxu0 %v107
    %843 = vmatpush1.msra.mxu0 %v106
    %844 = vmatprep.subr.mxu0 %v110
    %845 = vmatpush1.msra.mxu0 %v109
    %846 = vmatprep.subr.mxu0 %v113
    %847 = vmatpush1.msra.mxu0 %v112
    %848 = vmatprep.subr.mxu0 %v116
    %849 = vmatpush1.msra.mxu0 %v115
    %850 = vmatprep.subr.mxu0 %v119
    %851 = vmatpush1.msra.mxu0 %v118
    %852 = vmatprep.subr.mxu0 %v122
    %853 = vmatpush1.msra.mxu0 %v121
    %854 = vmatprep.subr.mxu0 %v125
    %855 = vmatpush1.msra.mxu0 %v124
    %856 = vmatprep.subr.mxu0 %v128
    %857 = vmatpush1.msra.mxu0 %v127
    %858 = vmatprep.subr.mxu0 %v131
    %859 = vmatpush1.msra.mxu0 %v130
    %860 = vmatprep.subr.mxu0 %v134
    %861 = vmatpush1.msra.mxu0 %v133
    %862 = vmatprep.subr.mxu0 %v137
    %863 = vmatpush1.msra.mxu0 %v136
    %864 = vmatprep.subr.mxu0 %v140
    %865 = vmatpush1.msra.mxu0 %v139
    %866 = vmatprep.subr.mxu0 %v143
    %867 = vmatpush1.msra.mxu0 %v142
    %868 = vmatprep.subr.mxu0 %v146
    %869 = vmatpush1.msra.mxu0 %v145
    %870 = vmatprep.subr.mxu0 %v149
    %871 = vmatpush1.msra.mxu0 %v148
    %872 = vmatprep.subr.mxu0 %v152
    %873 = vmatpush1.msra.mxu0 %v151
    %874 = vmatprep.subr.mxu0 0.0
    %875 = vmatpush1.msra.mxu0 0.0
    %876 = vmatprep.subr.mxu0 0.0
    %877 = vmatpush1.msra.mxu0 0.0
    %878 = vmatprep.subr.mxu0 0.0
    %879 = vmatpush1.msra.mxu0 0.0
    %880 = vmatprep.subr.mxu0 0.0
    %881 = vmatpush1.msra.mxu0 0.0
    %882 = vmatprep.subr.mxu0 0.0
    %883 = vmatpush1.msra.mxu0 0.0
    %884 = vmatprep.subr.mxu0 0.0
    %885 = vmatpush1.msra.mxu0 0.0
    %886 = vmatprep.subr.mxu0 0.0
    %887 = vmatpush1.msra.mxu0 0.0
    %888 = vmatprep.subr.mxu0 0.0
    %889 = vmatpush1.msra.mxu0 0.0
    %890 = vmatprep.subr.mxu0 0.0
    %891 = vmatpush1.msra.mxu0 0.0
    %892 = vmatprep.subr.mxu0 0.0
    %893 = vmatpush1.msra.mxu0 0.0
    %894 = vmatprep.subr.mxu0 0.0
    %895 = vmatpush1.msra.mxu0 0.0
    %896 = vmatprep.subr.mxu0 0.0
    %897 = vmatpush1.msra.mxu0 0.0
    %898 = vmatprep.subr.mxu0 0.0
    %899 = vmatpush1.msra.mxu0 0.0
    %900 = vmatprep.subr.mxu0 0.0
    %901 = vmatpush1.msra.mxu0 0.0
    %902 = vmatprep.subr.mxu0 0.0
    %903 = vmatpush1.msra.mxu0 0.0
    %904 = vmatprep.subr.mxu0 0.0
    %905 = vmatpush1.msra.mxu0 0.0
    %906 = vmatprep.mubr.f32.mxu0 0.0
    %907 = vmatmul.mubr.f32.gmra.mrb[0].mxu0 %v99
    %v908 = vpop.f32.mrb[0].mxu0
    %v909 = vadd.f32 %v208, %v908
    %v910 = vpop.f32.mrb[0].mxu0
    %v911 = vadd.f32 %v212, %v910
    %912 = vdwg.mxu0
    %913 = vmatprep.subr.mxu0 0.0
    %914 = vmatpush1.msra.mxu0 %v108
    %915 = vmatprep.subr.mxu0 0.0
    %916 = vmatpush1.msra.mxu0 %v111
    %917 = vmatprep.subr.mxu0 0.0
    %918 = vmatpush1.msra.mxu0 %v114
    %919 = vmatprep.subr.mxu0 0.0
    %920 = vmatpush1.msra.mxu0 %v117
    %921 = vmatprep.subr.mxu0 0.0
    %922 = vmatpush1.msra.mxu0 %v120
    %923 = vmatprep.subr.mxu0 0.0
    %924 = vmatpush1.msra.mxu0 %v123
    %925 = vmatprep.subr.mxu0 0.0
    %926 = vmatpush1.msra.mxu0 %v126
    %927 = vmatprep.subr.mxu0 0.0
    %928 = vmatpush1.msra.mxu0 %v129
    %929 = vmatprep.subr.mxu0 0.0
    %930 = vmatpush1.msra.mxu0 %v132
    %931 = vmatprep.subr.mxu0 0.0
    %932 = vmatpush1.msra.mxu0 %v135
    %933 = vmatprep.subr.mxu0 0.0
    %934 = vmatpush1.msra.mxu0 %v138
    %935 = vmatprep.subr.mxu0 0.0
    %936 = vmatpush1.msra.mxu0 %v141
    %937 = vmatprep.subr.mxu0 0.0
    %938 = vmatpush1.msra.mxu0 %v144
    %939 = vmatprep.subr.mxu0 0.0
    %940 = vmatpush1.msra.mxu0 %v147
    %941 = vmatprep.subr.mxu0 0.0
    %942 = vmatpush1.msra.mxu0 %v150
    %943 = vmatprep.subr.mxu0 0.0
    %944 = vmatpush1.msra.mxu0 %v153
    %945 = vmatprep.subr.mxu0 0.0
    %946 = vmatpush1.msra.mxu0 0.0
    %947 = vmatprep.subr.mxu0 0.0
    %948 = vmatpush1.msra.mxu0 0.0
    %949 = vmatprep.subr.mxu0 0.0
    %950 = vmatpush1.msra.mxu0 0.0
    %951 = vmatprep.subr.mxu0 0.0
    %952 = vmatpush1.msra.mxu0 0.0
    %953 = vmatprep.subr.mxu0 0.0
    %954 = vmatpush1.msra.mxu0 0.0
    %955 = vmatprep.subr.mxu0 0.0
    %956 = vmatpush1.msra.mxu0 0.0
    %957 = vmatprep.subr.mxu0 0.0
    %958 = vmatpush1.msra.mxu0 0.0
    %959 = vmatprep.subr.mxu0 0.0
    %960 = vmatpush1.msra.mxu0 0.0
    %961 = vmatprep.subr.mxu0 0.0
    %962 = vmatpush1.msra.mxu0 0.0
    %963 = vmatprep.subr.mxu0 0.0
    %964 = vmatpush1.msra.mxu0 0.0
    %965 = vmatprep.subr.mxu0 0.0
    %966 = vmatpush1.msra.mxu0 0.0
    %967 = vmatprep.subr.mxu0 0.0
    %968 = vmatpush1.msra.mxu0 0.0
    %969 = vmatprep.subr.mxu0 0.0
    %970 = vmatpush1.msra.mxu0 0.0
    %971 = vmatprep.subr.mxu0 0.0
    %972 = vmatpush1.msra.mxu0 0.0
    %973 = vmatprep.subr.mxu0 0.0
    %974 = vmatpush1.msra.mxu0 0.0
    %975 = vmatprep.subr.mxu0 0.0
    %976 = vmatpush1.msra.mxu0 0.0
    %977 = vmatprep.mubr.f32.mxu0 0.0
    %978 = vmatmul.mubr.f32.gmra.mrb[0].mxu0 %v99
    %v979 = vpop.f32.mrb[0].mxu0
    %v980 = vadd.f32 %v216, %v979
    %v981 = vpop.f32.mrb[0].mxu0
    %982 = vdwg.mxu0
    %983 = vmatprep.subr.mxu0 %v155
    %984 = vmatpush1.msra.mxu0 %v154
    %985 = vmatprep.subr.mxu0 %v158
    %986 = vmatpush1.msra.mxu0 %v157
    %987 = vmatprep.subr.mxu0 %v161
    %988 = vmatpush1.msra.mxu0 %v160
    %989 = vmatprep.subr.mxu0 %v164
    %990 = vmatpush1.msra.mxu0 %v163
    %991 = vmatprep.subr.mxu0 %v167
    %992 = vmatpush1.msra.mxu0 %v166
    %993 = vmatprep.subr.mxu0 %v170
    %994 = vmatpush1.msra.mxu0 %v169
    %995 = vmatprep.subr.mxu0 %v173
    %996 = vmatpush1.msra.mxu0 %v172
    %997 = vmatprep.subr.mxu0 %v176
    %998 = vmatpush1.msra.mxu0 %v175
    %999 = vmatprep.subr.mxu0 %v179
    %1000 = vmatpush1.msra.mxu0 %v178
    %1001 = vmatprep.subr.mxu0 %v182
    %1002 = vmatpush1.msra.mxu0 %v181
    %1003 = vmatprep.subr.mxu0 %v185
    %1004 = vmatpush1.msra.mxu0 %v184
    %1005 = vmatprep.subr.mxu0 %v188
    %1006 = vmatpush1.msra.mxu0 %v187
    %1007 = vmatprep.subr.mxu0 %v191
    %1008 = vmatpush1.msra.mxu0 %v190
    %1009 = vmatprep.subr.mxu0 %v194
    %1010 = vmatpush1.msra.mxu0 %v193
    %1011 = vmatprep.subr.mxu0 %v197
    %1012 = vmatpush1.msra.mxu0 %v196
    %1013 = vmatprep.subr.mxu0 %v200
    %1014 = vmatpush1.msra.mxu0 %v199
    %1015 = vmatprep.subr.mxu0 0.0
    %1016 = vmatpush1.msra.mxu0 0.0
    %1017 = vmatprep.subr.mxu0 0.0
    %1018 = vmatpush1.msra.mxu0 0.0
    %1019 = vmatprep.subr.mxu0 0.0
    %1020 = vmatpush1.msra.mxu0 0.0
    %1021 = vmatprep.subr.mxu0 0.0
    %1022 = vmatpush1.msra.mxu0 0.0
    %1023 = vmatprep.subr.mxu0 0.0
    %1024 = vmatpush1.msra.mxu0 0.0
    %1025 = vmatprep.subr.mxu0 0.0
    %1026 = vmatpush1.msra.mxu0 0.0
    %1027 = vmatprep.subr.mxu0 0.0
    %1028 = vmatpush1.msra.mxu0 0.0
    %1029 = vmatprep.subr.mxu0 0.0
    %1030 = vmatpush1.msra.mxu0 0.0
    %1031 = vmatprep.subr.mxu0 0.0
    %1032 = vmatpush1.msra.mxu0 0.0
    %1033 = vmatprep.subr.mxu0 0.0
    %1034 = vmatpush1.msra.mxu0 0.0
    %1035 = vmatprep.subr.mxu0 0.0
    %1036 = vmatpush1.msra.mxu0 0.0
    %1037 = vmatprep.subr.mxu0 0.0
    %1038 = vmatpush1.msra.mxu0 0.0
    %1039 = vmatprep.subr.mxu0 0.0
    %1040 = vmatpush1.msra.mxu0 0.0
    %1041 = vmatprep.subr.mxu0 0.0
    %1042 = vmatpush1.msra.mxu0 0.0
    %1043 = vmatprep.subr.mxu0 0.0
    %1044 = vmatpush1.msra.mxu0 0.0
    %1045 = vmatprep.subr.mxu0 0.0
    %1046 = vmatpush1.msra.mxu0 0.0
    %1047 = vmatprep.mubr.f32.mxu0 0.0
    %1048 = vmatmul.mubr.f32.gmra.mrb[0].mxu0 %v841
    %v1049 = vpop.f32.mrb[0].mxu0
    %v1050 = vadd.f32 %v365, %v1049
    %v1051 = vpop.f32.mrb[0].mxu0
    %v1052 = vadd.f32 %v369, %v1051
    %1053 = vdwg.mxu0
    %1054 = vmatprep.subr.mxu0 0.0
    %1055 = vmatpush1.msra.mxu0 %v156
    %1056 = vmatprep.subr.mxu0 0.0
    %1057 = vmatpush1.msra.mxu0 %v159
    %1058 = vmatprep.subr.mxu0 0.0
    %1059 = vmatpush1.msra.mxu0 %v162
    %1060 = vmatprep.subr.mxu0 0.0
    %1061 = vmatpush1.msra.mxu0 %v165
    %1062 = vmatprep.subr.mxu0 0.0
    %1063 = vmatpush1.msra.mxu0 %v168
    %1064 = vmatprep.subr.mxu0 0.0
    %1065 = vmatpush1.msra.mxu0 %v171
    %1066 = vmatprep.subr.mxu0 0.0
    %1067 = vmatpush1.msra.mxu0 %v174
    %1068 = vmatprep.subr.mxu0 0.0
    %1069 = vmatpush1.msra.mxu0 %v177
    %1070 = vmatprep.subr.mxu0 0.0
    %1071 = vmatpush1.msra.mxu0 %v180
    %1072 = vmatprep.subr.mxu0 0.0
    %1073 = vmatpush1.msra.mxu0 %v183
    %1074 = vmatprep.subr.mxu0 0.0
    %1075 = vmatpush1.msra.mxu0 %v186
    %1076 = vmatprep.subr.mxu0 0.0
    %1077 = vmatpush1.msra.mxu0 %v189
    %1078 = vmatprep.subr.mxu0 0.0
    %1079 = vmatpush1.msra.mxu0 %v192
    %1080 = vmatprep.subr.mxu0 0.0
    %1081 = vmatpush1.msra.mxu0 %v195
    %1082 = vmatprep.subr.mxu0 0.0
    %1083 = vmatpush1.msra.mxu0 %v198
    %1084 = vmatprep.subr.mxu0 0.0
    %1085 = vmatpush1.msra.mxu0 %v201
    %1086 = vmatprep.subr.mxu0 0.0
    %1087 = vmatpush1.msra.mxu0 0.0
    %1088 = vmatprep.subr.mxu0 0.0
    %1089 = vmatpush1.msra.mxu0 0.0
    %1090 = vmatprep.subr.mxu0 0.0
    %1091 = vmatpush1.msra.mxu0 0.0
    %1092 = vmatprep.subr.mxu0 0.0
    %1093 = vmatpush1.msra.mxu0 0.0
    %1094 = vmatprep.subr.mxu0 0.0
    %1095 = vmatpush1.msra.mxu0 0.0
    %1096 = vmatprep.subr.mxu0 0.0
    %1097 = vmatpush1.msra.mxu0 0.0
    %1098 = vmatprep.subr.mxu0 0.0
    %1099 = vmatpush1.msra.mxu0 0.0
    %1100 = vmatprep.subr.mxu0 0.0
    %1101 = vmatpush1.msra.mxu0 0.0
    %1102 = vmatprep.subr.mxu0 0.0
    %1103 = vmatpush1.msra.mxu0 0.0
    %1104 = vmatprep.subr.mxu0 0.0
    %1105 = vmatpush1.msra.mxu0 0.0
    %1106 = vmatprep.subr.mxu0 0.0
    %1107 = vmatpush1.msra.mxu0 0.0
    %1108 = vmatprep.subr.mxu0 0.0
    %1109 = vmatpush1.msra.mxu0 0.0
    %1110 = vmatprep.subr.mxu0 0.0
    %1111 = vmatpush1.msra.mxu0 0.0
    %1112 = vmatprep.subr.mxu0 0.0
    %1113 = vmatpush1.msra.mxu0 0.0
    %1114 = vmatprep.subr.mxu0 0.0
    %1115 = vmatpush1.msra.mxu0 0.0
    %1116 = vmatprep.subr.mxu0 0.0
    %1117 = vmatpush1.msra.mxu0 0.0
    %1118 = vmatprep.mubr.f32.mxu0 0.0
    %1119 = vmatmul.mubr.f32.gmra.mrb[0].mxu0 %v841
    %v1120 = vpop.f32.mrb[0].mxu0
    %v1121 = vadd.f32 %v373, %v1120
    %v1122 = vpop.f32.mrb[0].mxu0
    %1123 = vdwg.mxu0
    %v1124 = vadd.f32 %v909, %v1050
    %v1125 = vsub.f32 0.0, %v1124
    %v1126 = vmul.f32 %v1125, 1.442695
    %v1127 = vpow.pop %v1126
    %v1128 = vadd.f32 %v1127, 1.0
    %v1129 = vrcp.pop %v1128
    %v1130 = vmul.f32 1.0, %v1129
    %v1131 = vadd.f32 %v911, %v1052
    %v1132 = vsub.f32 0.0, %v1131
    %v1133 = vmul.f32 %v1132, 1.442695
    %v1134 = vpow.pop %v1133
    %v1135 = vadd.f32 %v1134, 1.0
    %v1136 = vrcp.pop %v1135
    %v1137 = vmul.f32 1.0, %v1136
    %v1138 = vmul.f32 %v1130, %v1121
    %v1139 = vadd.f32 %v980, %v1138
    %v1140 = vtanh.pop %v1139
    %v1141 = vsub.f32 1.0, %v1137
    %v1142 = vmul.f32 %v1141, %v1140
    %v1143 = vmul.f32 %v1137, %v841
    %v1144 = vadd.f32 %v1142, %v1143
    %1145 = vmatprep.subr.mxu0 %v107
    %1146 = vmatpush1.msra.mxu0 %v106
    %1147 = vmatprep.subr.mxu0 %v110
    %1148 = vmatpush1.msra.mxu0 %v109
    %1149 = vmatprep.subr.mxu0 %v113
    %1150 = vmatpush1.msra.mxu0 %v112
    %1151 = vmatprep.subr.mxu0 %v116
    %1152 = vmatpush1.msra.mxu0 %v115
    %1153 = vmatprep.subr.mxu0 %v119
    %1154 = vmatpush1.msra.mxu0 %v118
    %1155 = vmatprep.subr.mxu0 %v122
    %1156 = vmatpush1.msra.mxu0 %v121
    %1157 = vmatprep.subr.mxu0 %v125
    %1158 = vmatpush1.msra.mxu0 %v124
    %1159 = vmatprep.subr.mxu0 %v128
    %1160 = vmatpush1.msra.mxu0 %v127
    %1161 = vmatprep.subr.mxu0 %v131
    %1162 = vmatpush1.msra.mxu0 %v130
    %1163 = vmatprep.subr.mxu0 %v134
    %1164 = vmatpush1.msra.mxu0 %v133
    %1165 = vmatprep.subr.mxu0 %v137
    %1166 = vmatpush1.msra.mxu0 %v136
    %1167 = vmatprep.subr.mxu0 %v140
    %1168 = vmatpush1.msra.mxu0 %v139
    %1169 = vmatprep.subr.mxu0 %v143
    %1170 = vmatpush1.msra.mxu0 %v142
    %1171 = vmatprep.subr.mxu0 %v146
    %1172 = vmatpush1.msra.mxu0 %v145
    %1173 = vmatprep.subr.mxu0 %v149
    %1174 = vmatpush1.msra.mxu0 %v148
    %1175 = vmatprep.subr.mxu0 %v152
    %1176 = vmatpush1.msra.mxu0 %v151
    %1177 = vmatprep.subr.mxu0 0.0
    %1178 = vmatpush1.msra.mxu0 0.0
    %1179 = vmatprep.subr.mxu0 0.0
    %1180 = vmatpush1.msra.mxu0 0.0
    %1181 = vmatprep.subr.mxu0 0.0
    %1182 = vmatpush1.msra.mxu0 0.0
    %1183 = vmatprep.subr.mxu0 0.0
    %1184 = vmatpush1.msra.mxu0 0.0
    %1185 = vmatprep.subr.mxu0 0.0
    %1186 = vmatpush1.msra.mxu0 0.0
    %1187 = vmatprep.subr.mxu0 0.0
    %1188 = vmatpush1.msra.mxu0 0.0
    %1189 = vmatprep.subr.mxu0 0.0
    %1190 = vmatpush1.msra.mxu0 0.0
    %1191 = vmatprep.subr.mxu0 0.0
    %1192 = vmatpush1.msra.mxu0 0.0
    %1193 = vmatprep.subr.mxu0 0.0
    %1194 = vmatpush1.msra.mxu0 0.0
    %1195 = vmatprep.subr.mxu0 0.0
    %1196 = vmatpush1.msra.mxu0 0.0
    %1197 = vmatprep.subr.mxu0 0.0
    %1198 = vmatpush1.msra.mxu0 0.0
    %1199 = vmatprep.subr.mxu0 0.0
    %1200 = vmatpush1.msra.mxu0 0.0
    %1201 = vmatprep.subr.mxu0 0.0
    %1202 = vmatpush1.msra.mxu0 0.0
    %1203 = vmatprep.subr.mxu0 0.0
    %1204 = vmatpush1.msra.mxu0 0.0
    %1205 = vmatprep.subr.mxu0 0.0
    %1206 = vmatpush1.msra.mxu0 0.0
    %1207 = vmatprep.subr.mxu0 0.0
    %1208 = vmatpush1.msra.mxu0 0.0
    %1209 = vmatprep.mubr.f32.mxu0 0.0
    %1210 = vmatmul.mubr.f32.gmra.mrb[0].mxu0 %v101
    %v1211 = vpop.f32.mrb[0].mxu0
    %v1212 = vadd.f32 %v208, %v1211
    %v1213 = vpop.f32.mrb[0].mxu0
    %v1214 = vadd.f32 %v212, %v1213
    %1215 = vdwg.mxu0
    %1216 = vmatprep.subr.mxu0 0.0
    %1217 = vmatpush1.msra.mxu0 %v108
    %1218 = vmatprep.subr.mxu0 0.0
    %1219 = vmatpush1.msra.mxu0 %v111
    %1220 = vmatprep.subr.mxu0 0.0
    %1221 = vmatpush1.msra.mxu0 %v114
    %1222 = vmatprep.subr.mxu0 0.0
    %1223 = vmatpush1.msra.mxu0 %v117
    %1224 = vmatprep.subr.mxu0 0.0
    %1225 = vmatpush1.msra.mxu0 %v120
    %1226 = vmatprep.subr.mxu0 0.0
    %1227 = vmatpush1.msra.mxu0 %v123
    %1228 = vmatprep.subr.mxu0 0.0
    %1229 = vmatpush1.msra.mxu0 %v126
    %1230 = vmatprep.subr.mxu0 0.0
    %1231 = vmatpush1.msra.mxu0 %v129
    %1232 = vmatprep.subr.mxu0 0.0
    %1233 = vmatpush1.msra.mxu0 %v132
    %1234 = vmatprep.subr.mxu0 0.0
    %1235 = vmatpush1.msra.mxu0 %v135
    %1236 = vmatprep.subr.mxu0 0.0
    %1237 = vmatpush1.msra.mxu0 %v138
    %1238 = vmatprep.subr.mxu0 0.0
    %1239 = vmatpush1.msra.mxu0 %v141
    %1240 = vmatprep.subr.mxu0 0.0
    %1241 = vmatpush1.msra.mxu0 %v144
    %1242 = vmatprep.subr.mxu0 0.0
    %1243 = vmatpush1.msra.mxu0 %v147
    %1244 = vmatprep.subr.mxu0 0.0
    %1245 = vmatpush1.msra.mxu0 %v150
    %1246 = vmatprep.subr.mxu0 0.0
    %1247 = vmatpush1.msra.mxu0 %v153
    %1248 = vmatprep.subr.mxu0 0.0
    %1249 = vmatpush1.msra.mxu0 0.0
    %1250 = vmatprep.subr.mxu0 0.0
    %1251 = vmatpush1.msra.mxu0 0.0
    %1252 = vmatprep.subr.mxu0 0.0
    %1253 = vmatpush1.msra.mxu0 0.0
    %1254 = vmatprep.subr.mxu0 0.0
    %1255 = vmatpush1.msra.mxu0 0.0
    %1256 = vmatprep.subr.mxu0 0.0
    %1257 = vmatpush1.msra.mxu0 0.0
    %1258 = vmatprep.subr.mxu0 0.0
    %1259 = vmatpush1.msra.mxu0 0.0
    %1260 = vmatprep.subr.mxu0 0.0
    %1261 = vmatpush1.msra.mxu0 0.0
    %1262 = vmatprep.subr.mxu0 0.0
    %1263 = vmatpush1.msra.mxu0 0.0
    %1264 = vmatprep.subr.mxu0 0.0
    %1265 = vmatpush1.msra.mxu0 0.0
    %1266 = vmatprep.subr.mxu0 0.0
    %1267 = vmatpush1.msra.mxu0 0.0
    %1268 = vmatprep.subr.mxu0 0.0
    %1269 = vmatpush1.msra.mxu0 0.0
    %1270 = vmatprep.subr.mxu0 0.0
    %1271 = vmatpush1.msra.mxu0 0.0
    %1272 = vmatprep.subr.mxu0 0.0
    %1273 = vmatpush1.msra.mxu0 0.0
    %1274 = vmatprep.subr.mxu0 0.0
    %1275 = vmatpush1.msra.mxu0 0.0
    %1276 = vmatprep.subr.mxu0 0.0
    %1277 = vmatpush1.msra.mxu0 0.0
    %1278 = vmatprep.subr.mxu0 0.0
    %1279 = vmatpush1.msra.mxu0 0.0
    %1280 = vmatprep.mubr.f32.mxu0 0.0
    %1281 = vmatmul.mubr.f32.gmra.mrb[0].mxu0 %v101
    %v1282 = vpop.f32.mrb[0].mxu0
    %v1283 = vadd.f32 %v216, %v1282
    %v1284 = vpop.f32.mrb[0].mxu0
    %1285 = vdwg.mxu0
    %1286 = vmatprep.subr.mxu0 %v155
    %1287 = vmatpush1.msra.mxu0 %v154
    %1288 = vmatprep.subr.mxu0 %v158
    %1289 = vmatpush1.msra.mxu0 %v157
    %1290 = vmatprep.subr.mxu0 %v161
    %1291 = vmatpush1.msra.mxu0 %v160
    %1292 = vmatprep.subr.mxu0 %v164
    %1293 = vmatpush1.msra.mxu0 %v163
    %1294 = vmatprep.subr.mxu0 %v167
    %1295 = vmatpush1.msra.mxu0 %v166
    %1296 = vmatprep.subr.mxu0 %v170
    %1297 = vmatpush1.msra.mxu0 %v169
    %1298 = vmatprep.subr.mxu0 %v173
    %1299 = vmatpush1.msra.mxu0 %v172
    %1300 = vmatprep.subr.mxu0 %v176
    %1301 = vmatpush1.msra.mxu0 %v175
    %1302 = vmatprep.subr.mxu0 %v179
    %1303 = vmatpush1.msra.mxu0 %v178
    %1304 = vmatprep.subr.mxu0 %v182
    %1305 = vmatpush1.msra.mxu0 %v181
    %1306 = vmatprep.subr.mxu0 %v185
    %1307 = vmatpush1.msra.mxu0 %v184
    %1308 = vmatprep.subr.mxu0 %v188
    %1309 = vmatpush1.msra.mxu0 %v187
    %1310 = vmatprep.subr.mxu0 %v191
    %1311 = vmatpush1.msra.mxu0 %v190
    %1312 = vmatprep.subr.mxu0 %v194
    %1313 = vmatpush1.msra.mxu0 %v193
    %1314 = vmatprep.subr.mxu0 %v197
    %1315 = vmatpush1.msra.mxu0 %v196
    %1316 = vmatprep.subr.mxu0 %v200
    %1317 = vmatpush1.msra.mxu0 %v199
    %1318 = vmatprep.subr.mxu0 0.0
    %1319 = vmatpush1.msra.mxu0 0.0
    %1320 = vmatprep.subr.mxu0 0.0
    %1321 = vmatpush1.msra.mxu0 0.0
    %1322 = vmatprep.subr.mxu0 0.0
    %1323 = vmatpush1.msra.mxu0 0.0
    %1324 = vmatprep.subr.mxu0 0.0
    %1325 = vmatpush1.msra.mxu0 0.0
    %1326 = vmatprep.subr.mxu0 0.0
    %1327 = vmatpush1.msra.mxu0 0.0
    %1328 = vmatprep.subr.mxu0 0.0
    %1329 = vmatpush1.msra.mxu0 0.0
    %1330 = vmatprep.subr.mxu0 0.0
    %1331 = vmatpush1.msra.mxu0 0.0
    %1332 = vmatprep.subr.mxu0 0.0
    %1333 = vmatpush1.msra.mxu0 0.0
    %1334 = vmatprep.subr.mxu0 0.0
    %1335 = vmatpush1.msra.mxu0 0.0
    %1336 = vmatprep.subr.mxu0 0.0
    %1337 = vmatpush1.msra.mxu0 0.0
    %1338 = vmatprep.subr.mxu0 0.0
    %1339 = vmatpush1.msra.mxu0 0.0
    %1340 = vmatprep.subr.mxu0 0.0
    %1341 = vmatpush1.msra.mxu0 0.0
    %1342 = vmatprep.subr.mxu0 0.0
    %1343 = vmatpush1.msra.mxu0 0.0
    %1344 = vmatprep.subr.mxu0 0.0
    %1345 = vmatpush1.msra.mxu0 0.0
    %1346 = vmatprep.subr.mxu0 0.0
    %1347 = vmatpush1.msra.mxu0 0.0
    %1348 = vmatprep.subr.mxu0 0.0
    %1349 = vmatpush1.msra.mxu0 0.0
    %1350 = vmatprep.mubr.f32.mxu0 0.0
    %1351 = vmatmul.mubr.f32.gmra.mrb[0].mxu0 %v1144
    %v1352 = vpop.f32.mrb[0].mxu0
    %v1353 = vadd.f32 %v365, %v1352
    %v1354 = vpop.f32.mrb[0].mxu0
    %v1355 = vadd.f32 %v369, %v1354
    %1356 = vdwg.mxu0
    %1357 = vmatprep.subr.mxu0 0.0
    %1358 = vmatpush1.msra.mxu0 %v156
    %1359 = vmatprep.subr.mxu0 0.0
    %1360 = vmatpush1.msra.mxu0 %v159
    %1361 = vmatprep.subr.mxu0 0.0
    %1362 = vmatpush1.msra.mxu0 %v162
    %1363 = vmatprep.subr.mxu0 0.0
    %1364 = vmatpush1.msra.mxu0 %v165
    %1365 = vmatprep.subr.mxu0 0.0
    %1366 = vmatpush1.msra.mxu0 %v168
    %1367 = vmatprep.subr.mxu0 0.0
    %1368 = vmatpush1.msra.mxu0 %v171
    %1369 = vmatprep.subr.mxu0 0.0
    %1370 = vmatpush1.msra.mxu0 %v174
    %1371 = vmatprep.subr.mxu0 0.0
    %1372 = vmatpush1.msra.mxu0 %v177
    %1373 = vmatprep.subr.mxu0 0.0
    %1374 = vmatpush1.msra.mxu0 %v180
    %1375 = vmatprep.subr.mxu0 0.0
    %1376 = vmatpush1.msra.mxu0 %v183
    %1377 = vmatprep.subr.mxu0 0.0
    %1378 = vmatpush1.msra.mxu0 %v186
    %1379 = vmatprep.subr.mxu0 0.0
    %1380 = vmatpush1.msra.mxu0 %v189
    %1381 = vmatprep.subr.mxu0 0.0
    %1382 = vmatpush1.msra.mxu0 %v192
    %1383 = vmatprep.subr.mxu0 0.0
    %1384 = vmatpush1.msra.mxu0 %v195
    %1385 = vmatprep.subr.mxu0 0.0
    %1386 = vmatpush1.msra.mxu0 %v198
    %1387 = vmatprep.subr.mxu0 0.0
    %1388 = vmatpush1.msra.mxu0 %v201
    %1389 = vmatprep.subr.mxu0 0.0
    %1390 = vmatpush1.msra.mxu0 0.0
    %1391 = vmatprep.subr.mxu0 0.0
    %1392 = vmatpush1.msra.mxu0 0.0
    %1393 = vmatprep.subr.mxu0 0.0
    %1394 = vmatpush1.msra.mxu0 0.0
    %1395 = vmatprep.subr.mxu0 0.0
    %1396 = vmatpush1.msra.mxu0 0.0
    %1397 = vmatprep.subr.mxu0 0.0
    %1398 = vmatpush1.msra.mxu0 0.0
    %1399 = vmatprep.subr.mxu0 0.0
    %1400 = vmatpush1.msra.mxu0 0.0
    %1401 = vmatprep.subr.mxu0 0.0
    %1402 = vmatpush1.msra.mxu0 0.0
    %1403 = vmatprep.subr.mxu0 0.0
    %1404 = vmatpush1.msra.mxu0 0.0
    %1405 = vmatprep.subr.mxu0 0.0
    %1406 = vmatpush1.msra.mxu0 0.0
    %1407 = vmatprep.subr.mxu0 0.0
    %1408 = vmatpush1.msra.mxu0 0.0
    %1409 = vmatprep.subr.mxu0 0.0
    %1410 = vmatpush1.msra.mxu0 0.0
    %1411 = vmatprep.subr.mxu0 0.0
    %1412 = vmatpush1.msra.mxu0 0.0
    %1413 = vmatprep.subr.mxu0 0.0
    %1414 = vmatpush1.msra.mxu0 0.0
    %1415 = vmatprep.subr.mxu0 0.0
    %1416 = vmatpush1.msra.mxu0 0.0
    %1417 = vmatprep.subr.mxu0 0.0
    %1418 = vmatpush1.msra.mxu0 0.0
    %1419 = vmatprep.subr.mxu0 0.0
    %1420 = vmatpush1.msra.mxu0 0.0
    %1421 = vmatprep.mubr.f32.mxu0 0.0
    %1422 = vmatmul.mubr.f32.gmra.mrb[0].mxu0 %v1144
    %v1423 = vpop.f32.mrb[0].mxu0
    %v1424 = vadd.f32 %v373, %v1423
    %v1425 = vpop.f32.mrb[0].mxu0
    %1426 = vdwg.mxu0
    %v1427 = vadd.f32 %v1212, %v1353
    %v1428 = vsub.f32 0.0, %v1427
    %v1429 = vmul.f32 %v1428, 1.442695
    %v1430 = vpow.pop %v1429
    %v1431 = vadd.f32 %v1430, 1.0
    %v1432 = vrcp.pop %v1431
    %v1433 = vmul.f32 1.0, %v1432
    %v1434 = vadd.f32 %v1214, %v1355
    %v1435 = vsub.f32 0.0, %v1434
    %v1436 = vmul.f32 %v1435, 1.442695
    %v1437 = vpow.pop %v1436
    %v1438 = vadd.f32 %v1437, 1.0
    %v1439 = vrcp.pop %v1438
    %v1440 = vmul.f32 1.0, %v1439
    %v1441 = vmul.f32 %v1433, %v1424
    %v1442 = vadd.f32 %v1283, %v1441
    %v1443 = vtanh.pop %v1442
    %v1444 = vsub.f32 1.0, %v1440
    %v1445 = vmul.f32 %v1444, %v1443
    %v1446 = vmul.f32 %v1440, %v1144
    %v1447 = vadd.f32 %v1445, %v1446
    %1448 = vmatprep.subr.mxu0 %v107
    %1449 = vmatpush1.msra.mxu0 %v106
    %1450 = vmatprep.subr.mxu0 %v110
    %1451 = vmatpush1.msra.mxu0 %v109
    %1452 = vmatprep.subr.mxu0 %v113
    %1453 = vmatpush1.msra.mxu0 %v112
    %1454 = vmatprep.subr.mxu0 %v116
    %1455 = vmatpush1.msra.mxu0 %v115
    %1456 = vmatprep.subr.mxu0 %v119
    %1457 = vmatpush1.msra.mxu0 %v118
    %1458 = vmatprep.subr.mxu0 %v122
    %1459 = vmatpush1.msra.mxu0 %v121
    %1460 = vmatprep.subr.mxu0 %v125
    %1461 = vmatpush1.msra.mxu0 %v124
    %1462 = vmatprep.subr.mxu0 %v128
    %1463 = vmatpush1.msra.mxu0 %v127
    %1464 = vmatprep.subr.mxu0 %v131
    %1465 = vmatpush1.msra.mxu0 %v130
    %1466 = vmatprep.subr.mxu0 %v134
    %1467 = vmatpush1.msra.mxu0 %v133
    %1468 = vmatprep.subr.mxu0 %v137
    %1469 = vmatpush1.msra.mxu0 %v136
    %1470 = vmatprep.subr.mxu0 %v140
    %1471 = vmatpush1.msra.mxu0 %v139
    %1472 = vmatprep.subr.mxu0 %v143
    %1473 = vmatpush1.msra.mxu0 %v142
    %1474 = vmatprep.subr.mxu0 %v146
    %1475 = vmatpush1.msra.mxu0 %v145
    %1476 = vmatprep.subr.mxu0 %v149
    %1477 = vmatpush1.msra.mxu0 %v148
    %1478 = vmatprep.subr.mxu0 %v152
    %1479 = vmatpush1.msra.mxu0 %v151
    %1480 = vmatprep.subr.mxu0 0.0
    %1481 = vmatpush1.msra.mxu0 0.0
    %1482 = vmatprep.subr.mxu0 0.0
    %1483 = vmatpush1.msra.mxu0 0.0
    %1484 = vmatprep.subr.mxu0 0.0
    %1485 = vmatpush1.msra.mxu0 0.0
    %1486 = vmatprep.subr.mxu0 0.0
    %1487 = vmatpush1.msra.mxu0 0.0
    %1488 = vmatprep.subr.mxu0 0.0
    %1489 = vmatpush1.msra.mxu0 0.0
    %1490 = vmatprep.subr.mxu0 0.0
    %1491 = vmatpush1.msra.mxu0 0.0
    %1492 = vmatprep.subr.mxu0 0.0
    %1493 = vmatpush1.msra.mxu0 0.0
    %1494 = vmatprep.subr.mxu0 0.0
    %1495 = vmatpush1.msra.mxu0 0.0
    %1496 = vmatprep.subr.mxu0 0.0
    %1497 = vmatpush1.msra.mxu0 0.0
    %1498 = vmatprep.subr.mxu0 0.0
    %1499 = vmatpush1.msra.mxu0 0.0
    %1500 = vmatprep.subr.mxu0 0.0
    %1501 = vmatpush1.msra.mxu0 0.0
    %1502 = vmatprep.subr.mxu0 0.0
    %1503 = vmatpush1.msra.mxu0 0.0
    %1504 = vmatprep.subr.mxu0 0.0
    %1505 = vmatpush1.msra.mxu0 0.0
    %1506 = vmatprep.subr.mxu0 0.0
    %1507 = vmatpush1.msra.mxu0 0.0
    %1508 = vmatprep.subr.mxu0 0.0
    %1509 = vmatpush1.msra.mxu0 0.0
    %1510 = vmatprep.subr.mxu0 0.0
    %1511 = vmatpush1.msra.mxu0 0.0
    %1512 = vmatprep.mubr.f32.mxu0 0.0
    %1513 = vmatmul.mubr.f32.gmra.mrb[0].mxu0 %v103
    %v1514 = vpop.f32.mrb[0].mxu0
    %v1515 = vadd.f32 %v208, %v1514
    %v1516 = vpop.f32.mrb[0].mxu0
    %v1517 = vadd.f32 %v212, %v1516
    %1518 = vdwg.mxu0
    %1519 = vmatprep.subr.mxu0 0.0
    %1520 = vmatpush1.msra.mxu0 %v108
    %1521 = vmatprep.subr.mxu0 0.0
    %1522 = vmatpush1.msra.mxu0 %v111
    %1523 = vmatprep.subr.mxu0 0.0
    %1524 = vmatpush1.msra.mxu0 %v114
    %1525 = vmatprep.subr.mxu0 0.0
    %1526 = vmatpush1.msra.mxu0 %v117
    %1527 = vmatprep.subr.mxu0 0.0
    %1528 = vmatpush1.msra.mxu0 %v120
    %1529 = vmatprep.subr.mxu0 0.0
    %1530 = vmatpush1.msra.mxu0 %v123
    %1531 = vmatprep.subr.mxu0 0.0
    %1532 = vmatpush1.msra.mxu0 %v126
    %1533 = vmatprep.subr.mxu0 0.0
    %1534 = vmatpush1.msra.mxu0 %v129
    %1535 = vmatprep.subr.mxu0 0.0
    %1536 = vmatpush1.msra.mxu0 %v132
    %1537 = vmatprep.subr.mxu0 0.0
    %1538 = vmatpush1.msra.mxu0 %v135
    %1539 = vmatprep.subr.mxu0 0.0
    %1540 = vmatpush1.msra.mxu0 %v138
    %1541 = vmatprep.subr.mxu0 0.0
    %1542 = vmatpush1.msra.mxu0 %v141
    %1543 = vmatprep.subr.mxu0 0.0
    %1544 = vmatpush1.msra.mxu0 %v144
    %1545 = vmatprep.subr.mxu0 0.0
    %1546 = vmatpush1.msra.mxu0 %v147
    %1547 = vmatprep.subr.mxu0 0.0
    %1548 = vmatpush1.msra.mxu0 %v150
    %1549 = vmatprep.subr.mxu0 0.0
    %1550 = vmatpush1.msra.mxu0 %v153
    %1551 = vmatprep.subr.mxu0 0.0
    %1552 = vmatpush1.msra.mxu0 0.0
    %1553 = vmatprep.subr.mxu0 0.0
    %1554 = vmatpush1.msra.mxu0 0.0
    %1555 = vmatprep.subr.mxu0 0.0
    %1556 = vmatpush1.msra.mxu0 0.0
    %1557 = vmatprep.subr.mxu0 0.0
    %1558 = vmatpush1.msra.mxu0 0.0
    %1559 = vmatprep.subr.mxu0 0.0
    %1560 = vmatpush1.msra.mxu0 0.0
    %1561 = vmatprep.subr.mxu0 0.0
    %1562 = vmatpush1.msra.mxu0 0.0
    %1563 = vmatprep.subr.mxu0 0.0
    %1564 = vmatpush1.msra.mxu0 0.0
    %1565 = vmatprep.subr.mxu0 0.0
    %1566 = vmatpush1.msra.mxu0 0.0
    %1567 = vmatprep.subr.mxu0 0.0
    %1568 = vmatpush1.msra.mxu0 0.0
    %1569 = vmatprep.subr.mxu0 0.0
    %1570 = vmatpush1.msra.mxu0 0.0
    %1571 = vmatprep.subr.mxu0 0.0
    %1572 = vmatpush1.msra.mxu0 0.0
    %1573 = vmatprep.subr.mxu0 0.0
    %1574 = vmatpush1.msra.mxu0 0.0
    %1575 = vmatprep.subr.mxu0 0.0
    %1576 = vmatpush1.msra.mxu0 0.0
    %1577 = vmatprep.subr.mxu0 0.0
    %1578 = vmatpush1.msra.mxu0 0.0
    %1579 = vmatprep.subr.mxu0 0.0
    %1580 = vmatpush1.msra.mxu0 0.0
    %1581 = vmatprep.subr.mxu0 0.0
    %1582 = vmatpush1.msra.mxu0 0.0
    %1583 = vmatprep.mubr.f32.mxu0 0.0
    %1584 = vmatmul.mubr.f32.gmra.mrb[0].mxu0 %v103
    %v1585 = vpop.f32.mrb[0].mxu0
    %v1586 = vadd.f32 %v216, %v1585
    %v1587 = vpop.f32.mrb[0].mxu0
    %1588 = vdwg.mxu0
    %1589 = vmatprep.subr.mxu0 %v155
    %1590 = vmatpush1.msra.mxu0 %v154
    %1591 = vmatprep.subr.mxu0 %v158
    %1592 = vmatpush1.msra.mxu0 %v157
    %1593 = vmatprep.subr.mxu0 %v161
    %1594 = vmatpush1.msra.mxu0 %v160
    %1595 = vmatprep.subr.mxu0 %v164
    %1596 = vmatpush1.msra.mxu0 %v163
    %1597 = vmatprep.subr.mxu0 %v167
    %1598 = vmatpush1.msra.mxu0 %v166
    %1599 = vmatprep.subr.mxu0 %v170
    %1600 = vmatpush1.msra.mxu0 %v169
    %1601 = vmatprep.subr.mxu0 %v173
    %1602 = vmatpush1.msra.mxu0 %v172
    %1603 = vmatprep.subr.mxu0 %v176
    %1604 = vmatpush1.msra.mxu0 %v175
    %1605 = vmatprep.subr.mxu0 %v179
    %1606 = vmatpush1.msra.mxu0 %v178
    %1607 = vmatprep.subr.mxu0 %v182
    %1608 = vmatpush1.msra.mxu0 %v181
    %1609 = vmatprep.subr.mxu0 %v185
    %1610 = vmatpush1.msra.mxu0 %v184
    %1611 = vmatprep.subr.mxu0 %v188
    %1612 = vmatpush1.msra.mxu0 %v187
    %1613 = vmatprep.subr.mxu0 %v191
    %1614 = vmatpush1.msra.mxu0 %v190
    %1615 = vmatprep.subr.mxu0 %v194
    %1616 = vmatpush1.msra.mxu0 %v193
    %1617 = vmatprep.subr.mxu0 %v197
    %1618 = vmatpush1.msra.mxu0 %v196
    %1619 = vmatprep.subr.mxu0 %v200
    %1620 = vmatpush1.msra.mxu0 %v199
    %1621 = vmatprep.subr.mxu0 0.0
    %1622 = vmatpush1.msra.mxu0 0.0
    %1623 = vmatprep.subr.mxu0 0.0
    %1624 = vmatpush1.msra.mxu0 0.0
    %1625 = vmatprep.subr.mxu0 0.0
    %1626 = vmatpush1.msra.mxu0 0.0
    %1627 = vmatprep.subr.mxu0 0.0
    %1628 = vmatpush1.msra.mxu0 0.0
    %1629 = vmatprep.subr.mxu0 0.0
    %1630 = vmatpush1.msra.mxu0 0.0
    %1631 = vmatprep.subr.mxu0 0.0
    %1632 = vmatpush1.msra.mxu0 0.0
    %1633 = vmatprep.subr.mxu0 0.0
    %1634 = vmatpush1.msra.mxu0 0.0
    %1635 = vmatprep.subr.mxu0 0.0
    %1636 = vmatpush1.msra.mxu0 0.0
    %1637 = vmatprep.subr.mxu0 0.0
    %1638 = vmatpush1.msra.mxu0 0.0
    %1639 = vmatprep.subr.mxu0 0.0
    %1640 = vmatpush1.msra.mxu0 0.0
    %1641 = vmatprep.subr.mxu0 0.0
    %1642 = vmatpush1.msra.mxu0 0.0
    %1643 = vmatprep.subr.mxu0 0.0
    %1644 = vmatpush1.msra.mxu0 0.0
    %1645 = vmatprep.subr.mxu0 0.0
    %1646 = vmatpush1.msra.mxu0 0.0
    %1647 = vmatprep.subr.mxu0 0.0
    %1648 = vmatpush1.msra.mxu0 0.0
    %1649 = vmatprep.subr.mxu0 0.0
    %1650 = vmatpush1.msra.mxu0 0.0
    %1651 = vmatprep.subr.mxu0 0.0
    %1652 = vmatpush1.msra.mxu0 0.0
    %1653 = vmatprep.mubr.f32.mxu0 0.0
    %1654 = vmatmul.mubr.f32.gmra.mrb[0].mxu0 %v1447
    %v1655 = vpop.f32.mrb[0].mxu0
    %v1656 = vadd.f32 %v365, %v1655
    %v1657 = vpop.f32.mrb[0].mxu0
    %v1658 = vadd.f32 %v369, %v1657
    %1659 = vdwg.mxu0
    %1660 = vmatprep.subr.mxu0 0.0
    %1661 = vmatpush1.msra.mxu0 %v156
    %1662 = vmatprep.subr.mxu0 0.0
    %1663 = vmatpush1.msra.mxu0 %v159
    %1664 = vmatprep.subr.mxu0 0.0
    %1665 = vmatpush1.msra.mxu0 %v162
    %1666 = vmatprep.subr.mxu0 0.0
    %1667 = vmatpush1.msra.mxu0 %v165
    %1668 = vmatprep.subr.mxu0 0.0
    %1669 = vmatpush1.msra.mxu0 %v168
    %1670 = vmatprep.subr.mxu0 0.0
    %1671 = vmatpush1.msra.mxu0 %v171
    %1672 = vmatprep.subr.mxu0 0.0
    %1673 = vmatpush1.msra.mxu0 %v174
    %1674 = vmatprep.subr.mxu0 0.0
    %1675 = vmatpush1.msra.mxu0 %v177
    %1676 = vmatprep.subr.mxu0 0.0
    %1677 = vmatpush1.msra.mxu0 %v180
    %1678 = vmatprep.subr.mxu0 0.0
    %1679 = vmatpush1.msra.mxu0 %v183
    %1680 = vmatprep.subr.mxu0 0.0
    %1681 = vmatpush1.msra.mxu0 %v186
    %1682 = vmatprep.subr.mxu0 0.0
    %1683 = vmatpush1.msra.mxu0 %v189
    %1684 = vmatprep.subr.mxu0 0.0
    %1685 = vmatpush1.msra.mxu0 %v192
    %1686 = vmatprep.subr.mxu0 0.0
    %1687 = vmatpush1.msra.mxu0 %v195
    %1688 = vmatprep.subr.mxu0 0.0
    %1689 = vmatpush1.msra.mxu0 %v198
    %1690 = vmatprep.subr.mxu0 0.0
    %1691 = vmatpush1.msra.mxu0 %v201
    %1692 = vmatprep.subr.mxu0 0.0
    %1693 = vmatpush1.msra.mxu0 0.0
    %1694 = vmatprep.subr.mxu0 0.0
    %1695 = vmatpush1.msra.mxu0 0.0
    %1696 = vmatprep.subr.mxu0 0.0
    %1697 = vmatpush1.msra.mxu0 0.0
    %1698 = vmatprep.subr.mxu0 0.0
    %1699 = vmatpush1.msra.mxu0 0.0
    %1700 = vmatprep.subr.mxu0 0.0
    %1701 = vmatpush1.msra.mxu0 0.0
    %1702 = vmatprep.subr.mxu0 0.0
    %1703 = vmatpush1.msra.mxu0 0.0
    %1704 = vmatprep.subr.mxu0 0.0
    %1705 = vmatpush1.msra.mxu0 0.0
    %1706 = vmatprep.subr.mxu0 0.0
    %1707 = vmatpush1.msra.mxu0 0.0
    %1708 = vmatprep.subr.mxu0 0.0
    %1709 = vmatpush1.msra.mxu0 0.0
    %1710 = vmatprep.subr.mxu0 0.0
    %1711 = vmatpush1.msra.mxu0 0.0
    %1712 = vmatprep.subr.mxu0 0.0
    %1713 = vmatpush1.msra.mxu0 0.0
    %1714 = vmatprep.subr.mxu0 0.0
    %1715 = vmatpush1.msra.mxu0 0.0
    %1716 = vmatprep.subr.mxu0 0.0
    %1717 = vmatpush1.msra.mxu0 0.0
    %1718 = vmatprep.subr.mxu0 0.0
    %1719 = vmatpush1.msra.mxu0 0.0
    %1720 = vmatprep.subr.mxu0 0.0
    %1721 = vmatpush1.msra.mxu0 0.0
    %1722 = vmatprep.subr.mxu0 0.0
    %1723 = vmatpush1.msra.mxu0 0.0
    %1724 = vmatprep.mubr.f32.mxu0 0.0
    %1725 = vmatmul.mubr.f32.gmra.mrb[0].mxu0 %v1447
    %v1726 = vpop.f32.mrb[0].mxu0
    %v1727 = vadd.f32 %v373, %v1726
    %v1728 = vpop.f32.mrb[0].mxu0
    %1729 = vdwg.mxu0
    %v1730 = vadd.f32 %v1515, %v1656
    %v1731 = vsub.f32 0.0, %v1730
    %v1732 = vmul.f32 %v1731, 1.442695
    %v1733 = vpow.pop %v1732
    %v1734 = vadd.f32 %v1733, 1.0
    %v1735 = vrcp.pop %v1734
    %v1736 = vmul.f32 1.0, %v1735
    %v1737 = vadd.f32 %v1517, %v1658
    %v1738 = vsub.f32 0.0, %v1737
    %v1739 = vmul.f32 %v1738, 1.442695
    %v1740 = vpow.pop %v1739
    %v1741 = vadd.f32 %v1740, 1.0
    %v1742 = vrcp.pop %v1741
    %v1743 = vmul.f32 1.0, %v1742
    %v1744 = vmul.f32 %v1736, %v1727
    %v1745 = vadd.f32 %v1586, %v1744
    %v1746 = vtanh.pop %v1745
    %v1747 = vsub.f32 1.0, %v1743
    %v1748 = vmul.f32 %v1747, %v1746
    %v1749 = vmul.f32 %v1743, %v1447
    %v1750 = vadd.f32 %v1748, %v1749
    %1751 = vmatprep.subr.mxu0 %v107
    %1752 = vmatpush1.msra.mxu0 %v106
    %1753 = vmatprep.subr.mxu0 %v110
    %1754 = vmatpush1.msra.mxu0 %v109
    %1755 = vmatprep.subr.mxu0 %v113
    %1756 = vmatpush1.msra.mxu0 %v112
    %1757 = vmatprep.subr.mxu0 %v116
    %1758 = vmatpush1.msra.mxu0 %v115
    %1759 = vmatprep.subr.mxu0 %v119
    %1760 = vmatpush1.msra.mxu0 %v118
    %1761 = vmatprep.subr.mxu0 %v122
    %1762 = vmatpush1.msra.mxu0 %v121
    %1763 = vmatprep.subr.mxu0 %v125
    %1764 = vmatpush1.msra.mxu0 %v124
    %1765 = vmatprep.subr.mxu0 %v128
    %1766 = vmatpush1.msra.mxu0 %v127
    %1767 = vmatprep.subr.mxu0 %v131
    %1768 = vmatpush1.msra.mxu0 %v130
    %1769 = vmatprep.subr.mxu0 %v134
    %1770 = vmatpush1.msra.mxu0 %v133
    %1771 = vmatprep.subr.mxu0 %v137
    %1772 = vmatpush1.msra.mxu0 %v136
    %1773 = vmatprep.subr.mxu0 %v140
    %1774 = vmatpush1.msra.mxu0 %v139
    %1775 = vmatprep.subr.mxu0 %v143
    %1776 = vmatpush1.msra.mxu0 %v142
    %1777 = vmatprep.subr.mxu0 %v146
    %1778 = vmatpush1.msra.mxu0 %v145
    %1779 = vmatprep.subr.mxu0 %v149
    %1780 = vmatpush1.msra.mxu0 %v148
    %1781 = vmatprep.subr.mxu0 %v152
    %1782 = vmatpush1.msra.mxu0 %v151
    %1783 = vmatprep.subr.mxu0 0.0
    %1784 = vmatpush1.msra.mxu0 0.0
    %1785 = vmatprep.subr.mxu0 0.0
    %1786 = vmatpush1.msra.mxu0 0.0
    %1787 = vmatprep.subr.mxu0 0.0
    %1788 = vmatpush1.msra.mxu0 0.0
    %1789 = vmatprep.subr.mxu0 0.0
    %1790 = vmatpush1.msra.mxu0 0.0
    %1791 = vmatprep.subr.mxu0 0.0
    %1792 = vmatpush1.msra.mxu0 0.0
    %1793 = vmatprep.subr.mxu0 0.0
    %1794 = vmatpush1.msra.mxu0 0.0
    %1795 = vmatprep.subr.mxu0 0.0
    %1796 = vmatpush1.msra.mxu0 0.0
    %1797 = vmatprep.subr.mxu0 0.0
    %1798 = vmatpush1.msra.mxu0 0.0
    %1799 = vmatprep.subr.mxu0 0.0
    %1800 = vmatpush1.msra.mxu0 0.0
    %1801 = vmatprep.subr.mxu0 0.0
    %1802 = vmatpush1.msra.mxu0 0.0
    %1803 = vmatprep.subr.mxu0 0.0
    %1804 = vmatpush1.msra.mxu0 0.0
    %1805 = vmatprep.subr.mxu0 0.0
    %1806 = vmatpush1.msra.mxu0 0.0
    %1807 = vmatprep.subr.mxu0 0.0
    %1808 = vmatpush1.msra.mxu0 0.0
    %1809 = vmatprep.subr.mxu0 0.0
    %1810 = vmatpush1.msra.mxu0 0.0
    %1811 = vmatprep.subr.mxu0 0.0
    %1812 = vmatpush1.msra.mxu0 0.0
    %1813 = vmatprep.subr.mxu0 0.0
    %1814 = vmatpush1.msra.mxu0 0.0
    %1815 = vmatprep.mubr.f32.mxu0 0.0
    %1816 = vmatmul.mubr.f32.gmra.mrb[0].mxu0 %v105
    %v1817 = vpop.f32.mrb[0].mxu0
    %v1818 = vadd.f32 %v208, %v1817
    %v1819 = vpop.f32.mrb[0].mxu0
    %v1820 = vadd.f32 %v212, %v1819
    %1821 = vdwg.mxu0
    %1822 = vmatprep.subr.mxu0 0.0
    %1823 = vmatpush1.msra.mxu0 %v108
    %1824 = vmatprep.subr.mxu0 0.0
    %1825 = vmatpush1.msra.mxu0 %v111
    %1826 = vmatprep.subr.mxu0 0.0
    %1827 = vmatpush1.msra.mxu0 %v114
    %1828 = vmatprep.subr.mxu0 0.0
    %1829 = vmatpush1.msra.mxu0 %v117
    %1830 = vmatprep.subr.mxu0 0.0
    %1831 = vmatpush1.msra.mxu0 %v120
    %1832 = vmatprep.subr.mxu0 0.0
    %1833 = vmatpush1.msra.mxu0 %v123
    %1834 = vmatprep.subr.mxu0 0.0
    %1835 = vmatpush1.msra.mxu0 %v126
    %1836 = vmatprep.subr.mxu0 0.0
    %1837 = vmatpush1.msra.mxu0 %v129
    %1838 = vmatprep.subr.mxu0 0.0
    %1839 = vmatpush1.msra.mxu0 %v132
    %1840 = vmatprep.subr.mxu0 0.0
    %1841 = vmatpush1.msra.mxu0 %v135
    %1842 = vmatprep.subr.mxu0 0.0
    %1843 = vmatpush1.msra.mxu0 %v138
    %1844 = vmatprep.subr.mxu0 0.0
    %1845 = vmatpush1.msra.mxu0 %v141
    %1846 = vmatprep.subr.mxu0 0.0
    %1847 = vmatpush1.msra.mxu0 %v144
    %1848 = vmatprep.subr.mxu0 0.0
    %1849 = vmatpush1.msra.mxu0 %v147
    %1850 = vmatprep.subr.mxu0 0.0
    %1851 = vmatpush1.msra.mxu0 %v150
    %1852 = vmatprep.subr.mxu0 0.0
    %1853 = vmatpush1.msra.mxu0 %v153
    %1854 = vmatprep.subr.mxu0 0.0
    %1855 = vmatpush1.msra.mxu0 0.0
    %1856 = vmatprep.subr.mxu0 0.0
    %1857 = vmatpush1.msra.mxu0 0.0
    %1858 = vmatprep.subr.mxu0 0.0
    %1859 = vmatpush1.msra.mxu0 0.0
    %1860 = vmatprep.subr.mxu0 0.0
    %1861 = vmatpush1.msra.mxu0 0.0
    %1862 = vmatprep.subr.mxu0 0.0
    %1863 = vmatpush1.msra.mxu0 0.0
    %1864 = vmatprep.subr.mxu0 0.0
    %1865 = vmatpush1.msra.mxu0 0.0
    %1866 = vmatprep.subr.mxu0 0.0
    %1867 = vmatpush1.msra.mxu0 0.0
    %1868 = vmatprep.subr.mxu0 0.0
    %1869 = vmatpush1.msra.mxu0 0.0
    %1870 = vmatprep.subr.mxu0 0.0
    %1871 = vmatpush1.msra.mxu0 0.0
    %1872 = vmatprep.subr.mxu0 0.0
    %1873 = vmatpush1.msra.mxu0 0.0
    %1874 = vmatprep.subr.mxu0 0.0
    %1875 = vmatpush1.msra.mxu0 0.0
    %1876 = vmatprep.subr.mxu0 0.0
    %1877 = vmatpush1.msra.mxu0 0.0
    %1878 = vmatprep.subr.mxu0 0.0
    %1879 = vmatpush1.msra.mxu0 0.0
    %1880 = vmatprep.subr.mxu0 0.0
    %1881 = vmatpush1.msra.mxu0 0.0
    %1882 = vmatprep.subr.mxu0 0.0
    %1883 = vmatpush1.msra.mxu0 0.0
    %1884 = vmatprep.subr.mxu0 0.0
    %1885 = vmatpush1.msra.mxu0 0.0
    %1886 = vmatprep.mubr.f32.mxu0 0.0
    %1887 = vmatmul.mubr.f32.gmra.mrb[0].mxu0 %v105
    %v1888 = vpop.f32.mrb[0].mxu0
    %v1889 = vadd.f32 %v216, %v1888
    %v1890 = vpop.f32.mrb[0].mxu0
    %1891 = vdwg.mxu0
    %1892 = vmatprep.subr.mxu0 %v155
    %1893 = vmatpush1.msra.mxu0 %v154
    %1894 = vmatprep.subr.mxu0 %v158
    %1895 = vmatpush1.msra.mxu0 %v157
    %1896 = vmatprep.subr.mxu0 %v161
    %1897 = vmatpush1.msra.mxu0 %v160
    %1898 = vmatprep.subr.mxu0 %v164
    %1899 = vmatpush1.msra.mxu0 %v163
    %1900 = vmatprep.subr.mxu0 %v167
    %1901 = vmatpush1.msra.mxu0 %v166
    %1902 = vmatprep.subr.mxu0 %v170
    %1903 = vmatpush1.msra.mxu0 %v169
    %1904 = vmatprep.subr.mxu0 %v173
    %1905 = vmatpush1.msra.mxu0 %v172
    %1906 = vmatprep.subr.mxu0 %v176
    %1907 = vmatpush1.msra.mxu0 %v175
    %1908 = vmatprep.subr.mxu0 %v179
    %1909 = vmatpush1.msra.mxu0 %v178
    %1910 = vmatprep.subr.mxu0 %v182
    %1911 = vmatpush1.msra.mxu0 %v181
    %1912 = vmatprep.subr.mxu0 %v185
    %1913 = vmatpush1.msra.mxu0 %v184
    %1914 = vmatprep.subr.mxu0 %v188
    %1915 = vmatpush1.msra.mxu0 %v187
    %1916 = vmatprep.subr.mxu0 %v191
    %1917 = vmatpush1.msra.mxu0 %v190
    %1918 = vmatprep.subr.mxu0 %v194
    %1919 = vmatpush1.msra.mxu0 %v193
    %1920 = vmatprep.subr.mxu0 %v197
    %1921 = vmatpush1.msra.mxu0 %v196
    %1922 = vmatprep.subr.mxu0 %v200
    %1923 = vmatpush1.msra.mxu0 %v199
    %1924 = vmatprep.subr.mxu0 0.0
    %1925 = vmatpush1.msra.mxu0 0.0
    %1926 = vmatprep.subr.mxu0 0.0
    %1927 = vmatpush1.msra.mxu0 0.0
    %1928 = vmatprep.subr.mxu0 0.0
    %1929 = vmatpush1.msra.mxu0 0.0
    %1930 = vmatprep.subr.mxu0 0.0
    %1931 = vmatpush1.msra.mxu0 0.0
    %1932 = vmatprep.subr.mxu0 0.0
    %1933 = vmatpush1.msra.mxu0 0.0
    %1934 = vmatprep.subr.mxu0 0.0
    %1935 = vmatpush1.msra.mxu0 0.0
    %1936 = vmatprep.subr.mxu0 0.0
    %1937 = vmatpush1.msra.mxu0 0.0
    %1938 = vmatprep.subr.mxu0 0.0
    %1939 = vmatpush1.msra.mxu0 0.0
    %1940 = vmatprep.subr.mxu0 0.0
    %1941 = vmatpush1.msra.mxu0 0.0
    %1942 = vmatprep.subr.mxu0 0.0
    %1943 = vmatpush1.msra.mxu0 0.0
    %1944 = vmatprep.subr.mxu0 0.0
    %1945 = vmatpush1.msra.mxu0 0.0
    %1946 = vmatprep.subr.mxu0 0.0
    %1947 = vmatpush1.msra.mxu0 0.0
    %1948 = vmatprep.subr.mxu0 0.0
    %1949 = vmatpush1.msra.mxu0 0.0
    %1950 = vmatprep.subr.mxu0 0.0
    %1951 = vmatpush1.msra.mxu0 0.0
    %1952 = vmatprep.subr.mxu0 0.0
    %1953 = vmatpush1.msra.mxu0 0.0
    %1954 = vmatprep.subr.mxu0 0.0
    %1955 = vmatpush1.msra.mxu0 0.0
    %1956 = vmatprep.mubr.f32.mxu0 0.0
    %1957 = vmatmul.mubr.f32.gmra.mrb[0].mxu0 %v1750
    %v1958 = vpop.f32.mrb[0].mxu0
    %v1959 = vadd.f32 %v365, %v1958
    %v1960 = vpop.f32.mrb[0].mxu0
    %v1961 = vadd.f32 %v369, %v1960
    %1962 = vdwg.mxu0
    %1963 = vmatprep.subr.mxu0 0.0
    %1964 = vmatpush1.msra.mxu0 %v156
    %1965 = vmatprep.subr.mxu0 0.0
    %1966 = vmatpush1.msra.mxu0 %v159
    %1967 = vmatprep.subr.mxu0 0.0
    %1968 = vmatpush1.msra.mxu0 %v162
    %1969 = vmatprep.subr.mxu0 0.0
    %1970 = vmatpush1.msra.mxu0 %v165
    %1971 = vmatprep.subr.mxu0 0.0
    %1972 = vmatpush1.msra.mxu0 %v168
    %1973 = vmatprep.subr.mxu0 0.0
    %1974 = vmatpush1.msra.mxu0 %v171
    %1975 = vmatprep.subr.mxu0 0.0
    %1976 = vmatpush1.msra.mxu0 %v174
    %1977 = vmatprep.subr.mxu0 0.0
    %1978 = vmatpush1.msra.mxu0 %v177
    %1979 = vmatprep.subr.mxu0 0.0
    %1980 = vmatpush1.msra.mxu0 %v180
    %1981 = vmatprep.subr.mxu0 0.0
    %1982 = vmatpush1.msra.mxu0 %v183
    %1983 = vmatprep.subr.mxu0 0.0
    %1984 = vmatpush1.msra.mxu0 %v186
    %1985 = vmatprep.subr.mxu0 0.0
    %1986 = vmatpush1.msra.mxu0 %v189
    %1987 = vmatprep.subr.mxu0 0.0
    %1988 = vmatpush1.msra.mxu0 %v192
    %1989 = vmatprep.subr.mxu0 0.0
    %1990 = vmatpush1.msra.mxu0 %v195
    %1991 = vmatprep.subr.mxu0 0.0
    %1992 = vmatpush1.msra.mxu0 %v198
    %1993 = vmatprep.subr.mxu0 0.0
    %1994 = vmatpush1.msra.mxu0 %v201
    %1995 = vmatprep.subr.mxu0 0.0
    %1996 = vmatpush1.msra.mxu0 0.0
    %1997 = vmatprep.subr.mxu0 0.0
    %1998 = vmatpush1.msra.mxu0 0.0
    %1999 = vmatprep.subr.mxu0 0.0
    %2000 = vmatpush1.msra.mxu0 0.0
    %2001 = vmatprep.subr.mxu0 0.0
    %2002 = vmatpush1.msra.mxu0 0.0
    %2003 = vmatprep.subr.mxu0 0.0
    %2004 = vmatpush1.msra.mxu0 0.0
    %2005 = vmatprep.subr.mxu0 0.0
    %2006 = vmatpush1.msra.mxu0 0.0
    %2007 = vmatprep.subr.mxu0 0.0
    %2008 = vmatpush1.msra.mxu0 0.0
    %2009 = vmatprep.subr.mxu0 0.0
    %2010 = vmatpush1.msra.mxu0 0.0
    %2011 = vmatprep.subr.mxu0 0.0
    %2012 = vmatpush1.msra.mxu0 0.0
    %2013 = vmatprep.subr.mxu0 0.0
    %2014 = vmatpush1.msra.mxu0 0.0
    %2015 = vmatprep.subr.mxu0 0.0
    %2016 = vmatpush1.msra.mxu0 0.0
    %2017 = vmatprep.subr.mxu0 0.0
    %2018 = vmatpush1.msra.mxu0 0.0
    %2019 = vmatprep.subr.mxu0 0.0
    %2020 = vmatpush1.msra.mxu0 0.0
    %2021 = vmatprep.subr.mxu0 0.0
    %2022 = vmatpush1.msra.mxu0 0.0
    %2023 = vmatprep.subr.mxu0 0.0
    %2024 = vmatpush1.msra.mxu0 0.0
    %2025 = vmatprep.subr.mxu0 0.0
    %2026 = vmatpush1.msra.mxu0 0.0
    %2027 = vmatprep.mubr.f32.mxu0 0.0
    %2028 = vmatmul.mubr.f32.gmra.mrb[0].mxu0 %v1750
    %v2029 = vpop.f32.mrb[0].mxu0
    %v2030 = vadd.f32 %v373, %v2029
    %v2031 = vpop.f32.mrb[0].mxu0
    %2032 = vdwg.mxu0
    %v2033 = vadd.f32 %v1818, %v1959
    %v2034 = vsub.f32 0.0, %v2033
    %v2035 = vmul.f32 %v2034, 1.442695
    %v2036 = vpow.pop %v2035
    %v2037 = vadd.f32 %v2036, 1.0
    %v2038 = vrcp.pop %v2037
    %v2039 = vmul.f32 1.0, %v2038
    %v2040 = vadd.f32 %v1820, %v1961
    %v2041 = vsub.f32 0.0, %v2040
    %v2042 = vmul.f32 %v2041, 1.442695
    %v2043 = vpow.pop %v2042
    %v2044 = vadd.f32 %v2043, 1.0
    %v2045 = vrcp.pop %v2044
    %v2046 = vmul.f32 1.0, %v2045
    %v2047 = vmul.f32 %v2039, %v2030
    %v2048 = vadd.f32 %v1889, %v2047
    %v2049 = vtanh.pop %v2048
    %v2050 = vsub.f32 1.0, %v2046
    %v2051 = vmul.f32 %v2050, %v2049
    %v2052 = vmul.f32 %v2046, %v1750
    %v2053 = vadd.f32 %v2051, %v2052
    %s2054 = scalar_lea.vmem [#allocation5], 384
    %v2055 = vld [vmem:[%s2054] sm:$0xff]
    %v2056 = vld [vmem:[%s2054 + $0x8] sm:$0xff]
    %v2057 = vld [vmem:[%s2054 + $0x10] sm:$0xff]
    %v2058 = vld [vmem:[%s2054 + $0x18] sm:$0xff]
    %v2059 = vld [vmem:[%s2054 + $0x20] sm:$0xff]
    %v2060 = vld [vmem:[%s2054 + $0x28] sm:$0xff]
    %v2061 = vld [vmem:[%s2054 + $0x30] sm:$0xff]
    %v2062 = vld [vmem:[%s2054 + $0x38] sm:$0xff]
    %v2063 = vld [vmem:[%s2054 + $0x40] sm:$0xff]
    %v2064 = vld [vmem:[%s2054 + $0x48] sm:$0xff]
    %v2065 = vld [vmem:[%s2054 + $0x50] sm:$0xff]
    %v2066 = vld [vmem:[%s2054 + $0x58] sm:$0xff]
    %v2067 = vld [vmem:[%s2054 + $0x60] sm:$0xff]
    %v2068 = vld [vmem:[%s2054 + $0x68] sm:$0xff]
    %v2069 = vld [vmem:[%s2054 + $0x70] sm:$0xff]
    %v2070 = vld [vmem:[%s2054 + $0x78] sm:$0xff]
    %v2071 = vld [vmem:[%s2054 + $0x80] sm:$0xff]
    %v2072 = vld [vmem:[%s2054 + $0x88] sm:$0xff]
    %v2073 = vld [vmem:[%s2054 + $0x90] sm:$0xff]
    %v2074 = vld [vmem:[%s2054 + $0x98] sm:$0xff]
    %v2075 = vld [vmem:[%s2054 + $0xa0] sm:$0xff]
    %v2076 = vld [vmem:[%s2054 + $0xa8] sm:$0xff]
    %v2077 = vld [vmem:[%s2054 + $0xb0] sm:$0xff]
    %v2078 = vld [vmem:[%s2054 + $0xb8] sm:$0xff]
    %v2079 = vld [vmem:[%s2054 + $0xc0] sm:$0xff]
    %v2080 = vld [vmem:[%s2054 + $0xc8] sm:$0xff]
    %v2081 = vld [vmem:[%s2054 + $0xd0] sm:$0xff]
    %v2082 = vld [vmem:[%s2054 + $0xd8] sm:$0xff]
    %v2083 = vld [vmem:[%s2054 + $0xe0] sm:$0xff]
    %v2084 = vld [vmem:[%s2054 + $0xe8] sm:$0xff]
    %v2085 = vld [vmem:[%s2054 + $0xf0] sm:$0xff]
    %v2086 = vld [vmem:[%s2054 + $0xf8] sm:$0xff]
    %v2087 = vld [vmem:[%s2054 + $0x100] sm:$0xff]
    %v2088 = vld [vmem:[%s2054 + $0x108] sm:$0xff]
    %v2089 = vld [vmem:[%s2054 + $0x110] sm:$0xff]
    %v2090 = vld [vmem:[%s2054 + $0x118] sm:$0xff]
    %v2091 = vld [vmem:[%s2054 + $0x120] sm:$0xff]
    %v2092 = vld [vmem:[%s2054 + $0x128] sm:$0xff]
    %v2093 = vld [vmem:[%s2054 + $0x130] sm:$0xff]
    %v2094 = vld [vmem:[%s2054 + $0x138] sm:$0xff]
    %v2095 = vld [vmem:[%s2054 + $0x140] sm:$0xff]
    %v2096 = vld [vmem:[%s2054 + $0x148] sm:$0xff]
    %v2097 = vld [vmem:[%s2054 + $0x150] sm:$0xff]
    %v2098 = vld [vmem:[%s2054 + $0x158] sm:$0xff]
    %v2099 = vld [vmem:[%s2054 + $0x160] sm:$0xff]
    %v2100 = vld [vmem:[%s2054 + $0x168] sm:$0xff]
    %v2101 = vld [vmem:[%s2054 + $0x170] sm:$0xff]
    %v2102 = vld [vmem:[%s2054 + $0x178] sm:$0xff]
    %s2103 = scalar_lea.vmem [#allocation7], 384
    %v2104 = vld [vmem:[%s2103] sm:$0xff]
    %v2105 = vld [vmem:[%s2103 + $0x8] sm:$0xff]
    %v2106 = vld [vmem:[%s2103 + $0x10] sm:$0xff]
    %v2107 = vld [vmem:[%s2103 + $0x18] sm:$0xff]
    %v2108 = vld [vmem:[%s2103 + $0x20] sm:$0xff]
    %v2109 = vld [vmem:[%s2103 + $0x28] sm:$0xff]
    %v2110 = vld [vmem:[%s2103 + $0x30] sm:$0xff]
    %v2111 = vld [vmem:[%s2103 + $0x38] sm:$0xff]
    %v2112 = vld [vmem:[%s2103 + $0x40] sm:$0xff]
    %v2113 = vld [vmem:[%s2103 + $0x48] sm:$0xff]
    %v2114 = vld [vmem:[%s2103 + $0x50] sm:$0xff]
    %v2115 = vld [vmem:[%s2103 + $0x58] sm:$0xff]
    %v2116 = vld [vmem:[%s2103 + $0x60] sm:$0xff]
    %v2117 = vld [vmem:[%s2103 + $0x68] sm:$0xff]
    %v2118 = vld [vmem:[%s2103 + $0x70] sm:$0xff]
    %v2119 = vld [vmem:[%s2103 + $0x78] sm:$0xff]
    %v2120 = vld [vmem:[%s2103 + $0x80] sm:$0xff]
    %v2121 = vld [vmem:[%s2103 + $0x88] sm:$0xff]
    %v2122 = vld [vmem:[%s2103 + $0x90] sm:$0xff]
    %v2123 = vld [vmem:[%s2103 + $0x98] sm:$0xff]
    %v2124 = vld [vmem:[%s2103 + $0xa0] sm:$0xff]
    %v2125 = vld [vmem:[%s2103 + $0xa8] sm:$0xff]
    %v2126 = vld [vmem:[%s2103 + $0xb0] sm:$0xff]
    %v2127 = vld [vmem:[%s2103 + $0xb8] sm:$0xff]
    %v2128 = vld [vmem:[%s2103 + $0xc0] sm:$0xff]
    %v2129 = vld [vmem:[%s2103 + $0xc8] sm:$0xff]
    %v2130 = vld [vmem:[%s2103 + $0xd0] sm:$0xff]
    %v2131 = vld [vmem:[%s2103 + $0xd8] sm:$0xff]
    %v2132 = vld [vmem:[%s2103 + $0xe0] sm:$0xff]
    %v2133 = vld [vmem:[%s2103 + $0xe8] sm:$0xff]
    %v2134 = vld [vmem:[%s2103 + $0xf0] sm:$0xff]
    %v2135 = vld [vmem:[%s2103 + $0xf8] sm:$0xff]
    %v2136 = vld [vmem:[%s2103 + $0x100] sm:$0xff]
    %v2137 = vld [vmem:[%s2103 + $0x108] sm:$0xff]
    %v2138 = vld [vmem:[%s2103 + $0x110] sm:$0xff]
    %v2139 = vld [vmem:[%s2103 + $0x118] sm:$0xff]
    %v2140 = vld [vmem:[%s2103 + $0x120] sm:$0xff]
    %v2141 = vld [vmem:[%s2103 + $0x128] sm:$0xff]
    %v2142 = vld [vmem:[%s2103 + $0x130] sm:$0xff]
    %v2143 = vld [vmem:[%s2103 + $0x138] sm:$0xff]
    %v2144 = vld [vmem:[%s2103 + $0x140] sm:$0xff]
    %v2145 = vld [vmem:[%s2103 + $0x148] sm:$0xff]
    %v2146 = vld [vmem:[%s2103 + $0x150] sm:$0xff]
    %v2147 = vld [vmem:[%s2103 + $0x158] sm:$0xff]
    %v2148 = vld [vmem:[%s2103 + $0x160] sm:$0xff]
    %v2149 = vld [vmem:[%s2103 + $0x168] sm:$0xff]
    %v2150 = vld [vmem:[%s2103 + $0x170] sm:$0xff]
    %v2151 = vld [vmem:[%s2103 + $0x178] sm:$0xff]
    %s2152 = scalar_lea.vmem %s3, 3
    %v2153 = vld [vmem:[%s2152] sm:$0x7]
    %s2154 = scalar_lea.vmem [#allocation8], 3
    %v2155 = vld [vmem:[%s2154] sm:$0x7]
    %v2157 = vlaneseq
    %v2158 = vshrl.u32 %v2157, 7
    %v2159 = vsub.s32 0, %v2158
    %v2160 = vrot.slane %v2153, %v2159
    %v2161 = vlaneseq
    %v2162 = vshrl.u32 %v2161, 7
    %v2163 = vsub.s32 1, %v2162
    %v2164 = vrot.slane %v2153, %v2163
    %v2165 = vlaneseq
    %v2166 = vshrl.u32 %v2165, 7
    %v2167 = vsub.s32 2, %v2166
    %v2168 = vrot.slane %v2153, %v2167
    %2172 = vmatprep.subr.mxu0 %v2056
    %2173 = vmatpush1.msra.mxu0 %v2055
    %2174 = vmatprep.subr.mxu0 %v2059
    %2175 = vmatpush1.msra.mxu0 %v2058
    %2176 = vmatprep.subr.mxu0 %v2062
    %2177 = vmatpush1.msra.mxu0 %v2061
    %2178 = vmatprep.subr.mxu0 %v2065
    %2179 = vmatpush1.msra.mxu0 %v2064
    %2180 = vmatprep.subr.mxu0 %v2068
    %2181 = vmatpush1.msra.mxu0 %v2067
    %2182 = vmatprep.subr.mxu0 %v2071
    %2183 = vmatpush1.msra.mxu0 %v2070
    %2184 = vmatprep.subr.mxu0 %v2074
    %2185 = vmatpush1.msra.mxu0 %v2073
    %2186 = vmatprep.subr.mxu0 %v2077
    %2187 = vmatpush1.msra.mxu0 %v2076
    %2188 = vmatprep.subr.mxu0 %v2080
    %2189 = vmatpush1.msra.mxu0 %v2079
    %2190 = vmatprep.subr.mxu0 %v2083
    %2191 = vmatpush1.msra.mxu0 %v2082
    %2192 = vmatprep.subr.mxu0 %v2086
    %2193 = vmatpush1.msra.mxu0 %v2085
    %2194 = vmatprep.subr.mxu0 %v2089
    %2195 = vmatpush1.msra.mxu0 %v2088
    %2196 = vmatprep.subr.mxu0 %v2092
    %2197 = vmatpush1.msra.mxu0 %v2091
    %2198 = vmatprep.subr.mxu0 %v2095
    %2199 = vmatpush1.msra.mxu0 %v2094
    %2200 = vmatprep.subr.mxu0 %v2098
    %2201 = vmatpush1.msra.mxu0 %v2097
    %2202 = vmatprep.subr.mxu0 %v2101
    %2203 = vmatpush1.msra.mxu0 %v2100
    %2204 = vmatprep.subr.mxu0 0.0
    %2205 = vmatpush1.msra.mxu0 0.0
    %2206 = vmatprep.subr.mxu0 0.0
    %2207 = vmatpush1.msra.mxu0 0.0
    %2208 = vmatprep.subr.mxu0 0.0
    %2209 = vmatpush1.msra.mxu0 0.0
    %2210 = vmatprep.subr.mxu0 0.0
    %2211 = vmatpush1.msra.mxu0 0.0
    %2212 = vmatprep.subr.mxu0 0.0
    %2213 = vmatpush1.msra.mxu0 0.0
    %2214 = vmatprep.subr.mxu0 0.0
    %2215 = vmatpush1.msra.mxu0 0.0
    %2216 = vmatprep.subr.mxu0 0.0
    %2217 = vmatpush1.msra.mxu0 0.0
    %2218 = vmatprep.subr.mxu0 0.0
    %2219 = vmatpush1.msra.mxu0 0.0
    %2220 = vmatprep.subr.mxu0 0.0
    %2221 = vmatpush1.msra.mxu0 0.0
    %2222 = vmatprep.subr.mxu0 0.0
    %2223 = vmatpush1.msra.mxu0 0.0
    %2224 = vmatprep.subr.mxu0 0.0
    %2225 = vmatpush1.msra.mxu0 0.0
    %2226 = vmatprep.subr.mxu0 0.0
    %2227 = vmatpush1.msra.mxu0 0.0
    %2228 = vmatprep.subr.mxu0 0.0
    %2229 = vmatpush1.msra.mxu0 0.0
    %2230 = vmatprep.subr.mxu0 0.0
    %2231 = vmatpush1.msra.mxu0 0.0
    %2232 = vmatprep.subr.mxu0 0.0
    %2233 = vmatpush1.msra.mxu0 0.0
    %2234 = vmatprep.subr.mxu0 0.0
    %2235 = vmatpush1.msra.mxu0 0.0
    %2236 = vmatprep.mubr.f32.mxu0 0.0
    %2237 = vmatmul.mubr.f32.gmra.mrb[0].mxu0 %v538
    %v2238 = vpop.f32.mrb[0].mxu0
    %v2239 = vadd.f32 %v2160, %v2238
    %v2240 = vpop.f32.mrb[0].mxu0
    %v2241 = vadd.f32 %v2164, %v2240
    %2242 = vdwg.mxu0
    %2243 = vmatprep.subr.mxu0 0.0
    %2244 = vmatpush1.msra.mxu0 %v2057
    %2245 = vmatprep.subr.mxu0 0.0
    %2246 = vmatpush1.msra.mxu0 %v2060
    %2247 = vmatprep.subr.mxu0 0.0
    %2248 = vmatpush1.msra.mxu0 %v2063
    %2249 = vmatprep.subr.mxu0 0.0
    %2250 = vmatpush1.msra.mxu0 %v2066
    %2251 = vmatprep.subr.mxu0 0.0
    %2252 = vmatpush1.msra.mxu0 %v2069
    %2253 = vmatprep.subr.mxu0 0.0
    %2254 = vmatpush1.msra.mxu0 %v2072
    %2255 = vmatprep.subr.mxu0 0.0
    %2256 = vmatpush1.msra.mxu0 %v2075
    %2257 = vmatprep.subr.mxu0 0.0
    %2258 = vmatpush1.msra.mxu0 %v2078
    %2259 = vmatprep.subr.mxu0 0.0
    %2260 = vmatpush1.msra.mxu0 %v2081
    %2261 = vmatprep.subr.mxu0 0.0
    %2262 = vmatpush1.msra.mxu0 %v2084
    %2263 = vmatprep.subr.mxu0 0.0
    %2264 = vmatpush1.msra.mxu0 %v2087
    %2265 = vmatprep.subr.mxu0 0.0
    %2266 = vmatpush1.msra.mxu0 %v2090
    %2267 = vmatprep.subr.mxu0 0.0
    %2268 = vmatpush1.msra.mxu0 %v2093
    %2269 = vmatprep.subr.mxu0 0.0
    %2270 = vmatpush1.msra.mxu0 %v2096
    %2271 = vmatprep.subr.mxu0 0.0
    %2272 = vmatpush1.msra.mxu0 %v2099
    %2273 = vmatprep.subr.mxu0 0.0
    %2274 = vmatpush1.msra.mxu0 %v2102
    %2275 = vmatprep.subr.mxu0 0.0
    %2276 = vmatpush1.msra.mxu0 0.0
    %2277 = vmatprep.subr.mxu0 0.0
    %2278 = vmatpush1.msra.mxu0 0.0
    %2279 = vmatprep.subr.mxu0 0.0
    %2280 = vmatpush1.msra.mxu0 0.0
    %2281 = vmatprep.subr.mxu0 0.0
    %2282 = vmatpush1.msra.mxu0 0.0
    %2283 = vmatprep.subr.mxu0 0.0
    %2284 = vmatpush1.msra.mxu0 0.0
    %2285 = vmatprep.subr.mxu0 0.0
    %2286 = vmatpush1.msra.mxu0 0.0
    %2287 = vmatprep.subr.mxu0 0.0
    %2288 = vmatpush1.msra.mxu0 0.0
    %2289 = vmatprep.subr.mxu0 0.0
    %2290 = vmatpush1.msra.mxu0 0.0
    %2291 = vmatprep.subr.mxu0 0.0
    %2292 = vmatpush1.msra.mxu0 0.0
    %2293 = vmatprep.subr.mxu0 0.0
    %2294 = vmatpush1.msra.mxu0 0.0
    %2295 = vmatprep.subr.mxu0 0.0
    %2296 = vmatpush1.msra.mxu0 0.0
    %2297 = vmatprep.subr.mxu0 0.0
    %2298 = vmatpush1.msra.mxu0 0.0
    %2299 = vmatprep.subr.mxu0 0.0
    %2300 = vmatpush1.msra.mxu0 0.0
    %2301 = vmatprep.subr.mxu0 0.0
    %2302 = vmatpush1.msra.mxu0 0.0
    %2303 = vmatprep.subr.mxu0 0.0
    %2304 = vmatpush1.msra.mxu0 0.0
    %2305 = vmatprep.subr.mxu0 0.0
    %2306 = vmatpush1.msra.mxu0 0.0
    %2307 = vmatprep.mubr.f32.mxu0 0.0
    %2308 = vmatmul.mubr.f32.gmra.mrb[0].mxu0 %v538
    %v2309 = vpop.f32.mrb[0].mxu0
    %v2310 = vadd.f32 %v2168, %v2309
    %v2311 = vpop.f32.mrb[0].mxu0
    %2312 = vdwg.mxu0
    %v2314 = vlaneseq
    %v2315 = vshrl.u32 %v2314, 7
    %v2316 = vsub.s32 0, %v2315
    %v2317 = vrot.slane %v2155, %v2316
    %v2318 = vlaneseq
    %v2319 = vshrl.u32 %v2318, 7
    %v2320 = vsub.s32 1, %v2319
    %v2321 = vrot.slane %v2155, %v2320
    %v2322 = vlaneseq
    %v2323 = vshrl.u32 %v2322, 7
    %v2324 = vsub.s32 2, %v2323
    %v2325 = vrot.slane %v2155, %v2324
    %2329 = vmatprep.subr.mxu0 %v2105
    %2330 = vmatpush1.msra.mxu0 %v2104
    %2331 = vmatprep.subr.mxu0 %v2108
    %2332 = vmatpush1.msra.mxu0 %v2107
    %2333 = vmatprep.subr.mxu0 %v2111
    %2334 = vmatpush1.msra.mxu0 %v2110
    %2335 = vmatprep.subr.mxu0 %v2114
    %2336 = vmatpush1.msra.mxu0 %v2113
    %2337 = vmatprep.subr.mxu0 %v2117
    %2338 = vmatpush1.msra.mxu0 %v2116
    %2339 = vmatprep.subr.mxu0 %v2120
    %2340 = vmatpush1.msra.mxu0 %v2119
    %2341 = vmatprep.subr.mxu0 %v2123
    %2342 = vmatpush1.msra.mxu0 %v2122
    %2343 = vmatprep.subr.mxu0 %v2126
    %2344 = vmatpush1.msra.mxu0 %v2125
    %2345 = vmatprep.subr.mxu0 %v2129
    %2346 = vmatpush1.msra.mxu0 %v2128
    %2347 = vmatprep.subr.mxu0 %v2132
    %2348 = vmatpush1.msra.mxu0 %v2131
    %2349 = vmatprep.subr.mxu0 %v2135
    %2350 = vmatpush1.msra.mxu0 %v2134
    %2351 = vmatprep.subr.mxu0 %v2138
    %2352 = vmatpush1.msra.mxu0 %v2137
    %2353 = vmatprep.subr.mxu0 %v2141
    %2354 = vmatpush1.msra.mxu0 %v2140
    %2355 = vmatprep.subr.mxu0 %v2144
    %2356 = vmatpush1.msra.mxu0 %v2143
    %2357 = vmatprep.subr.mxu0 %v2147
    %2358 = vmatpush1.msra.mxu0 %v2146
    %2359 = vmatprep.subr.mxu0 %v2150
    %2360 = vmatpush1.msra.mxu0 %v2149
    %2361 = vmatprep.subr.mxu0 0.0
    %2362 = vmatpush1.msra.mxu0 0.0
    %2363 = vmatprep.subr.mxu0 0.0
    %2364 = vmatpush1.msra.mxu0 0.0
    %2365 = vmatprep.subr.mxu0 0.0
    %2366 = vmatpush1.msra.mxu0 0.0
    %2367 = vmatprep.subr.mxu0 0.0
    %2368 = vmatpush1.msra.mxu0 0.0
    %2369 = vmatprep.subr.mxu0 0.0
    %2370 = vmatpush1.msra.mxu0 0.0
    %2371 = vmatprep.subr.mxu0 0.0
    %2372 = vmatpush1.msra.mxu0 0.0
    %2373 = vmatprep.subr.mxu0 0.0
    %2374 = vmatpush1.msra.mxu0 0.0
    %2375 = vmatprep.subr.mxu0 0.0
    %2376 = vmatpush1.msra.mxu0 0.0
    %2377 = vmatprep.subr.mxu0 0.0
    %2378 = vmatpush1.msra.mxu0 0.0
    %2379 = vmatprep.subr.mxu0 0.0
    %2380 = vmatpush1.msra.mxu0 0.0
    %2381 = vmatprep.subr.mxu0 0.0
    %2382 = vmatpush1.msra.mxu0 0.0
    %2383 = vmatprep.subr.mxu0 0.0
    %2384 = vmatpush1.msra.mxu0 0.0
    %2385 = vmatprep.subr.mxu0 0.0
    %2386 = vmatpush1.msra.mxu0 0.0
    %2387 = vmatprep.subr.mxu0 0.0
    %2388 = vmatpush1.msra.mxu0 0.0
    %2389 = vmatprep.subr.mxu0 0.0
    %2390 = vmatpush1.msra.mxu0 0.0
    %2391 = vmatprep.subr.mxu0 0.0
    %2392 = vmatpush1.msra.mxu0 0.0
    %2393 = vmatprep.mubr.f32.mxu0 0.0
    %2394 = vmatmul.mubr.f32.gmra.mrb[0].mxu0 0.0
    %v2395 = vpop.f32.mrb[0].mxu0
    %v2396 = vadd.f32 %v2317, %v2395
    %v2397 = vpop.f32.mrb[0].mxu0
    %v2398 = vadd.f32 %v2321, %v2397
    %2399 = vdwg.mxu0
    %2400 = vmatprep.subr.mxu0 0.0
    %2401 = vmatpush1.msra.mxu0 %v2106
    %2402 = vmatprep.subr.mxu0 0.0
    %2403 = vmatpush1.msra.mxu0 %v2109
    %2404 = vmatprep.subr.mxu0 0.0
    %2405 = vmatpush1.msra.mxu0 %v2112
    %2406 = vmatprep.subr.mxu0 0.0
    %2407 = vmatpush1.msra.mxu0 %v2115
    %2408 = vmatprep.subr.mxu0 0.0
    %2409 = vmatpush1.msra.mxu0 %v2118
    %2410 = vmatprep.subr.mxu0 0.0
    %2411 = vmatpush1.msra.mxu0 %v2121
    %2412 = vmatprep.subr.mxu0 0.0
    %2413 = vmatpush1.msra.mxu0 %v2124
    %2414 = vmatprep.subr.mxu0 0.0
    %2415 = vmatpush1.msra.mxu0 %v2127
    %2416 = vmatprep.subr.mxu0 0.0
    %2417 = vmatpush1.msra.mxu0 %v2130
    %2418 = vmatprep.subr.mxu0 0.0
    %2419 = vmatpush1.msra.mxu0 %v2133
    %2420 = vmatprep.subr.mxu0 0.0
    %2421 = vmatpush1.msra.mxu0 %v2136
    %2422 = vmatprep.subr.mxu0 0.0
    %2423 = vmatpush1.msra.mxu0 %v2139
    %2424 = vmatprep.subr.mxu0 0.0
    %2425 = vmatpush1.msra.mxu0 %v2142
    %2426 = vmatprep.subr.mxu0 0.0
    %2427 = vmatpush1.msra.mxu0 %v2145
    %2428 = vmatprep.subr.mxu0 0.0
    %2429 = vmatpush1.msra.mxu0 %v2148
    %2430 = vmatprep.subr.mxu0 0.0
    %2431 = vmatpush1.msra.mxu0 %v2151
    %2432 = vmatprep.subr.mxu0 0.0
    %2433 = vmatpush1.msra.mxu0 0.0
    %2434 = vmatprep.subr.mxu0 0.0
    %2435 = vmatpush1.msra.mxu0 0.0
    %2436 = vmatprep.subr.mxu0 0.0
    %2437 = vmatpush1.msra.mxu0 0.0
    %2438 = vmatprep.subr.mxu0 0.0
    %2439 = vmatpush1.msra.mxu0 0.0
    %2440 = vmatprep.subr.mxu0 0.0
    %2441 = vmatpush1.msra.mxu0 0.0
    %2442 = vmatprep.subr.mxu0 0.0
    %2443 = vmatpush1.msra.mxu0 0.0
    %2444 = vmatprep.subr.mxu0 0.0
    %2445 = vmatpush1.msra.mxu0 0.0
    %2446 = vmatprep.subr.mxu0 0.0
    %2447 = vmatpush1.msra.mxu0 0.0
    %2448 = vmatprep.subr.mxu0 0.0
    %2449 = vmatpush1.msra.mxu0 0.0
    %2450 = vmatprep.subr.mxu0 0.0
    %2451 = vmatpush1.msra.mxu0 0.0
    %2452 = vmatprep.subr.mxu0 0.0
    %2453 = vmatpush1.msra.mxu0 0.0
    %2454 = vmatprep.subr.mxu0 0.0
    %2455 = vmatpush1.msra.mxu0 0.0
    %2456 = vmatprep.subr.mxu0 0.0
    %2457 = vmatpush1.msra.mxu0 0.0
    %2458 = vmatprep.subr.mxu0 0.0
    %2459 = vmatpush1.msra.mxu0 0.0
    %2460 = vmatprep.subr.mxu0 0.0
    %2461 = vmatpush1.msra.mxu0 0.0
    %2462 = vmatprep.subr.mxu0 0.0
    %2463 = vmatpush1.msra.mxu0 0.0
    %2464 = vmatprep.mubr.f32.mxu0 0.0
    %2465 = vmatmul.mubr.f32.gmra.mrb[0].mxu0 0.0
    %v2466 = vpop.f32.mrb[0].mxu0
    %v2467 = vadd.f32 %v2325, %v2466
    %v2468 = vpop.f32.mrb[0].mxu0
    %2469 = vdwg.mxu0
    %v2470 = vadd.f32 %v2239, %v2396
    %v2471 = vsub.f32 0.0, %v2470
    %v2472 = vmul.f32 %v2471, 1.442695
    %v2473 = vpow.pop %v2472
    %v2474 = vadd.f32 %v2473, 1.0
    %v2475 = vrcp.pop %v2474
    %v2476 = vmul.f32 1.0, %v2475
    %v2477 = vadd.f32 %v2241, %v2398
    %v2478 = vsub.f32 0.0, %v2477
    %v2479 = vmul.f32 %v2478, 1.442695
    %v2480 = vpow.pop %v2479
    %v2481 = vadd.f32 %v2480, 1.0
    %v2482 = vrcp.pop %v2481
    %v2483 = vmul.f32 1.0, %v2482
    %v2484 = vmul.f32 %v2476, %v2467
    %v2485 = vadd.f32 %v2310, %v2484
    %v2486 = vtanh.pop %v2485
    %v2487 = vsub.f32 1.0, %v2483
    %v2488 = vmul.f32 %v2487, %v2486
    %v2489 = vmul.f32 %v2483, 0.0
    %v2490 = vadd.f32 %v2488, %v2489
    %2491 = vmatprep.subr.mxu0 %v2056
    %2492 = vmatpush1.msra.mxu0 %v2055
    %2493 = vmatprep.subr.mxu0 %v2059
    %2494 = vmatpush1.msra.mxu0 %v2058
    %2495 = vmatprep.subr.mxu0 %v2062
    %2496 = vmatpush1.msra.mxu0 %v2061
    %2497 = vmatprep.subr.mxu0 %v2065
    %2498 = vmatpush1.msra.mxu0 %v2064
    %2499 = vmatprep.subr.mxu0 %v2068
    %2500 = vmatpush1.msra.mxu0 %v2067
    %2501 = vmatprep.subr.mxu0 %v2071
    %2502 = vmatpush1.msra.mxu0 %v2070
    %2503 = vmatprep.subr.mxu0 %v2074
    %2504 = vmatpush1.msra.mxu0 %v2073
    %2505 = vmatprep.subr.mxu0 %v2077
    %2506 = vmatpush1.msra.mxu0 %v2076
    %2507 = vmatprep.subr.mxu0 %v2080
    %2508 = vmatpush1.msra.mxu0 %v2079
    %2509 = vmatprep.subr.mxu0 %v2083
    %2510 = vmatpush1.msra.mxu0 %v2082
    %2511 = vmatprep.subr.mxu0 %v2086
    %2512 = vmatpush1.msra.mxu0 %v2085
    %2513 = vmatprep.subr.mxu0 %v2089
    %2514 = vmatpush1.msra.mxu0 %v2088
    %2515 = vmatprep.subr.mxu0 %v2092
    %2516 = vmatpush1.msra.mxu0 %v2091
    %2517 = vmatprep.subr.mxu0 %v2095
    %2518 = vmatpush1.msra.mxu0 %v2094
    %2519 = vmatprep.subr.mxu0 %v2098
    %2520 = vmatpush1.msra.mxu0 %v2097
    %2521 = vmatprep.subr.mxu0 %v2101
    %2522 = vmatpush1.msra.mxu0 %v2100
    %2523 = vmatprep.subr.mxu0 0.0
    %2524 = vmatpush1.msra.mxu0 0.0
    %2525 = vmatprep.subr.mxu0 0.0
    %2526 = vmatpush1.msra.mxu0 0.0
    %2527 = vmatprep.subr.mxu0 0.0
    %2528 = vmatpush1.msra.mxu0 0.0
    %2529 = vmatprep.subr.mxu0 0.0
    %2530 = vmatpush1.msra.mxu0 0.0
    %2531 = vmatprep.subr.mxu0 0.0
    %2532 = vmatpush1.msra.mxu0 0.0
    %2533 = vmatprep.subr.mxu0 0.0
    %2534 = vmatpush1.msra.mxu0 0.0
    %2535 = vmatprep.subr.mxu0 0.0
    %2536 = vmatpush1.msra.mxu0 0.0
    %2537 = vmatprep.subr.mxu0 0.0
    %2538 = vmatpush1.msra.mxu0 0.0
    %2539 = vmatprep.subr.mxu0 0.0
    %2540 = vmatpush1.msra.mxu0 0.0
    %2541 = vmatprep.subr.mxu0 0.0
    %2542 = vmatpush1.msra.mxu0 0.0
    %2543 = vmatprep.subr.mxu0 0.0
    %2544 = vmatpush1.msra.mxu0 0.0
    %2545 = vmatprep.subr.mxu0 0.0
    %2546 = vmatpush1.msra.mxu0 0.0
    %2547 = vmatprep.subr.mxu0 0.0
    %2548 = vmatpush1.msra.mxu0 0.0
    %2549 = vmatprep.subr.mxu0 0.0
    %2550 = vmatpush1.msra.mxu0 0.0
    %2551 = vmatprep.subr.mxu0 0.0
    %2552 = vmatpush1.msra.mxu0 0.0
    %2553 = vmatprep.subr.mxu0 0.0
    %2554 = vmatpush1.msra.mxu0 0.0
    %2555 = vmatprep.mubr.f32.mxu0 0.0
    %2556 = vmatmul.mubr.f32.gmra.mrb[0].mxu0 %v841
    %v2557 = vpop.f32.mrb[0].mxu0
    %v2558 = vadd.f32 %v2160, %v2557
    %v2559 = vpop.f32.mrb[0].mxu0
    %v2560 = vadd.f32 %v2164, %v2559
    %2561 = vdwg.mxu0
    %2562 = vmatprep.subr.mxu0 0.0
    %2563 = vmatpush1.msra.mxu0 %v2057
    %2564 = vmatprep.subr.mxu0 0.0
    %2565 = vmatpush1.msra.mxu0 %v2060
    %2566 = vmatprep.subr.mxu0 0.0
    %2567 = vmatpush1.msra.mxu0 %v2063
    %2568 = vmatprep.subr.mxu0 0.0
    %2569 = vmatpush1.msra.mxu0 %v2066
    %2570 = vmatprep.subr.mxu0 0.0
    %2571 = vmatpush1.msra.mxu0 %v2069
    %2572 = vmatprep.subr.mxu0 0.0
    %2573 = vmatpush1.msra.mxu0 %v2072
    %2574 = vmatprep.subr.mxu0 0.0
    %2575 = vmatpush1.msra.mxu0 %v2075
    %2576 = vmatprep.subr.mxu0 0.0
    %2577 = vmatpush1.msra.mxu0 %v2078
    %2578 = vmatprep.subr.mxu0 0.0
    %2579 = vmatpush1.msra.mxu0 %v2081
    %2580 = vmatprep.subr.mxu0 0.0
    %2581 = vmatpush1.msra.mxu0 %v2084
    %2582 = vmatprep.subr.mxu0 0.0
    %2583 = vmatpush1.msra.mxu0 %v2087
    %2584 = vmatprep.subr.mxu0 0.0
    %2585 = vmatpush1.msra.mxu0 %v2090
    %2586 = vmatprep.subr.mxu0 0.0
    %2587 = vmatpush1.msra.mxu0 %v2093
    %2588 = vmatprep.subr.mxu0 0.0
    %2589 = vmatpush1.msra.mxu0 %v2096
    %2590 = vmatprep.subr.mxu0 0.0
    %2591 = vmatpush1.msra.mxu0 %v2099
    %2592 = vmatprep.subr.mxu0 0.0
    %2593 = vmatpush1.msra.mxu0 %v2102
    %2594 = vmatprep.subr.mxu0 0.0
    %2595 = vmatpush1.msra.mxu0 0.0
    %2596 = vmatprep.subr.mxu0 0.0
    %2597 = vmatpush1.msra.mxu0 0.0
    %2598 = vmatprep.subr.mxu0 0.0
    %2599 = vmatpush1.msra.mxu0 0.0
    %2600 = vmatprep.subr.mxu0 0.0
    %2601 = vmatpush1.msra.mxu0 0.0
    %2602 = vmatprep.subr.mxu0 0.0
    %2603 = vmatpush1.msra.mxu0 0.0
    %2604 = vmatprep.subr.mxu0 0.0
    %2605 = vmatpush1.msra.mxu0 0.0
    %2606 = vmatprep.subr.mxu0 0.0
    %2607 = vmatpush1.msra.mxu0 0.0
    %2608 = vmatprep.subr.mxu0 0.0
    %2609 = vmatpush1.msra.mxu0 0.0
    %2610 = vmatprep.subr.mxu0 0.0
    %2611 = vmatpush1.msra.mxu0 0.0
    %2612 = vmatprep.subr.mxu0 0.0
    %2613 = vmatpush1.msra.mxu0 0.0
    %2614 = vmatprep.subr.mxu0 0.0
    %2615 = vmatpush1.msra.mxu0 0.0
    %2616 = vmatprep.subr.mxu0 0.0
    %2617 = vmatpush1.msra.mxu0 0.0
    %2618 = vmatprep.subr.mxu0 0.0
    %2619 = vmatpush1.msra.mxu0 0.0
    %2620 = vmatprep.subr.mxu0 0.0
    %2621 = vmatpush1.msra.mxu0 0.0
    %2622 = vmatprep.subr.mxu0 0.0
    %2623 = vmatpush1.msra.mxu0 0.0
    %2624 = vmatprep.subr.mxu0 0.0
    %2625 = vmatpush1.msra.mxu0 0.0
    %2626 = vmatprep.mubr.f32.mxu0 0.0
    %2627 = vmatmul.mubr.f32.gmra.mrb[0].mxu0 %v841
    %v2628 = vpop.f32.mrb[0].mxu0
    %v2629 = vadd.f32 %v2168, %v2628
    %v2630 = vpop.f32.mrb[0].mxu0
    %2631 = vdwg.mxu0
    %2632 = vmatprep.subr.mxu0 %v2105
    %2633 = vmatpush1.msra.mxu0 %v2104
    %2634 = vmatprep.subr.mxu0 %v2108
    %2635 = vmatpush1.msra.mxu0 %v2107
    %2636 = vmatprep.subr.mxu0 %v2111
    %2637 = vmatpush1.msra.mxu0 %v2110
    %2638 = vmatprep.subr.mxu0 %v2114
    %2639 = vmatpush1.msra.mxu0 %v2113
    %2640 = vmatprep.subr.mxu0 %v2117
    %2641 = vmatpush1.msra.mxu0 %v2116
    %2642 = vmatprep.subr.mxu0 %v2120
    %2643 = vmatpush1.msra.mxu0 %v2119
    %2644 = vmatprep.subr.mxu0 %v2123
    %2645 = vmatpush1.msra.mxu0 %v2122
    %2646 = vmatprep.subr.mxu0 %v2126
    %2647 = vmatpush1.msra.mxu0 %v2125
    %2648 = vmatprep.subr.mxu0 %v2129
    %2649 = vmatpush1.msra.mxu0 %v2128
    %2650 = vmatprep.subr.mxu0 %v2132
    %2651 = vmatpush1.msra.mxu0 %v2131
    %2652 = vmatprep.subr.mxu0 %v2135
    %2653 = vmatpush1.msra.mxu0 %v2134
    %2654 = vmatprep.subr.mxu0 %v2138
    %2655 = vmatpush1.msra.mxu0 %v2137
    %2656 = vmatprep.subr.mxu0 %v2141
    %2657 = vmatpush1.msra.mxu0 %v2140
    %2658 = vmatprep.subr.mxu0 %v2144
    %2659 = vmatpush1.msra.mxu0 %v2143
    %2660 = vmatprep.subr.mxu0 %v2147
    %2661 = vmatpush1.msra.mxu0 %v2146
    %2662 = vmatprep.subr.mxu0 %v2150
    %2663 = vmatpush1.msra.mxu0 %v2149
    %2664 = vmatprep.subr.mxu0 0.0
    %2665 = vmatpush1.msra.mxu0 0.0
    %2666 = vmatprep.subr.mxu0 0.0
    %2667 = vmatpush1.msra.mxu0 0.0
    %2668 = vmatprep.subr.mxu0 0.0
    %2669 = vmatpush1.msra.mxu0 0.0
    %2670 = vmatprep.subr.mxu0 0.0
    %2671 = vmatpush1.msra.mxu0 0.0
    %2672 = vmatprep.subr.mxu0 0.0
    %2673 = vmatpush1.msra.mxu0 0.0
    %2674 = vmatprep.subr.mxu0 0.0
    %2675 = vmatpush1.msra.mxu0 0.0
    %2676 = vmatprep.subr.mxu0 0.0
    %2677 = vmatpush1.msra.mxu0 0.0
    %2678 = vmatprep.subr.mxu0 0.0
    %2679 = vmatpush1.msra.mxu0 0.0
    %2680 = vmatprep.subr.mxu0 0.0
    %2681 = vmatpush1.msra.mxu0 0.0
    %2682 = vmatprep.subr.mxu0 0.0
    %2683 = vmatpush1.msra.mxu0 0.0
    %2684 = vmatprep.subr.mxu0 0.0
    %2685 = vmatpush1.msra.mxu0 0.0
    %2686 = vmatprep.subr.mxu0 0.0
    %2687 = vmatpush1.msra.mxu0 0.0
    %2688 = vmatprep.subr.mxu0 0.0
    %2689 = vmatpush1.msra.mxu0 0.0
    %2690 = vmatprep.subr.mxu0 0.0
    %2691 = vmatpush1.msra.mxu0 0.0
    %2692 = vmatprep.subr.mxu0 0.0
    %2693 = vmatpush1.msra.mxu0 0.0
    %2694 = vmatprep.subr.mxu0 0.0
    %2695 = vmatpush1.msra.mxu0 0.0
    %2696 = vmatprep.mubr.f32.mxu0 0.0
    %2697 = vmatmul.mubr.f32.gmra.mrb[0].mxu0 %v2490
    %v2698 = vpop.f32.mrb[0].mxu0
    %v2699 = vadd.f32 %v2317, %v2698
    %v2700 = vpop.f32.mrb[0].mxu0
    %v2701 = vadd.f32 %v2321, %v2700
    %2702 = vdwg.mxu0
    %2703 = vmatprep.subr.mxu0 0.0
    %2704 = vmatpush1.msra.mxu0 %v2106
    %2705 = vmatprep.subr.mxu0 0.0
    %2706 = vmatpush1.msra.mxu0 %v2109
    %2707 = vmatprep.subr.mxu0 0.0
    %2708 = vmatpush1.msra.mxu0 %v2112
    %2709 = vmatprep.subr.mxu0 0.0
    %2710 = vmatpush1.msra.mxu0 %v2115
    %2711 = vmatprep.subr.mxu0 0.0
    %2712 = vmatpush1.msra.mxu0 %v2118
    %2713 = vmatprep.subr.mxu0 0.0
    %2714 = vmatpush1.msra.mxu0 %v2121
    %2715 = vmatprep.subr.mxu0 0.0
    %2716 = vmatpush1.msra.mxu0 %v2124
    %2717 = vmatprep.subr.mxu0 0.0
    %2718 = vmatpush1.msra.mxu0 %v2127
    %2719 = vmatprep.subr.mxu0 0.0
    %2720 = vmatpush1.msra.mxu0 %v2130
    %2721 = vmatprep.subr.mxu0 0.0
    %2722 = vmatpush1.msra.mxu0 %v2133
    %2723 = vmatprep.subr.mxu0 0.0
    %2724 = vmatpush1.msra.mxu0 %v2136
    %2725 = vmatprep.subr.mxu0 0.0
    %2726 = vmatpush1.msra.mxu0 %v2139
    %2727 = vmatprep.subr.mxu0 0.0
    %2728 = vmatpush1.msra.mxu0 %v2142
    %2729 = vmatprep.subr.mxu0 0.0
    %2730 = vmatpush1.msra.mxu0 %v2145
    %2731 = vmatprep.subr.mxu0 0.0
    %2732 = vmatpush1.msra.mxu0 %v2148
    %2733 = vmatprep.subr.mxu0 0.0
    %2734 = vmatpush1.msra.mxu0 %v2151
    %2735 = vmatprep.subr.mxu0 0.0
    %2736 = vmatpush1.msra.mxu0 0.0
    %2737 = vmatprep.subr.mxu0 0.0
    %2738 = vmatpush1.msra.mxu0 0.0
    %2739 = vmatprep.subr.mxu0 0.0
    %2740 = vmatpush1.msra.mxu0 0.0
    %2741 = vmatprep.subr.mxu0 0.0
    %2742 = vmatpush1.msra.mxu0 0.0
    %2743 = vmatprep.subr.mxu0 0.0
    %2744 = vmatpush1.msra.mxu0 0.0
    %2745 = vmatprep.subr.mxu0 0.0
    %2746 = vmatpush1.msra.mxu0 0.0
    %2747 = vmatprep.subr.mxu0 0.0
    %2748 = vmatpush1.msra.mxu0 0.0
    %2749 = vmatprep.subr.mxu0 0.0
    %2750 = vmatpush1.msra.mxu0 0.0
    %2751 = vmatprep.subr.mxu0 0.0
    %2752 = vmatpush1.msra.mxu0 0.0
    %2753 = vmatprep.subr.mxu0 0.0
    %2754 = vmatpush1.msra.mxu0 0.0
    %2755 = vmatprep.subr.mxu0 0.0
    %2756 = vmatpush1.msra.mxu0 0.0
    %2757 = vmatprep.subr.mxu0 0.0
    %2758 = vmatpush1.msra.mxu0 0.0
    %2759 = vmatprep.subr.mxu0 0.0
    %2760 = vmatpush1.msra.mxu0 0.0
    %2761 = vmatprep.subr.mxu0 0.0
    %2762 = vmatpush1.msra.mxu0 0.0
    %2763 = vmatprep.subr.mxu0 0.0
    %2764 = vmatpush1.msra.mxu0 0.0
    %2765 = vmatprep.subr.mxu0 0.0
    %2766 = vmatpush1.msra.mxu0 0.0
    %2767 = vmatprep.mubr.f32.mxu0 0.0
    %2768 = vmatmul.mubr.f32.gmra.mrb[0].mxu0 %v2490
    %v2769 = vpop.f32.mrb[0].mxu0
    %v2770 = vadd.f32 %v2325, %v2769
    %v2771 = vpop.f32.mrb[0].mxu0
    %2772 = vdwg.mxu0
    %v2773 = vadd.f32 %v2558, %v2699
    %v2774 = vsub.f32 0.0, %v2773
    %v2775 = vmul.f32 %v2774, 1.442695
    %v2776 = vpow.pop %v2775
    %v2777 = vadd.f32 %v2776, 1.0
    %v2778 = vrcp.pop %v2777
    %v2779 = vmul.f32 1.0, %v2778
    %v2780 = vadd.f32 %v2560, %v2701
    %v2781 = vsub.f32 0.0, %v2780
    %v2782 = vmul.f32 %v2781, 1.442695
    %v2783 = vpow.pop %v2782
    %v2784 = vadd.f32 %v2783, 1.0
    %v2785 = vrcp.pop %v2784
    %v2786 = vmul.f32 1.0, %v2785
    %v2787 = vmul.f32 %v2779, %v2770
    %v2788 = vadd.f32 %v2629, %v2787
    %v2789 = vtanh.pop %v2788
    %v2790 = vsub.f32 1.0, %v2786
    %v2791 = vmul.f32 %v2790, %v2789
    %v2792 = vmul.f32 %v2786, %v2490
    %v2793 = vadd.f32 %v2791, %v2792
    %2794 = vmatprep.subr.mxu0 %v2056
    %2795 = vmatpush1.msra.mxu0 %v2055
    %2796 = vmatprep.subr.mxu0 %v2059
    %2797 = vmatpush1.msra.mxu0 %v2058
    %2798 = vmatprep.subr.mxu0 %v2062
    %2799 = vmatpush1.msra.mxu0 %v2061
    %2800 = vmatprep.subr.mxu0 %v2065
    %2801 = vmatpush1.msra.mxu0 %v2064
    %2802 = vmatprep.subr.mxu0 %v2068
    %2803 = vmatpush1.msra.mxu0 %v2067
    %2804 = vmatprep.subr.mxu0 %v2071
    %2805 = vmatpush1.msra.mxu0 %v2070
    %2806 = vmatprep.subr.mxu0 %v2074
    %2807 = vmatpush1.msra.mxu0 %v2073
    %2808 = vmatprep.subr.mxu0 %v2077
    %2809 = vmatpush1.msra.mxu0 %v2076
    %2810 = vmatprep.subr.mxu0 %v2080
    %2811 = vmatpush1.msra.mxu0 %v2079
    %2812 = vmatprep.subr.mxu0 %v2083
    %2813 = vmatpush1.msra.mxu0 %v2082
    %2814 = vmatprep.subr.mxu0 %v2086
    %2815 = vmatpush1.msra.mxu0 %v2085
    %2816 = vmatprep.subr.mxu0 %v2089
    %2817 = vmatpush1.msra.mxu0 %v2088
    %2818 = vmatprep.subr.mxu0 %v2092
    %2819 = vmatpush1.msra.mxu0 %v2091
    %2820 = vmatprep.subr.mxu0 %v2095
    %2821 = vmatpush1.msra.mxu0 %v2094
    %2822 = vmatprep.subr.mxu0 %v2098
    %2823 = vmatpush1.msra.mxu0 %v2097
    %2824 = vmatprep.subr.mxu0 %v2101
    %2825 = vmatpush1.msra.mxu0 %v2100
    %2826 = vmatprep.subr.mxu0 0.0
    %2827 = vmatpush1.msra.mxu0 0.0
    %2828 = vmatprep.subr.mxu0 0.0
    %2829 = vmatpush1.msra.mxu0 0.0
    %2830 = vmatprep.subr.mxu0 0.0
    %2831 = vmatpush1.msra.mxu0 0.0
    %2832 = vmatprep.subr.mxu0 0.0
    %2833 = vmatpush1.msra.mxu0 0.0
    %2834 = vmatprep.subr.mxu0 0.0
    %2835 = vmatpush1.msra.mxu0 0.0
    %2836 = vmatprep.subr.mxu0 0.0
    %2837 = vmatpush1.msra.mxu0 0.0
    %2838 = vmatprep.subr.mxu0 0.0
    %2839 = vmatpush1.msra.mxu0 0.0
    %2840 = vmatprep.subr.mxu0 0.0
    %2841 = vmatpush1.msra.mxu0 0.0
    %2842 = vmatprep.subr.mxu0 0.0
    %2843 = vmatpush1.msra.mxu0 0.0
    %2844 = vmatprep.subr.mxu0 0.0
    %2845 = vmatpush1.msra.mxu0 0.0
    %2846 = vmatprep.subr.mxu0 0.0
    %2847 = vmatpush1.msra.mxu0 0.0
    %2848 = vmatprep.subr.mxu0 0.0
    %2849 = vmatpush1.msra.mxu0 0.0
    %2850 = vmatprep.subr.mxu0 0.0
    %2851 = vmatpush1.msra.mxu0 0.0
    %2852 = vmatprep.subr.mxu0 0.0
    %2853 = vmatpush1.msra.mxu0 0.0
    %2854 = vmatprep.subr.mxu0 0.0
    %2855 = vmatpush1.msra.mxu0 0.0
    %2856 = vmatprep.subr.mxu0 0.0
    %2857 = vmatpush1.msra.mxu0 0.0
    %2858 = vmatprep.mubr.f32.mxu0 0.0
    %2859 = vmatmul.mubr.f32.gmra.mrb[0].mxu0 %v1144
    %v2860 = vpop.f32.mrb[0].mxu0
    %v2861 = vadd.f32 %v2160, %v2860
    %v2862 = vpop.f32.mrb[0].mxu0
    %v2863 = vadd.f32 %v2164, %v2862
    %2864 = vdwg.mxu0
    %2865 = vmatprep.subr.mxu0 0.0
    %2866 = vmatpush1.msra.mxu0 %v2057
    %2867 = vmatprep.subr.mxu0 0.0
    %2868 = vmatpush1.msra.mxu0 %v2060
    %2869 = vmatprep.subr.mxu0 0.0
    %2870 = vmatpush1.msra.mxu0 %v2063
    %2871 = vmatprep.subr.mxu0 0.0
    %2872 = vmatpush1.msra.mxu0 %v2066
    %2873 = vmatprep.subr.mxu0 0.0
    %2874 = vmatpush1.msra.mxu0 %v2069
    %2875 = vmatprep.subr.mxu0 0.0
    %2876 = vmatpush1.msra.mxu0 %v2072
    %2877 = vmatprep.subr.mxu0 0.0
    %2878 = vmatpush1.msra.mxu0 %v2075
    %2879 = vmatprep.subr.mxu0 0.0
    %2880 = vmatpush1.msra.mxu0 %v2078
    %2881 = vmatprep.subr.mxu0 0.0
    %2882 = vmatpush1.msra.mxu0 %v2081
    %2883 = vmatprep.subr.mxu0 0.0
    %2884 = vmatpush1.msra.mxu0 %v2084
    %2885 = vmatprep.subr.mxu0 0.0
    %2886 = vmatpush1.msra.mxu0 %v2087
    %2887 = vmatprep.subr.mxu0 0.0
    %2888 = vmatpush1.msra.mxu0 %v2090
    %2889 = vmatprep.subr.mxu0 0.0
    %2890 = vmatpush1.msra.mxu0 %v2093
    %2891 = vmatprep.subr.mxu0 0.0
    %2892 = vmatpush1.msra.mxu0 %v2096
    %2893 = vmatprep.subr.mxu0 0.0
    %2894 = vmatpush1.msra.mxu0 %v2099
    %2895 = vmatprep.subr.mxu0 0.0
    %2896 = vmatpush1.msra.mxu0 %v2102
    %2897 = vmatprep.subr.mxu0 0.0
    %2898 = vmatpush1.msra.mxu0 0.0
    %2899 = vmatprep.subr.mxu0 0.0
    %2900 = vmatpush1.msra.mxu0 0.0
    %2901 = vmatprep.subr.mxu0 0.0
    %2902 = vmatpush1.msra.mxu0 0.0
    %2903 = vmatprep.subr.mxu0 0.0
    %2904 = vmatpush1.msra.mxu0 0.0
    %2905 = vmatprep.subr.mxu0 0.0
    %2906 = vmatpush1.msra.mxu0 0.0
    %2907 = vmatprep.subr.mxu0 0.0
    %2908 = vmatpush1.msra.mxu0 0.0
    %2909 = vmatprep.subr.mxu0 0.0
    %2910 = vmatpush1.msra.mxu0 0.0
    %2911 = vmatprep.subr.mxu0 0.0
    %2912 = vmatpush1.msra.mxu0 0.0
    %2913 = vmatprep.subr.mxu0 0.0
    %2914 = vmatpush1.msra.mxu0 0.0
    %2915 = vmatprep.subr.mxu0 0.0
    %2916 = vmatpush1.msra.mxu0 0.0
    %2917 = vmatprep.subr.mxu0 0.0
    %2918 = vmatpush1.msra.mxu0 0.0
    %2919 = vmatprep.subr.mxu0 0.0
    %2920 = vmatpush1.msra.mxu0 0.0
    %2921 = vmatprep.subr.mxu0 0.0
    %2922 = vmatpush1.msra.mxu0 0.0
    %2923 = vmatprep.subr.mxu0 0.0
    %2924 = vmatpush1.msra.mxu0 0.0
    %2925 = vmatprep.subr.mxu0 0.0
    %2926 = vmatpush1.msra.mxu0 0.0
    %2927 = vmatprep.subr.mxu0 0.0
    %2928 = vmatpush1.msra.mxu0 0.0
    %2929 = vmatprep.mubr.f32.mxu0 0.0
    %2930 = vmatmul.mubr.f32.gmra.mrb[0].mxu0 %v1144
    %v2931 = vpop.f32.mrb[0].mxu0
    %v2932 = vadd.f32 %v2168, %v2931
    %v2933 = vpop.f32.mrb[0].mxu0
    %2934 = vdwg.mxu0
    %2935 = vmatprep.subr.mxu0 %v2105
    %2936 = vmatpush1.msra.mxu0 %v2104
    %2937 = vmatprep.subr.mxu0 %v2108
    %2938 = vmatpush1.msra.mxu0 %v2107
    %2939 = vmatprep.subr.mxu0 %v2111
    %2940 = vmatpush1.msra.mxu0 %v2110
    %2941 = vmatprep.subr.mxu0 %v2114
    %2942 = vmatpush1.msra.mxu0 %v2113
    %2943 = vmatprep.subr.mxu0 %v2117
    %2944 = vmatpush1.msra.mxu0 %v2116
    %2945 = vmatprep.subr.mxu0 %v2120
    %2946 = vmatpush1.msra.mxu0 %v2119
    %2947 = vmatprep.subr.mxu0 %v2123
    %2948 = vmatpush1.msra.mxu0 %v2122
    %2949 = vmatprep.subr.mxu0 %v2126
    %2950 = vmatpush1.msra.mxu0 %v2125
    %2951 = vmatprep.subr.mxu0 %v2129
    %2952 = vmatpush1.msra.mxu0 %v2128
    %2953 = vmatprep.subr.mxu0 %v2132
    %2954 = vmatpush1.msra.mxu0 %v2131
    %2955 = vmatprep.subr.mxu0 %v2135
    %2956 = vmatpush1.msra.mxu0 %v2134
    %2957 = vmatprep.subr.mxu0 %v2138
    %2958 = vmatpush1.msra.mxu0 %v2137
    %2959 = vmatprep.subr.mxu0 %v2141
    %2960 = vmatpush1.msra.mxu0 %v2140
    %2961 = vmatprep.subr.mxu0 %v2144
    %2962 = vmatpush1.msra.mxu0 %v2143
    %2963 = vmatprep.subr.mxu0 %v2147
    %2964 = vmatpush1.msra.mxu0 %v2146
    %2965 = vmatprep.subr.mxu0 %v2150
    %2966 = vmatpush1.msra.mxu0 %v2149
    %2967 = vmatprep.subr.mxu0 0.0
    %2968 = vmatpush1.msra.mxu0 0.0
    %2969 = vmatprep.subr.mxu0 0.0
    %2970 = vmatpush1.msra.mxu0 0.0
    %2971 = vmatprep.subr.mxu0 0.0
    %2972 = vmatpush1.msra.mxu0 0.0
    %2973 = vmatprep.subr.mxu0 0.0
    %2974 = vmatpush1.msra.mxu0 0.0
    %2975 = vmatprep.subr.mxu0 0.0
    %2976 = vmatpush1.msra.mxu0 0.0
    %2977 = vmatprep.subr.mxu0 0.0
    %2978 = vmatpush1.msra.mxu0 0.0
    %2979 = vmatprep.subr.mxu0 0.0
    %2980 = vmatpush1.msra.mxu0 0.0
    %2981 = vmatprep.subr.mxu0 0.0
    %2982 = vmatpush1.msra.mxu0 0.0
    %2983 = vmatprep.subr.mxu0 0.0
    %2984 = vmatpush1.msra.mxu0 0.0
    %2985 = vmatprep.subr.mxu0 0.0
    %2986 = vmatpush1.msra.mxu0 0.0
    %2987 = vmatprep.subr.mxu0 0.0
    %2988 = vmatpush1.msra.mxu0 0.0
    %2989 = vmatprep.subr.mxu0 0.0
    %2990 = vmatpush1.msra.mxu0 0.0
    %2991 = vmatprep.subr.mxu0 0.0
    %2992 = vmatpush1.msra.mxu0 0.0
    %2993 = vmatprep.subr.mxu0 0.0
    %2994 = vmatpush1.msra.mxu0 0.0
    %2995 = vmatprep.subr.mxu0 0.0
    %2996 = vmatpush1.msra.mxu0 0.0
    %2997 = vmatprep.subr.mxu0 0.0
    %2998 = vmatpush1.msra.mxu0 0.0
    %2999 = vmatprep.mubr.f32.mxu0 0.0
    %3000 = vmatmul.mubr.f32.gmra.mrb[0].mxu0 %v2793
    %v3001 = vpop.f32.mrb[0].mxu0
    %v3002 = vadd.f32 %v2317, %v3001
    %v3003 = vpop.f32.mrb[0].mxu0
    %v3004 = vadd.f32 %v2321, %v3003
    %3005 = vdwg.mxu0
    %3006 = vmatprep.subr.mxu0 0.0
    %3007 = vmatpush1.msra.mxu0 %v2106
    %3008 = vmatprep.subr.mxu0 0.0
    %3009 = vmatpush1.msra.mxu0 %v2109
    %3010 = vmatprep.subr.mxu0 0.0
    %3011 = vmatpush1.msra.mxu0 %v2112
    %3012 = vmatprep.subr.mxu0 0.0
    %3013 = vmatpush1.msra.mxu0 %v2115
    %3014 = vmatprep.subr.mxu0 0.0
    %3015 = vmatpush1.msra.mxu0 %v2118
    %3016 = vmatprep.subr.mxu0 0.0
    %3017 = vmatpush1.msra.mxu0 %v2121
    %3018 = vmatprep.subr.mxu0 0.0
    %3019 = vmatpush1.msra.mxu0 %v2124
    %3020 = vmatprep.subr.mxu0 0.0
    %3021 = vmatpush1.msra.mxu0 %v2127
    %3022 = vmatprep.subr.mxu0 0.0
    %3023 = vmatpush1.msra.mxu0 %v2130
    %3024 = vmatprep.subr.mxu0 0.0
    %3025 = vmatpush1.msra.mxu0 %v2133
    %3026 = vmatprep.subr.mxu0 0.0
    %3027 = vmatpush1.msra.mxu0 %v2136
    %3028 = vmatprep.subr.mxu0 0.0
    %3029 = vmatpush1.msra.mxu0 %v2139
    %3030 = vmatprep.subr.mxu0 0.0
    %3031 = vmatpush1.msra.mxu0 %v2142
    %3032 = vmatprep.subr.mxu0 0.0
    %3033 = vmatpush1.msra.mxu0 %v2145
    %3034 = vmatprep.subr.mxu0 0.0
    %3035 = vmatpush1.msra.mxu0 %v2148
    %3036 = vmatprep.subr.mxu0 0.0
    %3037 = vmatpush1.msra.mxu0 %v2151
    %3038 = vmatprep.subr.mxu0 0.0
    %3039 = vmatpush1.msra.mxu0 0.0
    %3040 = vmatprep.subr.mxu0 0.0
    %3041 = vmatpush1.msra.mxu0 0.0
    %3042 = vmatprep.subr.mxu0 0.0
    %3043 = vmatpush1.msra.mxu0 0.0
    %3044 = vmatprep.subr.mxu0 0.0
    %3045 = vmatpush1.msra.mxu0 0.0
    %3046 = vmatprep.subr.mxu0 0.0
    %3047 = vmatpush1.msra.mxu0 0.0
    %3048 = vmatprep.subr.mxu0 0.0
    %3049 = vmatpush1.msra.mxu0 0.0
    %3050 = vmatprep.subr.mxu0 0.0
    %3051 = vmatpush1.msra.mxu0 0.0
    %3052 = vmatprep.subr.mxu0 0.0
    %3053 = vmatpush1.msra.mxu0 0.0
    %3054 = vmatprep.subr.mxu0 0.0
    %3055 = vmatpush1.msra.mxu0 0.0
    %3056 = vmatprep.subr.mxu0 0.0
    %3057 = vmatpush1.msra.mxu0 0.0
    %3058 = vmatprep.subr.mxu0 0.0
    %3059 = vmatpush1.msra.mxu0 0.0
    %3060 = vmatprep.subr.mxu0 0.0
    %3061 = vmatpush1.msra.mxu0 0.0
    %3062 = vmatprep.subr.mxu0 0.0
    %3063 = vmatpush1.msra.mxu0 0.0
    %3064 = vmatprep.subr.mxu0 0.0
    %3065 = vmatpush1.msra.mxu0 0.0
    %3066 = vmatprep.subr.mxu0 0.0
    %3067 = vmatpush1.msra.mxu0 0.0
    %3068 = vmatprep.subr.mxu0 0.0
    %3069 = vmatpush1.msra.mxu0 0.0
    %3070 = vmatprep.mubr.f32.mxu0 0.0
    %3071 = vmatmul.mubr.f32.gmra.mrb[0].mxu0 %v2793
    %v3072 = vpop.f32.mrb[0].mxu0
    %v3073 = vadd.f32 %v2325, %v3072
    %v3074 = vpop.f32.mrb[0].mxu0
    %3075 = vdwg.mxu0
    %v3076 = vadd.f32 %v2861, %v3002
    %v3077 = vsub.f32 0.0, %v3076
    %v3078 = vmul.f32 %v3077, 1.442695
    %v3079 = vpow.pop %v3078
    %v3080 = vadd.f32 %v3079, 1.0
    %v3081 = vrcp.pop %v3080
    %v3082 = vmul.f32 1.0, %v3081
    %v3083 = vadd.f32 %v2863, %v3004
    %v3084 = vsub.f32 0.0, %v3083
    %v3085 = vmul.f32 %v3084, 1.442695
    %v3086 = vpow.pop %v3085
    %v3087 = vadd.f32 %v3086, 1.0
    %v3088 = vrcp.pop %v3087
    %v3089 = vmul.f32 1.0, %v3088
    %v3090 = vmul.f32 %v3082, %v3073
    %v3091 = vadd.f32 %v2932, %v3090
    %v3092 = vtanh.pop %v3091
    %v3093 = vsub.f32 1.0, %v3089
    %v3094 = vmul.f32 %v3093, %v3092
    %v3095 = vmul.f32 %v3089, %v2793
    %v3096 = vadd.f32 %v3094, %v3095
    %3097 = vmatprep.subr.mxu0 %v2056
    %3098 = vmatpush1.msra.mxu0 %v2055
    %3099 = vmatprep.subr.mxu0 %v2059
    %3100 = vmatpush1.msra.mxu0 %v2058
    %3101 = vmatprep.subr.mxu0 %v2062
    %3102 = vmatpush1.msra.mxu0 %v2061
    %3103 = vmatprep.subr.mxu0 %v2065
    %3104 = vmatpush1.msra.mxu0 %v2064
    %3105 = vmatprep.subr.mxu0 %v2068
    %3106 = vmatpush1.msra.mxu0 %v2067
    %3107 = vmatprep.subr.mxu0 %v2071
    %3108 = vmatpush1.msra.mxu0 %v2070
    %3109 = vmatprep.subr.mxu0 %v2074
    %3110 = vmatpush1.msra.mxu0 %v2073
    %3111 = vmatprep.subr.mxu0 %v2077
    %3112 = vmatpush1.msra.mxu0 %v2076
    %3113 = vmatprep.subr.mxu0 %v2080
    %3114 = vmatpush1.msra.mxu0 %v2079
    %3115 = vmatprep.subr.mxu0 %v2083
    %3116 = vmatpush1.msra.mxu0 %v2082
    %3117 = vmatprep.subr.mxu0 %v2086
    %3118 = vmatpush1.msra.mxu0 %v2085
    %3119 = vmatprep.subr.mxu0 %v2089
    %3120 = vmatpush1.msra.mxu0 %v2088
    %3121 = vmatprep.subr.mxu0 %v2092
    %3122 = vmatpush1.msra.mxu0 %v2091
    %3123 = vmatprep.subr.mxu0 %v2095
    %3124 = vmatpush1.msra.mxu0 %v2094
    %3125 = vmatprep.subr.mxu0 %v2098
    %3126 = vmatpush1.msra.mxu0 %v2097
    %3127 = vmatprep.subr.mxu0 %v2101
    %3128 = vmatpush1.msra.mxu0 %v2100
    %3129 = vmatprep.subr.mxu0 0.0
    %3130 = vmatpush1.msra.mxu0 0.0
    %3131 = vmatprep.subr.mxu0 0.0
    %3132 = vmatpush1.msra.mxu0 0.0
    %3133 = vmatprep.subr.mxu0 0.0
    %3134 = vmatpush1.msra.mxu0 0.0
    %3135 = vmatprep.subr.mxu0 0.0
    %3136 = vmatpush1.msra.mxu0 0.0
    %3137 = vmatprep.subr.mxu0 0.0
    %3138 = vmatpush1.msra.mxu0 0.0
    %3139 = vmatprep.subr.mxu0 0.0
    %3140 = vmatpush1.msra.mxu0 0.0
    %3141 = vmatprep.subr.mxu0 0.0
    %3142 = vmatpush1.msra.mxu0 0.0
    %3143 = vmatprep.subr.mxu0 0.0
    %3144 = vmatpush1.msra.mxu0 0.0
    %3145 = vmatprep.subr.mxu0 0.0
    %3146 = vmatpush1.msra.mxu0 0.0
    %3147 = vmatprep.subr.mxu0 0.0
    %3148 = vmatpush1.msra.mxu0 0.0
    %3149 = vmatprep.subr.mxu0 0.0
    %3150 = vmatpush1.msra.mxu0 0.0
    %3151 = vmatprep.subr.mxu0 0.0
    %3152 = vmatpush1.msra.mxu0 0.0
    %3153 = vmatprep.subr.mxu0 0.0
    %3154 = vmatpush1.msra.mxu0 0.0
    %3155 = vmatprep.subr.mxu0 0.0
    %3156 = vmatpush1.msra.mxu0 0.0
    %3157 = vmatprep.subr.mxu0 0.0
    %3158 = vmatpush1.msra.mxu0 0.0
    %3159 = vmatprep.subr.mxu0 0.0
    %3160 = vmatpush1.msra.mxu0 0.0
    %3161 = vmatprep.mubr.f32.mxu0 0.0
    %3162 = vmatmul.mubr.f32.gmra.mrb[0].mxu0 %v1447
    %v3163 = vpop.f32.mrb[0].mxu0
    %v3164 = vadd.f32 %v2160, %v3163
    %v3165 = vpop.f32.mrb[0].mxu0
    %v3166 = vadd.f32 %v2164, %v3165
    %3167 = vdwg.mxu0
    %3168 = vmatprep.subr.mxu0 0.0
    %3169 = vmatpush1.msra.mxu0 %v2057
    %3170 = vmatprep.subr.mxu0 0.0
    %3171 = vmatpush1.msra.mxu0 %v2060
    %3172 = vmatprep.subr.mxu0 0.0
    %3173 = vmatpush1.msra.mxu0 %v2063
    %3174 = vmatprep.subr.mxu0 0.0
    %3175 = vmatpush1.msra.mxu0 %v2066
    %3176 = vmatprep.subr.mxu0 0.0
    %3177 = vmatpush1.msra.mxu0 %v2069
    %3178 = vmatprep.subr.mxu0 0.0
    %3179 = vmatpush1.msra.mxu0 %v2072
    %3180 = vmatprep.subr.mxu0 0.0
    %3181 = vmatpush1.msra.mxu0 %v2075
    %3182 = vmatprep.subr.mxu0 0.0
    %3183 = vmatpush1.msra.mxu0 %v2078
    %3184 = vmatprep.subr.mxu0 0.0
    %3185 = vmatpush1.msra.mxu0 %v2081
    %3186 = vmatprep.subr.mxu0 0.0
    %3187 = vmatpush1.msra.mxu0 %v2084
    %3188 = vmatprep.subr.mxu0 0.0
    %3189 = vmatpush1.msra.mxu0 %v2087
    %3190 = vmatprep.subr.mxu0 0.0
    %3191 = vmatpush1.msra.mxu0 %v2090
    %3192 = vmatprep.subr.mxu0 0.0
    %3193 = vmatpush1.msra.mxu0 %v2093
    %3194 = vmatprep.subr.mxu0 0.0
    %3195 = vmatpush1.msra.mxu0 %v2096
    %3196 = vmatprep.subr.mxu0 0.0
    %3197 = vmatpush1.msra.mxu0 %v2099
    %3198 = vmatprep.subr.mxu0 0.0
    %3199 = vmatpush1.msra.mxu0 %v2102
    %3200 = vmatprep.subr.mxu0 0.0
    %3201 = vmatpush1.msra.mxu0 0.0
    %3202 = vmatprep.subr.mxu0 0.0
    %3203 = vmatpush1.msra.mxu0 0.0
    %3204 = vmatprep.subr.mxu0 0.0
    %3205 = vmatpush1.msra.mxu0 0.0
    %3206 = vmatprep.subr.mxu0 0.0
    %3207 = vmatpush1.msra.mxu0 0.0
    %3208 = vmatprep.subr.mxu0 0.0
    %3209 = vmatpush1.msra.mxu0 0.0
    %3210 = vmatprep.subr.mxu0 0.0
    %3211 = vmatpush1.msra.mxu0 0.0
    %3212 = vmatprep.subr.mxu0 0.0
    %3213 = vmatpush1.msra.mxu0 0.0
    %3214 = vmatprep.subr.mxu0 0.0
    %3215 = vmatpush1.msra.mxu0 0.0
    %3216 = vmatprep.subr.mxu0 0.0
    %3217 = vmatpush1.msra.mxu0 0.0
    %3218 = vmatprep.subr.mxu0 0.0
    %3219 = vmatpush1.msra.mxu0 0.0
    %3220 = vmatprep.subr.mxu0 0.0
    %3221 = vmatpush1.msra.mxu0 0.0
    %3222 = vmatprep.subr.mxu0 0.0
    %3223 = vmatpush1.msra.mxu0 0.0
    %3224 = vmatprep.subr.mxu0 0.0
    %3225 = vmatpush1.msra.mxu0 0.0
    %3226 = vmatprep.subr.mxu0 0.0
    %3227 = vmatpush1.msra.mxu0 0.0
    %3228 = vmatprep.subr.mxu0 0.0
    %3229 = vmatpush1.msra.mxu0 0.0
    %3230 = vmatprep.subr.mxu0 0.0
    %3231 = vmatpush1.msra.mxu0 0.0
    %3232 = vmatprep.mubr.f32.mxu0 0.0
    %3233 = vmatmul.mubr.f32.gmra.mrb[0].mxu0 %v1447
    %v3234 = vpop.f32.mrb[0].mxu0
    %v3235 = vadd.f32 %v2168, %v3234
    %v3236 = vpop.f32.mrb[0].mxu0
    %3237 = vdwg.mxu0
    %3238 = vmatprep.subr.mxu0 %v2105
    %3239 = vmatpush1.msra.mxu0 %v2104
    %3240 = vmatprep.subr.mxu0 %v2108
    %3241 = vmatpush1.msra.mxu0 %v2107
    %3242 = vmatprep.subr.mxu0 %v2111
    %3243 = vmatpush1.msra.mxu0 %v2110
    %3244 = vmatprep.subr.mxu0 %v2114
    %3245 = vmatpush1.msra.mxu0 %v2113
    %3246 = vmatprep.subr.mxu0 %v2117
    %3247 = vmatpush1.msra.mxu0 %v2116
    %3248 = vmatprep.subr.mxu0 %v2120
    %3249 = vmatpush1.msra.mxu0 %v2119
    %3250 = vmatprep.subr.mxu0 %v2123
    %3251 = vmatpush1.msra.mxu0 %v2122
    %3252 = vmatprep.subr.mxu0 %v2126
    %3253 = vmatpush1.msra.mxu0 %v2125
    %3254 = vmatprep.subr.mxu0 %v2129
    %3255 = vmatpush1.msra.mxu0 %v2128
    %3256 = vmatprep.subr.mxu0 %v2132
    %3257 = vmatpush1.msra.mxu0 %v2131
    %3258 = vmatprep.subr.mxu0 %v2135
    %3259 = vmatpush1.msra.mxu0 %v2134
    %3260 = vmatprep.subr.mxu0 %v2138
    %3261 = vmatpush1.msra.mxu0 %v2137
    %3262 = vmatprep.subr.mxu0 %v2141
    %3263 = vmatpush1.msra.mxu0 %v2140
    %3264 = vmatprep.subr.mxu0 %v2144
    %3265 = vmatpush1.msra.mxu0 %v2143
    %3266 = vmatprep.subr.mxu0 %v2147
    %3267 = vmatpush1.msra.mxu0 %v2146
    %3268 = vmatprep.subr.mxu0 %v2150
    %3269 = vmatpush1.msra.mxu0 %v2149
    %3270 = vmatprep.subr.mxu0 0.0
    %3271 = vmatpush1.msra.mxu0 0.0
    %3272 = vmatprep.subr.mxu0 0.0
    %3273 = vmatpush1.msra.mxu0 0.0
    %3274 = vmatprep.subr.mxu0 0.0
    %3275 = vmatpush1.msra.mxu0 0.0
    %3276 = vmatprep.subr.mxu0 0.0
    %3277 = vmatpush1.msra.mxu0 0.0
    %3278 = vmatprep.subr.mxu0 0.0
    %3279 = vmatpush1.msra.mxu0 0.0
    %3280 = vmatprep.subr.mxu0 0.0
    %3281 = vmatpush1.msra.mxu0 0.0
    %3282 = vmatprep.subr.mxu0 0.0
    %3283 = vmatpush1.msra.mxu0 0.0
    %3284 = vmatprep.subr.mxu0 0.0
    %3285 = vmatpush1.msra.mxu0 0.0
    %3286 = vmatprep.subr.mxu0 0.0
    %3287 = vmatpush1.msra.mxu0 0.0
    %3288 = vmatprep.subr.mxu0 0.0
    %3289 = vmatpush1.msra.mxu0 0.0
    %3290 = vmatprep.subr.mxu0 0.0
    %3291 = vmatpush1.msra.mxu0 0.0
    %3292 = vmatprep.subr.mxu0 0.0
    %3293 = vmatpush1.msra.mxu0 0.0
    %3294 = vmatprep.subr.mxu0 0.0
    %3295 = vmatpush1.msra.mxu0 0.0
    %3296 = vmatprep.subr.mxu0 0.0
    %3297 = vmatpush1.msra.mxu0 0.0
    %3298 = vmatprep.subr.mxu0 0.0
    %3299 = vmatpush1.msra.mxu0 0.0
    %3300 = vmatprep.subr.mxu0 0.0
    %3301 = vmatpush1.msra.mxu0 0.0
    %3302 = vmatprep.mubr.f32.mxu0 0.0
    %3303 = vmatmul.mubr.f32.gmra.mrb[0].mxu0 %v3096
    %v3304 = vpop.f32.mrb[0].mxu0
    %v3305 = vadd.f32 %v2317, %v3304
    %v3306 = vpop.f32.mrb[0].mxu0
    %v3307 = vadd.f32 %v2321, %v3306
    %3308 = vdwg.mxu0
    %3309 = vmatprep.subr.mxu0 0.0
    %3310 = vmatpush1.msra.mxu0 %v2106
    %3311 = vmatprep.subr.mxu0 0.0
    %3312 = vmatpush1.msra.mxu0 %v2109
    %3313 = vmatprep.subr.mxu0 0.0
    %3314 = vmatpush1.msra.mxu0 %v2112
    %3315 = vmatprep.subr.mxu0 0.0
    %3316 = vmatpush1.msra.mxu0 %v2115
    %3317 = vmatprep.subr.mxu0 0.0
    %3318 = vmatpush1.msra.mxu0 %v2118
    %3319 = vmatprep.subr.mxu0 0.0
    %3320 = vmatpush1.msra.mxu0 %v2121
    %3321 = vmatprep.subr.mxu0 0.0
    %3322 = vmatpush1.msra.mxu0 %v2124
    %3323 = vmatprep.subr.mxu0 0.0
    %3324 = vmatpush1.msra.mxu0 %v2127
    %3325 = vmatprep.subr.mxu0 0.0
    %3326 = vmatpush1.msra.mxu0 %v2130
    %3327 = vmatprep.subr.mxu0 0.0
    %3328 = vmatpush1.msra.mxu0 %v2133
    %3329 = vmatprep.subr.mxu0 0.0
    %3330 = vmatpush1.msra.mxu0 %v2136
    %3331 = vmatprep.subr.mxu0 0.0
    %3332 = vmatpush1.msra.mxu0 %v2139
    %3333 = vmatprep.subr.mxu0 0.0
    %3334 = vmatpush1.msra.mxu0 %v2142
    %3335 = vmatprep.subr.mxu0 0.0
    %3336 = vmatpush1.msra.mxu0 %v2145
    %3337 = vmatprep.subr.mxu0 0.0
    %3338 = vmatpush1.msra.mxu0 %v2148
    %3339 = vmatprep.subr.mxu0 0.0
    %3340 = vmatpush1.msra.mxu0 %v2151
    %3341 = vmatprep.subr.mxu0 0.0
    %3342 = vmatpush1.msra.mxu0 0.0
    %3343 = vmatprep.subr.mxu0 0.0
    %3344 = vmatpush1.msra.mxu0 0.0
    %3345 = vmatprep.subr.mxu0 0.0
    %3346 = vmatpush1.msra.mxu0 0.0
    %3347 = vmatprep.subr.mxu0 0.0
    %3348 = vmatpush1.msra.mxu0 0.0
    %3349 = vmatprep.subr.mxu0 0.0
    %3350 = vmatpush1.msra.mxu0 0.0
    %3351 = vmatprep.subr.mxu0 0.0
    %3352 = vmatpush1.msra.mxu0 0.0
    %3353 = vmatprep.subr.mxu0 0.0
    %3354 = vmatpush1.msra.mxu0 0.0
    %3355 = vmatprep.subr.mxu0 0.0
    %3356 = vmatpush1.msra.mxu0 0.0
    %3357 = vmatprep.subr.mxu0 0.0
    %3358 = vmatpush1.msra.mxu0 0.0
    %3359 = vmatprep.subr.mxu0 0.0
    %3360 = vmatpush1.msra.mxu0 0.0
    %3361 = vmatprep.subr.mxu0 0.0
    %3362 = vmatpush1.msra.mxu0 0.0
    %3363 = vmatprep.subr.mxu0 0.0
    %3364 = vmatpush1.msra.mxu0 0.0
    %3365 = vmatprep.subr.mxu0 0.0
    %3366 = vmatpush1.msra.mxu0 0.0
    %3367 = vmatprep.subr.mxu0 0.0
    %3368 = vmatpush1.msra.mxu0 0.0
    %3369 = vmatprep.subr.mxu0 0.0
    %3370 = vmatpush1.msra.mxu0 0.0
    %3371 = vmatprep.subr.mxu0 0.0
    %3372 = vmatpush1.msra.mxu0 0.0
    %3373 = vmatprep.mubr.f32.mxu0 0.0
    %3374 = vmatmul.mubr.f32.gmra.mrb[0].mxu0 %v3096
    %v3375 = vpop.f32.mrb[0].mxu0
    %v3376 = vadd.f32 %v2325, %v3375
    %v3377 = vpop.f32.mrb[0].mxu0
    %3378 = vdwg.mxu0
    %v3379 = vadd.f32 %v3164, %v3305
    %v3380 = vsub.f32 0.0, %v3379
    %v3381 = vmul.f32 %v3380, 1.442695
    %v3382 = vpow.pop %v3381
    %v3383 = vadd.f32 %v3382, 1.0
    %v3384 = vrcp.pop %v3383
    %v3385 = vmul.f32 1.0, %v3384
    %v3386 = vadd.f32 %v3166, %v3307
    %v3387 = vsub.f32 0.0, %v3386
    %v3388 = vmul.f32 %v3387, 1.442695
    %v3389 = vpow.pop %v3388
    %v3390 = vadd.f32 %v3389, 1.0
    %v3391 = vrcp.pop %v3390
    %v3392 = vmul.f32 1.0, %v3391
    %v3393 = vmul.f32 %v3385, %v3376
    %v3394 = vadd.f32 %v3235, %v3393
    %v3395 = vtanh.pop %v3394
    %v3396 = vsub.f32 1.0, %v3392
    %v3397 = vmul.f32 %v3396, %v3395
    %v3398 = vmul.f32 %v3392, %v3096
    %v3399 = vadd.f32 %v3397, %v3398
    %3400 = vmatprep.subr.mxu0 %v2056
    %3401 = vmatpush1.msra.mxu0 %v2055
    %3402 = vmatprep.subr.mxu0 %v2059
    %3403 = vmatpush1.msra.mxu0 %v2058
    %3404 = vmatprep.subr.mxu0 %v2062
    %3405 = vmatpush1.msra.mxu0 %v2061
    %3406 = vmatprep.subr.mxu0 %v2065
    %3407 = vmatpush1.msra.mxu0 %v2064
    %3408 = vmatprep.subr.mxu0 %v2068
    %3409 = vmatpush1.msra.mxu0 %v2067
    %3410 = vmatprep.subr.mxu0 %v2071
    %3411 = vmatpush1.msra.mxu0 %v2070
    %3412 = vmatprep.subr.mxu0 %v2074
    %3413 = vmatpush1.msra.mxu0 %v2073
    %3414 = vmatprep.subr.mxu0 %v2077
    %3415 = vmatpush1.msra.mxu0 %v2076
    %3416 = vmatprep.subr.mxu0 %v2080
    %3417 = vmatpush1.msra.mxu0 %v2079
    %3418 = vmatprep.subr.mxu0 %v2083
    %3419 = vmatpush1.msra.mxu0 %v2082
    %3420 = vmatprep.subr.mxu0 %v2086
    %3421 = vmatpush1.msra.mxu0 %v2085
    %3422 = vmatprep.subr.mxu0 %v2089
    %3423 = vmatpush1.msra.mxu0 %v2088
    %3424 = vmatprep.subr.mxu0 %v2092
    %3425 = vmatpush1.msra.mxu0 %v2091
    %3426 = vmatprep.subr.mxu0 %v2095
    %3427 = vmatpush1.msra.mxu0 %v2094
    %3428 = vmatprep.subr.mxu0 %v2098
    %3429 = vmatpush1.msra.mxu0 %v2097
    %3430 = vmatprep.subr.mxu0 %v2101
    %3431 = vmatpush1.msra.mxu0 %v2100
    %3432 = vmatprep.subr.mxu0 0.0
    %3433 = vmatpush1.msra.mxu0 0.0
    %3434 = vmatprep.subr.mxu0 0.0
    %3435 = vmatpush1.msra.mxu0 0.0
    %3436 = vmatprep.subr.mxu0 0.0
    %3437 = vmatpush1.msra.mxu0 0.0
    %3438 = vmatprep.subr.mxu0 0.0
    %3439 = vmatpush1.msra.mxu0 0.0
    %3440 = vmatprep.subr.mxu0 0.0
    %3441 = vmatpush1.msra.mxu0 0.0
    %3442 = vmatprep.subr.mxu0 0.0
    %3443 = vmatpush1.msra.mxu0 0.0
    %3444 = vmatprep.subr.mxu0 0.0
    %3445 = vmatpush1.msra.mxu0 0.0
    %3446 = vmatprep.subr.mxu0 0.0
    %3447 = vmatpush1.msra.mxu0 0.0
    %3448 = vmatprep.subr.mxu0 0.0
    %3449 = vmatpush1.msra.mxu0 0.0
    %3450 = vmatprep.subr.mxu0 0.0
    %3451 = vmatpush1.msra.mxu0 0.0
    %3452 = vmatprep.subr.mxu0 0.0
    %3453 = vmatpush1.msra.mxu0 0.0
    %3454 = vmatprep.subr.mxu0 0.0
    %3455 = vmatpush1.msra.mxu0 0.0
    %3456 = vmatprep.subr.mxu0 0.0
    %3457 = vmatpush1.msra.mxu0 0.0
    %3458 = vmatprep.subr.mxu0 0.0
    %3459 = vmatpush1.msra.mxu0 0.0
    %3460 = vmatprep.subr.mxu0 0.0
    %3461 = vmatpush1.msra.mxu0 0.0
    %3462 = vmatprep.subr.mxu0 0.0
    %3463 = vmatpush1.msra.mxu0 0.0
    %3464 = vmatprep.mubr.f32.mxu0 0.0
    %3465 = vmatmul.mubr.f32.gmra.mrb[0].mxu0 %v1750
    %v3466 = vpop.f32.mrb[0].mxu0
    %v3467 = vadd.f32 %v2160, %v3466
    %v3468 = vpop.f32.mrb[0].mxu0
    %v3469 = vadd.f32 %v2164, %v3468
    %3470 = vdwg.mxu0
    %3471 = vmatprep.subr.mxu0 0.0
    %3472 = vmatpush1.msra.mxu0 %v2057
    %3473 = vmatprep.subr.mxu0 0.0
    %3474 = vmatpush1.msra.mxu0 %v2060
    %3475 = vmatprep.subr.mxu0 0.0
    %3476 = vmatpush1.msra.mxu0 %v2063
    %3477 = vmatprep.subr.mxu0 0.0
    %3478 = vmatpush1.msra.mxu0 %v2066
    %3479 = vmatprep.subr.mxu0 0.0
    %3480 = vmatpush1.msra.mxu0 %v2069
    %3481 = vmatprep.subr.mxu0 0.0
    %3482 = vmatpush1.msra.mxu0 %v2072
    %3483 = vmatprep.subr.mxu0 0.0
    %3484 = vmatpush1.msra.mxu0 %v2075
    %3485 = vmatprep.subr.mxu0 0.0
    %3486 = vmatpush1.msra.mxu0 %v2078
    %3487 = vmatprep.subr.mxu0 0.0
    %3488 = vmatpush1.msra.mxu0 %v2081
    %3489 = vmatprep.subr.mxu0 0.0
    %3490 = vmatpush1.msra.mxu0 %v2084
    %3491 = vmatprep.subr.mxu0 0.0
    %3492 = vmatpush1.msra.mxu0 %v2087
    %3493 = vmatprep.subr.mxu0 0.0
    %3494 = vmatpush1.msra.mxu0 %v2090
    %3495 = vmatprep.subr.mxu0 0.0
    %3496 = vmatpush1.msra.mxu0 %v2093
    %3497 = vmatprep.subr.mxu0 0.0
    %3498 = vmatpush1.msra.mxu0 %v2096
    %3499 = vmatprep.subr.mxu0 0.0
    %3500 = vmatpush1.msra.mxu0 %v2099
    %3501 = vmatprep.subr.mxu0 0.0
    %3502 = vmatpush1.msra.mxu0 %v2102
    %3503 = vmatprep.subr.mxu0 0.0
    %3504 = vmatpush1.msra.mxu0 0.0
    %3505 = vmatprep.subr.mxu0 0.0
    %3506 = vmatpush1.msra.mxu0 0.0
    %3507 = vmatprep.subr.mxu0 0.0
    %3508 = vmatpush1.msra.mxu0 0.0
    %3509 = vmatprep.subr.mxu0 0.0
    %3510 = vmatpush1.msra.mxu0 0.0
    %3511 = vmatprep.subr.mxu0 0.0
    %3512 = vmatpush1.msra.mxu0 0.0
    %3513 = vmatprep.subr.mxu0 0.0
    %3514 = vmatpush1.msra.mxu0 0.0
    %3515 = vmatprep.subr.mxu0 0.0
    %3516 = vmatpush1.msra.mxu0 0.0
    %3517 = vmatprep.subr.mxu0 0.0
    %3518 = vmatpush1.msra.mxu0 0.0
    %3519 = vmatprep.subr.mxu0 0.0
    %3520 = vmatpush1.msra.mxu0 0.0
    %3521 = vmatprep.subr.mxu0 0.0
    %3522 = vmatpush1.msra.mxu0 0.0
    %3523 = vmatprep.subr.mxu0 0.0
    %3524 = vmatpush1.msra.mxu0 0.0
    %3525 = vmatprep.subr.mxu0 0.0
    %3526 = vmatpush1.msra.mxu0 0.0
    %3527 = vmatprep.subr.mxu0 0.0
    %3528 = vmatpush1.msra.mxu0 0.0
    %3529 = vmatprep.subr.mxu0 0.0
    %3530 = vmatpush1.msra.mxu0 0.0
    %3531 = vmatprep.subr.mxu0 0.0
    %3532 = vmatpush1.msra.mxu0 0.0
    %3533 = vmatprep.subr.mxu0 0.0
    %3534 = vmatpush1.msra.mxu0 0.0
    %3535 = vmatprep.mubr.f32.mxu0 0.0
    %3536 = vmatmul.mubr.f32.gmra.mrb[0].mxu0 %v1750
    %v3537 = vpop.f32.mrb[0].mxu0
    %v3538 = vadd.f32 %v2168, %v3537
    %v3539 = vpop.f32.mrb[0].mxu0
    %3540 = vdwg.mxu0
    %3541 = vmatprep.subr.mxu0 %v2105
    %3542 = vmatpush1.msra.mxu0 %v2104
    %3543 = vmatprep.subr.mxu0 %v2108
    %3544 = vmatpush1.msra.mxu0 %v2107
    %3545 = vmatprep.subr.mxu0 %v2111
    %3546 = vmatpush1.msra.mxu0 %v2110
    %3547 = vmatprep.subr.mxu0 %v2114
    %3548 = vmatpush1.msra.mxu0 %v2113
    %3549 = vmatprep.subr.mxu0 %v2117
    %3550 = vmatpush1.msra.mxu0 %v2116
    %3551 = vmatprep.subr.mxu0 %v2120
    %3552 = vmatpush1.msra.mxu0 %v2119
    %3553 = vmatprep.subr.mxu0 %v2123
    %3554 = vmatpush1.msra.mxu0 %v2122
    %3555 = vmatprep.subr.mxu0 %v2126
    %3556 = vmatpush1.msra.mxu0 %v2125
    %3557 = vmatprep.subr.mxu0 %v2129
    %3558 = vmatpush1.msra.mxu0 %v2128
    %3559 = vmatprep.subr.mxu0 %v2132
    %3560 = vmatpush1.msra.mxu0 %v2131
    %3561 = vmatprep.subr.mxu0 %v2135
    %3562 = vmatpush1.msra.mxu0 %v2134
    %3563 = vmatprep.subr.mxu0 %v2138
    %3564 = vmatpush1.msra.mxu0 %v2137
    %3565 = vmatprep.subr.mxu0 %v2141
    %3566 = vmatpush1.msra.mxu0 %v2140
    %3567 = vmatprep.subr.mxu0 %v2144
    %3568 = vmatpush1.msra.mxu0 %v2143
    %3569 = vmatprep.subr.mxu0 %v2147
    %3570 = vmatpush1.msra.mxu0 %v2146
    %3571 = vmatprep.subr.mxu0 %v2150
    %3572 = vmatpush1.msra.mxu0 %v2149
    %3573 = vmatprep.subr.mxu0 0.0
    %3574 = vmatpush1.msra.mxu0 0.0
    %3575 = vmatprep.subr.mxu0 0.0
    %3576 = vmatpush1.msra.mxu0 0.0
    %3577 = vmatprep.subr.mxu0 0.0
    %3578 = vmatpush1.msra.mxu0 0.0
    %3579 = vmatprep.subr.mxu0 0.0
    %3580 = vmatpush1.msra.mxu0 0.0
    %3581 = vmatprep.subr.mxu0 0.0
    %3582 = vmatpush1.msra.mxu0 0.0
    %3583 = vmatprep.subr.mxu0 0.0
    %3584 = vmatpush1.msra.mxu0 0.0
    %3585 = vmatprep.subr.mxu0 0.0
    %3586 = vmatpush1.msra.mxu0 0.0
    %3587 = vmatprep.subr.mxu0 0.0
    %3588 = vmatpush1.msra.mxu0 0.0
    %3589 = vmatprep.subr.mxu0 0.0
    %3590 = vmatpush1.msra.mxu0 0.0
    %3591 = vmatprep.subr.mxu0 0.0
    %3592 = vmatpush1.msra.mxu0 0.0
    %3593 = vmatprep.subr.mxu0 0.0
    %3594 = vmatpush1.msra.mxu0 0.0
    %3595 = vmatprep.subr.mxu0 0.0
    %3596 = vmatpush1.msra.mxu0 0.0
    %3597 = vmatprep.subr.mxu0 0.0
    %3598 = vmatpush1.msra.mxu0 0.0
    %3599 = vmatprep.subr.mxu0 0.0
    %3600 = vmatpush1.msra.mxu0 0.0
    %3601 = vmatprep.subr.mxu0 0.0
    %3602 = vmatpush1.msra.mxu0 0.0
    %3603 = vmatprep.subr.mxu0 0.0
    %3604 = vmatpush1.msra.mxu0 0.0
    %3605 = vmatprep.mubr.f32.mxu0 0.0
    %3606 = vmatmul.mubr.f32.gmra.mrb[0].mxu0 %v3399
    %v3607 = vpop.f32.mrb[0].mxu0
    %v3608 = vadd.f32 %v2317, %v3607
    %v3609 = vpop.f32.mrb[0].mxu0
    %v3610 = vadd.f32 %v2321, %v3609
    %3611 = vdwg.mxu0
    %3612 = vmatprep.subr.mxu0 0.0
    %3613 = vmatpush1.msra.mxu0 %v2106
    %3614 = vmatprep.subr.mxu0 0.0
    %3615 = vmatpush1.msra.mxu0 %v2109
    %3616 = vmatprep.subr.mxu0 0.0
    %3617 = vmatpush1.msra.mxu0 %v2112
    %3618 = vmatprep.subr.mxu0 0.0
    %3619 = vmatpush1.msra.mxu0 %v2115
    %3620 = vmatprep.subr.mxu0 0.0
    %3621 = vmatpush1.msra.mxu0 %v2118
    %3622 = vmatprep.subr.mxu0 0.0
    %3623 = vmatpush1.msra.mxu0 %v2121
    %3624 = vmatprep.subr.mxu0 0.0
    %3625 = vmatpush1.msra.mxu0 %v2124
    %3626 = vmatprep.subr.mxu0 0.0
    %3627 = vmatpush1.msra.mxu0 %v2127
    %3628 = vmatprep.subr.mxu0 0.0
    %3629 = vmatpush1.msra.mxu0 %v2130
    %3630 = vmatprep.subr.mxu0 0.0
    %3631 = vmatpush1.msra.mxu0 %v2133
    %3632 = vmatprep.subr.mxu0 0.0
    %3633 = vmatpush1.msra.mxu0 %v2136
    %3634 = vmatprep.subr.mxu0 0.0
    %3635 = vmatpush1.msra.mxu0 %v2139
    %3636 = vmatprep.subr.mxu0 0.0
    %3637 = vmatpush1.msra.mxu0 %v2142
    %3638 = vmatprep.subr.mxu0 0.0
    %3639 = vmatpush1.msra.mxu0 %v2145
    %3640 = vmatprep.subr.mxu0 0.0
    %3641 = vmatpush1.msra.mxu0 %v2148
    %3642 = vmatprep.subr.mxu0 0.0
    %3643 = vmatpush1.msra.mxu0 %v2151
    %3644 = vmatprep.subr.mxu0 0.0
    %3645 = vmatpush1.msra.mxu0 0.0
    %3646 = vmatprep.subr.mxu0 0.0
    %3647 = vmatpush1.msra.mxu0 0.0
    %3648 = vmatprep.subr.mxu0 0.0
    %3649 = vmatpush1.msra.mxu0 0.0
    %3650 = vmatprep.subr.mxu0 0.0
    %3651 = vmatpush1.msra.mxu0 0.0
    %3652 = vmatprep.subr.mxu0 0.0
    %3653 = vmatpush1.msra.mxu0 0.0
    %3654 = vmatprep.subr.mxu0 0.0
    %3655 = vmatpush1.msra.mxu0 0.0
    %3656 = vmatprep.subr.mxu0 0.0
    %3657 = vmatpush1.msra.mxu0 0.0
    %3658 = vmatprep.subr.mxu0 0.0
    %3659 = vmatpush1.msra.mxu0 0.0
    %3660 = vmatprep.subr.mxu0 0.0
    %3661 = vmatpush1.msra.mxu0 0.0
    %3662 = vmatprep.subr.mxu0 0.0
    %3663 = vmatpush1.msra.mxu0 0.0
    %3664 = vmatprep.subr.mxu0 0.0
    %3665 = vmatpush1.msra.mxu0 0.0
    %3666 = vmatprep.subr.mxu0 0.0
    %3667 = vmatpush1.msra.mxu0 0.0
    %3668 = vmatprep.subr.mxu0 0.0
    %3669 = vmatpush1.msra.mxu0 0.0
    %3670 = vmatprep.subr.mxu0 0.0
    %3671 = vmatpush1.msra.mxu0 0.0
    %3672 = vmatprep.subr.mxu0 0.0
    %3673 = vmatpush1.msra.mxu0 0.0
    %3674 = vmatprep.subr.mxu0 0.0
    %3675 = vmatpush1.msra.mxu0 0.0
    %3676 = vmatprep.mubr.f32.mxu0 0.0
    %3677 = vmatmul.mubr.f32.gmra.mrb[0].mxu0 %v3399
    %v3678 = vpop.f32.mrb[0].mxu0
    %v3679 = vadd.f32 %v2325, %v3678
    %v3680 = vpop.f32.mrb[0].mxu0
    %3681 = vdwg.mxu0
    %v3682 = vadd.f32 %v3467, %v3608
    %v3683 = vsub.f32 0.0, %v3682
    %v3684 = vmul.f32 %v3683, 1.442695
    %v3685 = vpow.pop %v3684
    %v3686 = vadd.f32 %v3685, 1.0
    %v3687 = vrcp.pop %v3686
    %v3688 = vmul.f32 1.0, %v3687
    %v3689 = vadd.f32 %v3469, %v3610
    %v3690 = vsub.f32 0.0, %v3689
    %v3691 = vmul.f32 %v3690, 1.442695
    %v3692 = vpow.pop %v3691
    %v3693 = vadd.f32 %v3692, 1.0
    %v3694 = vrcp.pop %v3693
    %v3695 = vmul.f32 1.0, %v3694
    %v3696 = vmul.f32 %v3688, %v3679
    %v3697 = vadd.f32 %v3538, %v3696
    %v3698 = vtanh.pop %v3697
    %v3699 = vsub.f32 1.0, %v3695
    %v3700 = vmul.f32 %v3699, %v3698
    %v3701 = vmul.f32 %v3695, %v3399
    %v3702 = vadd.f32 %v3700, %v3701
    %3703 = vmatprep.subr.mxu0 %v2056
    %3704 = vmatpush1.msra.mxu0 %v2055
    %3705 = vmatprep.subr.mxu0 %v2059
    %3706 = vmatpush1.msra.mxu0 %v2058
    %3707 = vmatprep.subr.mxu0 %v2062
    %3708 = vmatpush1.msra.mxu0 %v2061
    %3709 = vmatprep.subr.mxu0 %v2065
    %3710 = vmatpush1.msra.mxu0 %v2064
    %3711 = vmatprep.subr.mxu0 %v2068
    %3712 = vmatpush1.msra.mxu0 %v2067
    %3713 = vmatprep.subr.mxu0 %v2071
    %3714 = vmatpush1.msra.mxu0 %v2070
    %3715 = vmatprep.subr.mxu0 %v2074
    %3716 = vmatpush1.msra.mxu0 %v2073
    %3717 = vmatprep.subr.mxu0 %v2077
    %3718 = vmatpush1.msra.mxu0 %v2076
    %3719 = vmatprep.subr.mxu0 %v2080
    %3720 = vmatpush1.msra.mxu0 %v2079
    %3721 = vmatprep.subr.mxu0 %v2083
    %3722 = vmatpush1.msra.mxu0 %v2082
    %3723 = vmatprep.subr.mxu0 %v2086
    %3724 = vmatpush1.msra.mxu0 %v2085
    %3725 = vmatprep.subr.mxu0 %v2089
    %3726 = vmatpush1.msra.mxu0 %v2088
    %3727 = vmatprep.subr.mxu0 %v2092
    %3728 = vmatpush1.msra.mxu0 %v2091
    %3729 = vmatprep.subr.mxu0 %v2095
    %3730 = vmatpush1.msra.mxu0 %v2094
    %3731 = vmatprep.subr.mxu0 %v2098
    %3732 = vmatpush1.msra.mxu0 %v2097
    %3733 = vmatprep.subr.mxu0 %v2101
    %3734 = vmatpush1.msra.mxu0 %v2100
    %3735 = vmatprep.subr.mxu0 0.0
    %3736 = vmatpush1.msra.mxu0 0.0
    %3737 = vmatprep.subr.mxu0 0.0
    %3738 = vmatpush1.msra.mxu0 0.0
    %3739 = vmatprep.subr.mxu0 0.0
    %3740 = vmatpush1.msra.mxu0 0.0
    %3741 = vmatprep.subr.mxu0 0.0
    %3742 = vmatpush1.msra.mxu0 0.0
    %3743 = vmatprep.subr.mxu0 0.0
    %3744 = vmatpush1.msra.mxu0 0.0
    %3745 = vmatprep.subr.mxu0 0.0
    %3746 = vmatpush1.msra.mxu0 0.0
    %3747 = vmatprep.subr.mxu0 0.0
    %3748 = vmatpush1.msra.mxu0 0.0
    %3749 = vmatprep.subr.mxu0 0.0
    %3750 = vmatpush1.msra.mxu0 0.0
    %3751 = vmatprep.subr.mxu0 0.0
    %3752 = vmatpush1.msra.mxu0 0.0
    %3753 = vmatprep.subr.mxu0 0.0
    %3754 = vmatpush1.msra.mxu0 0.0
    %3755 = vmatprep.subr.mxu0 0.0
    %3756 = vmatpush1.msra.mxu0 0.0
    %3757 = vmatprep.subr.mxu0 0.0
    %3758 = vmatpush1.msra.mxu0 0.0
    %3759 = vmatprep.subr.mxu0 0.0
    %3760 = vmatpush1.msra.mxu0 0.0
    %3761 = vmatprep.subr.mxu0 0.0
    %3762 = vmatpush1.msra.mxu0 0.0
    %3763 = vmatprep.subr.mxu0 0.0
    %3764 = vmatpush1.msra.mxu0 0.0
    %3765 = vmatprep.subr.mxu0 0.0
    %3766 = vmatpush1.msra.mxu0 0.0
    %3767 = vmatprep.mubr.f32.mxu0 0.0
    %3768 = vmatmul.mubr.f32.gmra.mrb[0].mxu0 %v2053
    %v3769 = vpop.f32.mrb[0].mxu0
    %v3770 = vadd.f32 %v2160, %v3769
    %v3771 = vpop.f32.mrb[0].mxu0
    %v3772 = vadd.f32 %v2164, %v3771
    %3773 = vdwg.mxu0
    %3774 = vmatprep.subr.mxu0 0.0
    %3775 = vmatpush1.msra.mxu0 %v2057
    %3776 = vmatprep.subr.mxu0 0.0
    %3777 = vmatpush1.msra.mxu0 %v2060
    %3778 = vmatprep.subr.mxu0 0.0
    %3779 = vmatpush1.msra.mxu0 %v2063
    %3780 = vmatprep.subr.mxu0 0.0
    %3781 = vmatpush1.msra.mxu0 %v2066
    %3782 = vmatprep.subr.mxu0 0.0
    %3783 = vmatpush1.msra.mxu0 %v2069
    %3784 = vmatprep.subr.mxu0 0.0
    %3785 = vmatpush1.msra.mxu0 %v2072
    %3786 = vmatprep.subr.mxu0 0.0
    %3787 = vmatpush1.msra.mxu0 %v2075
    %3788 = vmatprep.subr.mxu0 0.0
    %3789 = vmatpush1.msra.mxu0 %v2078
    %3790 = vmatprep.subr.mxu0 0.0
    %3791 = vmatpush1.msra.mxu0 %v2081
    %3792 = vmatprep.subr.mxu0 0.0
    %3793 = vmatpush1.msra.mxu0 %v2084
    %3794 = vmatprep.subr.mxu0 0.0
    %3795 = vmatpush1.msra.mxu0 %v2087
    %3796 = vmatprep.subr.mxu0 0.0
    %3797 = vmatpush1.msra.mxu0 %v2090
    %3798 = vmatprep.subr.mxu0 0.0
    %3799 = vmatpush1.msra.mxu0 %v2093
    %3800 = vmatprep.subr.mxu0 0.0
    %3801 = vmatpush1.msra.mxu0 %v2096
    %3802 = vmatprep.subr.mxu0 0.0
    %3803 = vmatpush1.msra.mxu0 %v2099
    %3804 = vmatprep.subr.mxu0 0.0
    %3805 = vmatpush1.msra.mxu0 %v2102
    %3806 = vmatprep.subr.mxu0 0.0
    %3807 = vmatpush1.msra.mxu0 0.0
    %3808 = vmatprep.subr.mxu0 0.0
    %3809 = vmatpush1.msra.mxu0 0.0
    %3810 = vmatprep.subr.mxu0 0.0
    %3811 = vmatpush1.msra.mxu0 0.0
    %3812 = vmatprep.subr.mxu0 0.0
    %3813 = vmatpush1.msra.mxu0 0.0
    %3814 = vmatprep.subr.mxu0 0.0
    %3815 = vmatpush1.msra.mxu0 0.0
    %3816 = vmatprep.subr.mxu0 0.0
    %3817 = vmatpush1.msra.mxu0 0.0
    %3818 = vmatprep.subr.mxu0 0.0
    %3819 = vmatpush1.msra.mxu0 0.0
    %3820 = vmatprep.subr.mxu0 0.0
    %3821 = vmatpush1.msra.mxu0 0.0
    %3822 = vmatprep.subr.mxu0 0.0
    %3823 = vmatpush1.msra.mxu0 0.0
    %3824 = vmatprep.subr.mxu0 0.0
    %3825 = vmatpush1.msra.mxu0 0.0
    %3826 = vmatprep.subr.mxu0 0.0
    %3827 = vmatpush1.msra.mxu0 0.0
    %3828 = vmatprep.subr.mxu0 0.0
    %3829 = vmatpush1.msra.mxu0 0.0
    %3830 = vmatprep.subr.mxu0 0.0
    %3831 = vmatpush1.msra.mxu0 0.0
    %3832 = vmatprep.subr.mxu0 0.0
    %3833 = vmatpush1.msra.mxu0 0.0
    %3834 = vmatprep.subr.mxu0 0.0
    %3835 = vmatpush1.msra.mxu0 0.0
    %3836 = vmatprep.subr.mxu0 0.0
    %3837 = vmatpush1.msra.mxu0 0.0
    %3838 = vmatprep.mubr.f32.mxu0 0.0
    %3839 = vmatmul.mubr.f32.gmra.mrb[0].mxu0 %v2053
    %v3840 = vpop.f32.mrb[0].mxu0
    %v3841 = vadd.f32 %v2168, %v3840
    %v3842 = vpop.f32.mrb[0].mxu0
    %3843 = vdwg.mxu0
    %3844 = vmatprep.subr.mxu0 %v2105
    %3845 = vmatpush1.msra.mxu0 %v2104
    %3846 = vmatprep.subr.mxu0 %v2108
    %3847 = vmatpush1.msra.mxu0 %v2107
    %3848 = vmatprep.subr.mxu0 %v2111
    %3849 = vmatpush1.msra.mxu0 %v2110
    %3850 = vmatprep.subr.mxu0 %v2114
    %3851 = vmatpush1.msra.mxu0 %v2113
    %3852 = vmatprep.subr.mxu0 %v2117
    %3853 = vmatpush1.msra.mxu0 %v2116
    %3854 = vmatprep.subr.mxu0 %v2120
    %3855 = vmatpush1.msra.mxu0 %v2119
    %3856 = vmatprep.subr.mxu0 %v2123
    %3857 = vmatpush1.msra.mxu0 %v2122
    %3858 = vmatprep.subr.mxu0 %v2126
    %3859 = vmatpush1.msra.mxu0 %v2125
    %3860 = vmatprep.subr.mxu0 %v2129
    %3861 = vmatpush1.msra.mxu0 %v2128
    %3862 = vmatprep.subr.mxu0 %v2132
    %3863 = vmatpush1.msra.mxu0 %v2131
    %3864 = vmatprep.subr.mxu0 %v2135
    %3865 = vmatpush1.msra.mxu0 %v2134
    %3866 = vmatprep.subr.mxu0 %v2138
    %3867 = vmatpush1.msra.mxu0 %v2137
    %3868 = vmatprep.subr.mxu0 %v2141
    %3869 = vmatpush1.msra.mxu0 %v2140
    %3870 = vmatprep.subr.mxu0 %v2144
    %3871 = vmatpush1.msra.mxu0 %v2143
    %3872 = vmatprep.subr.mxu0 %v2147
    %3873 = vmatpush1.msra.mxu0 %v2146
    %3874 = vmatprep.subr.mxu0 %v2150
    %3875 = vmatpush1.msra.mxu0 %v2149
    %3876 = vmatprep.subr.mxu0 0.0
    %3877 = vmatpush1.msra.mxu0 0.0
    %3878 = vmatprep.subr.mxu0 0.0
    %3879 = vmatpush1.msra.mxu0 0.0
    %3880 = vmatprep.subr.mxu0 0.0
    %3881 = vmatpush1.msra.mxu0 0.0
    %3882 = vmatprep.subr.mxu0 0.0
    %3883 = vmatpush1.msra.mxu0 0.0
    %3884 = vmatprep.subr.mxu0 0.0
    %3885 = vmatpush1.msra.mxu0 0.0
    %3886 = vmatprep.subr.mxu0 0.0
    %3887 = vmatpush1.msra.mxu0 0.0
    %3888 = vmatprep.subr.mxu0 0.0
    %3889 = vmatpush1.msra.mxu0 0.0
    %3890 = vmatprep.subr.mxu0 0.0
    %3891 = vmatpush1.msra.mxu0 0.0
    %3892 = vmatprep.subr.mxu0 0.0
    %3893 = vmatpush1.msra.mxu0 0.0
    %3894 = vmatprep.subr.mxu0 0.0
    %3895 = vmatpush1.msra.mxu0 0.0
    %3896 = vmatprep.subr.mxu0 0.0
    %3897 = vmatpush1.msra.mxu0 0.0
    %3898 = vmatprep.subr.mxu0 0.0
    %3899 = vmatpush1.msra.mxu0 0.0
    %3900 = vmatprep.subr.mxu0 0.0
    %3901 = vmatpush1.msra.mxu0 0.0
    %3902 = vmatprep.subr.mxu0 0.0
    %3903 = vmatpush1.msra.mxu0 0.0
    %3904 = vmatprep.subr.mxu0 0.0
    %3905 = vmatpush1.msra.mxu0 0.0
    %3906 = vmatprep.subr.mxu0 0.0
    %3907 = vmatpush1.msra.mxu0 0.0
    %3908 = vmatprep.mubr.f32.mxu0 0.0
    %3909 = vmatmul.mubr.f32.gmra.mrb[0].mxu0 %v3702
    %v3910 = vpop.f32.mrb[0].mxu0
    %v3911 = vadd.f32 %v2317, %v3910
    %v3912 = vpop.f32.mrb[0].mxu0
    %v3913 = vadd.f32 %v2321, %v3912
    %3914 = vdwg.mxu0
    %3915 = vmatprep.subr.mxu0 0.0
    %3916 = vmatpush1.msra.mxu0 %v2106
    %3917 = vmatprep.subr.mxu0 0.0
    %3918 = vmatpush1.msra.mxu0 %v2109
    %3919 = vmatprep.subr.mxu0 0.0
    %3920 = vmatpush1.msra.mxu0 %v2112
    %3921 = vmatprep.subr.mxu0 0.0
    %3922 = vmatpush1.msra.mxu0 %v2115
    %3923 = vmatprep.subr.mxu0 0.0
    %3924 = vmatpush1.msra.mxu0 %v2118
    %3925 = vmatprep.subr.mxu0 0.0
    %3926 = vmatpush1.msra.mxu0 %v2121
    %3927 = vmatprep.subr.mxu0 0.0
    %3928 = vmatpush1.msra.mxu0 %v2124
    %3929 = vmatprep.subr.mxu0 0.0
    %3930 = vmatpush1.msra.mxu0 %v2127
    %3931 = vmatprep.subr.mxu0 0.0
    %3932 = vmatpush1.msra.mxu0 %v2130
    %3933 = vmatprep.subr.mxu0 0.0
    %3934 = vmatpush1.msra.mxu0 %v2133
    %3935 = vmatprep.subr.mxu0 0.0
    %3936 = vmatpush1.msra.mxu0 %v2136
    %3937 = vmatprep.subr.mxu0 0.0
    %3938 = vmatpush1.msra.mxu0 %v2139
    %3939 = vmatprep.subr.mxu0 0.0
    %3940 = vmatpush1.msra.mxu0 %v2142
    %3941 = vmatprep.subr.mxu0 0.0
    %3942 = vmatpush1.msra.mxu0 %v2145
    %3943 = vmatprep.subr.mxu0 0.0
    %3944 = vmatpush1.msra.mxu0 %v2148
    %3945 = vmatprep.subr.mxu0 0.0
    %3946 = vmatpush1.msra.mxu0 %v2151
    %3947 = vmatprep.subr.mxu0 0.0
    %3948 = vmatpush1.msra.mxu0 0.0
    %3949 = vmatprep.subr.mxu0 0.0
    %3950 = vmatpush1.msra.mxu0 0.0
    %3951 = vmatprep.subr.mxu0 0.0
    %3952 = vmatpush1.msra.mxu0 0.0
    %3953 = vmatprep.subr.mxu0 0.0
    %3954 = vmatpush1.msra.mxu0 0.0
    %3955 = vmatprep.subr.mxu0 0.0
    %3956 = vmatpush1.msra.mxu0 0.0
    %3957 = vmatprep.subr.mxu0 0.0
    %3958 = vmatpush1.msra.mxu0 0.0
    %3959 = vmatprep.subr.mxu0 0.0
    %3960 = vmatpush1.msra.mxu0 0.0
    %3961 = vmatprep.subr.mxu0 0.0
    %3962 = vmatpush1.msra.mxu0 0.0
    %3963 = vmatprep.subr.mxu0 0.0
    %3964 = vmatpush1.msra.mxu0 0.0
    %3965 = vmatprep.subr.mxu0 0.0
    %3966 = vmatpush1.msra.mxu0 0.0
    %3967 = vmatprep.subr.mxu0 0.0
    %3968 = vmatpush1.msra.mxu0 0.0
    %3969 = vmatprep.subr.mxu0 0.0
    %3970 = vmatpush1.msra.mxu0 0.0
    %3971 = vmatprep.subr.mxu0 0.0
    %3972 = vmatpush1.msra.mxu0 0.0
    %3973 = vmatprep.subr.mxu0 0.0
    %3974 = vmatpush1.msra.mxu0 0.0
    %3975 = vmatprep.subr.mxu0 0.0
    %3976 = vmatpush1.msra.mxu0 0.0
    %3977 = vmatprep.subr.mxu0 0.0
    %3978 = vmatpush1.msra.mxu0 0.0
    %3979 = vmatprep.mubr.f32.mxu0 0.0
    %3980 = vmatmul.mubr.f32.gmra.mrb[0].mxu0 %v3702
    %v3981 = vpop.f32.mrb[0].mxu0
    %v3982 = vadd.f32 %v2325, %v3981
    %v3983 = vpop.f32.mrb[0].mxu0
    %3984 = vdwg.mxu0
    %v3985 = vadd.f32 %v3770, %v3911
    %v3986 = vsub.f32 0.0, %v3985
    %v3987 = vmul.f32 %v3986, 1.442695
    %v3988 = vpow.pop %v3987
    %v3989 = vadd.f32 %v3988, 1.0
    %v3990 = vrcp.pop %v3989
    %v3991 = vmul.f32 1.0, %v3990
    %v3992 = vadd.f32 %v3772, %v3913
    %v3993 = vsub.f32 0.0, %v3992
    %v3994 = vmul.f32 %v3993, 1.442695
    %v3995 = vpow.pop %v3994
    %v3996 = vadd.f32 %v3995, 1.0
    %v3997 = vrcp.pop %v3996
    %v3998 = vmul.f32 1.0, %v3997
    %v3999 = vmul.f32 %v3991, %v3982
    %v4000 = vadd.f32 %v3841, %v3999
    %v4001 = vtanh.pop %v4000
    %v4002 = vsub.f32 1.0, %v3998
    %v4003 = vmul.f32 %v4002, %v4001
    %v4004 = vmul.f32 %v3998, %v3702
    %v4005 = vadd.f32 %v4003, %v4004
    %s4006 = scalar_lea.vmem [#allocation5], 768
    %v4007 = vld [vmem:[%s4006] sm:$0xff]
    %v4008 = vld [vmem:[%s4006 + $0x8] sm:$0xff]
    %v4009 = vld [vmem:[%s4006 + $0x10] sm:$0xff]
    %v4010 = vld [vmem:[%s4006 + $0x18] sm:$0xff]
    %v4011 = vld [vmem:[%s4006 + $0x20] sm:$0xff]
    %v4012 = vld [vmem:[%s4006 + $0x28] sm:$0xff]
    %v4013 = vld [vmem:[%s4006 + $0x30] sm:$0xff]
    %v4014 = vld [vmem:[%s4006 + $0x38] sm:$0xff]
    %v4015 = vld [vmem:[%s4006 + $0x40] sm:$0xff]
    %v4016 = vld [vmem:[%s4006 + $0x48] sm:$0xff]
    %v4017 = vld [vmem:[%s4006 + $0x50] sm:$0xff]
    %v4018 = vld [vmem:[%s4006 + $0x58] sm:$0xff]
    %v4019 = vld [vmem:[%s4006 + $0x60] sm:$0xff]
    %v4020 = vld [vmem:[%s4006 + $0x68] sm:$0xff]
    %v4021 = vld [vmem:[%s4006 + $0x70] sm:$0xff]
    %v4022 = vld [vmem:[%s4006 + $0x78] sm:$0xff]
    %v4023 = vld [vmem:[%s4006 + $0x80] sm:$0xff]
    %v4024 = vld [vmem:[%s4006 + $0x88] sm:$0xff]
    %v4025 = vld [vmem:[%s4006 + $0x90] sm:$0xff]
    %v4026 = vld [vmem:[%s4006 + $0x98] sm:$0xff]
    %v4027 = vld [vmem:[%s4006 + $0xa0] sm:$0xff]
    %v4028 = vld [vmem:[%s4006 + $0xa8] sm:$0xff]
    %v4029 = vld [vmem:[%s4006 + $0xb0] sm:$0xff]
    %v4030 = vld [vmem:[%s4006 + $0xb8] sm:$0xff]
    %v4031 = vld [vmem:[%s4006 + $0xc0] sm:$0xff]
    %v4032 = vld [vmem:[%s4006 + $0xc8] sm:$0xff]
    %v4033 = vld [vmem:[%s4006 + $0xd0] sm:$0xff]
    %v4034 = vld [vmem:[%s4006 + $0xd8] sm:$0xff]
    %v4035 = vld [vmem:[%s4006 + $0xe0] sm:$0xff]
    %v4036 = vld [vmem:[%s4006 + $0xe8] sm:$0xff]
    %v4037 = vld [vmem:[%s4006 + $0xf0] sm:$0xff]
    %v4038 = vld [vmem:[%s4006 + $0xf8] sm:$0xff]
    %v4039 = vld [vmem:[%s4006 + $0x100] sm:$0xff]
    %v4040 = vld [vmem:[%s4006 + $0x108] sm:$0xff]
    %v4041 = vld [vmem:[%s4006 + $0x110] sm:$0xff]
    %v4042 = vld [vmem:[%s4006 + $0x118] sm:$0xff]
    %v4043 = vld [vmem:[%s4006 + $0x120] sm:$0xff]
    %v4044 = vld [vmem:[%s4006 + $0x128] sm:$0xff]
    %v4045 = vld [vmem:[%s4006 + $0x130] sm:$0xff]
    %v4046 = vld [vmem:[%s4006 + $0x138] sm:$0xff]
    %v4047 = vld [vmem:[%s4006 + $0x140] sm:$0xff]
    %v4048 = vld [vmem:[%s4006 + $0x148] sm:$0xff]
    %v4049 = vld [vmem:[%s4006 + $0x150] sm:$0xff]
    %v4050 = vld [vmem:[%s4006 + $0x158] sm:$0xff]
    %v4051 = vld [vmem:[%s4006 + $0x160] sm:$0xff]
    %v4052 = vld [vmem:[%s4006 + $0x168] sm:$0xff]
    %v4053 = vld [vmem:[%s4006 + $0x170] sm:$0xff]
    %v4054 = vld [vmem:[%s4006 + $0x178] sm:$0xff]
    %s4055 = scalar_lea.vmem [#allocation7], 768
    %v4056 = vld [vmem:[%s4055] sm:$0xff]
    %v4057 = vld [vmem:[%s4055 + $0x8] sm:$0xff]
    %v4058 = vld [vmem:[%s4055 + $0x10] sm:$0xff]
    %v4059 = vld [vmem:[%s4055 + $0x18] sm:$0xff]
    %v4060 = vld [vmem:[%s4055 + $0x20] sm:$0xff]
    %v4061 = vld [vmem:[%s4055 + $0x28] sm:$0xff]
    %v4062 = vld [vmem:[%s4055 + $0x30] sm:$0xff]
    %v4063 = vld [vmem:[%s4055 + $0x38] sm:$0xff]
    %v4064 = vld [vmem:[%s4055 + $0x40] sm:$0xff]
    %v4065 = vld [vmem:[%s4055 + $0x48] sm:$0xff]
    %v4066 = vld [vmem:[%s4055 + $0x50] sm:$0xff]
    %v4067 = vld [vmem:[%s4055 + $0x58] sm:$0xff]
    %v4068 = vld [vmem:[%s4055 + $0x60] sm:$0xff]
    %v4069 = vld [vmem:[%s4055 + $0x68] sm:$0xff]
    %v4070 = vld [vmem:[%s4055 + $0x70] sm:$0xff]
    %v4071 = vld [vmem:[%s4055 + $0x78] sm:$0xff]
    %v4072 = vld [vmem:[%s4055 + $0x80] sm:$0xff]
    %v4073 = vld [vmem:[%s4055 + $0x88] sm:$0xff]
    %v4074 = vld [vmem:[%s4055 + $0x90] sm:$0xff]
    %v4075 = vld [vmem:[%s4055 + $0x98] sm:$0xff]
    %v4076 = vld [vmem:[%s4055 + $0xa0] sm:$0xff]
    %v4077 = vld [vmem:[%s4055 + $0xa8] sm:$0xff]
    %v4078 = vld [vmem:[%s4055 + $0xb0] sm:$0xff]
    %v4079 = vld [vmem:[%s4055 + $0xb8] sm:$0xff]
    %v4080 = vld [vmem:[%s4055 + $0xc0] sm:$0xff]
    %v4081 = vld [vmem:[%s4055 + $0xc8] sm:$0xff]
    %v4082 = vld [vmem:[%s4055 + $0xd0] sm:$0xff]
    %v4083 = vld [vmem:[%s4055 + $0xd8] sm:$0xff]
    %v4084 = vld [vmem:[%s4055 + $0xe0] sm:$0xff]
    %v4085 = vld [vmem:[%s4055 + $0xe8] sm:$0xff]
    %v4086 = vld [vmem:[%s4055 + $0xf0] sm:$0xff]
    %v4087 = vld [vmem:[%s4055 + $0xf8] sm:$0xff]
    %v4088 = vld [vmem:[%s4055 + $0x100] sm:$0xff]
    %v4089 = vld [vmem:[%s4055 + $0x108] sm:$0xff]
    %v4090 = vld [vmem:[%s4055 + $0x110] sm:$0xff]
    %v4091 = vld [vmem:[%s4055 + $0x118] sm:$0xff]
    %v4092 = vld [vmem:[%s4055 + $0x120] sm:$0xff]
    %v4093 = vld [vmem:[%s4055 + $0x128] sm:$0xff]
    %v4094 = vld [vmem:[%s4055 + $0x130] sm:$0xff]
    %v4095 = vld [vmem:[%s4055 + $0x138] sm:$0xff]
    %v4096 = vld [vmem:[%s4055 + $0x140] sm:$0xff]
    %v4097 = vld [vmem:[%s4055 + $0x148] sm:$0xff]
    %v4098 = vld [vmem:[%s4055 + $0x150] sm:$0xff]
    %v4099 = vld [vmem:[%s4055 + $0x158] sm:$0xff]
    %v4100 = vld [vmem:[%s4055 + $0x160] sm:$0xff]
    %v4101 = vld [vmem:[%s4055 + $0x168] sm:$0xff]
    %v4102 = vld [vmem:[%s4055 + $0x170] sm:$0xff]
    %v4103 = vld [vmem:[%s4055 + $0x178] sm:$0xff]
    %s4104 = scalar_lea.vmem %s3, 6
    %v4105 = vld [vmem:[%s4104] sm:$0x7]
    %s4106 = scalar_lea.vmem [#allocation8], 6
    %v4107 = vld [vmem:[%s4106] sm:$0x7]
    %v4109 = vlaneseq
    %v4110 = vshrl.u32 %v4109, 7
    %v4111 = vsub.s32 0, %v4110
    %v4112 = vrot.slane %v4105, %v4111
    %v4113 = vlaneseq
    %v4114 = vshrl.u32 %v4113, 7
    %v4115 = vsub.s32 1, %v4114
    %v4116 = vrot.slane %v4105, %v4115
    %v4117 = vlaneseq
    %v4118 = vshrl.u32 %v4117, 7
    %v4119 = vsub.s32 2, %v4118
    %v4120 = vrot.slane %v4105, %v4119
    %4124 = vmatprep.subr.mxu0 %v4008
    %4125 = vmatpush1.msra.mxu0 %v4007
    %4126 = vmatprep.subr.mxu0 %v4011
    %4127 = vmatpush1.msra.mxu0 %v4010
    %4128 = vmatprep.subr.mxu0 %v4014
    %4129 = vmatpush1.msra.mxu0 %v4013
    %4130 = vmatprep.subr.mxu0 %v4017
    %4131 = vmatpush1.msra.mxu0 %v4016
    %4132 = vmatprep.subr.mxu0 %v4020
    %4133 = vmatpush1.msra.mxu0 %v4019
    %4134 = vmatprep.subr.mxu0 %v4023
    %4135 = vmatpush1.msra.mxu0 %v4022
    %4136 = vmatprep.subr.mxu0 %v4026
    %4137 = vmatpush1.msra.mxu0 %v4025
    %4138 = vmatprep.subr.mxu0 %v4029
    %4139 = vmatpush1.msra.mxu0 %v4028
    %4140 = vmatprep.subr.mxu0 %v4032
    %4141 = vmatpush1.msra.mxu0 %v4031
    %4142 = vmatprep.subr.mxu0 %v4035
    %4143 = vmatpush1.msra.mxu0 %v4034
    %4144 = vmatprep.subr.mxu0 %v4038
    %4145 = vmatpush1.msra.mxu0 %v4037
    %4146 = vmatprep.subr.mxu0 %v4041
    %4147 = vmatpush1.msra.mxu0 %v4040
    %4148 = vmatprep.subr.mxu0 %v4044
    %4149 = vmatpush1.msra.mxu0 %v4043
    %4150 = vmatprep.subr.mxu0 %v4047
    %4151 = vmatpush1.msra.mxu0 %v4046
    %4152 = vmatprep.subr.mxu0 %v4050
    %4153 = vmatpush1.msra.mxu0 %v4049
    %4154 = vmatprep.subr.mxu0 %v4053
    %4155 = vmatpush1.msra.mxu0 %v4052
    %4156 = vmatprep.subr.mxu0 0.0
    %4157 = vmatpush1.msra.mxu0 0.0
    %4158 = vmatprep.subr.mxu0 0.0
    %4159 = vmatpush1.msra.mxu0 0.0
    %4160 = vmatprep.subr.mxu0 0.0
    %4161 = vmatpush1.msra.mxu0 0.0
    %4162 = vmatprep.subr.mxu0 0.0
    %4163 = vmatpush1.msra.mxu0 0.0
    %4164 = vmatprep.subr.mxu0 0.0
    %4165 = vmatpush1.msra.mxu0 0.0
    %4166 = vmatprep.subr.mxu0 0.0
    %4167 = vmatpush1.msra.mxu0 0.0
    %4168 = vmatprep.subr.mxu0 0.0
    %4169 = vmatpush1.msra.mxu0 0.0
    %4170 = vmatprep.subr.mxu0 0.0
    %4171 = vmatpush1.msra.mxu0 0.0
    %4172 = vmatprep.subr.mxu0 0.0
    %4173 = vmatpush1.msra.mxu0 0.0
    %4174 = vmatprep.subr.mxu0 0.0
    %4175 = vmatpush1.msra.mxu0 0.0
    %4176 = vmatprep.subr.mxu0 0.0
    %4177 = vmatpush1.msra.mxu0 0.0
    %4178 = vmatprep.subr.mxu0 0.0
    %4179 = vmatpush1.msra.mxu0 0.0
    %4180 = vmatprep.subr.mxu0 0.0
    %4181 = vmatpush1.msra.mxu0 0.0
    %4182 = vmatprep.subr.mxu0 0.0
    %4183 = vmatpush1.msra.mxu0 0.0
    %4184 = vmatprep.subr.mxu0 0.0
    %4185 = vmatpush1.msra.mxu0 0.0
    %4186 = vmatprep.subr.mxu0 0.0
    %4187 = vmatpush1.msra.mxu0 0.0
    %4188 = vmatprep.mubr.f32.mxu0 0.0
    %4189 = vmatmul.mubr.f32.gmra.mrb[0].mxu0 %v2490
    %v4190 = vpop.f32.mrb[0].mxu0
    %v4191 = vadd.f32 %v4112, %v4190
    %v4192 = vpop.f32.mrb[0].mxu0
    %v4193 = vadd.f32 %v4116, %v4192
    %4194 = vdwg.mxu0
    %4195 = vmatprep.subr.mxu0 0.0
    %4196 = vmatpush1.msra.mxu0 %v4009
    %4197 = vmatprep.subr.mxu0 0.0
    %4198 = vmatpush1.msra.mxu0 %v4012
    %4199 = vmatprep.subr.mxu0 0.0
    %4200 = vmatpush1.msra.mxu0 %v4015
    %4201 = vmatprep.subr.mxu0 0.0
    %4202 = vmatpush1.msra.mxu0 %v4018
    %4203 = vmatprep.subr.mxu0 0.0
    %4204 = vmatpush1.msra.mxu0 %v4021
    %4205 = vmatprep.subr.mxu0 0.0
    %4206 = vmatpush1.msra.mxu0 %v4024
    %4207 = vmatprep.subr.mxu0 0.0
    %4208 = vmatpush1.msra.mxu0 %v4027
    %4209 = vmatprep.subr.mxu0 0.0
    %4210 = vmatpush1.msra.mxu0 %v4030
    %4211 = vmatprep.subr.mxu0 0.0
    %4212 = vmatpush1.msra.mxu0 %v4033
    %4213 = vmatprep.subr.mxu0 0.0
    %4214 = vmatpush1.msra.mxu0 %v4036
    %4215 = vmatprep.subr.mxu0 0.0
    %4216 = vmatpush1.msra.mxu0 %v4039
    %4217 = vmatprep.subr.mxu0 0.0
    %4218 = vmatpush1.msra.mxu0 %v4042
    %4219 = vmatprep.subr.mxu0 0.0
    %4220 = vmatpush1.msra.mxu0 %v4045
    %4221 = vmatprep.subr.mxu0 0.0
    %4222 = vmatpush1.msra.mxu0 %v4048
    %4223 = vmatprep.subr.mxu0 0.0
    %4224 = vmatpush1.msra.mxu0 %v4051
    %4225 = vmatprep.subr.mxu0 0.0
    %4226 = vmatpush1.msra.mxu0 %v4054
    %4227 = vmatprep.subr.mxu0 0.0
    %4228 = vmatpush1.msra.mxu0 0.0
    %4229 = vmatprep.subr.mxu0 0.0
    %4230 = vmatpush1.msra.mxu0 0.0
    %4231 = vmatprep.subr.mxu0 0.0
    %4232 = vmatpush1.msra.mxu0 0.0
    %4233 = vmatprep.subr.mxu0 0.0
    %4234 = vmatpush1.msra.mxu0 0.0
    %4235 = vmatprep.subr.mxu0 0.0
    %4236 = vmatpush1.msra.mxu0 0.0
    %4237 = vmatprep.subr.mxu0 0.0
    %4238 = vmatpush1.msra.mxu0 0.0
    %4239 = vmatprep.subr.mxu0 0.0
    %4240 = vmatpush1.msra.mxu0 0.0
    %4241 = vmatprep.subr.mxu0 0.0
    %4242 = vmatpush1.msra.mxu0 0.0
    %4243 = vmatprep.subr.mxu0 0.0
    %4244 = vmatpush1.msra.mxu0 0.0
    %4245 = vmatprep.subr.mxu0 0.0
    %4246 = vmatpush1.msra.mxu0 0.0
    %4247 = vmatprep.subr.mxu0 0.0
    %4248 = vmatpush1.msra.mxu0 0.0
    %4249 = vmatprep.subr.mxu0 0.0
    %4250 = vmatpush1.msra.mxu0 0.0
    %4251 = vmatprep.subr.mxu0 0.0
    %4252 = vmatpush1.msra.mxu0 0.0
    %4253 = vmatprep.subr.mxu0 0.0
    %4254 = vmatpush1.msra.mxu0 0.0
    %4255 = vmatprep.subr.mxu0 0.0
    %4256 = vmatpush1.msra.mxu0 0.0
    %4257 = vmatprep.subr.mxu0 0.0
    %4258 = vmatpush1.msra.mxu0 0.0
    %4259 = vmatprep.mubr.f32.mxu0 0.0
    %4260 = vmatmul.mubr.f32.gmra.mrb[0].mxu0 %v2490
    %v4261 = vpop.f32.mrb[0].mxu0
    %v4262 = vadd.f32 %v4120, %v4261
    %v4263 = vpop.f32.mrb[0].mxu0
    %4264 = vdwg.mxu0
    %v4266 = vlaneseq
    %v4267 = vshrl.u32 %v4266, 7
    %v4268 = vsub.s32 0, %v4267
    %v4269 = vrot.slane %v4107, %v4268
    %v4270 = vlaneseq
    %v4271 = vshrl.u32 %v4270, 7
    %v4272 = vsub.s32 1, %v4271
    %v4273 = vrot.slane %v4107, %v4272
    %v4274 = vlaneseq
    %v4275 = vshrl.u32 %v4274, 7
    %v4276 = vsub.s32 2, %v4275
    %v4277 = vrot.slane %v4107, %v4276
    %4281 = vmatprep.subr.mxu0 %v4057
    %4282 = vmatpush1.msra.mxu0 %v4056
    %4283 = vmatprep.subr.mxu0 %v4060
    %4284 = vmatpush1.msra.mxu0 %v4059
    %4285 = vmatprep.subr.mxu0 %v4063
    %4286 = vmatpush1.msra.mxu0 %v4062
    %4287 = vmatprep.subr.mxu0 %v4066
    %4288 = vmatpush1.msra.mxu0 %v4065
    %4289 = vmatprep.subr.mxu0 %v4069
    %4290 = vmatpush1.msra.mxu0 %v4068
    %4291 = vmatprep.subr.mxu0 %v4072
    %4292 = vmatpush1.msra.mxu0 %v4071
    %4293 = vmatprep.subr.mxu0 %v4075
    %4294 = vmatpush1.msra.mxu0 %v4074
    %4295 = vmatprep.subr.mxu0 %v4078
    %4296 = vmatpush1.msra.mxu0 %v4077
    %4297 = vmatprep.subr.mxu0 %v4081
    %4298 = vmatpush1.msra.mxu0 %v4080
    %4299 = vmatprep.subr.mxu0 %v4084
    %4300 = vmatpush1.msra.mxu0 %v4083
    %4301 = vmatprep.subr.mxu0 %v4087
    %4302 = vmatpush1.msra.mxu0 %v4086
    %4303 = vmatprep.subr.mxu0 %v4090
    %4304 = vmatpush1.msra.mxu0 %v4089
    %4305 = vmatprep.subr.mxu0 %v4093
    %4306 = vmatpush1.msra.mxu0 %v4092
    %4307 = vmatprep.subr.mxu0 %v4096
    %4308 = vmatpush1.msra.mxu0 %v4095
    %4309 = vmatprep.subr.mxu0 %v4099
    %4310 = vmatpush1.msra.mxu0 %v4098
    %4311 = vmatprep.subr.mxu0 %v4102
    %4312 = vmatpush1.msra.mxu0 %v4101
    %4313 = vmatprep.subr.mxu0 0.0
    %4314 = vmatpush1.msra.mxu0 0.0
    %4315 = vmatprep.subr.mxu0 0.0
    %4316 = vmatpush1.msra.mxu0 0.0
    %4317 = vmatprep.subr.mxu0 0.0
    %4318 = vmatpush1.msra.mxu0 0.0
    %4319 = vmatprep.subr.mxu0 0.0
    %4320 = vmatpush1.msra.mxu0 0.0
    %4321 = vmatprep.subr.mxu0 0.0
    %4322 = vmatpush1.msra.mxu0 0.0
    %4323 = vmatprep.subr.mxu0 0.0
    %4324 = vmatpush1.msra.mxu0 0.0
    %4325 = vmatprep.subr.mxu0 0.0
    %4326 = vmatpush1.msra.mxu0 0.0
    %4327 = vmatprep.subr.mxu0 0.0
    %4328 = vmatpush1.msra.mxu0 0.0
    %4329 = vmatprep.subr.mxu0 0.0
    %4330 = vmatpush1.msra.mxu0 0.0
    %4331 = vmatprep.subr.mxu0 0.0
    %4332 = vmatpush1.msra.mxu0 0.0
    %4333 = vmatprep.subr.mxu0 0.0
    %4334 = vmatpush1.msra.mxu0 0.0
    %4335 = vmatprep.subr.mxu0 0.0
    %4336 = vmatpush1.msra.mxu0 0.0
    %4337 = vmatprep.subr.mxu0 0.0
    %4338 = vmatpush1.msra.mxu0 0.0
    %4339 = vmatprep.subr.mxu0 0.0
    %4340 = vmatpush1.msra.mxu0 0.0
    %4341 = vmatprep.subr.mxu0 0.0
    %4342 = vmatpush1.msra.mxu0 0.0
    %4343 = vmatprep.subr.mxu0 0.0
    %4344 = vmatpush1.msra.mxu0 0.0
    %4345 = vmatprep.mubr.f32.mxu0 0.0
    %4346 = vmatmul.mubr.f32.gmra.mrb[0].mxu0 0.0
    %v4347 = vpop.f32.mrb[0].mxu0
    %v4348 = vadd.f32 %v4269, %v4347
    %v4349 = vpop.f32.mrb[0].mxu0
    %v4350 = vadd.f32 %v4273, %v4349
    %4351 = vdwg.mxu0
    %4352 = vmatprep.subr.mxu0 0.0
    %4353 = vmatpush1.msra.mxu0 %v4058
    %4354 = vmatprep.subr.mxu0 0.0
    %4355 = vmatpush1.msra.mxu0 %v4061
    %4356 = vmatprep.subr.mxu0 0.0
    %4357 = vmatpush1.msra.mxu0 %v4064
    %4358 = vmatprep.subr.mxu0 0.0
    %4359 = vmatpush1.msra.mxu0 %v4067
    %4360 = vmatprep.subr.mxu0 0.0
    %4361 = vmatpush1.msra.mxu0 %v4070
    %4362 = vmatprep.subr.mxu0 0.0
    %4363 = vmatpush1.msra.mxu0 %v4073
    %4364 = vmatprep.subr.mxu0 0.0
    %4365 = vmatpush1.msra.mxu0 %v4076
    %4366 = vmatprep.subr.mxu0 0.0
    %4367 = vmatpush1.msra.mxu0 %v4079
    %4368 = vmatprep.subr.mxu0 0.0
    %4369 = vmatpush1.msra.mxu0 %v4082
    %4370 = vmatprep.subr.mxu0 0.0
    %4371 = vmatpush1.msra.mxu0 %v4085
    %4372 = vmatprep.subr.mxu0 0.0
    %4373 = vmatpush1.msra.mxu0 %v4088
    %4374 = vmatprep.subr.mxu0 0.0
    %4375 = vmatpush1.msra.mxu0 %v4091
    %4376 = vmatprep.subr.mxu0 0.0
    %4377 = vmatpush1.msra.mxu0 %v4094
    %4378 = vmatprep.subr.mxu0 0.0
    %4379 = vmatpush1.msra.mxu0 %v4097
    %4380 = vmatprep.subr.mxu0 0.0
    %4381 = vmatpush1.msra.mxu0 %v4100
    %4382 = vmatprep.subr.mxu0 0.0
    %4383 = vmatpush1.msra.mxu0 %v4103
    %4384 = vmatprep.subr.mxu0 0.0
    %4385 = vmatpush1.msra.mxu0 0.0
    %4386 = vmatprep.subr.mxu0 0.0
    %4387 = vmatpush1.msra.mxu0 0.0
    %4388 = vmatprep.subr.mxu0 0.0
    %4389 = vmatpush1.msra.mxu0 0.0
    %4390 = vmatprep.subr.mxu0 0.0
    %4391 = vmatpush1.msra.mxu0 0.0
    %4392 = vmatprep.subr.mxu0 0.0
    %4393 = vmatpush1.msra.mxu0 0.0
    %4394 = vmatprep.subr.mxu0 0.0
    %4395 = vmatpush1.msra.mxu0 0.0
    %4396 = vmatprep.subr.mxu0 0.0
    %4397 = vmatpush1.msra.mxu0 0.0
    %4398 = vmatprep.subr.mxu0 0.0
    %4399 = vmatpush1.msra.mxu0 0.0
    %4400 = vmatprep.subr.mxu0 0.0
    %4401 = vmatpush1.msra.mxu0 0.0
    %4402 = vmatprep.subr.mxu0 0.0
    %4403 = vmatpush1.msra.mxu0 0.0
    %4404 = vmatprep.subr.mxu0 0.0
    %4405 = vmatpush1.msra.mxu0 0.0
    %4406 = vmatprep.subr.mxu0 0.0
    %4407 = vmatpush1.msra.mxu0 0.0
    %4408 = vmatprep.subr.mxu0 0.0
    %4409 = vmatpush1.msra.mxu0 0.0
    %4410 = vmatprep.subr.mxu0 0.0
    %4411 = vmatpush1.msra.mxu0 0.0
    %4412 = vmatprep.subr.mxu0 0.0
    %4413 = vmatpush1.msra.mxu0 0.0
    %4414 = vmatprep.subr.mxu0 0.0
    %4415 = vmatpush1.msra.mxu0 0.0
    %4416 = vmatprep.mubr.f32.mxu0 0.0
    %4417 = vmatmul.mubr.f32.gmra.mrb[0].mxu0 0.0
    %v4418 = vpop.f32.mrb[0].mxu0
    %v4419 = vadd.f32 %v4277, %v4418
    %v4420 = vpop.f32.mrb[0].mxu0
    %4421 = vdwg.mxu0
    %v4422 = vadd.f32 %v4191, %v4348
    %v4423 = vsub.f32 0.0, %v4422
    %v4424 = vmul.f32 %v4423, 1.442695
    %v4425 = vpow.pop %v4424
    %v4426 = vadd.f32 %v4425, 1.0
    %v4427 = vrcp.pop %v4426
    %v4428 = vmul.f32 1.0, %v4427
    %v4429 = vadd.f32 %v4193, %v4350
    %v4430 = vsub.f32 0.0, %v4429
    %v4431 = vmul.f32 %v4430, 1.442695
    %v4432 = vpow.pop %v4431
    %v4433 = vadd.f32 %v4432, 1.0
    %v4434 = vrcp.pop %v4433
    %v4435 = vmul.f32 1.0, %v4434
    %v4436 = vmul.f32 %v4428, %v4419
    %v4437 = vadd.f32 %v4262, %v4436
    %v4438 = vtanh.pop %v4437
    %v4439 = vsub.f32 1.0, %v4435
    %v4440 = vmul.f32 %v4439, %v4438
    %v4441 = vmul.f32 %v4435, 0.0
    %v4442 = vadd.f32 %v4440, %v4441
    %4443 = vmatprep.subr.mxu0 %v4008
    %4444 = vmatpush1.msra.mxu0 %v4007
    %4445 = vmatprep.subr.mxu0 %v4011
    %4446 = vmatpush1.msra.mxu0 %v4010
    %4447 = vmatprep.subr.mxu0 %v4014
    %4448 = vmatpush1.msra.mxu0 %v4013
    %4449 = vmatprep.subr.mxu0 %v4017
    %4450 = vmatpush1.msra.mxu0 %v4016
    %4451 = vmatprep.subr.mxu0 %v4020
    %4452 = vmatpush1.msra.mxu0 %v4019
    %4453 = vmatprep.subr.mxu0 %v4023
    %4454 = vmatpush1.msra.mxu0 %v4022
    %4455 = vmatprep.subr.mxu0 %v4026
    %4456 = vmatpush1.msra.mxu0 %v4025
    %4457 = vmatprep.subr.mxu0 %v4029
    %4458 = vmatpush1.msra.mxu0 %v4028
    %4459 = vmatprep.subr.mxu0 %v4032
    %4460 = vmatpush1.msra.mxu0 %v4031
    %4461 = vmatprep.subr.mxu0 %v4035
    %4462 = vmatpush1.msra.mxu0 %v4034
    %4463 = vmatprep.subr.mxu0 %v4038
    %4464 = vmatpush1.msra.mxu0 %v4037
    %4465 = vmatprep.subr.mxu0 %v4041
    %4466 = vmatpush1.msra.mxu0 %v4040
    %4467 = vmatprep.subr.mxu0 %v4044
    %4468 = vmatpush1.msra.mxu0 %v4043
    %4469 = vmatprep.subr.mxu0 %v4047
    %4470 = vmatpush1.msra.mxu0 %v4046
    %4471 = vmatprep.subr.mxu0 %v4050
    %4472 = vmatpush1.msra.mxu0 %v4049
    %4473 = vmatprep.subr.mxu0 %v4053
    %4474 = vmatpush1.msra.mxu0 %v4052
    %4475 = vmatprep.subr.mxu0 0.0
    %4476 = vmatpush1.msra.mxu0 0.0
    %4477 = vmatprep.subr.mxu0 0.0
    %4478 = vmatpush1.msra.mxu0 0.0
    %4479 = vmatprep.subr.mxu0 0.0
    %4480 = vmatpush1.msra.mxu0 0.0
    %4481 = vmatprep.subr.mxu0 0.0
    %4482 = vmatpush1.msra.mxu0 0.0
    %4483 = vmatprep.subr.mxu0 0.0
    %4484 = vmatpush1.msra.mxu0 0.0
    %4485 = vmatprep.subr.mxu0 0.0
    %4486 = vmatpush1.msra.mxu0 0.0
    %4487 = vmatprep.subr.mxu0 0.0
    %4488 = vmatpush1.msra.mxu0 0.0
    %4489 = vmatprep.subr.mxu0 0.0
    %4490 = vmatpush1.msra.mxu0 0.0
    %4491 = vmatprep.subr.mxu0 0.0
    %4492 = vmatpush1.msra.mxu0 0.0
    %4493 = vmatprep.subr.mxu0 0.0
    %4494 = vmatpush1.msra.mxu0 0.0
    %4495 = vmatprep.subr.mxu0 0.0
    %4496 = vmatpush1.msra.mxu0 0.0
    %4497 = vmatprep.subr.mxu0 0.0
    %4498 = vmatpush1.msra.mxu0 0.0
    %4499 = vmatprep.subr.mxu0 0.0
    %4500 = vmatpush1.msra.mxu0 0.0
    %4501 = vmatprep.subr.mxu0 0.0
    %4502 = vmatpush1.msra.mxu0 0.0
    %4503 = vmatprep.subr.mxu0 0.0
    %4504 = vmatpush1.msra.mxu0 0.0
    %4505 = vmatprep.subr.mxu0 0.0
    %4506 = vmatpush1.msra.mxu0 0.0
    %4507 = vmatprep.mubr.f32.mxu0 0.0
    %4508 = vmatmul.mubr.f32.gmra.mrb[0].mxu0 %v2793
    %v4509 = vpop.f32.mrb[0].mxu0
    %v4510 = vadd.f32 %v4112, %v4509
    %v4511 = vpop.f32.mrb[0].mxu0
    %v4512 = vadd.f32 %v4116, %v4511
    %4513 = vdwg.mxu0
    %4514 = vmatprep.subr.mxu0 0.0
    %4515 = vmatpush1.msra.mxu0 %v4009
    %4516 = vmatprep.subr.mxu0 0.0
    %4517 = vmatpush1.msra.mxu0 %v4012
    %4518 = vmatprep.subr.mxu0 0.0
    %4519 = vmatpush1.msra.mxu0 %v4015
    %4520 = vmatprep.subr.mxu0 0.0
    %4521 = vmatpush1.msra.mxu0 %v4018
    %4522 = vmatprep.subr.mxu0 0.0
    %4523 = vmatpush1.msra.mxu0 %v4021
    %4524 = vmatprep.subr.mxu0 0.0
    %4525 = vmatpush1.msra.mxu0 %v4024
    %4526 = vmatprep.subr.mxu0 0.0
    %4527 = vmatpush1.msra.mxu0 %v4027
    %4528 = vmatprep.subr.mxu0 0.0
    %4529 = vmatpush1.msra.mxu0 %v4030
    %4530 = vmatprep.subr.mxu0 0.0
    %4531 = vmatpush1.msra.mxu0 %v4033
    %4532 = vmatprep.subr.mxu0 0.0
    %4533 = vmatpush1.msra.mxu0 %v4036
    %4534 = vmatprep.subr.mxu0 0.0
    %4535 = vmatpush1.msra.mxu0 %v4039
    %4536 = vmatprep.subr.mxu0 0.0
    %4537 = vmatpush1.msra.mxu0 %v4042
    %4538 = vmatprep.subr.mxu0 0.0
    %4539 = vmatpush1.msra.mxu0 %v4045
    %4540 = vmatprep.subr.mxu0 0.0
    %4541 = vmatpush1.msra.mxu0 %v4048
    %4542 = vmatprep.subr.mxu0 0.0
    %4543 = vmatpush1.msra.mxu0 %v4051
    %4544 = vmatprep.subr.mxu0 0.0
    %4545 = vmatpush1.msra.mxu0 %v4054
    %4546 = vmatprep.subr.mxu0 0.0
    %4547 = vmatpush1.msra.mxu0 0.0
    %4548 = vmatprep.subr.mxu0 0.0
    %4549 = vmatpush1.msra.mxu0 0.0
    %4550 = vmatprep.subr.mxu0 0.0
    %4551 = vmatpush1.msra.mxu0 0.0
    %4552 = vmatprep.subr.mxu0 0.0
    %4553 = vmatpush1.msra.mxu0 0.0
    %4554 = vmatprep.subr.mxu0 0.0
    %4555 = vmatpush1.msra.mxu0 0.0
    %4556 = vmatprep.subr.mxu0 0.0
    %4557 = vmatpush1.msra.mxu0 0.0
    %4558 = vmatprep.subr.mxu0 0.0
    %4559 = vmatpush1.msra.mxu0 0.0
    %4560 = vmatprep.subr.mxu0 0.0
    %4561 = vmatpush1.msra.mxu0 0.0
    %4562 = vmatprep.subr.mxu0 0.0
    %4563 = vmatpush1.msra.mxu0 0.0
    %4564 = vmatprep.subr.mxu0 0.0
    %4565 = vmatpush1.msra.mxu0 0.0
    %4566 = vmatprep.subr.mxu0 0.0
    %4567 = vmatpush1.msra.mxu0 0.0
    %4568 = vmatprep.subr.mxu0 0.0
    %4569 = vmatpush1.msra.mxu0 0.0
    %4570 = vmatprep.subr.mxu0 0.0
    %4571 = vmatpush1.msra.mxu0 0.0
    %4572 = vmatprep.subr.mxu0 0.0
    %4573 = vmatpush1.msra.mxu0 0.0
    %4574 = vmatprep.subr.mxu0 0.0
    %4575 = vmatpush1.msra.mxu0 0.0
    %4576 = vmatprep.subr.mxu0 0.0
    %4577 = vmatpush1.msra.mxu0 0.0
    %4578 = vmatprep.mubr.f32.mxu0 0.0
    %4579 = vmatmul.mubr.f32.gmra.mrb[0].mxu0 %v2793
    %v4580 = vpop.f32.mrb[0].mxu0
    %v4581 = vadd.f32 %v4120, %v4580
    %v4582 = vpop.f32.mrb[0].mxu0
    %4583 = vdwg.mxu0
    %4584 = vmatprep.subr.mxu0 %v4057
    %4585 = vmatpush1.msra.mxu0 %v4056
    %4586 = vmatprep.subr.mxu0 %v4060
    %4587 = vmatpush1.msra.mxu0 %v4059
    %4588 = vmatprep.subr.mxu0 %v4063
    %4589 = vmatpush1.msra.mxu0 %v4062
    %4590 = vmatprep.subr.mxu0 %v4066
    %4591 = vmatpush1.msra.mxu0 %v4065
    %4592 = vmatprep.subr.mxu0 %v4069
    %4593 = vmatpush1.msra.mxu0 %v4068
    %4594 = vmatprep.subr.mxu0 %v4072
    %4595 = vmatpush1.msra.mxu0 %v4071
    %4596 = vmatprep.subr.mxu0 %v4075
    %4597 = vmatpush1.msra.mxu0 %v4074
    %4598 = vmatprep.subr.mxu0 %v4078
    %4599 = vmatpush1.msra.mxu0 %v4077
    %4600 = vmatprep.subr.mxu0 %v4081
    %4601 = vmatpush1.msra.mxu0 %v4080
    %4602 = vmatprep.subr.mxu0 %v4084
    %4603 = vmatpush1.msra.mxu0 %v4083
    %4604 = vmatprep.subr.mxu0 %v4087
    %4605 = vmatpush1.msra.mxu0 %v4086
    %4606 = vmatprep.subr.mxu0 %v4090
    %4607 = vmatpush1.msra.mxu0 %v4089
    %4608 = vmatprep.subr.mxu0 %v4093
    %4609 = vmatpush1.msra.mxu0 %v4092
    %4610 = vmatprep.subr.mxu0 %v4096
    %4611 = vmatpush1.msra.mxu0 %v4095
    %4612 = vmatprep.subr.mxu0 %v4099
    %4613 = vmatpush1.msra.mxu0 %v4098
    %4614 = vmatprep.subr.mxu0 %v4102
    %4615 = vmatpush1.msra.mxu0 %v4101
    %4616 = vmatprep.subr.mxu0 0.0
    %4617 = vmatpush1.msra.mxu0 0.0
    %4618 = vmatprep.subr.mxu0 0.0
    %4619 = vmatpush1.msra.mxu0 0.0
    %4620 = vmatprep.subr.mxu0 0.0
    %4621 = vmatpush1.msra.mxu0 0.0
    %4622 = vmatprep.subr.mxu0 0.0
    %4623 = vmatpush1.msra.mxu0 0.0
    %4624 = vmatprep.subr.mxu0 0.0
    %4625 = vmatpush1.msra.mxu0 0.0
    %4626 = vmatprep.subr.mxu0 0.0
    %4627 = vmatpush1.msra.mxu0 0.0
    %4628 = vmatprep.subr.mxu0 0.0
    %4629 = vmatpush1.msra.mxu0 0.0
    %4630 = vmatprep.subr.mxu0 0.0
    %4631 = vmatpush1.msra.mxu0 0.0
    %4632 = vmatprep.subr.mxu0 0.0
    %4633 = vmatpush1.msra.mxu0 0.0
    %4634 = vmatprep.subr.mxu0 0.0
    %4635 = vmatpush1.msra.mxu0 0.0
    %4636 = vmatprep.subr.mxu0 0.0
    %4637 = vmatpush1.msra.mxu0 0.0
    %4638 = vmatprep.subr.mxu0 0.0
    %4639 = vmatpush1.msra.mxu0 0.0
    %4640 = vmatprep.subr.mxu0 0.0
    %4641 = vmatpush1.msra.mxu0 0.0
    %4642 = vmatprep.subr.mxu0 0.0
    %4643 = vmatpush1.msra.mxu0 0.0
    %4644 = vmatprep.subr.mxu0 0.0
    %4645 = vmatpush1.msra.mxu0 0.0
    %4646 = vmatprep.subr.mxu0 0.0
    %4647 = vmatpush1.msra.mxu0 0.0
    %4648 = vmatprep.mubr.f32.mxu0 0.0
    %4649 = vmatmul.mubr.f32.gmra.mrb[0].mxu0 %v4442
    %v4650 = vpop.f32.mrb[0].mxu0
    %v4651 = vadd.f32 %v4269, %v4650
    %v4652 = vpop.f32.mrb[0].mxu0
    %v4653 = vadd.f32 %v4273, %v4652
    %4654 = vdwg.mxu0
    %4655 = vmatprep.subr.mxu0 0.0
    %4656 = vmatpush1.msra.mxu0 %v4058
    %4657 = vmatprep.subr.mxu0 0.0
    %4658 = vmatpush1.msra.mxu0 %v4061
    %4659 = vmatprep.subr.mxu0 0.0
    %4660 = vmatpush1.msra.mxu0 %v4064
    %4661 = vmatprep.subr.mxu0 0.0
    %4662 = vmatpush1.msra.mxu0 %v4067
    %4663 = vmatprep.subr.mxu0 0.0
    %4664 = vmatpush1.msra.mxu0 %v4070
    %4665 = vmatprep.subr.mxu0 0.0
    %4666 = vmatpush1.msra.mxu0 %v4073
    %4667 = vmatprep.subr.mxu0 0.0
    %4668 = vmatpush1.msra.mxu0 %v4076
    %4669 = vmatprep.subr.mxu0 0.0
    %4670 = vmatpush1.msra.mxu0 %v4079
    %4671 = vmatprep.subr.mxu0 0.0
    %4672 = vmatpush1.msra.mxu0 %v4082
    %4673 = vmatprep.subr.mxu0 0.0
    %4674 = vmatpush1.msra.mxu0 %v4085
    %4675 = vmatprep.subr.mxu0 0.0
    %4676 = vmatpush1.msra.mxu0 %v4088
    %4677 = vmatprep.subr.mxu0 0.0
    %4678 = vmatpush1.msra.mxu0 %v4091
    %4679 = vmatprep.subr.mxu0 0.0
    %4680 = vmatpush1.msra.mxu0 %v4094
    %4681 = vmatprep.subr.mxu0 0.0
    %4682 = vmatpush1.msra.mxu0 %v4097
    %4683 = vmatprep.subr.mxu0 0.0
    %4684 = vmatpush1.msra.mxu0 %v4100
    %4685 = vmatprep.subr.mxu0 0.0
    %4686 = vmatpush1.msra.mxu0 %v4103
    %4687 = vmatprep.subr.mxu0 0.0
    %4688 = vmatpush1.msra.mxu0 0.0
    %4689 = vmatprep.subr.mxu0 0.0
    %4690 = vmatpush1.msra.mxu0 0.0
    %4691 = vmatprep.subr.mxu0 0.0
    %4692 = vmatpush1.msra.mxu0 0.0
    %4693 = vmatprep.subr.mxu0 0.0
    %4694 = vmatpush1.msra.mxu0 0.0
    %4695 = vmatprep.subr.mxu0 0.0
    %4696 = vmatpush1.msra.mxu0 0.0
    %4697 = vmatprep.subr.mxu0 0.0
    %4698 = vmatpush1.msra.mxu0 0.0
    %4699 = vmatprep.subr.mxu0 0.0
    %4700 = vmatpush1.msra.mxu0 0.0
    %4701 = vmatprep.subr.mxu0 0.0
    %4702 = vmatpush1.msra.mxu0 0.0
    %4703 = vmatprep.subr.mxu0 0.0
    %4704 = vmatpush1.msra.mxu0 0.0
    %4705 = vmatprep.subr.mxu0 0.0
    %4706 = vmatpush1.msra.mxu0 0.0
    %4707 = vmatprep.subr.mxu0 0.0
    %4708 = vmatpush1.msra.mxu0 0.0
    %4709 = vmatprep.subr.mxu0 0.0
    %4710 = vmatpush1.msra.mxu0 0.0
    %4711 = vmatprep.subr.mxu0 0.0
    %4712 = vmatpush1.msra.mxu0 0.0
    %4713 = vmatprep.subr.mxu0 0.0
    %4714 = vmatpush1.msra.mxu0 0.0
    %4715 = vmatprep.subr.mxu0 0.0
    %4716 = vmatpush1.msra.mxu0 0.0
    %4717 = vmatprep.subr.mxu0 0.0
    %4718 = vmatpush1.msra.mxu0 0.0
    %4719 = vmatprep.mubr.f32.mxu0 0.0
    %4720 = vmatmul.mubr.f32.gmra.mrb[0].mxu0 %v4442
    %v4721 = vpop.f32.mrb[0].mxu0
    %v4722 = vadd.f32 %v4277, %v4721
    %v4723 = vpop.f32.mrb[0].mxu0
    %4724 = vdwg.mxu0
    %v4725 = vadd.f32 %v4510, %v4651
    %v4726 = vsub.f32 0.0, %v4725
    %v4727 = vmul.f32 %v4726, 1.442695
    %v4728 = vpow.pop %v4727
    %v4729 = vadd.f32 %v4728, 1.0
    %v4730 = vrcp.pop %v4729
    %v4731 = vmul.f32 1.0, %v4730
    %v4732 = vadd.f32 %v4512, %v4653
    %v4733 = vsub.f32 0.0, %v4732
    %v4734 = vmul.f32 %v4733, 1.442695
    %v4735 = vpow.pop %v4734
    %v4736 = vadd.f32 %v4735, 1.0
    %v4737 = vrcp.pop %v4736
    %v4738 = vmul.f32 1.0, %v4737
    %v4739 = vmul.f32 %v4731, %v4722
    %v4740 = vadd.f32 %v4581, %v4739
    %v4741 = vtanh.pop %v4740
    %v4742 = vsub.f32 1.0, %v4738
    %v4743 = vmul.f32 %v4742, %v4741
    %v4744 = vmul.f32 %v4738, %v4442
    %v4745 = vadd.f32 %v4743, %v4744
    %4746 = vmatprep.subr.mxu0 %v4008
    %4747 = vmatpush1.msra.mxu0 %v4007
    %4748 = vmatprep.subr.mxu0 %v4011
    %4749 = vmatpush1.msra.mxu0 %v4010
    %4750 = vmatprep.subr.mxu0 %v4014
    %4751 = vmatpush1.msra.mxu0 %v4013
    %4752 = vmatprep.subr.mxu0 %v4017
    %4753 = vmatpush1.msra.mxu0 %v4016
    %4754 = vmatprep.subr.mxu0 %v4020
    %4755 = vmatpush1.msra.mxu0 %v4019
    %4756 = vmatprep.subr.mxu0 %v4023
    %4757 = vmatpush1.msra.mxu0 %v4022
    %4758 = vmatprep.subr.mxu0 %v4026
    %4759 = vmatpush1.msra.mxu0 %v4025
    %4760 = vmatprep.subr.mxu0 %v4029
    %4761 = vmatpush1.msra.mxu0 %v4028
    %4762 = vmatprep.subr.mxu0 %v4032
    %4763 = vmatpush1.msra.mxu0 %v4031
    %4764 = vmatprep.subr.mxu0 %v4035
    %4765 = vmatpush1.msra.mxu0 %v4034
    %4766 = vmatprep.subr.mxu0 %v4038
    %4767 = vmatpush1.msra.mxu0 %v4037
    %4768 = vmatprep.subr.mxu0 %v4041
    %4769 = vmatpush1.msra.mxu0 %v4040
    %4770 = vmatprep.subr.mxu0 %v4044
    %4771 = vmatpush1.msra.mxu0 %v4043
    %4772 = vmatprep.subr.mxu0 %v4047
    %4773 = vmatpush1.msra.mxu0 %v4046
    %4774 = vmatprep.subr.mxu0 %v4050
    %4775 = vmatpush1.msra.mxu0 %v4049
    %4776 = vmatprep.subr.mxu0 %v4053
    %4777 = vmatpush1.msra.mxu0 %v4052
    %4778 = vmatprep.subr.mxu0 0.0
    %4779 = vmatpush1.msra.mxu0 0.0
    %4780 = vmatprep.subr.mxu0 0.0
    %4781 = vmatpush1.msra.mxu0 0.0
    %4782 = vmatprep.subr.mxu0 0.0
    %4783 = vmatpush1.msra.mxu0 0.0
    %4784 = vmatprep.subr.mxu0 0.0
    %4785 = vmatpush1.msra.mxu0 0.0
    %4786 = vmatprep.subr.mxu0 0.0
    %4787 = vmatpush1.msra.mxu0 0.0
    %4788 = vmatprep.subr.mxu0 0.0
    %4789 = vmatpush1.msra.mxu0 0.0
    %4790 = vmatprep.subr.mxu0 0.0
    %4791 = vmatpush1.msra.mxu0 0.0
    %4792 = vmatprep.subr.mxu0 0.0
    %4793 = vmatpush1.msra.mxu0 0.0
    %4794 = vmatprep.subr.mxu0 0.0
    %4795 = vmatpush1.msra.mxu0 0.0
    %4796 = vmatprep.subr.mxu0 0.0
    %4797 = vmatpush1.msra.mxu0 0.0
    %4798 = vmatprep.subr.mxu0 0.0
    %4799 = vmatpush1.msra.mxu0 0.0
    %4800 = vmatprep.subr.mxu0 0.0
    %4801 = vmatpush1.msra.mxu0 0.0
    %4802 = vmatprep.subr.mxu0 0.0
    %4803 = vmatpush1.msra.mxu0 0.0
    %4804 = vmatprep.subr.mxu0 0.0
    %4805 = vmatpush1.msra.mxu0 0.0
    %4806 = vmatprep.subr.mxu0 0.0
    %4807 = vmatpush1.msra.mxu0 0.0
    %4808 = vmatprep.subr.mxu0 0.0
    %4809 = vmatpush1.msra.mxu0 0.0
    %4810 = vmatprep.mubr.f32.mxu0 0.0
    %4811 = vmatmul.mubr.f32.gmra.mrb[0].mxu0 %v3096
    %v4812 = vpop.f32.mrb[0].mxu0
    %v4813 = vadd.f32 %v4112, %v4812
    %v4814 = vpop.f32.mrb[0].mxu0
    %v4815 = vadd.f32 %v4116, %v4814
    %4816 = vdwg.mxu0
    %4817 = vmatprep.subr.mxu0 0.0
    %4818 = vmatpush1.msra.mxu0 %v4009
    %4819 = vmatprep.subr.mxu0 0.0
    %4820 = vmatpush1.msra.mxu0 %v4012
    %4821 = vmatprep.subr.mxu0 0.0
    %4822 = vmatpush1.msra.mxu0 %v4015
    %4823 = vmatprep.subr.mxu0 0.0
    %4824 = vmatpush1.msra.mxu0 %v4018
    %4825 = vmatprep.subr.mxu0 0.0
    %4826 = vmatpush1.msra.mxu0 %v4021
    %4827 = vmatprep.subr.mxu0 0.0
    %4828 = vmatpush1.msra.mxu0 %v4024
    %4829 = vmatprep.subr.mxu0 0.0
    %4830 = vmatpush1.msra.mxu0 %v4027
    %4831 = vmatprep.subr.mxu0 0.0
    %4832 = vmatpush1.msra.mxu0 %v4030
    %4833 = vmatprep.subr.mxu0 0.0
    %4834 = vmatpush1.msra.mxu0 %v4033
    %4835 = vmatprep.subr.mxu0 0.0
    %4836 = vmatpush1.msra.mxu0 %v4036
    %4837 = vmatprep.subr.mxu0 0.0
    %4838 = vmatpush1.msra.mxu0 %v4039
    %4839 = vmatprep.subr.mxu0 0.0
    %4840 = vmatpush1.msra.mxu0 %v4042
    %4841 = vmatprep.subr.mxu0 0.0
    %4842 = vmatpush1.msra.mxu0 %v4045
    %4843 = vmatprep.subr.mxu0 0.0
    %4844 = vmatpush1.msra.mxu0 %v4048
    %4845 = vmatprep.subr.mxu0 0.0
    %4846 = vmatpush1.msra.mxu0 %v4051
    %4847 = vmatprep.subr.mxu0 0.0
    %4848 = vmatpush1.msra.mxu0 %v4054
    %4849 = vmatprep.subr.mxu0 0.0
    %4850 = vmatpush1.msra.mxu0 0.0
    %4851 = vmatprep.subr.mxu0 0.0
    %4852 = vmatpush1.msra.mxu0 0.0
    %4853 = vmatprep.subr.mxu0 0.0
    %4854 = vmatpush1.msra.mxu0 0.0
    %4855 = vmatprep.subr.mxu0 0.0
    %4856 = vmatpush1.msra.mxu0 0.0
    %4857 = vmatprep.subr.mxu0 0.0
    %4858 = vmatpush1.msra.mxu0 0.0
    %4859 = vmatprep.subr.mxu0 0.0
    %4860 = vmatpush1.msra.mxu0 0.0
    %4861 = vmatprep.subr.mxu0 0.0
    %4862 = vmatpush1.msra.mxu0 0.0
    %4863 = vmatprep.subr.mxu0 0.0
    %4864 = vmatpush1.msra.mxu0 0.0
    %4865 = vmatprep.subr.mxu0 0.0
    %4866 = vmatpush1.msra.mxu0 0.0
    %4867 = vmatprep.subr.mxu0 0.0
    %4868 = vmatpush1.msra.mxu0 0.0
    %4869 = vmatprep.subr.mxu0 0.0
    %4870 = vmatpush1.msra.mxu0 0.0
    %4871 = vmatprep.subr.mxu0 0.0
    %4872 = vmatpush1.msra.mxu0 0.0
    %4873 = vmatprep.subr.mxu0 0.0
    %4874 = vmatpush1.msra.mxu0 0.0
    %4875 = vmatprep.subr.mxu0 0.0
    %4876 = vmatpush1.msra.mxu0 0.0
    %4877 = vmatprep.subr.mxu0 0.0
    %4878 = vmatpush1.msra.mxu0 0.0
    %4879 = vmatprep.subr.mxu0 0.0
    %4880 = vmatpush1.msra.mxu0 0.0
    %4881 = vmatprep.mubr.f32.mxu0 0.0
    %4882 = vmatmul.mubr.f32.gmra.mrb[0].mxu0 %v3096
    %v4883 = vpop.f32.mrb[0].mxu0
    %v4884 = vadd.f32 %v4120, %v4883
    %v4885 = vpop.f32.mrb[0].mxu0
    %4886 = vdwg.mxu0
    %4887 = vmatprep.subr.mxu0 %v4057
    %4888 = vmatpush1.msra.mxu0 %v4056
    %4889 = vmatprep.subr.mxu0 %v4060
    %4890 = vmatpush1.msra.mxu0 %v4059
    %4891 = vmatprep.subr.mxu0 %v4063
    %4892 = vmatpush1.msra.mxu0 %v4062
    %4893 = vmatprep.subr.mxu0 %v4066
    %4894 = vmatpush1.msra.mxu0 %v4065
    %4895 = vmatprep.subr.mxu0 %v4069
    %4896 = vmatpush1.msra.mxu0 %v4068
    %4897 = vmatprep.subr.mxu0 %v4072
    %4898 = vmatpush1.msra.mxu0 %v4071
    %4899 = vmatprep.subr.mxu0 %v4075
    %4900 = vmatpush1.msra.mxu0 %v4074
    %4901 = vmatprep.subr.mxu0 %v4078
    %4902 = vmatpush1.msra.mxu0 %v4077
    %4903 = vmatprep.subr.mxu0 %v4081
    %4904 = vmatpush1.msra.mxu0 %v4080
    %4905 = vmatprep.subr.mxu0 %v4084
    %4906 = vmatpush1.msra.mxu0 %v4083
    %4907 = vmatprep.subr.mxu0 %v4087
    %4908 = vmatpush1.msra.mxu0 %v4086
    %4909 = vmatprep.subr.mxu0 %v4090
    %4910 = vmatpush1.msra.mxu0 %v4089
    %4911 = vmatprep.subr.mxu0 %v4093
    %4912 = vmatpush1.msra.mxu0 %v4092
    %4913 = vmatprep.subr.mxu0 %v4096
    %4914 = vmatpush1.msra.mxu0 %v4095
    %4915 = vmatprep.subr.mxu0 %v4099
    %4916 = vmatpush1.msra.mxu0 %v4098
    %4917 = vmatprep.subr.mxu0 %v4102
    %4918 = vmatpush1.msra.mxu0 %v4101
    %4919 = vmatprep.subr.mxu0 0.0
    %4920 = vmatpush1.msra.mxu0 0.0
    %4921 = vmatprep.subr.mxu0 0.0
    %4922 = vmatpush1.msra.mxu0 0.0
    %4923 = vmatprep.subr.mxu0 0.0
    %4924 = vmatpush1.msra.mxu0 0.0
    %4925 = vmatprep.subr.mxu0 0.0
    %4926 = vmatpush1.msra.mxu0 0.0
    %4927 = vmatprep.subr.mxu0 0.0
    %4928 = vmatpush1.msra.mxu0 0.0
    %4929 = vmatprep.subr.mxu0 0.0
    %4930 = vmatpush1.msra.mxu0 0.0
    %4931 = vmatprep.subr.mxu0 0.0
    %4932 = vmatpush1.msra.mxu0 0.0
    %4933 = vmatprep.subr.mxu0 0.0
    %4934 = vmatpush1.msra.mxu0 0.0
    %4935 = vmatprep.subr.mxu0 0.0
    %4936 = vmatpush1.msra.mxu0 0.0
    %4937 = vmatprep.subr.mxu0 0.0
    %4938 = vmatpush1.msra.mxu0 0.0
    %4939 = vmatprep.subr.mxu0 0.0
    %4940 = vmatpush1.msra.mxu0 0.0
    %4941 = vmatprep.subr.mxu0 0.0
    %4942 = vmatpush1.msra.mxu0 0.0
    %4943 = vmatprep.subr.mxu0 0.0
    %4944 = vmatpush1.msra.mxu0 0.0
    %4945 = vmatprep.subr.mxu0 0.0
    %4946 = vmatpush1.msra.mxu0 0.0
    %4947 = vmatprep.subr.mxu0 0.0
    %4948 = vmatpush1.msra.mxu0 0.0
    %4949 = vmatprep.subr.mxu0 0.0
    %4950 = vmatpush1.msra.mxu0 0.0
    %4951 = vmatprep.mubr.f32.mxu0 0.0
    %4952 = vmatmul.mubr.f32.gmra.mrb[0].mxu0 %v4745
    %v4953 = vpop.f32.mrb[0].mxu0
    %v4954 = vadd.f32 %v4269, %v4953
    %v4955 = vpop.f32.mrb[0].mxu0
    %v4956 = vadd.f32 %v4273, %v4955
    %4957 = vdwg.mxu0
    %4958 = vmatprep.subr.mxu0 0.0
    %4959 = vmatpush1.msra.mxu0 %v4058
    %4960 = vmatprep.subr.mxu0 0.0
    %4961 = vmatpush1.msra.mxu0 %v4061
    %4962 = vmatprep.subr.mxu0 0.0
    %4963 = vmatpush1.msra.mxu0 %v4064
    %4964 = vmatprep.subr.mxu0 0.0
    %4965 = vmatpush1.msra.mxu0 %v4067
    %4966 = vmatprep.subr.mxu0 0.0
    %4967 = vmatpush1.msra.mxu0 %v4070
    %4968 = vmatprep.subr.mxu0 0.0
    %4969 = vmatpush1.msra.mxu0 %v4073
    %4970 = vmatprep.subr.mxu0 0.0
    %4971 = vmatpush1.msra.mxu0 %v4076
    %4972 = vmatprep.subr.mxu0 0.0
    %4973 = vmatpush1.msra.mxu0 %v4079
    %4974 = vmatprep.subr.mxu0 0.0
    %4975 = vmatpush1.msra.mxu0 %v4082
    %4976 = vmatprep.subr.mxu0 0.0
    %4977 = vmatpush1.msra.mxu0 %v4085
    %4978 = vmatprep.subr.mxu0 0.0
    %4979 = vmatpush1.msra.mxu0 %v4088
    %4980 = vmatprep.subr.mxu0 0.0
    %4981 = vmatpush1.msra.mxu0 %v4091
    %4982 = vmatprep.subr.mxu0 0.0
    %4983 = vmatpush1.msra.mxu0 %v4094
    %4984 = vmatprep.subr.mxu0 0.0
    %4985 = vmatpush1.msra.mxu0 %v4097
    %4986 = vmatprep.subr.mxu0 0.0
    %4987 = vmatpush1.msra.mxu0 %v4100
    %4988 = vmatprep.subr.mxu0 0.0
    %4989 = vmatpush1.msra.mxu0 %v4103
    %4990 = vmatprep.subr.mxu0 0.0
    %4991 = vmatpush1.msra.mxu0 0.0
    %4992 = vmatprep.subr.mxu0 0.0
    %4993 = vmatpush1.msra.mxu0 0.0
    %4994 = vmatprep.subr.mxu0 0.0
    %4995 = vmatpush1.msra.mxu0 0.0
    %4996 = vmatprep.subr.mxu0 0.0
    %4997 = vmatpush1.msra.mxu0 0.0
    %4998 = vmatprep.subr.mxu0 0.0
    %4999 = vmatpush1.msra.mxu0 0.0
    %5000 = vmatprep.subr.mxu0 0.0
    %5001 = vmatpush1.msra.mxu0 0.0
    %5002 = vmatprep.subr.mxu0 0.0
    %5003 = vmatpush1.msra.mxu0 0.0
    %5004 = vmatprep.subr.mxu0 0.0
    %5005 = vmatpush1.msra.mxu0 0.0
    %5006 = vmatprep.subr.mxu0 0.0
    %5007 = vmatpush1.msra.mxu0 0.0
    %5008 = vmatprep.subr.mxu0 0.0
    %5009 = vmatpush1.msra.mxu0 0.0
    %5010 = vmatprep.subr.mxu0 0.0
    %5011 = vmatpush1.msra.mxu0 0.0
    %5012 = vmatprep.subr.mxu0 0.0
    %5013 = vmatpush1.msra.mxu0 0.0
    %5014 = vmatprep.subr.mxu0 0.0
    %5015 = vmatpush1.msra.mxu0 0.0
    %5016 = vmatprep.subr.mxu0 0.0
    %5017 = vmatpush1.msra.mxu0 0.0
    %5018 = vmatprep.subr.mxu0 0.0
    %5019 = vmatpush1.msra.mxu0 0.0
    %5020 = vmatprep.subr.mxu0 0.0
    %5021 = vmatpush1.msra.mxu0 0.0
    %5022 = vmatprep.mubr.f32.mxu0 0.0
    %5023 = vmatmul.mubr.f32.gmra.mrb[0].mxu0 %v4745
    %v5024 = vpop.f32.mrb[0].mxu0
    %v5025 = vadd.f32 %v4277, %v5024
    %v5026 = vpop.f32.mrb[0].mxu0
    %5027 = vdwg.mxu0
    %v5028 = vadd.f32 %v4813, %v4954
    %v5029 = vsub.f32 0.0, %v5028
    %v5030 = vmul.f32 %v5029, 1.442695
    %v5031 = vpow.pop %v5030
    %v5032 = vadd.f32 %v5031, 1.0
    %v5033 = vrcp.pop %v5032
    %v5034 = vmul.f32 1.0, %v5033
    %v5035 = vadd.f32 %v4815, %v4956
    %v5036 = vsub.f32 0.0, %v5035
    %v5037 = vmul.f32 %v5036, 1.442695
    %v5038 = vpow.pop %v5037
    %v5039 = vadd.f32 %v5038, 1.0
    %v5040 = vrcp.pop %v5039
    %v5041 = vmul.f32 1.0, %v5040
    %v5042 = vmul.f32 %v5034, %v5025
    %v5043 = vadd.f32 %v4884, %v5042
    %v5044 = vtanh.pop %v5043
    %v5045 = vsub.f32 1.0, %v5041
    %v5046 = vmul.f32 %v5045, %v5044
    %v5047 = vmul.f32 %v5041, %v4745
    %v5048 = vadd.f32 %v5046, %v5047
    %5049 = vmatprep.subr.mxu0 %v4008
    %5050 = vmatpush1.msra.mxu0 %v4007
    %5051 = vmatprep.subr.mxu0 %v4011
    %5052 = vmatpush1.msra.mxu0 %v4010
    %5053 = vmatprep.subr.mxu0 %v4014
    %5054 = vmatpush1.msra.mxu0 %v4013
    %5055 = vmatprep.subr.mxu0 %v4017
    %5056 = vmatpush1.msra.mxu0 %v4016
    %5057 = vmatprep.subr.mxu0 %v4020
    %5058 = vmatpush1.msra.mxu0 %v4019
    %5059 = vmatprep.subr.mxu0 %v4023
    %5060 = vmatpush1.msra.mxu0 %v4022
    %5061 = vmatprep.subr.mxu0 %v4026
    %5062 = vmatpush1.msra.mxu0 %v4025
    %5063 = vmatprep.subr.mxu0 %v4029
    %5064 = vmatpush1.msra.mxu0 %v4028
    %5065 = vmatprep.subr.mxu0 %v4032
    %5066 = vmatpush1.msra.mxu0 %v4031
    %5067 = vmatprep.subr.mxu0 %v4035
    %5068 = vmatpush1.msra.mxu0 %v4034
    %5069 = vmatprep.subr.mxu0 %v4038
    %5070 = vmatpush1.msra.mxu0 %v4037
    %5071 = vmatprep.subr.mxu0 %v4041
    %5072 = vmatpush1.msra.mxu0 %v4040
    %5073 = vmatprep.subr.mxu0 %v4044
    %5074 = vmatpush1.msra.mxu0 %v4043
    %5075 = vmatprep.subr.mxu0 %v4047
    %5076 = vmatpush1.msra.mxu0 %v4046
    %5077 = vmatprep.subr.mxu0 %v4050
    %5078 = vmatpush1.msra.mxu0 %v4049
    %5079 = vmatprep.subr.mxu0 %v4053
    %5080 = vmatpush1.msra.mxu0 %v4052
    %5081 = vmatprep.subr.mxu0 0.0
    %5082 = vmatpush1.msra.mxu0 0.0
    %5083 = vmatprep.subr.mxu0 0.0
    %5084 = vmatpush1.msra.mxu0 0.0
    %5085 = vmatprep.subr.mxu0 0.0
    %5086 = vmatpush1.msra.mxu0 0.0
    %5087 = vmatprep.subr.mxu0 0.0
    %5088 = vmatpush1.msra.mxu0 0.0
    %5089 = vmatprep.subr.mxu0 0.0
    %5090 = vmatpush1.msra.mxu0 0.0
    %5091 = vmatprep.subr.mxu0 0.0
    %5092 = vmatpush1.msra.mxu0 0.0
    %5093 = vmatprep.subr.mxu0 0.0
    %5094 = vmatpush1.msra.mxu0 0.0
    %5095 = vmatprep.subr.mxu0 0.0
    %5096 = vmatpush1.msra.mxu0 0.0
    %5097 = vmatprep.subr.mxu0 0.0
    %5098 = vmatpush1.msra.mxu0 0.0
    %5099 = vmatprep.subr.mxu0 0.0
    %5100 = vmatpush1.msra.mxu0 0.0
    %5101 = vmatprep.subr.mxu0 0.0
    %5102 = vmatpush1.msra.mxu0 0.0
    %5103 = vmatprep.subr.mxu0 0.0
    %5104 = vmatpush1.msra.mxu0 0.0
    %5105 = vmatprep.subr.mxu0 0.0
    %5106 = vmatpush1.msra.mxu0 0.0
    %5107 = vmatprep.subr.mxu0 0.0
    %5108 = vmatpush1.msra.mxu0 0.0
    %5109 = vmatprep.subr.mxu0 0.0
    %5110 = vmatpush1.msra.mxu0 0.0
    %5111 = vmatprep.subr.mxu0 0.0
    %5112 = vmatpush1.msra.mxu0 0.0
    %5113 = vmatprep.mubr.f32.mxu0 0.0
    %5114 = vmatmul.mubr.f32.gmra.mrb[0].mxu0 %v3399
    %v5115 = vpop.f32.mrb[0].mxu0
    %v5116 = vadd.f32 %v4112, %v5115
    %v5117 = vpop.f32.mrb[0].mxu0
    %v5118 = vadd.f32 %v4116, %v5117
    %5119 = vdwg.mxu0
    %5120 = vmatprep.subr.mxu0 0.0
    %5121 = vmatpush1.msra.mxu0 %v4009
    %5122 = vmatprep.subr.mxu0 0.0
    %5123 = vmatpush1.msra.mxu0 %v4012
    %5124 = vmatprep.subr.mxu0 0.0
    %5125 = vmatpush1.msra.mxu0 %v4015
    %5126 = vmatprep.subr.mxu0 0.0
    %5127 = vmatpush1.msra.mxu0 %v4018
    %5128 = vmatprep.subr.mxu0 0.0
    %5129 = vmatpush1.msra.mxu0 %v4021
    %5130 = vmatprep.subr.mxu0 0.0
    %5131 = vmatpush1.msra.mxu0 %v4024
    %5132 = vmatprep.subr.mxu0 0.0
    %5133 = vmatpush1.msra.mxu0 %v4027
    %5134 = vmatprep.subr.mxu0 0.0
    %5135 = vmatpush1.msra.mxu0 %v4030
    %5136 = vmatprep.subr.mxu0 0.0
    %5137 = vmatpush1.msra.mxu0 %v4033
    %5138 = vmatprep.subr.mxu0 0.0
    %5139 = vmatpush1.msra.mxu0 %v4036
    %5140 = vmatprep.subr.mxu0 0.0
    %5141 = vmatpush1.msra.mxu0 %v4039
    %5142 = vmatprep.subr.mxu0 0.0
    %5143 = vmatpush1.msra.mxu0 %v4042
    %5144 = vmatprep.subr.mxu0 0.0
    %5145 = vmatpush1.msra.mxu0 %v4045
    %5146 = vmatprep.subr.mxu0 0.0
    %5147 = vmatpush1.msra.mxu0 %v4048
    %5148 = vmatprep.subr.mxu0 0.0
    %5149 = vmatpush1.msra.mxu0 %v4051
    %5150 = vmatprep.subr.mxu0 0.0
    %5151 = vmatpush1.msra.mxu0 %v4054
    %5152 = vmatprep.subr.mxu0 0.0
    %5153 = vmatpush1.msra.mxu0 0.0
    %5154 = vmatprep.subr.mxu0 0.0
    %5155 = vmatpush1.msra.mxu0 0.0
    %5156 = vmatprep.subr.mxu0 0.0
    %5157 = vmatpush1.msra.mxu0 0.0
    %5158 = vmatprep.subr.mxu0 0.0
    %5159 = vmatpush1.msra.mxu0 0.0
    %5160 = vmatprep.subr.mxu0 0.0
    %5161 = vmatpush1.msra.mxu0 0.0
    %5162 = vmatprep.subr.mxu0 0.0
    %5163 = vmatpush1.msra.mxu0 0.0
    %5164 = vmatprep.subr.mxu0 0.0
    %5165 = vmatpush1.msra.mxu0 0.0
    %5166 = vmatprep.subr.mxu0 0.0
    %5167 = vmatpush1.msra.mxu0 0.0
    %5168 = vmatprep.subr.mxu0 0.0
    %5169 = vmatpush1.msra.mxu0 0.0
    %5170 = vmatprep.subr.mxu0 0.0
    %5171 = vmatpush1.msra.mxu0 0.0
    %5172 = vmatprep.subr.mxu0 0.0
    %5173 = vmatpush1.msra.mxu0 0.0
    %5174 = vmatprep.subr.mxu0 0.0
    %5175 = vmatpush1.msra.mxu0 0.0
    %5176 = vmatprep.subr.mxu0 0.0
    %5177 = vmatpush1.msra.mxu0 0.0
    %5178 = vmatprep.subr.mxu0 0.0
    %5179 = vmatpush1.msra.mxu0 0.0
    %5180 = vmatprep.subr.mxu0 0.0
    %5181 = vmatpush1.msra.mxu0 0.0
    %5182 = vmatprep.subr.mxu0 0.0
    %5183 = vmatpush1.msra.mxu0 0.0
    %5184 = vmatprep.mubr.f32.mxu0 0.0
    %5185 = vmatmul.mubr.f32.gmra.mrb[0].mxu0 %v3399
    %v5186 = vpop.f32.mrb[0].mxu0
    %v5187 = vadd.f32 %v4120, %v5186
    %v5188 = vpop.f32.mrb[0].mxu0
    %5189 = vdwg.mxu0
    %5190 = vmatprep.subr.mxu0 %v4057
    %5191 = vmatpush1.msra.mxu0 %v4056
    %5192 = vmatprep.subr.mxu0 %v4060
    %5193 = vmatpush1.msra.mxu0 %v4059
    %5194 = vmatprep.subr.mxu0 %v4063
    %5195 = vmatpush1.msra.mxu0 %v4062
    %5196 = vmatprep.subr.mxu0 %v4066
    %5197 = vmatpush1.msra.mxu0 %v4065
    %5198 = vmatprep.subr.mxu0 %v4069
    %5199 = vmatpush1.msra.mxu0 %v4068
    %5200 = vmatprep.subr.mxu0 %v4072
    %5201 = vmatpush1.msra.mxu0 %v4071
    %5202 = vmatprep.subr.mxu0 %v4075
    %5203 = vmatpush1.msra.mxu0 %v4074
    %5204 = vmatprep.subr.mxu0 %v4078
    %5205 = vmatpush1.msra.mxu0 %v4077
    %5206 = vmatprep.subr.mxu0 %v4081
    %5207 = vmatpush1.msra.mxu0 %v4080
    %5208 = vmatprep.subr.mxu0 %v4084
    %5209 = vmatpush1.msra.mxu0 %v4083
    %5210 = vmatprep.subr.mxu0 %v4087
    %5211 = vmatpush1.msra.mxu0 %v4086
    %5212 = vmatprep.subr.mxu0 %v4090
    %5213 = vmatpush1.msra.mxu0 %v4089
    %5214 = vmatprep.subr.mxu0 %v4093
    %5215 = vmatpush1.msra.mxu0 %v4092
    %5216 = vmatprep.subr.mxu0 %v4096
    %5217 = vmatpush1.msra.mxu0 %v4095
    %5218 = vmatprep.subr.mxu0 %v4099
    %5219 = vmatpush1.msra.mxu0 %v4098
    %5220 = vmatprep.subr.mxu0 %v4102
    %5221 = vmatpush1.msra.mxu0 %v4101
    %5222 = vmatprep.subr.mxu0 0.0
    %5223 = vmatpush1.msra.mxu0 0.0
    %5224 = vmatprep.subr.mxu0 0.0
    %5225 = vmatpush1.msra.mxu0 0.0
    %5226 = vmatprep.subr.mxu0 0.0
    %5227 = vmatpush1.msra.mxu0 0.0
    %5228 = vmatprep.subr.mxu0 0.0
    %5229 = vmatpush1.msra.mxu0 0.0
    %5230 = vmatprep.subr.mxu0 0.0
    %5231 = vmatpush1.msra.mxu0 0.0
    %5232 = vmatprep.subr.mxu0 0.0
    %5233 = vmatpush1.msra.mxu0 0.0
    %5234 = vmatprep.subr.mxu0 0.0
    %5235 = vmatpush1.msra.mxu0 0.0
    %5236 = vmatprep.subr.mxu0 0.0
    %5237 = vmatpush1.msra.mxu0 0.0
    %5238 = vmatprep.subr.mxu0 0.0
    %5239 = vmatpush1.msra.mxu0 0.0
    %5240 = vmatprep.subr.mxu0 0.0
    %5241 = vmatpush1.msra.mxu0 0.0
    %5242 = vmatprep.subr.mxu0 0.0
    %5243 = vmatpush1.msra.mxu0 0.0
    %5244 = vmatprep.subr.mxu0 0.0
    %5245 = vmatpush1.msra.mxu0 0.0
    %5246 = vmatprep.subr.mxu0 0.0
    %5247 = vmatpush1.msra.mxu0 0.0
    %5248 = vmatprep.subr.mxu0 0.0
    %5249 = vmatpush1.msra.mxu0 0.0
    %5250 = vmatprep.subr.mxu0 0.0
    %5251 = vmatpush1.msra.mxu0 0.0
    %5252 = vmatprep.subr.mxu0 0.0
    %5253 = vmatpush1.msra.mxu0 0.0
    %5254 = vmatprep.mubr.f32.mxu0 0.0
    %5255 = vmatmul.mubr.f32.gmra.mrb[0].mxu0 %v5048
    %v5256 = vpop.f32.mrb[0].mxu0
    %v5257 = vadd.f32 %v4269, %v5256
    %v5258 = vpop.f32.mrb[0].mxu0
    %v5259 = vadd.f32 %v4273, %v5258
    %5260 = vdwg.mxu0
    %5261 = vmatprep.subr.mxu0 0.0
    %5262 = vmatpush1.msra.mxu0 %v4058
    %5263 = vmatprep.subr.mxu0 0.0
    %5264 = vmatpush1.msra.mxu0 %v4061
    %5265 = vmatprep.subr.mxu0 0.0
    %5266 = vmatpush1.msra.mxu0 %v4064
    %5267 = vmatprep.subr.mxu0 0.0
    %5268 = vmatpush1.msra.mxu0 %v4067
    %5269 = vmatprep.subr.mxu0 0.0
    %5270 = vmatpush1.msra.mxu0 %v4070
    %5271 = vmatprep.subr.mxu0 0.0
    %5272 = vmatpush1.msra.mxu0 %v4073
    %5273 = vmatprep.subr.mxu0 0.0
    %5274 = vmatpush1.msra.mxu0 %v4076
    %5275 = vmatprep.subr.mxu0 0.0
    %5276 = vmatpush1.msra.mxu0 %v4079
    %5277 = vmatprep.subr.mxu0 0.0
    %5278 = vmatpush1.msra.mxu0 %v4082
    %5279 = vmatprep.subr.mxu0 0.0
    %5280 = vmatpush1.msra.mxu0 %v4085
    %5281 = vmatprep.subr.mxu0 0.0
    %5282 = vmatpush1.msra.mxu0 %v4088
    %5283 = vmatprep.subr.mxu0 0.0
    %5284 = vmatpush1.msra.mxu0 %v4091
    %5285 = vmatprep.subr.mxu0 0.0
    %5286 = vmatpush1.msra.mxu0 %v4094
    %5287 = vmatprep.subr.mxu0 0.0
    %5288 = vmatpush1.msra.mxu0 %v4097
    %5289 = vmatprep.subr.mxu0 0.0
    %5290 = vmatpush1.msra.mxu0 %v4100
    %5291 = vmatprep.subr.mxu0 0.0
    %5292 = vmatpush1.msra.mxu0 %v4103
    %5293 = vmatprep.subr.mxu0 0.0
    %5294 = vmatpush1.msra.mxu0 0.0
    %5295 = vmatprep.subr.mxu0 0.0
    %5296 = vmatpush1.msra.mxu0 0.0
    %5297 = vmatprep.subr.mxu0 0.0
    %5298 = vmatpush1.msra.mxu0 0.0
    %5299 = vmatprep.subr.mxu0 0.0
    %5300 = vmatpush1.msra.mxu0 0.0
    %5301 = vmatprep.subr.mxu0 0.0
    %5302 = vmatpush1.msra.mxu0 0.0
    %5303 = vmatprep.subr.mxu0 0.0
    %5304 = vmatpush1.msra.mxu0 0.0
    %5305 = vmatprep.subr.mxu0 0.0
    %5306 = vmatpush1.msra.mxu0 0.0
    %5307 = vmatprep.subr.mxu0 0.0
    %5308 = vmatpush1.msra.mxu0 0.0
    %5309 = vmatprep.subr.mxu0 0.0
    %5310 = vmatpush1.msra.mxu0 0.0
    %5311 = vmatprep.subr.mxu0 0.0
    %5312 = vmatpush1.msra.mxu0 0.0
    %5313 = vmatprep.subr.mxu0 0.0
    %5314 = vmatpush1.msra.mxu0 0.0
    %5315 = vmatprep.subr.mxu0 0.0
    %5316 = vmatpush1.msra.mxu0 0.0
    %5317 = vmatprep.subr.mxu0 0.0
    %5318 = vmatpush1.msra.mxu0 0.0
    %5319 = vmatprep.subr.mxu0 0.0
    %5320 = vmatpush1.msra.mxu0 0.0
    %5321 = vmatprep.subr.mxu0 0.0
    %5322 = vmatpush1.msra.mxu0 0.0
    %5323 = vmatprep.subr.mxu0 0.0
    %5324 = vmatpush1.msra.mxu0 0.0
    %5325 = vmatprep.mubr.f32.mxu0 0.0
    %5326 = vmatmul.mubr.f32.gmra.mrb[0].mxu0 %v5048
    %v5327 = vpop.f32.mrb[0].mxu0
    %v5328 = vadd.f32 %v4277, %v5327
    %v5329 = vpop.f32.mrb[0].mxu0
    %5330 = vdwg.mxu0
    %v5331 = vadd.f32 %v5116, %v5257
    %v5332 = vsub.f32 0.0, %v5331
    %v5333 = vmul.f32 %v5332, 1.442695
    %v5334 = vpow.pop %v5333
    %v5335 = vadd.f32 %v5334, 1.0
    %v5336 = vrcp.pop %v5335
    %v5337 = vmul.f32 1.0, %v5336
    %v5338 = vadd.f32 %v5118, %v5259
    %v5339 = vsub.f32 0.0, %v5338
    %v5340 = vmul.f32 %v5339, 1.442695
    %v5341 = vpow.pop %v5340
    %v5342 = vadd.f32 %v5341, 1.0
    %v5343 = vrcp.pop %v5342
    %v5344 = vmul.f32 1.0, %v5343
    %v5345 = vmul.f32 %v5337, %v5328
    %v5346 = vadd.f32 %v5187, %v5345
    %v5347 = vtanh.pop %v5346
    %v5348 = vsub.f32 1.0, %v5344
    %v5349 = vmul.f32 %v5348, %v5347
    %v5350 = vmul.f32 %v5344, %v5048
    %v5351 = vadd.f32 %v5349, %v5350
    %5352 = vmatprep.subr.mxu0 %v4008
    %5353 = vmatpush1.msra.mxu0 %v4007
    %5354 = vmatprep.subr.mxu0 %v4011
    %5355 = vmatpush1.msra.mxu0 %v4010
    %5356 = vmatprep.subr.mxu0 %v4014
    %5357 = vmatpush1.msra.mxu0 %v4013
    %5358 = vmatprep.subr.mxu0 %v4017
    %5359 = vmatpush1.msra.mxu0 %v4016
    %5360 = vmatprep.subr.mxu0 %v4020
    %5361 = vmatpush1.msra.mxu0 %v4019
    %5362 = vmatprep.subr.mxu0 %v4023
    %5363 = vmatpush1.msra.mxu0 %v4022
    %5364 = vmatprep.subr.mxu0 %v4026
    %5365 = vmatpush1.msra.mxu0 %v4025
    %5366 = vmatprep.subr.mxu0 %v4029
    %5367 = vmatpush1.msra.mxu0 %v4028
    %5368 = vmatprep.subr.mxu0 %v4032
    %5369 = vmatpush1.msra.mxu0 %v4031
    %5370 = vmatprep.subr.mxu0 %v4035
    %5371 = vmatpush1.msra.mxu0 %v4034
    %5372 = vmatprep.subr.mxu0 %v4038
    %5373 = vmatpush1.msra.mxu0 %v4037
    %5374 = vmatprep.subr.mxu0 %v4041
    %5375 = vmatpush1.msra.mxu0 %v4040
    %5376 = vmatprep.subr.mxu0 %v4044
    %5377 = vmatpush1.msra.mxu0 %v4043
    %5378 = vmatprep.subr.mxu0 %v4047
    %5379 = vmatpush1.msra.mxu0 %v4046
    %5380 = vmatprep.subr.mxu0 %v4050
    %5381 = vmatpush1.msra.mxu0 %v4049
    %5382 = vmatprep.subr.mxu0 %v4053
    %5383 = vmatpush1.msra.mxu0 %v4052
    %5384 = vmatprep.subr.mxu0 0.0
    %5385 = vmatpush1.msra.mxu0 0.0
    %5386 = vmatprep.subr.mxu0 0.0
    %5387 = vmatpush1.msra.mxu0 0.0
    %5388 = vmatprep.subr.mxu0 0.0
    %5389 = vmatpush1.msra.mxu0 0.0
    %5390 = vmatprep.subr.mxu0 0.0
    %5391 = vmatpush1.msra.mxu0 0.0
    %5392 = vmatprep.subr.mxu0 0.0
    %5393 = vmatpush1.msra.mxu0 0.0
    %5394 = vmatprep.subr.mxu0 0.0
    %5395 = vmatpush1.msra.mxu0 0.0
    %5396 = vmatprep.subr.mxu0 0.0
    %5397 = vmatpush1.msra.mxu0 0.0
    %5398 = vmatprep.subr.mxu0 0.0
    %5399 = vmatpush1.msra.mxu0 0.0
    %5400 = vmatprep.subr.mxu0 0.0
    %5401 = vmatpush1.msra.mxu0 0.0
    %5402 = vmatprep.subr.mxu0 0.0
    %5403 = vmatpush1.msra.mxu0 0.0
    %5404 = vmatprep.subr.mxu0 0.0
    %5405 = vmatpush1.msra.mxu0 0.0
    %5406 = vmatprep.subr.mxu0 0.0
    %5407 = vmatpush1.msra.mxu0 0.0
    %5408 = vmatprep.subr.mxu0 0.0
    %5409 = vmatpush1.msra.mxu0 0.0
    %5410 = vmatprep.subr.mxu0 0.0
    %5411 = vmatpush1.msra.mxu0 0.0
    %5412 = vmatprep.subr.mxu0 0.0
    %5413 = vmatpush1.msra.mxu0 0.0
    %5414 = vmatprep.subr.mxu0 0.0
    %5415 = vmatpush1.msra.mxu0 0.0
    %5416 = vmatprep.mubr.f32.mxu0 0.0
    %5417 = vmatmul.mubr.f32.gmra.mrb[0].mxu0 %v3702
    %v5418 = vpop.f32.mrb[0].mxu0
    %v5419 = vadd.f32 %v4112, %v5418
    %v5420 = vpop.f32.mrb[0].mxu0
    %v5421 = vadd.f32 %v4116, %v5420
    %5422 = vdwg.mxu0
    %5423 = vmatprep.subr.mxu0 0.0
    %5424 = vmatpush1.msra.mxu0 %v4009
    %5425 = vmatprep.subr.mxu0 0.0
    %5426 = vmatpush1.msra.mxu0 %v4012
    %5427 = vmatprep.subr.mxu0 0.0
    %5428 = vmatpush1.msra.mxu0 %v4015
    %5429 = vmatprep.subr.mxu0 0.0
    %5430 = vmatpush1.msra.mxu0 %v4018
    %5431 = vmatprep.subr.mxu0 0.0
    %5432 = vmatpush1.msra.mxu0 %v4021
    %5433 = vmatprep.subr.mxu0 0.0
    %5434 = vmatpush1.msra.mxu0 %v4024
    %5435 = vmatprep.subr.mxu0 0.0
    %5436 = vmatpush1.msra.mxu0 %v4027
    %5437 = vmatprep.subr.mxu0 0.0
    %5438 = vmatpush1.msra.mxu0 %v4030
    %5439 = vmatprep.subr.mxu0 0.0
    %5440 = vmatpush1.msra.mxu0 %v4033
    %5441 = vmatprep.subr.mxu0 0.0
    %5442 = vmatpush1.msra.mxu0 %v4036
    %5443 = vmatprep.subr.mxu0 0.0
    %5444 = vmatpush1.msra.mxu0 %v4039
    %5445 = vmatprep.subr.mxu0 0.0
    %5446 = vmatpush1.msra.mxu0 %v4042
    %5447 = vmatprep.subr.mxu0 0.0
    %5448 = vmatpush1.msra.mxu0 %v4045
    %5449 = vmatprep.subr.mxu0 0.0
    %5450 = vmatpush1.msra.mxu0 %v4048
    %5451 = vmatprep.subr.mxu0 0.0
    %5452 = vmatpush1.msra.mxu0 %v4051
    %5453 = vmatprep.subr.mxu0 0.0
    %5454 = vmatpush1.msra.mxu0 %v4054
    %5455 = vmatprep.subr.mxu0 0.0
    %5456 = vmatpush1.msra.mxu0 0.0
    %5457 = vmatprep.subr.mxu0 0.0
    %5458 = vmatpush1.msra.mxu0 0.0
    %5459 = vmatprep.subr.mxu0 0.0
    %5460 = vmatpush1.msra.mxu0 0.0
    %5461 = vmatprep.subr.mxu0 0.0
    %5462 = vmatpush1.msra.mxu0 0.0
    %5463 = vmatprep.subr.mxu0 0.0
    %5464 = vmatpush1.msra.mxu0 0.0
    %5465 = vmatprep.subr.mxu0 0.0
    %5466 = vmatpush1.msra.mxu0 0.0
    %5467 = vmatprep.subr.mxu0 0.0
    %5468 = vmatpush1.msra.mxu0 0.0
    %5469 = vmatprep.subr.mxu0 0.0
    %5470 = vmatpush1.msra.mxu0 0.0
    %5471 = vmatprep.subr.mxu0 0.0
    %5472 = vmatpush1.msra.mxu0 0.0
    %5473 = vmatprep.subr.mxu0 0.0
    %5474 = vmatpush1.msra.mxu0 0.0
    %5475 = vmatprep.subr.mxu0 0.0
    %5476 = vmatpush1.msra.mxu0 0.0
    %5477 = vmatprep.subr.mxu0 0.0
    %5478 = vmatpush1.msra.mxu0 0.0
    %5479 = vmatprep.subr.mxu0 0.0
    %5480 = vmatpush1.msra.mxu0 0.0
    %5481 = vmatprep.subr.mxu0 0.0
    %5482 = vmatpush1.msra.mxu0 0.0
    %5483 = vmatprep.subr.mxu0 0.0
    %5484 = vmatpush1.msra.mxu0 0.0
    %5485 = vmatprep.subr.mxu0 0.0
    %5486 = vmatpush1.msra.mxu0 0.0
    %5487 = vmatprep.mubr.f32.mxu0 0.0
    %5488 = vmatmul.mubr.f32.gmra.mrb[0].mxu0 %v3702
    %v5489 = vpop.f32.mrb[0].mxu0
    %v5490 = vadd.f32 %v4120, %v5489
    %v5491 = vpop.f32.mrb[0].mxu0
    %5492 = vdwg.mxu0
    %5493 = vmatprep.subr.mxu0 %v4057
    %5494 = vmatpush1.msra.mxu0 %v4056
    %5495 = vmatprep.subr.mxu0 %v4060
    %5496 = vmatpush1.msra.mxu0 %v4059
    %5497 = vmatprep.subr.mxu0 %v4063
    %5498 = vmatpush1.msra.mxu0 %v4062
    %5499 = vmatprep.subr.mxu0 %v4066
    %5500 = vmatpush1.msra.mxu0 %v4065
    %5501 = vmatprep.subr.mxu0 %v4069
    %5502 = vmatpush1.msra.mxu0 %v4068
    %5503 = vmatprep.subr.mxu0 %v4072
    %5504 = vmatpush1.msra.mxu0 %v4071
    %5505 = vmatprep.subr.mxu0 %v4075
    %5506 = vmatpush1.msra.mxu0 %v4074
    %5507 = vmatprep.subr.mxu0 %v4078
    %5508 = vmatpush1.msra.mxu0 %v4077
    %5509 = vmatprep.subr.mxu0 %v4081
    %5510 = vmatpush1.msra.mxu0 %v4080
    %5511 = vmatprep.subr.mxu0 %v4084
    %5512 = vmatpush1.msra.mxu0 %v4083
    %5513 = vmatprep.subr.mxu0 %v4087
    %5514 = vmatpush1.msra.mxu0 %v4086
    %5515 = vmatprep.subr.mxu0 %v4090
    %5516 = vmatpush1.msra.mxu0 %v4089
    %5517 = vmatprep.subr.mxu0 %v4093
    %5518 = vmatpush1.msra.mxu0 %v4092
    %5519 = vmatprep.subr.mxu0 %v4096
    %5520 = vmatpush1.msra.mxu0 %v4095
    %5521 = vmatprep.subr.mxu0 %v4099
    %5522 = vmatpush1.msra.mxu0 %v4098
    %5523 = vmatprep.subr.mxu0 %v4102
    %5524 = vmatpush1.msra.mxu0 %v4101
    %5525 = vmatprep.subr.mxu0 0.0
    %5526 = vmatpush1.msra.mxu0 0.0
    %5527 = vmatprep.subr.mxu0 0.0
    %5528 = vmatpush1.msra.mxu0 0.0
    %5529 = vmatprep.subr.mxu0 0.0
    %5530 = vmatpush1.msra.mxu0 0.0
    %5531 = vmatprep.subr.mxu0 0.0
    %5532 = vmatpush1.msra.mxu0 0.0
    %5533 = vmatprep.subr.mxu0 0.0
    %5534 = vmatpush1.msra.mxu0 0.0
    %5535 = vmatprep.subr.mxu0 0.0
    %5536 = vmatpush1.msra.mxu0 0.0
    %5537 = vmatprep.subr.mxu0 0.0
    %5538 = vmatpush1.msra.mxu0 0.0
    %5539 = vmatprep.subr.mxu0 0.0
    %5540 = vmatpush1.msra.mxu0 0.0
    %5541 = vmatprep.subr.mxu0 0.0
    %5542 = vmatpush1.msra.mxu0 0.0
    %5543 = vmatprep.subr.mxu0 0.0
    %5544 = vmatpush1.msra.mxu0 0.0
    %5545 = vmatprep.subr.mxu0 0.0
    %5546 = vmatpush1.msra.mxu0 0.0
    %5547 = vmatprep.subr.mxu0 0.0
    %5548 = vmatpush1.msra.mxu0 0.0
    %5549 = vmatprep.subr.mxu0 0.0
    %5550 = vmatpush1.msra.mxu0 0.0
    %5551 = vmatprep.subr.mxu0 0.0
    %5552 = vmatpush1.msra.mxu0 0.0
    %5553 = vmatprep.subr.mxu0 0.0
    %5554 = vmatpush1.msra.mxu0 0.0
    %5555 = vmatprep.subr.mxu0 0.0
    %5556 = vmatpush1.msra.mxu0 0.0
    %5557 = vmatprep.mubr.f32.mxu0 0.0
    %5558 = vmatmul.mubr.f32.gmra.mrb[0].mxu0 %v5351
    %v5559 = vpop.f32.mrb[0].mxu0
    %v5560 = vadd.f32 %v4269, %v5559
    %v5561 = vpop.f32.mrb[0].mxu0
    %v5562 = vadd.f32 %v4273, %v5561
    %5563 = vdwg.mxu0
    %5564 = vmatprep.subr.mxu0 0.0
    %5565 = vmatpush1.msra.mxu0 %v4058
    %5566 = vmatprep.subr.mxu0 0.0
    %5567 = vmatpush1.msra.mxu0 %v4061
    %5568 = vmatprep.subr.mxu0 0.0
    %5569 = vmatpush1.msra.mxu0 %v4064
    %5570 = vmatprep.subr.mxu0 0.0
    %5571 = vmatpush1.msra.mxu0 %v4067
    %5572 = vmatprep.subr.mxu0 0.0
    %5573 = vmatpush1.msra.mxu0 %v4070
    %5574 = vmatprep.subr.mxu0 0.0
    %5575 = vmatpush1.msra.mxu0 %v4073
    %5576 = vmatprep.subr.mxu0 0.0
    %5577 = vmatpush1.msra.mxu0 %v4076
    %5578 = vmatprep.subr.mxu0 0.0
    %5579 = vmatpush1.msra.mxu0 %v4079
    %5580 = vmatprep.subr.mxu0 0.0
    %5581 = vmatpush1.msra.mxu0 %v4082
    %5582 = vmatprep.subr.mxu0 0.0
    %5583 = vmatpush1.msra.mxu0 %v4085
    %5584 = vmatprep.subr.mxu0 0.0
    %5585 = vmatpush1.msra.mxu0 %v4088
    %5586 = vmatprep.subr.mxu0 0.0
    %5587 = vmatpush1.msra.mxu0 %v4091
    %5588 = vmatprep.subr.mxu0 0.0
    %5589 = vmatpush1.msra.mxu0 %v4094
    %5590 = vmatprep.subr.mxu0 0.0
    %5591 = vmatpush1.msra.mxu0 %v4097
    %5592 = vmatprep.subr.mxu0 0.0
    %5593 = vmatpush1.msra.mxu0 %v4100
    %5594 = vmatprep.subr.mxu0 0.0
    %5595 = vmatpush1.msra.mxu0 %v4103
    %5596 = vmatprep.subr.mxu0 0.0
    %5597 = vmatpush1.msra.mxu0 0.0
    %5598 = vmatprep.subr.mxu0 0.0
    %5599 = vmatpush1.msra.mxu0 0.0
    %5600 = vmatprep.subr.mxu0 0.0
    %5601 = vmatpush1.msra.mxu0 0.0
    %5602 = vmatprep.subr.mxu0 0.0
    %5603 = vmatpush1.msra.mxu0 0.0
    %5604 = vmatprep.subr.mxu0 0.0
    %5605 = vmatpush1.msra.mxu0 0.0
    %5606 = vmatprep.subr.mxu0 0.0
    %5607 = vmatpush1.msra.mxu0 0.0
    %5608 = vmatprep.subr.mxu0 0.0
    %5609 = vmatpush1.msra.mxu0 0.0
    %5610 = vmatprep.subr.mxu0 0.0
    %5611 = vmatpush1.msra.mxu0 0.0
    %5612 = vmatprep.subr.mxu0 0.0
    %5613 = vmatpush1.msra.mxu0 0.0
    %5614 = vmatprep.subr.mxu0 0.0
    %5615 = vmatpush1.msra.mxu0 0.0
    %5616 = vmatprep.subr.mxu0 0.0
    %5617 = vmatpush1.msra.mxu0 0.0
    %5618 = vmatprep.subr.mxu0 0.0
    %5619 = vmatpush1.msra.mxu0 0.0
    %5620 = vmatprep.subr.mxu0 0.0
    %5621 = vmatpush1.msra.mxu0 0.0
    %5622 = vmatprep.subr.mxu0 0.0
    %5623 = vmatpush1.msra.mxu0 0.0
    %5624 = vmatprep.subr.mxu0 0.0
    %5625 = vmatpush1.msra.mxu0 0.0
    %5626 = vmatprep.subr.mxu0 0.0
    %5627 = vmatpush1.msra.mxu0 0.0
    %5628 = vmatprep.mubr.f32.mxu0 0.0
    %5629 = vmatmul.mubr.f32.gmra.mrb[0].mxu0 %v5351
    %v5630 = vpop.f32.mrb[0].mxu0
    %v5631 = vadd.f32 %v4277, %v5630
    %v5632 = vpop.f32.mrb[0].mxu0
    %5633 = vdwg.mxu0
    %v5634 = vadd.f32 %v5419, %v5560
    %v5635 = vsub.f32 0.0, %v5634
    %v5636 = vmul.f32 %v5635, 1.442695
    %v5637 = vpow.pop %v5636
    %v5638 = vadd.f32 %v5637, 1.0
    %v5639 = vrcp.pop %v5638
    %v5640 = vmul.f32 1.0, %v5639
    %v5641 = vadd.f32 %v5421, %v5562
    %v5642 = vsub.f32 0.0, %v5641
    %v5643 = vmul.f32 %v5642, 1.442695
    %v5644 = vpow.pop %v5643
    %v5645 = vadd.f32 %v5644, 1.0
    %v5646 = vrcp.pop %v5645
    %v5647 = vmul.f32 1.0, %v5646
    %v5648 = vmul.f32 %v5640, %v5631
    %v5649 = vadd.f32 %v5490, %v5648
    %v5650 = vtanh.pop %v5649
    %v5651 = vsub.f32 1.0, %v5647
    %v5652 = vmul.f32 %v5651, %v5650
    %v5653 = vmul.f32 %v5647, %v5351
    %v5654 = vadd.f32 %v5652, %v5653
    %5655 = vmatprep.subr.mxu0 %v4008
    %5656 = vmatpush1.msra.mxu0 %v4007
    %5657 = vmatprep.subr.mxu0 %v4011
    %5658 = vmatpush1.msra.mxu0 %v4010
    %5659 = vmatprep.subr.mxu0 %v4014
    %5660 = vmatpush1.msra.mxu0 %v4013
    %5661 = vmatprep.subr.mxu0 %v4017
    %5662 = vmatpush1.msra.mxu0 %v4016
    %5663 = vmatprep.subr.mxu0 %v4020
    %5664 = vmatpush1.msra.mxu0 %v4019
    %5665 = vmatprep.subr.mxu0 %v4023
    %5666 = vmatpush1.msra.mxu0 %v4022
    %5667 = vmatprep.subr.mxu0 %v4026
    %5668 = vmatpush1.msra.mxu0 %v4025
    %5669 = vmatprep.subr.mxu0 %v4029
    %5670 = vmatpush1.msra.mxu0 %v4028
    %5671 = vmatprep.subr.mxu0 %v4032
    %5672 = vmatpush1.msra.mxu0 %v4031
    %5673 = vmatprep.subr.mxu0 %v4035
    %5674 = vmatpush1.msra.mxu0 %v4034
    %5675 = vmatprep.subr.mxu0 %v4038
    %5676 = vmatpush1.msra.mxu0 %v4037
    %5677 = vmatprep.subr.mxu0 %v4041
    %5678 = vmatpush1.msra.mxu0 %v4040
    %5679 = vmatprep.subr.mxu0 %v4044
    %5680 = vmatpush1.msra.mxu0 %v4043
    %5681 = vmatprep.subr.mxu0 %v4047
    %5682 = vmatpush1.msra.mxu0 %v4046
    %5683 = vmatprep.subr.mxu0 %v4050
    %5684 = vmatpush1.msra.mxu0 %v4049
    %5685 = vmatprep.subr.mxu0 %v4053
    %5686 = vmatpush1.msra.mxu0 %v4052
    %5687 = vmatprep.subr.mxu0 0.0
    %5688 = vmatpush1.msra.mxu0 0.0
    %5689 = vmatprep.subr.mxu0 0.0
    %5690 = vmatpush1.msra.mxu0 0.0
    %5691 = vmatprep.subr.mxu0 0.0
    %5692 = vmatpush1.msra.mxu0 0.0
    %5693 = vmatprep.subr.mxu0 0.0
    %5694 = vmatpush1.msra.mxu0 0.0
    %5695 = vmatprep.subr.mxu0 0.0
    %5696 = vmatpush1.msra.mxu0 0.0
    %5697 = vmatprep.subr.mxu0 0.0
    %5698 = vmatpush1.msra.mxu0 0.0
    %5699 = vmatprep.subr.mxu0 0.0
    %5700 = vmatpush1.msra.mxu0 0.0
    %5701 = vmatprep.subr.mxu0 0.0
    %5702 = vmatpush1.msra.mxu0 0.0
    %5703 = vmatprep.subr.mxu0 0.0
    %5704 = vmatpush1.msra.mxu0 0.0
    %5705 = vmatprep.subr.mxu0 0.0
    %5706 = vmatpush1.msra.mxu0 0.0
    %5707 = vmatprep.subr.mxu0 0.0
    %5708 = vmatpush1.msra.mxu0 0.0
    %5709 = vmatprep.subr.mxu0 0.0
    %5710 = vmatpush1.msra.mxu0 0.0
    %5711 = vmatprep.subr.mxu0 0.0
    %5712 = vmatpush1.msra.mxu0 0.0
    %5713 = vmatprep.subr.mxu0 0.0
    %5714 = vmatpush1.msra.mxu0 0.0
    %5715 = vmatprep.subr.mxu0 0.0
    %5716 = vmatpush1.msra.mxu0 0.0
    %5717 = vmatprep.subr.mxu0 0.0
    %5718 = vmatpush1.msra.mxu0 0.0
    %5719 = vmatprep.mubr.f32.mxu0 0.0
    %5720 = vmatmul.mubr.f32.gmra.mrb[0].mxu0 %v4005
    %v5721 = vpop.f32.mrb[0].mxu0
    %v5722 = vadd.f32 %v4112, %v5721
    %v5723 = vpop.f32.mrb[0].mxu0
    %v5724 = vadd.f32 %v4116, %v5723
    %5725 = vdwg.mxu0
    %5726 = vmatprep.subr.mxu0 0.0
    %5727 = vmatpush1.msra.mxu0 %v4009
    %5728 = vmatprep.subr.mxu0 0.0
    %5729 = vmatpush1.msra.mxu0 %v4012
    %5730 = vmatprep.subr.mxu0 0.0
    %5731 = vmatpush1.msra.mxu0 %v4015
    %5732 = vmatprep.subr.mxu0 0.0
    %5733 = vmatpush1.msra.mxu0 %v4018
    %5734 = vmatprep.subr.mxu0 0.0
    %5735 = vmatpush1.msra.mxu0 %v4021
    %5736 = vmatprep.subr.mxu0 0.0
    %5737 = vmatpush1.msra.mxu0 %v4024
    %5738 = vmatprep.subr.mxu0 0.0
    %5739 = vmatpush1.msra.mxu0 %v4027
    %5740 = vmatprep.subr.mxu0 0.0
    %5741 = vmatpush1.msra.mxu0 %v4030
    %5742 = vmatprep.subr.mxu0 0.0
    %5743 = vmatpush1.msra.mxu0 %v4033
    %5744 = vmatprep.subr.mxu0 0.0
    %5745 = vmatpush1.msra.mxu0 %v4036
    %5746 = vmatprep.subr.mxu0 0.0
    %5747 = vmatpush1.msra.mxu0 %v4039
    %5748 = vmatprep.subr.mxu0 0.0
    %5749 = vmatpush1.msra.mxu0 %v4042
    %5750 = vmatprep.subr.mxu0 0.0
    %5751 = vmatpush1.msra.mxu0 %v4045
    %5752 = vmatprep.subr.mxu0 0.0
    %5753 = vmatpush1.msra.mxu0 %v4048
    %5754 = vmatprep.subr.mxu0 0.0
    %5755 = vmatpush1.msra.mxu0 %v4051
    %5756 = vmatprep.subr.mxu0 0.0
    %5757 = vmatpush1.msra.mxu0 %v4054
    %5758 = vmatprep.subr.mxu0 0.0
    %5759 = vmatpush1.msra.mxu0 0.0
    %5760 = vmatprep.subr.mxu0 0.0
    %5761 = vmatpush1.msra.mxu0 0.0
    %5762 = vmatprep.subr.mxu0 0.0
    %5763 = vmatpush1.msra.mxu0 0.0
    %5764 = vmatprep.subr.mxu0 0.0
    %5765 = vmatpush1.msra.mxu0 0.0
    %5766 = vmatprep.subr.mxu0 0.0
    %5767 = vmatpush1.msra.mxu0 0.0
    %5768 = vmatprep.subr.mxu0 0.0
    %5769 = vmatpush1.msra.mxu0 0.0
    %5770 = vmatprep.subr.mxu0 0.0
    %5771 = vmatpush1.msra.mxu0 0.0
    %5772 = vmatprep.subr.mxu0 0.0
    %5773 = vmatpush1.msra.mxu0 0.0
    %5774 = vmatprep.subr.mxu0 0.0
    %5775 = vmatpush1.msra.mxu0 0.0
    %5776 = vmatprep.subr.mxu0 0.0
    %5777 = vmatpush1.msra.mxu0 0.0
    %5778 = vmatprep.subr.mxu0 0.0
    %5779 = vmatpush1.msra.mxu0 0.0
    %5780 = vmatprep.subr.mxu0 0.0
    %5781 = vmatpush1.msra.mxu0 0.0
    %5782 = vmatprep.subr.mxu0 0.0
    %5783 = vmatpush1.msra.mxu0 0.0
    %5784 = vmatprep.subr.mxu0 0.0
    %5785 = vmatpush1.msra.mxu0 0.0
    %5786 = vmatprep.subr.mxu0 0.0
    %5787 = vmatpush1.msra.mxu0 0.0
    %5788 = vmatprep.subr.mxu0 0.0
    %5789 = vmatpush1.msra.mxu0 0.0
    %5790 = vmatprep.mubr.f32.mxu0 0.0
    %5791 = vmatmul.mubr.f32.gmra.mrb[0].mxu0 %v4005
    %v5792 = vpop.f32.mrb[0].mxu0
    %v5793 = vadd.f32 %v4120, %v5792
    %v5794 = vpop.f32.mrb[0].mxu0
    %5795 = vdwg.mxu0
    %5796 = vmatprep.subr.mxu0 %v4057
    %5797 = vmatpush1.msra.mxu0 %v4056
    %5798 = vmatprep.subr.mxu0 %v4060
    %5799 = vmatpush1.msra.mxu0 %v4059
    %5800 = vmatprep.subr.mxu0 %v4063
    %5801 = vmatpush1.msra.mxu0 %v4062
    %5802 = vmatprep.subr.mxu0 %v4066
    %5803 = vmatpush1.msra.mxu0 %v4065
    %5804 = vmatprep.subr.mxu0 %v4069
    %5805 = vmatpush1.msra.mxu0 %v4068
    %5806 = vmatprep.subr.mxu0 %v4072
    %5807 = vmatpush1.msra.mxu0 %v4071
    %5808 = vmatprep.subr.mxu0 %v4075
    %5809 = vmatpush1.msra.mxu0 %v4074
    %5810 = vmatprep.subr.mxu0 %v4078
    %5811 = vmatpush1.msra.mxu0 %v4077
    %5812 = vmatprep.subr.mxu0 %v4081
    %5813 = vmatpush1.msra.mxu0 %v4080
    %5814 = vmatprep.subr.mxu0 %v4084
    %5815 = vmatpush1.msra.mxu0 %v4083
    %5816 = vmatprep.subr.mxu0 %v4087
    %5817 = vmatpush1.msra.mxu0 %v4086
    %5818 = vmatprep.subr.mxu0 %v4090
    %5819 = vmatpush1.msra.mxu0 %v4089
    %5820 = vmatprep.subr.mxu0 %v4093
    %5821 = vmatpush1.msra.mxu0 %v4092
    %5822 = vmatprep.subr.mxu0 %v4096
    %5823 = vmatpush1.msra.mxu0 %v4095
    %5824 = vmatprep.subr.mxu0 %v4099
    %5825 = vmatpush1.msra.mxu0 %v4098
    %5826 = vmatprep.subr.mxu0 %v4102
    %5827 = vmatpush1.msra.mxu0 %v4101
    %5828 = vmatprep.subr.mxu0 0.0
    %5829 = vmatpush1.msra.mxu0 0.0
    %5830 = vmatprep.subr.mxu0 0.0
    %5831 = vmatpush1.msra.mxu0 0.0
    %5832 = vmatprep.subr.mxu0 0.0
    %5833 = vmatpush1.msra.mxu0 0.0
    %5834 = vmatprep.subr.mxu0 0.0
    %5835 = vmatpush1.msra.mxu0 0.0
    %5836 = vmatprep.subr.mxu0 0.0
    %5837 = vmatpush1.msra.mxu0 0.0
    %5838 = vmatprep.subr.mxu0 0.0
    %5839 = vmatpush1.msra.mxu0 0.0
    %5840 = vmatprep.subr.mxu0 0.0
    %5841 = vmatpush1.msra.mxu0 0.0
    %5842 = vmatprep.subr.mxu0 0.0
    %5843 = vmatpush1.msra.mxu0 0.0
    %5844 = vmatprep.subr.mxu0 0.0
    %5845 = vmatpush1.msra.mxu0 0.0
    %5846 = vmatprep.subr.mxu0 0.0
    %5847 = vmatpush1.msra.mxu0 0.0
    %5848 = vmatprep.subr.mxu0 0.0
    %5849 = vmatpush1.msra.mxu0 0.0
    %5850 = vmatprep.subr.mxu0 0.0
    %5851 = vmatpush1.msra.mxu0 0.0
    %5852 = vmatprep.subr.mxu0 0.0
    %5853 = vmatpush1.msra.mxu0 0.0
    %5854 = vmatprep.subr.mxu0 0.0
    %5855 = vmatpush1.msra.mxu0 0.0
    %5856 = vmatprep.subr.mxu0 0.0
    %5857 = vmatpush1.msra.mxu0 0.0
    %5858 = vmatprep.subr.mxu0 0.0
    %5859 = vmatpush1.msra.mxu0 0.0
    %5860 = vmatprep.mubr.f32.mxu0 0.0
    %5861 = vmatmul.mubr.f32.gmra.mrb[0].mxu0 %v5654
    %v5862 = vpop.f32.mrb[0].mxu0
    %v5863 = vadd.f32 %v4269, %v5862
    %v5864 = vpop.f32.mrb[0].mxu0
    %v5865 = vadd.f32 %v4273, %v5864
    %5866 = vdwg.mxu0
    %5867 = vmatprep.subr.mxu0 0.0
    %5868 = vmatpush1.msra.mxu0 %v4058
    %5869 = vmatprep.subr.mxu0 0.0
    %5870 = vmatpush1.msra.mxu0 %v4061
    %5871 = vmatprep.subr.mxu0 0.0
    %5872 = vmatpush1.msra.mxu0 %v4064
    %5873 = vmatprep.subr.mxu0 0.0
    %5874 = vmatpush1.msra.mxu0 %v4067
    %5875 = vmatprep.subr.mxu0 0.0
    %5876 = vmatpush1.msra.mxu0 %v4070
    %5877 = vmatprep.subr.mxu0 0.0
    %5878 = vmatpush1.msra.mxu0 %v4073
    %5879 = vmatprep.subr.mxu0 0.0
    %5880 = vmatpush1.msra.mxu0 %v4076
    %5881 = vmatprep.subr.mxu0 0.0
    %5882 = vmatpush1.msra.mxu0 %v4079
    %5883 = vmatprep.subr.mxu0 0.0
    %5884 = vmatpush1.msra.mxu0 %v4082
    %5885 = vmatprep.subr.mxu0 0.0
    %5886 = vmatpush1.msra.mxu0 %v4085
    %5887 = vmatprep.subr.mxu0 0.0
    %5888 = vmatpush1.msra.mxu0 %v4088
    %5889 = vmatprep.subr.mxu0 0.0
    %5890 = vmatpush1.msra.mxu0 %v4091
    %5891 = vmatprep.subr.mxu0 0.0
    %5892 = vmatpush1.msra.mxu0 %v4094
    %5893 = vmatprep.subr.mxu0 0.0
    %5894 = vmatpush1.msra.mxu0 %v4097
    %5895 = vmatprep.subr.mxu0 0.0
    %5896 = vmatpush1.msra.mxu0 %v4100
    %5897 = vmatprep.subr.mxu0 0.0
    %5898 = vmatpush1.msra.mxu0 %v4103
    %5899 = vmatprep.subr.mxu0 0.0
    %5900 = vmatpush1.msra.mxu0 0.0
    %5901 = vmatprep.subr.mxu0 0.0
    %5902 = vmatpush1.msra.mxu0 0.0
    %5903 = vmatprep.subr.mxu0 0.0
    %5904 = vmatpush1.msra.mxu0 0.0
    %5905 = vmatprep.subr.mxu0 0.0
    %5906 = vmatpush1.msra.mxu0 0.0
    %5907 = vmatprep.subr.mxu0 0.0
    %5908 = vmatpush1.msra.mxu0 0.0
    %5909 = vmatprep.subr.mxu0 0.0
    %5910 = vmatpush1.msra.mxu0 0.0
    %5911 = vmatprep.subr.mxu0 0.0
    %5912 = vmatpush1.msra.mxu0 0.0
    %5913 = vmatprep.subr.mxu0 0.0
    %5914 = vmatpush1.msra.mxu0 0.0
    %5915 = vmatprep.subr.mxu0 0.0
    %5916 = vmatpush1.msra.mxu0 0.0
    %5917 = vmatprep.subr.mxu0 0.0
    %5918 = vmatpush1.msra.mxu0 0.0
    %5919 = vmatprep.subr.mxu0 0.0
    %5920 = vmatpush1.msra.mxu0 0.0
    %5921 = vmatprep.subr.mxu0 0.0
    %5922 = vmatpush1.msra.mxu0 0.0
    %5923 = vmatprep.subr.mxu0 0.0
    %5924 = vmatpush1.msra.mxu0 0.0
    %5925 = vmatprep.subr.mxu0 0.0
    %5926 = vmatpush1.msra.mxu0 0.0
    %5927 = vmatprep.subr.mxu0 0.0
    %5928 = vmatpush1.msra.mxu0 0.0
    %5929 = vmatprep.subr.mxu0 0.0
    %5930 = vmatpush1.msra.mxu0 0.0
    %5931 = vmatprep.mubr.f32.mxu0 0.0
    %5932 = vmatmul.mubr.f32.gmra.mrb[0].mxu0 %v5654
    %v5933 = vpop.f32.mrb[0].mxu0
    %v5934 = vadd.f32 %v4277, %v5933
    %v5935 = vpop.f32.mrb[0].mxu0
    %5936 = vdwg.mxu0
    %v5937 = vadd.f32 %v5722, %v5863
    %v5938 = vsub.f32 0.0, %v5937
    %v5939 = vmul.f32 %v5938, 1.442695
    %v5940 = vpow.pop %v5939
    %v5941 = vadd.f32 %v5940, 1.0
    %v5942 = vrcp.pop %v5941
    %v5943 = vmul.f32 1.0, %v5942
    %v5944 = vadd.f32 %v5724, %v5865
    %v5945 = vsub.f32 0.0, %v5944
    %v5946 = vmul.f32 %v5945, 1.442695
    %v5947 = vpow.pop %v5946
    %v5948 = vadd.f32 %v5947, 1.0
    %v5949 = vrcp.pop %v5948
    %v5950 = vmul.f32 1.0, %v5949
    %v5951 = vmul.f32 %v5943, %v5934
    %v5952 = vadd.f32 %v5793, %v5951
    %v5953 = vtanh.pop %v5952
    %v5954 = vsub.f32 1.0, %v5950
    %v5955 = vmul.f32 %v5954, %v5953
    %v5956 = vmul.f32 %v5950, %v5654
    %v5957 = vadd.f32 %v5955, %v5956
    %v5958 = vld [vmem:[#allocation10] sm:$0xff]
    %v5959 = vld [vmem:[#allocation10 + $0x8] sm:$0xff]
    %v5960 = vld [vmem:[#allocation10 + $0x10] sm:$0xff]
    %v5961 = vld [vmem:[#allocation10 + $0x18] sm:$0xff]
    %v5962 = vld [vmem:[#allocation10 + $0x20] sm:$0xff]
    %v5963 = vld [vmem:[#allocation10 + $0x28] sm:$0xff]
    %v5964 = vld [vmem:[#allocation10 + $0x30] sm:$0xff]
    %v5965 = vld [vmem:[#allocation10 + $0x38] sm:$0xff]
    %v5966 = vld [vmem:[#allocation10 + $0x40] sm:$0xff]
    %v5967 = vld [vmem:[#allocation10 + $0x48] sm:$0xff]
    %v5968 = vld [vmem:[#allocation10 + $0x50] sm:$0xff]
    %v5969 = vld [vmem:[#allocation10 + $0x58] sm:$0xff]
    %v5970 = vld [vmem:[#allocation10 + $0x60] sm:$0xff]
    %v5971 = vld [vmem:[#allocation10 + $0x68] sm:$0xff]
    %v5972 = vld [vmem:[#allocation10 + $0x70] sm:$0xff]
    %v5973 = vld [vmem:[#allocation10 + $0x78] sm:$0xff]
    %v5974 = vld [vmem:[%s6] sm:$0x1]
    %v5976 = vlaneseq
    %v5977 = vshrl.u32 %v5976, 7
    %v5978 = vsub.s32 0, %v5977
    %v5979 = vrot.slane %v5974, %v5978
    %5981 = vmatprep.subr.mxu0 0.0
    %5982 = vmatpush1.msra.mxu0 %v5958
    %5983 = vmatprep.subr.mxu0 0.0
    %5984 = vmatpush1.msra.mxu0 %v5959
    %5985 = vmatprep.subr.mxu0 0.0
    %5986 = vmatpush1.msra.mxu0 %v5960
    %5987 = vmatprep.subr.mxu0 0.0
    %5988 = vmatpush1.msra.mxu0 %v5961
    %5989 = vmatprep.subr.mxu0 0.0
    %5990 = vmatpush1.msra.mxu0 %v5962
    %5991 = vmatprep.subr.mxu0 0.0
    %5992 = vmatpush1.msra.mxu0 %v5963
    %5993 = vmatprep.subr.mxu0 0.0
    %5994 = vmatpush1.msra.mxu0 %v5964
    %5995 = vmatprep.subr.mxu0 0.0
    %5996 = vmatpush1.msra.mxu0 %v5965
    %5997 = vmatprep.subr.mxu0 0.0
    %5998 = vmatpush1.msra.mxu0 %v5966
    %5999 = vmatprep.subr.mxu0 0.0
    %6000 = vmatpush1.msra.mxu0 %v5967
    %6001 = vmatprep.subr.mxu0 0.0
    %6002 = vmatpush1.msra.mxu0 %v5968
    %6003 = vmatprep.subr.mxu0 0.0
    %6004 = vmatpush1.msra.mxu0 %v5969
    %6005 = vmatprep.subr.mxu0 0.0
    %6006 = vmatpush1.msra.mxu0 %v5970
    %6007 = vmatprep.subr.mxu0 0.0
    %6008 = vmatpush1.msra.mxu0 %v5971
    %6009 = vmatprep.subr.mxu0 0.0
    %6010 = vmatpush1.msra.mxu0 %v5972
    %6011 = vmatprep.subr.mxu0 0.0
    %6012 = vmatpush1.msra.mxu0 %v5973
    %6013 = vmatprep.subr.mxu0 0.0
    %6014 = vmatpush1.msra.mxu0 0.0
    %6015 = vmatprep.subr.mxu0 0.0
    %6016 = vmatpush1.msra.mxu0 0.0
    %6017 = vmatprep.subr.mxu0 0.0
    %6018 = vmatpush1.msra.mxu0 0.0
    %6019 = vmatprep.subr.mxu0 0.0
    %6020 = vmatpush1.msra.mxu0 0.0
    %6021 = vmatprep.subr.mxu0 0.0
    %6022 = vmatpush1.msra.mxu0 0.0
    %6023 = vmatprep.subr.mxu0 0.0
    %6024 = vmatpush1.msra.mxu0 0.0
    %6025 = vmatprep.subr.mxu0 0.0
    %6026 = vmatpush1.msra.mxu0 0.0
    %6027 = vmatprep.subr.mxu0 0.0
    %6028 = vmatpush1.msra.mxu0 0.0
    %6029 = vmatprep.subr.mxu0 0.0
    %6030 = vmatpush1.msra.mxu0 0.0
    %6031 = vmatprep.subr.mxu0 0.0
    %6032 = vmatpush1.msra.mxu0 0.0
    %6033 = vmatprep.subr.mxu0 0.0
    %6034 = vmatpush1.msra.mxu0 0.0
    %6035 = vmatprep.subr.mxu0 0.0
    %6036 = vmatpush1.msra.mxu0 0.0
    %6037 = vmatprep.subr.mxu0 0.0
    %6038 = vmatpush1.msra.mxu0 0.0
    %6039 = vmatprep.subr.mxu0 0.0
    %6040 = vmatpush1.msra.mxu0 0.0
    %6041 = vmatprep.subr.mxu0 0.0
    %6042 = vmatpush1.msra.mxu0 0.0
    %6043 = vmatprep.subr.mxu0 0.0
    %6044 = vmatpush1.msra.mxu0 0.0
    %6045 = vmatprep.mubr.f32.mxu0 0.0
    %6046 = vmatmul.mubr.f32.gmra.mrb[0].mxu0 %v5957
    %v6047 = vpop.f32.mrb[0].mxu0
    %v6048 = vadd.f32 %v5979, %v6047
    %v6049 = vpop.f32.mrb[0].mxu0
    %6050 = vdwg.mxu0
    %6051 = vst [vmem:[#allocation11] sm:$0xff] %v6048
    // Predicated region
    $region50: #{tpu_custom_call.1} parent=1 // pred_check
      _
    $region51: #{tpu_custom_call.1} parent=1 // pred_check_branch
      %6053 = sbr.rel (0) target = $region53
    $region52: #{tpu_custom_call.1} parent=1 // pred_region
      %s6055 = ssub.s32 128, 128
      %6056 = vsyncadd [#allocation4], %s6055
      %s6058 = sshll.u32 [#allocation11], 4
      %s6059 = int_to_ptr.vmem [resolvable:$true] %s6058
      %6061 = dma.vmem_to_hbm [thread:$0]  %s6059, 128, %s7, [#allocation4]
    $region53: #{tpu_custom_call.1} parent=1 // pred_fallthru
      _
    // Predicated region
    $region54: #{tpu_custom_call.1} parent=1 // pred_check
      _
    $region55: #{tpu_custom_call.1} parent=1 // pred_check_branch
      %6063 = sbr.rel (0) target = $region57
    $region56: #{tpu_custom_call.1} parent=1 // pred_region
      %6064 = dma.done [#allocation4], 128
    $region57: #{tpu_custom_call.1} parent=1 // pred_fallthru
      _
    %6065 = vsyncpa [#allocation3], 1
    %6066 = vsyncpa [#allocation6], 1
    %6067 = vsyncpa [#allocation9], 1
    %6068 = vsyncpa [#allocation4], 1

</llo_original>
